<compile_context>
chip_gen: v7x
topology: tpu7x:2x2x1
jax: 0.10.0
libtpu: 0.0.40
codegen_flags: <defaults>
</compile_context>

<pallas_src>
import math

import jax
import jax.numpy as jnp
from jax.experimental import pallas as pl
from jax.experimental.pallas import tpu as pltpu

LANE = 128                       # channel dims padded to a multiple of this
ACT_DTYPE = jnp.bfloat16         # activation/weight storage + MXU operand dtype


def _round_up(n, m=LANE):
    return ((n + m - 1) // m) * m


def _pad_vec(v, cp):
    return jnp.pad(v, (0, cp - v.shape[0]))


def _nbytes(shape, dtype):
    return math.prod(shape) * jnp.dtype(dtype).itemsize


def _vmem_limit(in_bytes, out_bytes, scratch_bytes):
    """Explicit scoped-VMEM budget: double-buffered I/O blocks + scratch,
    2x headroom for compiler temporaries, never below the 32 MiB default."""
    total = 2 * sum(in_bytes) + 2 * sum(out_bytes) + sum(scratch_bytes)
    return int(min(max(2 * total + (8 << 20), 32 << 20), 64 << 20))


# --------------------------------------------------------------------------
# In-kernel helpers
# --------------------------------------------------------------------------
def _zero_border_3d(ref, h, w):
    """Zero the 1-wide spatial border of a (h+2, w+2, C) pad scratch.
    The interior is fully rewritten every grid step; the border is never
    written elsewhere, so only these strips need clearing."""
    hp, wp, c = ref.shape
    zr = jnp.zeros((1, wp, c), ref.dtype)
    zc = jnp.zeros((hp, 1, c), ref.dtype)
    ref[0:1, :, :] = zr
    ref[h + 1:h + 2, :, :] = zr
    ref[:, 0:1, :] = zc
    ref[:, w + 1:w + 2, :] = zc


def _build_im2col(col_ref, pad_ref, h, w, c):
    """Copy the 9 shifted 3x3 taps of the zero-padded (h+2, w+2, >=c) input
    into the lane-aligned (h*w, 9*c) column scratch (one tap per 128-aligned
    column block)."""
    for t in range(9):
        kh, kw = t // 3, t % 3
        col_ref[:, t * c:(t + 1) * c] = (
            pad_ref[kh:kh + h, kw:kw + w, :c].reshape(h * w, c))


# --------------------------------------------------------------------------
# Fused BasicBlock kernels (one batch image per grid step)
# --------------------------------------------------------------------------
def _make_block_s1_kernel(H, W, Cin, Cm, equal_in_out):
    """Fused pre-activation BasicBlock, stride 1."""
    HW = H * W

    def kernel(x_ref, w1_ref, w2_ref, s1_ref, b1_ref, s2_ref, b2_ref, *rest):
        if equal_in_out:
            o_ref, pad_ref, col_ref = rest
        else:
            wsc_ref, o_ref, pad_ref, col_ref, res_ref = rest

        _zero_border_3d(pad_ref, H, W)

        # ---- conv1: bn1+relu prologue (f32 math), im2col, one MXU matmul --
        a1 = jnp.maximum(
            x_ref[0].astype(jnp.float32) * s1_ref[...] + b1_ref[...], 0.0)
        pad_ref[1:H + 1, 1:W + 1, :Cin] = a1.astype(pad_ref.dtype)
        _build_im2col(col_ref, pad_ref, H, W, Cin)

        if not equal_in_out:
            # 1x1 shortcut on relu(bn1(x)) == centre tap (kh=kw=1) of im2col.
            res_ref[...] = jnp.dot(col_ref[:, 4 * Cin:5 * Cin], wsc_ref[...],
                                   preferred_element_type=jnp.float32)

        h = jnp.dot(col_ref[:, :9 * Cin], w1_ref[...],
                    preferred_element_type=jnp.float32)
        # ---- bn2+relu epilogue (f32), h goes straight back into VMEM ------
        h = jnp.maximum(h * s2_ref[...] + b2_ref[...], 0.0)
        pad_ref[1:H + 1, 1:W + 1, :Cm] = (
            h.reshape(H, W, Cm).astype(pad_ref.dtype))

        # ---- conv2 (stride 1) + residual add -------------------------------
        _build_im2col(col_ref, pad_ref, H, W, Cm)
        out = jnp.dot(col_ref[:, :9 * Cm], w2_ref[...],
                      preferred_element_type=jnp.float32)
        if equal_in_out:
            out = out + x_ref[0].reshape(HW, Cm).astype(jnp.float32)
        else:
            out = out + res_ref[...]
        o_ref[...] = out.astype(o_ref.dtype).reshape(1, H, W, Cm)

    return kernel


def _make_block_s2_kernel(Ho, Wo, Cin, Cm):
    """Fused pre-activation BasicBlock, stride 2 (requires cin != cout).
    Input is the 4-phase row/col-parity split of the RAW x; bn1+relu, the
    padded-phase placement, both convs, the strided 1x1 shortcut and the
    residual add are all done in-kernel."""
    HW = Ho * Wo

    def kernel(xph_ref, w1_ref, w2_ref, wsc_ref,
               s1_ref, b1_ref, s2_ref, b2_ref,
               o_ref, php_ref, pad2_ref, col_ref, res_ref):
        # Never-written borders of the phase scratch / conv2 pad scratch.
        for r in (0, 1):
            for c in (0, 1):
                p = 2 * r + c
                php_ref[p, r * Ho:r * Ho + 1, :, :] = jnp.zeros(
                    (1, Wo + 1, Cin), php_ref.dtype)
                php_ref[p, :, c * Wo:c * Wo + 1, :] = jnp.zeros(
                    (Ho + 1, 1, Cin), php_ref.dtype)
        _zero_border_3d(pad2_ref, Ho, Wo)

        # bn1+relu on each raw phase, placed into the zero-padded-phase layout
        #   padded-phase(r,c)[i,j] = relu(bn1(x))[2i+r-1, 2j+c-1]  (0 outside)
        # which is raw phase (1-r, 1-c) shifted by (1-r, 1-c).
        for r in (0, 1):
            for c in (0, 1):
                p_dst, p_src = 2 * r + c, 2 * (1 - r) + (1 - c)
                a = jnp.maximum(
                    xph_ref[0, p_src].astype(jnp.float32) * s1_ref[...]
                    + b1_ref[...], 0.0)
                php_ref[p_dst, 1 - r:1 - r + Ho, 1 - c:1 - c + Wo, :] = (
                    a.astype(php_ref.dtype))

        # ---- conv1 (3x3, stride 2) as one im2col matmul over the phases ---
        # output (i,j), tap (kh,kw) reads padded-phase(kh%2,kw%2)[i+kh//2, j+kw//2]
        for t in range(9):
            kh, kw = t // 3, t % 3
            p = 2 * (kh % 2) + (kw % 2)
            col_ref[:, t * Cin:(t + 1) * Cin] = (
                php_ref[p, kh // 2:kh // 2 + Ho, kw // 2:kw // 2 + Wo, :]
                .reshape(HW, Cin))

        # strided 1x1 shortcut on relu(bn1(x)) == centre tap of the im2col
        res_ref[...] = jnp.dot(col_ref[:, 4 * Cin:5 * Cin], wsc_ref[...],
                               preferred_element_type=jnp.float32)

        h = jnp.dot(col_ref[:, :9 * Cin], w1_ref[...],
                    preferred_element_type=jnp.float32)
        h = jnp.maximum(h * s2_ref[...] + b2_ref[...], 0.0)
        pad2_ref[1:Ho + 1, 1:Wo + 1, :] = (
            h.reshape(Ho, Wo, Cm).astype(pad2_ref.dtype))

        # ---- conv2 (3x3, stride 1) + residual ------------------------------
        _build_im2col(col_ref, pad2_ref, Ho, Wo, Cm)
        out = jnp.dot(col_ref[:, :9 * Cm], w2_ref[...],
                      preferred_element_type=jnp.float32)
        out = out + res_ref[...]
        o_ref[...] = out.astype(o_ref.dtype).reshape(1, Ho, Wo, Cm)

    return kernel


# --------------------------------------------------------------------------
# Pallas wrappers
# --------------------------------------------------------------------------
def fused_block_s1(x, p, equal_in_out):
    """x: (N, H, W, Cin) NHWC, channel-padded, ACT_DTYPE."""
    N, H, W, Cin = x.shape
    Cm = p["w2"].shape[1]
    Cmax = max(Cin, Cm)
    kernel = _make_block_s1_kernel(H, W, Cin, Cm, equal_in_out)

    in_specs = [
        pl.BlockSpec((1, H, W, Cin), lambda n: (n, 0, 0, 0)),
        pl.BlockSpec((9 * Cin, Cm), lambda n: (0, 0)),
        pl.BlockSpec((9 * Cm, Cm), lambda n: (0, 0)),
        pl.BlockSpec((1, Cin), lambda n: (0, 0)),
        pl.BlockSpec((1, Cin), lambda n: (0, 0)),
        pl.BlockSpec((1, Cm), lambda n: (0, 0)),
        pl.BlockSpec((1, Cm), lambda n: (0, 0)),
    ]
    args = [x, p["w1"], p["w2"], p["s1"], p["b1"], p["s2"], p["b2"]]
    scratch_defs = [((H + 2, W + 2, Cmax), ACT_DTYPE),       # pad scratch
                    ((H * W, 9 * Cmax), ACT_DTYPE)]          # im2col scratch
    if not equal_in_out:
        in_specs.append(pl.BlockSpec((Cin, Cm), lambda n: (0, 0)))
        args.append(p["w_sc"])
        scratch_defs.append(((H * W, Cm), jnp.float32))      # shortcut result

    in_bytes = [_nbytes((1, H, W, Cin), ACT_DTYPE),
                _nbytes((9 * Cin, Cm), ACT_DTYPE),
                _nbytes((9 * Cm, Cm), ACT_DTYPE),
                4 * _nbytes((1, Cmax), jnp.float32)]
    if not equal_in_out:
        in_bytes.append(_nbytes((Cin, Cm), ACT_DTYPE))
    out_block = (1, H, W, Cm)
    vmem = _vmem_limit(in_bytes, [_nbytes(out_block, ACT_DTYPE)],
                       [_nbytes(s, d) for s, d in scratch_defs])

    return pl.pallas_call(
        kernel,
        out_shape=jax.ShapeDtypeStruct((N, H, W, Cm), ACT_DTYPE),
        grid=(N,),
        in_specs=in_specs,
        out_specs=pl.BlockSpec(out_block, lambda n: (n, 0, 0, 0)),
        scratch_shapes=[pltpu.VMEM(s, d) for s, d in scratch_defs],
        compiler_params=pltpu.CompilerParams(
            dimension_semantics=("parallel",), vmem_limit_bytes=vmem),
    )(*args)


def fused_block_s2(x, p):
    """Stride-2 BasicBlock (cin != cout). x: (N, H, W, Cin), ACT_DTYPE."""
    N, H, W, Cin = x.shape
    assert H % 2 == 0 and W % 2 == 0, "stride-2 path assumes even spatial dims"
    Ho, Wo = H // 2, W // 2
    Cm = p["w2"].shape[1]
    Cmax = max(Cin, Cm)

    # Row/col parity split of the RAW input (single cheap XLA pass); all the
    # real work (activation, padding, convs, shortcut) stays in the kernel.
    xph = jnp.stack([x[:, 0::2, 0::2], x[:, 0::2, 1::2],
                     x[:, 1::2, 0::2], x[:, 1::2, 1::2]], axis=1)

    kernel = _make_block_s2_kernel(Ho, Wo, Cin, Cm)
    in_specs = [
        pl.BlockSpec((1, 4, Ho, Wo, Cin), lambda n: (n, 0, 0, 0, 0)),
        pl.BlockSpec((9 * Cin, Cm), lambda n: (0, 0)),
        pl.BlockSpec((9 * Cm, Cm), lambda n: (0, 0)),
        pl.BlockSpec((Cin, Cm), lambda n: (0, 0)),
        pl.BlockSpec((1, Cin), lambda n: (0, 0)),
        pl.BlockSpec((1, Cin), lambda n: (0, 0)),
        pl.BlockSpec((1, Cm), lambda n: (0, 0)),
        pl.BlockSpec((1, Cm), lambda n: (0, 0)),
    ]
    args = [xph, p["w1"], p["w2"], p["w_sc"],
            p["s1"], p["b1"], p["s2"], p["b2"]]
    scratch_defs = [((4, Ho + 1, Wo + 1, Cin), ACT_DTYPE),    # padded phases
                    ((Ho + 2, Wo + 2, Cm), ACT_DTYPE),        # conv2 pad
                    ((Ho * Wo, 9 * Cmax), ACT_DTYPE),         # im2col scratch
                    ((Ho * Wo, Cm), jnp.float32)]             # shortcut result

    in_bytes = [_nbytes((1, 4, Ho, Wo, Cin), ACT_DTYPE),
                _nbytes((9 * Cin, Cm), ACT_DTYPE),
                _nbytes((9 * Cm, Cm), ACT_DTYPE),
                _nbytes((Cin, Cm), ACT_DTYPE),
                4 * _nbytes((1, Cmax), jnp.float32)]
    out_block = (1, Ho, Wo, Cm)
    vmem = _vmem_limit(in_bytes, [_nbytes(out_block, ACT_DTYPE)],
                       [_nbytes(s, d) for s, d in scratch_defs])

    return pl.pallas_call(
        kernel,
        out_shape=jax.ShapeDtypeStruct((N, Ho, Wo, Cm), ACT_DTYPE),
        grid=(N,),
        in_specs=in_specs,
        out_specs=pl.BlockSpec(out_block, lambda n: (n, 0, 0, 0)),
        scratch_shapes=[pltpu.VMEM(s, d) for s, d in scratch_defs],
        compiler_params=pltpu.CompilerParams(
            dimension_semantics=("parallel",), vmem_limit_bytes=vmem),
    )(*args)


# --------------------------------------------------------------------------
# Parameters: raw (PyTorch-layout) init + one-time kernel-ready preparation
# --------------------------------------------------------------------------
def init_network_block_params(key, nb_layers, in_planes, out_planes):
    params = []
    for i in range(nb_layers):
        cin = in_planes if i == 0 else out_planes
        cout = out_planes
        key, *ks = jax.random.split(key, 12)
        p = {
            "bn1_gamma": jax.random.uniform(ks[0], (cin,), jnp.float32, 0.5, 1.5),
            "bn1_beta": 0.1 * jax.random.normal(ks[1], (cin,), jnp.float32),
            "bn1_mean": 0.1 * jax.random.normal(ks[2], (cin,), jnp.float32),
            "bn1_var": jax.random.uniform(ks[3], (cin,), jnp.float32, 0.5, 1.5),
            "w1": jax.random.normal(ks[4], (cout, cin, 3, 3), jnp.float32)
            * math.sqrt(2.0 / (9 * cout)),
            "bn2_gamma": jax.random.uniform(ks[5], (cout,), jnp.float32, 0.5, 1.5),
            "bn2_beta": 0.1 * jax.random.normal(ks[6], (cout,), jnp.float32),
            "bn2_mean": 0.1 * jax.random.normal(ks[7], (cout,), jnp.float32),
            "bn2_var": jax.random.uniform(ks[8], (cout,), jnp.float32, 0.5, 1.5),
            "w2": jax.random.normal(ks[9], (cout, cout, 3, 3), jnp.float32)
            * math.sqrt(2.0 / (9 * cout)),
        }
        if cin != cout:
            p["w_sc"] = jax.random.normal(ks[10], (cout, cin, 1, 1), jnp.float32) \
                * math.sqrt(2.0 / cout)
        params.append(p)
    return params


def prepare_block_params(raw_params, in_planes, out_planes, eps=1e-5,
                         dtype=ACT_DTYPE):
    """Fold BN into (scale, bias) in f32, reorder conv weights to a
    (9*Cin_p, Cout_p) im2col layout in bf16, zero-pad channel dims to a
    multiple of 128.  Done once, off the hot path."""
    prepared = []
    for i, p in enumerate(raw_params):
        cin = in_planes if i == 0 else out_planes
        cout = out_planes
        cin_p, cout_p = _round_up(cin), _round_up(cout)

        s1 = p["bn1_gamma"] / jnp.sqrt(p["bn1_var"] + eps)
        b1 = p["bn1_beta"] - p["bn1_mean"] * s1
        s2 = p["bn2_gamma"] / jnp.sqrt(p["bn2_var"] + eps)
        b2 = p["bn2_beta"] - p["bn2_mean"] * s2

        def conv_w(w, ci, co, ci_p, co_p):     # (co, ci, 3, 3) -> (9*ci_p, co_p)
            w = jnp.transpose(w, (2, 3, 1, 0)).reshape(9, ci, co)
            w = jnp.pad(w, ((0, 0), (0, ci_p - ci), (0, co_p - co)))
            return w.reshape(9 * ci_p, co_p).astype(dtype)

        q = {
            "s1": _pad_vec(s1, cin_p).reshape(1, cin_p),
            "b1": _pad_vec(b1, cin_p).reshape(1, cin_p),
            "s2": _pad_vec(s2, cout_p).reshape(1, cout_p),
            "b2": _pad_vec(b2, cout_p).reshape(1, cout_p),
            "w1": conv_w(p["w1"], cin, cout, cin_p, cout_p),
            "w2": conv_w(p["w2"], cout, cout, cout_p, cout_p),
        }
        if cin != cout:
            wsc = jnp.transpose(p["w_sc"][:, :, 0, 0], (1, 0))   # (cin, cout)
            q["w_sc"] = jnp.pad(
                wsc, ((0, cin_p - cin), (0, cout_p - cout))).astype(dtype)
        prepared.append(q)
    return prepared


# --------------------------------------------------------------------------
# NetworkBlock forward
# --------------------------------------------------------------------------
def network_block_fwd(x_nchw, prepared_params, in_planes, out_planes, stride):
    x = jnp.transpose(x_nchw, (0, 2, 3, 1))                # NCHW -> NHWC
    cin_p = _round_up(in_planes)
    if cin_p != in_planes:
        x = jnp.pad(x, ((0, 0), (0, 0), (0, 0), (0, cin_p - in_planes)))
    x = x.astype(ACT_DTYPE)
    for i, p in enumerate(prepared_params):
        cin = in_planes if i == 0 else out_planes
        s = stride if i == 0 else 1
        equal = (cin == out_planes)
        if s == 1:
            x = fused_block_s1(x, p, equal)
        elif s == 2:
            assert not equal, "stride-2 BasicBlock requires a 1x1 shortcut conv"
            x = fused_block_s2(x, p)
        else:
            raise NotImplementedError("only stride 1 and 2 are supported")
    x = x[..., :out_planes].astype(jnp.float32)            # drop channel padding
    return jnp.transpose(x, (0, 3, 1, 2))                  # NHWC -> NCHW


# --------------------------------------------------------------------------
# Pure-JAX f32 reference (lax.conv) for a sanity check
# --------------------------------------------------------------------------
def _ref_bn_relu(x, g, b, m, v, eps=1e-5):
    s = g / jnp.sqrt(v + eps)
    return jnp.maximum(x * s + (b - m * s), 0.0)


def _ref_conv(x_nhwc, w_oihw, stride):
    w_hwio = jnp.transpose(w_oihw, (2, 3, 1, 0))
    pad = ((1, 1), (1, 1)) if w_oihw.shape[2] == 3 else ((0, 0), (0, 0))
    return jax.lax.conv_general_dilated(
        x_nhwc, w_hwio, window_strides=(stride, stride), padding=pad,
        dimension_numbers=("NHWC", "HWIO", "NHWC"))


def _ref_network_block(x_nchw, raw_params, in_planes, out_planes, stride):
    x = jnp.transpose(x_nchw, (0, 2, 3, 1))
    for i, p in enumerate(raw_params):
        cin = in_planes if i == 0 else out_planes
        s = stride if i == 0 else 1
        equal = cin == out_planes
        pre = _ref_bn_relu(x, p["bn1_gamma"], p["bn1_beta"],
                           p["bn1_mean"], p["bn1_var"])
        shortcut = x if equal else _ref_conv(pre, p["w_sc"], s)
        h = _ref_conv(pre, p["w1"], s)
        h = _ref_bn_relu(h, p["bn2_gamma"], p["bn2_beta"],
                         p["bn2_mean"], p["bn2_var"])
        x = _ref_conv(h, p["w2"], 1) + shortcut
    return jnp.transpose(x, (0, 3, 1, 2))


# --------------------------------------------------------------------------
if __name__ == "__main__":
    key = jax.random.PRNGKey(0)
    k_x, k_p, k_x2, k_p2 = jax.random.split(key, 4)

    fwd = jax.jit(network_block_fwd, static_argnums=(2, 3, 4))

    # Config A: NetworkBlock(nb_layers=2, in=4, out=8, stride=2) on (2,4,16,16)
    nb_layers, in_planes, out_planes, stride = 2, 4, 8, 2
    x = jax.random.normal(k_x, (2, in_planes, 16, 16), jnp.float32)   # NCHW
    raw = init_network_block_params(k_p, nb_layers, in_planes, out_planes)
    prep = prepare_block_params(raw, in_planes, out_planes)
    out = jax.block_until_ready(fwd(x, prep, in_planes, out_planes, stride))
    ref = jax.block_until_ready(
        _ref_network_block(x, raw, in_planes, out_planes, stride))
    assert out.shape == (2, out_planes, 8, 8), out.shape
    err = float(jnp.max(jnp.abs(out - ref)))
    # bf16 MXU operands vs f32 reference -> loose but bug-catching tolerance
    assert jnp.allclose(out, ref, rtol=5e-2, atol=1e-1), err

    # Config B: stride-1 first block with a channel change (fused 1x1-shortcut
    # path of the stride-1 kernel).
    nb2, inp2, outp2 = 1, 4, 8
    x2 = jax.random.normal(k_x2, (2, inp2, 8, 8), jnp.float32)
    raw2 = init_network_block_params(k_p2, nb2, inp2, outp2)
    prep2 = prepare_block_params(raw2, inp2, outp2)
    out2 = jax.block_until_ready(fwd(x2, prep2, inp2, outp2, 1))
    ref2 = jax.block_until_ready(_ref_network_block(x2, raw2, inp2, outp2, 1))
    assert out2.shape == (2, outp2, 8, 8), out2.shape
    err2 = float(jnp.max(jnp.abs(out2 - ref2)))
    assert jnp.allclose(out2, ref2, rtol=5e-2, atol=1e-1), err2

    print("KERNEL_OK")
</pallas_src>

<mosaic_0001>
module attributes {stable_mosaic.version = 11 : i64} {
  func.func @kernel(%arg0: i32, %arg1: memref<1x8x8x128xbf16, #tpu.memory_space<vmem>>, %arg2: memref<1152x128xbf16, #tpu.memory_space<vmem>>, %arg3: memref<1152x128xbf16, #tpu.memory_space<vmem>>, %arg4: memref<1x128xf32, #tpu.memory_space<vmem>>, %arg5: memref<1x128xf32, #tpu.memory_space<vmem>>, %arg6: memref<1x128xf32, #tpu.memory_space<vmem>>, %arg7: memref<1x128xf32, #tpu.memory_space<vmem>>, %arg8: memref<1x8x8x128xbf16, #tpu.memory_space<vmem>>, %arg9: memref<10x10x128xbf16, #tpu.memory_space<vmem>>, %arg10: memref<64x1152xbf16, #tpu.memory_space<vmem>>) attributes {dimension_semantics = [#tpu.dimension_semantics<parallel>], iteration_bounds = array<i64: 2>, scalar_prefetch = 0 : i64, scratch_operands = 2 : i64, tpu.core_type = #tpu.core_type<tc>, window_params = [{transform_indices = @transform_0, window_bounds = array<i64: 1, 8, 8, 128>}, {pipeline_mode = #tpu.pipeline_mode<synchronous>, transform_indices = @transform_1, window_bounds = array<i64: 1152, 128>}, {pipeline_mode = #tpu.pipeline_mode<synchronous>, transform_indices = @transform_2, window_bounds = array<i64: 1152, 128>}, {pipeline_mode = #tpu.pipeline_mode<synchronous>, transform_indices = @transform_3, window_bounds = array<i64: 1, 128>}, {pipeline_mode = #tpu.pipeline_mode<synchronous>, transform_indices = @transform_4, window_bounds = array<i64: 1, 128>}, {pipeline_mode = #tpu.pipeline_mode<synchronous>, transform_indices = @transform_5, window_bounds = array<i64: 1, 128>}, {pipeline_mode = #tpu.pipeline_mode<synchronous>, transform_indices = @transform_6, window_bounds = array<i64: 1, 128>}, {transform_indices = @transform_7, window_bounds = array<i64: 1, 8, 8, 128>}]} {
    %cst = arith.constant 0.000000e+00 : bf16
    %0 = vector.broadcast %cst : bf16 to vector<1x10x128xbf16>
    %cst_0 = arith.constant 0.000000e+00 : bf16
    %1 = vector.broadcast %cst_0 : bf16 to vector<10x1x128xbf16>
    %c0 = arith.constant 0 : index
    %c0_1 = arith.constant 0 : index
    %c0_2 = arith.constant 0 : index
    %2 = vector.load %arg9[%c0, %c0_1, %c0_2] : memref<10x10x128xbf16, #tpu.memory_space<vmem>>, vector<1x10x128xbf16>
    tpu.vector_store %arg9[%c0, %c0_1, %c0_2], %0 {strides = array<i32>} : memref<10x10x128xbf16, #tpu.memory_space<vmem>>, vector<1x10x128xbf16>,
    %c9 = arith.constant 9 : index
    %c0_3 = arith.constant 0 : index
    %c0_4 = arith.constant 0 : index
    %3 = vector.load %arg9[%c9, %c0_3, %c0_4] : memref<10x10x128xbf16, #tpu.memory_space<vmem>>, vector<1x10x128xbf16>
    tpu.vector_store %arg9[%c9, %c0_3, %c0_4], %0 {strides = array<i32>} : memref<10x10x128xbf16, #tpu.memory_space<vmem>>, vector<1x10x128xbf16>,
    %c0_5 = arith.constant 0 : index
    %c0_6 = arith.constant 0 : index
    %c0_7 = arith.constant 0 : index
    %4 = vector.load %arg9[%c0_5, %c0_6, %c0_7] : memref<10x10x128xbf16, #tpu.memory_space<vmem>>, vector<10x1x128xbf16>
    tpu.vector_store %arg9[%c0_5, %c0_6, %c0_7], %1 {strides = array<i32>} : memref<10x10x128xbf16, #tpu.memory_space<vmem>>, vector<10x1x128xbf16>,
    %c0_8 = arith.constant 0 : index
    %c9_9 = arith.constant 9 : index
    %c0_10 = arith.constant 0 : index
    %5 = vector.load %arg9[%c0_8, %c9_9, %c0_10] : memref<10x10x128xbf16, #tpu.memory_space<vmem>>, vector<10x1x128xbf16>
    tpu.vector_store %arg9[%c0_8, %c9_9, %c0_10], %1 {strides = array<i32>} : memref<10x10x128xbf16, #tpu.memory_space<vmem>>, vector<10x1x128xbf16>,
    %c0_11 = arith.constant 0 : index
    %c0_12 = arith.constant 0 : index
    %c0_13 = arith.constant 0 : index
    %c0_14 = arith.constant 0 : index
    %6 = vector.load %arg1[%c0_11, %c0_12, %c0_13, %c0_14] : memref<1x8x8x128xbf16, #tpu.memory_space<vmem>>, vector<1x8x8x128xbf16>
    %7 = vector.shape_cast %6 : vector<1x8x8x128xbf16> to vector<8x8x128xbf16>
    %8 = arith.extf %7 : vector<8x8x128xbf16> to vector<8x8x128xf32>
    %c0_15 = arith.constant 0 : index
    %c0_16 = arith.constant 0 : index
    %9 = vector.load %arg4[%c0_15, %c0_16] : memref<1x128xf32, #tpu.memory_space<vmem>>, vector<1x128xf32>
    %10 = vector.shape_cast %9 : vector<1x128xf32> to vector<1x1x128xf32>
    %11 = vector.broadcast %10 : vector<1x1x128xf32> to vector<8x8x128xf32>
    %12 = arith.mulf %8, %11 : vector<8x8x128xf32>
    %c0_17 = arith.constant 0 : index
    %c0_18 = arith.constant 0 : index
    %13 = vector.load %arg5[%c0_17, %c0_18] : memref<1x128xf32, #tpu.memory_space<vmem>>, vector<1x128xf32>
    %14 = vector.shape_cast %13 : vector<1x128xf32> to vector<1x1x128xf32>
    %15 = vector.broadcast %14 : vector<1x1x128xf32> to vector<8x8x128xf32>
    %16 = arith.addf %12, %15 : vector<8x8x128xf32>
    %cst_19 = arith.constant 0.000000e+00 : f32
    %17 = vector.broadcast %cst_19 : f32 to vector<8x8x128xf32>
    %18 = arith.maximumf %16, %17 : vector<8x8x128xf32>
    %19 = arith.truncf %18 : vector<8x8x128xf32> to vector<8x8x128xbf16>
    %c1 = arith.constant 1 : index
    %c1_20 = arith.constant 1 : index
    %c0_21 = arith.constant 0 : index
    %20 = vector.load %arg9[%c1, %c1_20, %c0_21] : memref<10x10x128xbf16, #tpu.memory_space<vmem>>, vector<8x8x128xbf16>
    tpu.vector_store %arg9[%c1, %c1_20, %c0_21], %19 {strides = array<i32>} : memref<10x10x128xbf16, #tpu.memory_space<vmem>>, vector<8x8x128xbf16>,
    %c0_22 = arith.constant 0 : index
    %c0_23 = arith.constant 0 : index
    %c0_24 = arith.constant 0 : index
    %21 = vector.load %arg9[%c0_22, %c0_23, %c0_24] : memref<10x10x128xbf16, #tpu.memory_space<vmem>>, vector<8x8x128xbf16>
    %22 = vector.shape_cast %21 : vector<8x8x128xbf16> to vector<64x128xbf16>
    %c0_25 = arith.constant 0 : index
    %c0_26 = arith.constant 0 : index
    %23 = vector.load %arg10[%c0_25, %c0_26] : memref<64x1152xbf16, #tpu.memory_space<vmem>>, vector<64x128xbf16>
    tpu.vector_store %arg10[%c0_25, %c0_26], %22 {strides = array<i32>} : memref<64x1152xbf16, #tpu.memory_space<vmem>>, vector<64x128xbf16>,
    %c0_27 = arith.constant 0 : index
    %c1_28 = arith.constant 1 : index
    %c0_29 = arith.constant 0 : index
    %24 = vector.load %arg9[%c0_27, %c1_28, %c0_29] : memref<10x10x128xbf16, #tpu.memory_space<vmem>>, vector<8x8x128xbf16>
    %25 = vector.shape_cast %24 : vector<8x8x128xbf16> to vector<64x128xbf16>
    %c0_30 = arith.constant 0 : index
    %c128 = arith.constant 128 : index
    %26 = vector.load %arg10[%c0_30, %c128] : memref<64x1152xbf16, #tpu.memory_space<vmem>>, vector<64x128xbf16>
    tpu.vector_store %arg10[%c0_30, %c128], %25 {strides = array<i32>} : memref<64x1152xbf16, #tpu.memory_space<vmem>>, vector<64x128xbf16>,
    %c0_31 = arith.constant 0 : index
    %c2 = arith.constant 2 : index
    %c0_32 = arith.constant 0 : index
    %27 = vector.load %arg9[%c0_31, %c2, %c0_32] : memref<10x10x128xbf16, #tpu.memory_space<vmem>>, vector<8x8x128xbf16>
    %28 = vector.shape_cast %27 : vector<8x8x128xbf16> to vector<64x128xbf16>
    %c0_33 = arith.constant 0 : index
    %c256 = arith.constant 256 : index
    %29 = vector.load %arg10[%c0_33, %c256] : memref<64x1152xbf16, #tpu.memory_space<vmem>>, vector<64x128xbf16>
    tpu.vector_store %arg10[%c0_33, %c256], %28 {strides = array<i32>} : memref<64x1152xbf16, #tpu.memory_space<vmem>>, vector<64x128xbf16>,
    %c1_34 = arith.constant 1 : index
    %c0_35 = arith.constant 0 : index
    %c0_36 = arith.constant 0 : index
    %30 = vector.load %arg9[%c1_34, %c0_35, %c0_36] : memref<10x10x128xbf16, #tpu.memory_space<vmem>>, vector<8x8x128xbf16>
    %31 = vector.shape_cast %30 : vector<8x8x128xbf16> to vector<64x128xbf16>
    %c0_37 = arith.constant 0 : index
    %c384 = arith.constant 384 : index
    %32 = vector.load %arg10[%c0_37, %c384] : memref<64x1152xbf16, #tpu.memory_space<vmem>>, vector<64x128xbf16>
    tpu.vector_store %arg10[%c0_37, %c384], %31 {strides = array<i32>} : memref<64x1152xbf16, #tpu.memory_space<vmem>>, vector<64x128xbf16>,
    %c1_38 = arith.constant 1 : index
    %c1_39 = arith.constant 1 : index
    %c0_40 = arith.constant 0 : index
    %33 = vector.load %arg9[%c1_38, %c1_39, %c0_40] : memref<10x10x128xbf16, #tpu.memory_space<vmem>>, vector<8x8x128xbf16>
    %34 = vector.shape_cast %33 : vector<8x8x128xbf16> to vector<64x128xbf16>
    %c0_41 = arith.constant 0 : index
    %c512 = arith.constant 512 : index
    %35 = vector.load %arg10[%c0_41, %c512] : memref<64x1152xbf16, #tpu.memory_space<vmem>>, vector<64x128xbf16>
    tpu.vector_store %arg10[%c0_41, %c512], %34 {strides = array<i32>} : memref<64x1152xbf16, #tpu.memory_space<vmem>>, vector<64x128xbf16>,
    %c1_42 = arith.constant 1 : index
    %c2_43 = arith.constant 2 : index
    %c0_44 = arith.constant 0 : index
    %36 = vector.load %arg9[%c1_42, %c2_43, %c0_44] : memref<10x10x128xbf16, #tpu.memory_space<vmem>>, vector<8x8x128xbf16>
    %37 = vector.shape_cast %36 : vector<8x8x128xbf16> to vector<64x128xbf16>
    %c0_45 = arith.constant 0 : index
    %c640 = arith.constant 640 : index
    %38 = vector.load %arg10[%c0_45, %c640] : memref<64x1152xbf16, #tpu.memory_space<vmem>>, vector<64x128xbf16>
    tpu.vector_store %arg10[%c0_45, %c640], %37 {strides = array<i32>} : memref<64x1152xbf16, #tpu.memory_space<vmem>>, vector<64x128xbf16>,
    %c2_46 = arith.constant 2 : index
    %c0_47 = arith.constant 0 : index
    %c0_48 = arith.constant 0 : index
    %39 = vector.load %arg9[%c2_46, %c0_47, %c0_48] : memref<10x10x128xbf16, #tpu.memory_space<vmem>>, vector<8x8x128xbf16>
    %40 = vector.shape_cast %39 : vector<8x8x128xbf16> to vector<64x128xbf16>
    %c0_49 = arith.constant 0 : index
    %c768 = arith.constant 768 : index
    %41 = vector.load %arg10[%c0_49, %c768] : memref<64x1152xbf16, #tpu.memory_space<vmem>>, vector<64x128xbf16>
    tpu.vector_store %arg10[%c0_49, %c768], %40 {strides = array<i32>} : memref<64x1152xbf16, #tpu.memory_space<vmem>>, vector<64x128xbf16>,
    %c2_50 = arith.constant 2 : index
    %c1_51 = arith.constant 1 : index
    %c0_52 = arith.constant 0 : index
    %42 = vector.load %arg9[%c2_50, %c1_51, %c0_52] : memref<10x10x128xbf16, #tpu.memory_space<vmem>>, vector<8x8x128xbf16>
    %43 = vector.shape_cast %42 : vector<8x8x128xbf16> to vector<64x128xbf16>
    %c0_53 = arith.constant 0 : index
    %c896 = arith.constant 896 : index
    %44 = vector.load %arg10[%c0_53, %c896] : memref<64x1152xbf16, #tpu.memory_space<vmem>>, vector<64x128xbf16>
    tpu.vector_store %arg10[%c0_53, %c896], %43 {strides = array<i32>} : memref<64x1152xbf16, #tpu.memory_space<vmem>>, vector<64x128xbf16>,
    %c2_54 = arith.constant 2 : index
    %c2_55 = arith.constant 2 : index
    %c0_56 = arith.constant 0 : index
    %45 = vector.load %arg9[%c2_54, %c2_55, %c0_56] : memref<10x10x128xbf16, #tpu.memory_space<vmem>>, vector<8x8x128xbf16>
    %46 = vector.shape_cast %45 : vector<8x8x128xbf16> to vector<64x128xbf16>
    %c0_57 = arith.constant 0 : index
    %c1024 = arith.constant 1024 : index
    %47 = vector.load %arg10[%c0_57, %c1024] : memref<64x1152xbf16, #tpu.memory_space<vmem>>, vector<64x128xbf16>
    tpu.vector_store %arg10[%c0_57, %c1024], %46 {strides = array<i32>} : memref<64x1152xbf16, #tpu.memory_space<vmem>>, vector<64x128xbf16>,
    %c0_58 = arith.constant 0 : index
    %c0_59 = arith.constant 0 : index
    %48 = vector.load %arg10[%c0_58, %c0_59] : memref<64x1152xbf16, #tpu.memory_space<vmem>>, vector<64x1152xbf16>
    %c0_60 = arith.constant 0 : index
    %c0_61 = arith.constant 0 : index
    %49 = vector.load %arg2[%c0_60, %c0_61] : memref<1152x128xbf16, #tpu.memory_space<vmem>>, vector<1152x128xbf16>
    %cst_62 = arith.constant dense<0.000000e+00> : vector<64x128xf32>
    %50 = tpu.matmul %48, %49, %cst_62 {dimension_numbers = #tpu.dot_dimension_numbers<[1], [0], [0], [1], [0, 0, 1, 1], [], []>} : vector<64x1152xbf16>, vector<1152x128xbf16>, vector<64x128xf32> -> vector<64x128xf32>
    %c0_63 = arith.constant 0 : index
    %c0_64 = arith.constant 0 : index
    %51 = vector.load %arg6[%c0_63, %c0_64] : memref<1x128xf32, #tpu.memory_space<vmem>>, vector<1x128xf32>
    %52 = vector.broadcast %51 : vector<1x128xf32> to vector<64x128xf32>
    %53 = arith.mulf %50, %52 : vector<64x128xf32>
    %c0_65 = arith.constant 0 : index
    %c0_66 = arith.constant 0 : index
    %54 = vector.load %arg7[%c0_65, %c0_66] : memref<1x128xf32, #tpu.memory_space<vmem>>, vector<1x128xf32>
    %55 = vector.broadcast %54 : vector<1x128xf32> to vector<64x128xf32>
    %56 = arith.addf %53, %55 : vector<64x128xf32>
    %cst_67 = arith.constant 0.000000e+00 : f32
    %57 = vector.broadcast %cst_67 : f32 to vector<64x128xf32>
    %58 = arith.maximumf %56, %57 : vector<64x128xf32>
    %59 = vector.shape_cast %58 : vector<64x128xf32> to vector<8x8x128xf32>
    %60 = arith.truncf %59 : vector<8x8x128xf32> to vector<8x8x128xbf16>
    %c1_68 = arith.constant 1 : index
    %c1_69 = arith.constant 1 : index
    %c0_70 = arith.constant 0 : index
    %61 = vector.load %arg9[%c1_68, %c1_69, %c0_70] : memref<10x10x128xbf16, #tpu.memory_space<vmem>>, vector<8x8x128xbf16>
    tpu.vector_store %arg9[%c1_68, %c1_69, %c0_70], %60 {strides = array<i32>} : memref<10x10x128xbf16, #tpu.memory_space<vmem>>, vector<8x8x128xbf16>,
    %c0_71 = arith.constant 0 : index
    %c0_72 = arith.constant 0 : index
    %c0_73 = arith.constant 0 : index
    %62 = vector.load %arg9[%c0_71, %c0_72, %c0_73] : memref<10x10x128xbf16, #tpu.memory_space<vmem>>, vector<8x8x128xbf16>
    %63 = vector.shape_cast %62 : vector<8x8x128xbf16> to vector<64x128xbf16>
    %c0_74 = arith.constant 0 : index
    %c0_75 = arith.constant 0 : index
    %64 = vector.load %arg10[%c0_74, %c0_75] : memref<64x1152xbf16, #tpu.memory_space<vmem>>, vector<64x128xbf16>
    tpu.vector_store %arg10[%c0_74, %c0_75], %63 {strides = array<i32>} : memref<64x1152xbf16, #tpu.memory_space<vmem>>, vector<64x128xbf16>,
    %c0_76 = arith.constant 0 : index
    %c1_77 = arith.constant 1 : index
    %c0_78 = arith.constant 0 : index
    %65 = vector.load %arg9[%c0_76, %c1_77, %c0_78] : memref<10x10x128xbf16, #tpu.memory_space<vmem>>, vector<8x8x128xbf16>
    %66 = vector.shape_cast %65 : vector<8x8x128xbf16> to vector<64x128xbf16>
    %c0_79 = arith.constant 0 : index
    %c128_80 = arith.constant 128 : index
    %67 = vector.load %arg10[%c0_79, %c128_80] : memref<64x1152xbf16, #tpu.memory_space<vmem>>, vector<64x128xbf16>
    tpu.vector_store %arg10[%c0_79, %c128_80], %66 {strides = array<i32>} : memref<64x1152xbf16, #tpu.memory_space<vmem>>, vector<64x128xbf16>,
    %c0_81 = arith.constant 0 : index
    %c2_82 = arith.constant 2 : index
    %c0_83 = arith.constant 0 : index
    %68 = vector.load %arg9[%c0_81, %c2_82, %c0_83] : memref<10x10x128xbf16, #tpu.memory_space<vmem>>, vector<8x8x128xbf16>
    %69 = vector.shape_cast %68 : vector<8x8x128xbf16> to vector<64x128xbf16>
    %c0_84 = arith.constant 0 : index
    %c256_85 = arith.constant 256 : index
    %70 = vector.load %arg10[%c0_84, %c256_85] : memref<64x1152xbf16, #tpu.memory_space<vmem>>, vector<64x128xbf16>
    tpu.vector_store %arg10[%c0_84, %c256_85], %69 {strides = array<i32>} : memref<64x1152xbf16, #tpu.memory_space<vmem>>, vector<64x128xbf16>,
    %c1_86 = arith.constant 1 : index
    %c0_87 = arith.constant 0 : index
    %c0_88 = arith.constant 0 : index
    %71 = vector.load %arg9[%c1_86, %c0_87, %c0_88] : memref<10x10x128xbf16, #tpu.memory_space<vmem>>, vector<8x8x128xbf16>
    %72 = vector.shape_cast %71 : vector<8x8x128xbf16> to vector<64x128xbf16>
    %c0_89 = arith.constant 0 : index
    %c384_90 = arith.constant 384 : index
    %73 = vector.load %arg10[%c0_89, %c384_90] : memref<64x1152xbf16, #tpu.memory_space<vmem>>, vector<64x128xbf16>
    tpu.vector_store %arg10[%c0_89, %c384_90], %72 {strides = array<i32>} : memref<64x1152xbf16, #tpu.memory_space<vmem>>, vector<64x128xbf16>,
    %c1_91 = arith.constant 1 : index
    %c1_92 = arith.constant 1 : index
    %c0_93 = arith.constant 0 : index
    %74 = vector.load %arg9[%c1_91, %c1_92, %c0_93] : memref<10x10x128xbf16, #tpu.memory_space<vmem>>, vector<8x8x128xbf16>
    %75 = vector.shape_cast %74 : vector<8x8x128xbf16> to vector<64x128xbf16>
    %c0_94 = arith.constant 0 : index
    %c512_95 = arith.constant 512 : index
    %76 = vector.load %arg10[%c0_94, %c512_95] : memref<64x1152xbf16, #tpu.memory_space<vmem>>, vector<64x128xbf16>
    tpu.vector_store %arg10[%c0_94, %c512_95], %75 {strides = array<i32>} : memref<64x1152xbf16, #tpu.memory_space<vmem>>, vector<64x128xbf16>,
    %c1_96 = arith.constant 1 : index
    %c2_97 = arith.constant 2 : index
    %c0_98 = arith.constant 0 : index
    %77 = vector.load %arg9[%c1_96, %c2_97, %c0_98] : memref<10x10x128xbf16, #tpu.memory_space<vmem>>, vector<8x8x128xbf16>
    %78 = vector.shape_cast %77 : vector<8x8x128xbf16> to vector<64x128xbf16>
    %c0_99 = arith.constant 0 : index
    %c640_100 = arith.constant 640 : index
    %79 = vector.load %arg10[%c0_99, %c640_100] : memref<64x1152xbf16, #tpu.memory_space<vmem>>, vector<64x128xbf16>
    tpu.vector_store %arg10[%c0_99, %c640_100], %78 {strides = array<i32>} : memref<64x1152xbf16, #tpu.memory_space<vmem>>, vector<64x128xbf16>,
    %c2_101 = arith.constant 2 : index
    %c0_102 = arith.constant 0 : index
    %c0_103 = arith.constant 0 : index
    %80 = vector.load %arg9[%c2_101, %c0_102, %c0_103] : memref<10x10x128xbf16, #tpu.memory_space<vmem>>, vector<8x8x128xbf16>
    %81 = vector.shape_cast %80 : vector<8x8x128xbf16> to vector<64x128xbf16>
    %c0_104 = arith.constant 0 : index
    %c768_105 = arith.constant 768 : index
    %82 = vector.load %arg10[%c0_104, %c768_105] : memref<64x1152xbf16, #tpu.memory_space<vmem>>, vector<64x128xbf16>
    tpu.vector_store %arg10[%c0_104, %c768_105], %81 {strides = array<i32>} : memref<64x1152xbf16, #tpu.memory_space<vmem>>, vector<64x128xbf16>,
    %c2_106 = arith.constant 2 : index
    %c1_107 = arith.constant 1 : index
    %c0_108 = arith.constant 0 : index
    %83 = vector.load %arg9[%c2_106, %c1_107, %c0_108] : memref<10x10x128xbf16, #tpu.memory_space<vmem>>, vector<8x8x128xbf16>
    %84 = vector.shape_cast %83 : vector<8x8x128xbf16> to vector<64x128xbf16>
    %c0_109 = arith.constant 0 : index
    %c896_110 = arith.constant 896 : index
    %85 = vector.load %arg10[%c0_109, %c896_110] : memref<64x1152xbf16, #tpu.memory_space<vmem>>, vector<64x128xbf16>
    tpu.vector_store %arg10[%c0_109, %c896_110], %84 {strides = array<i32>} : memref<64x1152xbf16, #tpu.memory_space<vmem>>, vector<64x128xbf16>,
    %c2_111 = arith.constant 2 : index
    %c2_112 = arith.constant 2 : index
    %c0_113 = arith.constant 0 : index
    %86 = vector.load %arg9[%c2_111, %c2_112, %c0_113] : memref<10x10x128xbf16, #tpu.memory_space<vmem>>, vector<8x8x128xbf16>
    %87 = vector.shape_cast %86 : vector<8x8x128xbf16> to vector<64x128xbf16>
    %c0_114 = arith.constant 0 : index
    %c1024_115 = arith.constant 1024 : index
    %88 = vector.load %arg10[%c0_114, %c1024_115] : memref<64x1152xbf16, #tpu.memory_space<vmem>>, vector<64x128xbf16>
    tpu.vector_store %arg10[%c0_114, %c1024_115], %87 {strides = array<i32>} : memref<64x1152xbf16, #tpu.memory_space<vmem>>, vector<64x128xbf16>,
    %c0_116 = arith.constant 0 : index
    %c0_117 = arith.constant 0 : index
    %89 = vector.load %arg10[%c0_116, %c0_117] : memref<64x1152xbf16, #tpu.memory_space<vmem>>, vector<64x1152xbf16>
    %c0_118 = arith.constant 0 : index
    %c0_119 = arith.constant 0 : index
    %90 = vector.load %arg3[%c0_118, %c0_119] : memref<1152x128xbf16, #tpu.memory_space<vmem>>, vector<1152x128xbf16>
    %cst_120 = arith.constant dense<0.000000e+00> : vector<64x128xf32>
    %91 = tpu.matmul %89, %90, %cst_120 {dimension_numbers = #tpu.dot_dimension_numbers<[1], [0], [0], [1], [0, 0, 1, 1], [], []>} : vector<64x1152xbf16>, vector<1152x128xbf16>, vector<64x128xf32> -> vector<64x128xf32>
    %c0_121 = arith.constant 0 : index
    %c0_122 = arith.constant 0 : index
    %c0_123 = arith.constant 0 : index
    %c0_124 = arith.constant 0 : index
    %92 = vector.load %arg1[%c0_121, %c0_122, %c0_123, %c0_124] : memref<1x8x8x128xbf16, #tpu.memory_space<vmem>>, vector<1x8x8x128xbf16>
    %93 = vector.shape_cast %92 : vector<1x8x8x128xbf16> to vector<8x8x128xbf16>
    %94 = vector.shape_cast %93 : vector<8x8x128xbf16> to vector<64x128xbf16>
    %95 = arith.extf %94 : vector<64x128xbf16> to vector<64x128xf32>
    %96 = arith.addf %91, %95 : vector<64x128xf32>
    %97 = arith.truncf %96 : vector<64x128xf32> to vector<64x128xbf16>
    %98 = vector.shape_cast %97 : vector<64x128xbf16> to vector<1x8x8x128xbf16>
    %c0_125 = arith.constant 0 : index
    %c0_126 = arith.constant 0 : index
    %c0_127 = arith.constant 0 : index
    %c0_128 = arith.constant 0 : index
    %99 = vector.load %arg8[%c0_125, %c0_126, %c0_127, %c0_128] : memref<1x8x8x128xbf16, #tpu.memory_space<vmem>>, vector<1x8x8x128xbf16>
    tpu.vector_store %arg8[%c0_125, %c0_126, %c0_127, %c0_128], %98 {strides = array<i32>} : memref<1x8x8x128xbf16, #tpu.memory_space<vmem>>, vector<1x8x8x128xbf16>,
    return
  }
  func.func @transform_0(%arg0: i32) -> (i32, i32, i32, i32) {
    %c0_i32 = arith.constant 0 : i32
    %c0_i32_0 = arith.constant 0 : i32
    %c0_i32_1 = arith.constant 0 : i32
    %c0_i32_2 = arith.constant 0 : i32
    return %arg0, %c0_i32, %c0_i32_0, %c0_i32_1 : i32, i32, i32, i32
  }
  func.func @transform_1(%arg0: i32) -> (i32, i32) {
    %c0_i32 = arith.constant 0 : i32
    %c0_i32_0 = arith.constant 0 : i32
    %c0_i32_1 = arith.constant 0 : i32
    return %c0_i32, %c0_i32_0 : i32, i32
  }
  func.func @transform_2(%arg0: i32) -> (i32, i32) {
    %c0_i32 = arith.constant 0 : i32
    %c0_i32_0 = arith.constant 0 : i32
    %c0_i32_1 = arith.constant 0 : i32
    return %c0_i32, %c0_i32_0 : i32, i32
  }
  func.func @transform_3(%arg0: i32) -> (i32, i32) {
    %c0_i32 = arith.constant 0 : i32
    %c0_i32_0 = arith.constant 0 : i32
    %c0_i32_1 = arith.constant 0 : i32
    return %c0_i32, %c0_i32_0 : i32, i32
  }
  func.func @transform_4(%arg0: i32) -> (i32, i32) {
    %c0_i32 = arith.constant 0 : i32
    %c0_i32_0 = arith.constant 0 : i32
    %c0_i32_1 = arith.constant 0 : i32
    return %c0_i32, %c0_i32_0 : i32, i32
  }
  func.func @transform_5(%arg0: i32) -> (i32, i32) {
    %c0_i32 = arith.constant 0 : i32
    %c0_i32_0 = arith.constant 0 : i32
    %c0_i32_1 = arith.constant 0 : i32
    return %c0_i32, %c0_i32_0 : i32, i32
  }
  func.func @transform_6(%arg0: i32) -> (i32, i32) {
    %c0_i32 = arith.constant 0 : i32
    %c0_i32_0 = arith.constant 0 : i32
    %c0_i32_1 = arith.constant 0 : i32
    return %c0_i32, %c0_i32_0 : i32, i32
  }
  func.func @transform_7(%arg0: i32) -> (i32, i32, i32, i32) {
    %c0_i32 = arith.constant 0 : i32
    %c0_i32_0 = arith.constant 0 : i32
    %c0_i32_1 = arith.constant 0 : i32
    %c0_i32_2 = arith.constant 0 : i32
    return %arg0, %c0_i32, %c0_i32_0, %c0_i32_1 : i32, i32, i32, i32
  }
}

module attributes {stable_mosaic.version = 11 : i64} {
  func.func @kernel(%arg0: i32, %arg1: memref<1x4x8x8x128xbf16, #tpu.memory_space<vmem>>, %arg2: memref<1152x128xbf16, #tpu.memory_space<vmem>>, %arg3: memref<1152x128xbf16, #tpu.memory_space<vmem>>, %arg4: memref<128x128xbf16, #tpu.memory_space<vmem>>, %arg5: memref<1x128xf32, #tpu.memory_space<vmem>>, %arg6: memref<1x128xf32, #tpu.memory_space<vmem>>, %arg7: memref<1x128xf32, #tpu.memory_space<vmem>>, %arg8: memref<1x128xf32, #tpu.memory_space<vmem>>, %arg9: memref<1x8x8x128xbf16, #tpu.memory_space<vmem>>, %arg10: memref<4x9x9x128xbf16, #tpu.memory_space<vmem>>, %arg11: memref<10x10x128xbf16, #tpu.memory_space<vmem>>, %arg12: memref<64x1152xbf16, #tpu.memory_space<vmem>>, %arg13: memref<64x128xf32, #tpu.memory_space<vmem>>) attributes {dimension_semantics = [#tpu.dimension_semantics<parallel>], iteration_bounds = array<i64: 2>, scalar_prefetch = 0 : i64, scratch_operands = 4 : i64, tpu.core_type = #tpu.core_type<tc>, window_params = [{transform_indices = @transform_0, window_bounds = array<i64: 1, 4, 8, 8, 128>}, {pipeline_mode = #tpu.pipeline_mode<synchronous>, transform_indices = @transform_1, window_bounds = array<i64: 1152, 128>}, {pipeline_mode = #tpu.pipeline_mode<synchronous>, transform_indices = @transform_2, window_bounds = array<i64: 1152, 128>}, {pipeline_mode = #tpu.pipeline_mode<synchronous>, transform_indices = @transform_3, window_bounds = array<i64: 128, 128>}, {pipeline_mode = #tpu.pipeline_mode<synchronous>, transform_indices = @transform_4, window_bounds = array<i64: 1, 128>}, {pipeline_mode = #tpu.pipeline_mode<synchronous>, transform_indices = @transform_5, window_bounds = array<i64: 1, 128>}, {pipeline_mode = #tpu.pipeline_mode<synchronous>, transform_indices = @transform_6, window_bounds = array<i64: 1, 128>}, {pipeline_mode = #tpu.pipeline_mode<synchronous>, transform_indices = @transform_7, window_bounds = array<i64: 1, 128>}, {transform_indices = @transform_8, window_bounds = array<i64: 1, 8, 8, 128>}]} {
    %cst = arith.constant 0.000000e+00 : bf16
    %0 = vector.broadcast %cst : bf16 to vector<1x9x128xbf16>
    %c0 = arith.constant 0 : index
    %c0_0 = arith.constant 0 : index
    %c0_1 = arith.constant 0 : index
    %c0_2 = arith.constant 0 : index
    %1 = vector.load %arg10[%c0, %c0_0, %c0_1, %c0_2] : memref<4x9x9x128xbf16, #tpu.memory_space<vmem>>, vector<1x1x9x128xbf16>
    %2 = vector.shape_cast %1 : vector<1x1x9x128xbf16> to vector<1x9x128xbf16>
    %3 = vector.shape_cast %0 : vector<1x9x128xbf16> to vector<1x1x9x128xbf16>
    tpu.vector_store %arg10[%c0, %c0_0, %c0_1, %c0_2], %3 {strides = array<i32>} : memref<4x9x9x128xbf16, #tpu.memory_space<vmem>>, vector<1x1x9x128xbf16>,
    %cst_3 = arith.constant 0.000000e+00 : bf16
    %4 = vector.broadcast %cst_3 : bf16 to vector<9x1x128xbf16>
    %c0_4 = arith.constant 0 : index
    %c0_5 = arith.constant 0 : index
    %c0_6 = arith.constant 0 : index
    %c0_7 = arith.constant 0 : index
    %5 = vector.load %arg10[%c0_4, %c0_5, %c0_6, %c0_7] : memref<4x9x9x128xbf16, #tpu.memory_space<vmem>>, vector<1x9x1x128xbf16>
    %6 = vector.shape_cast %5 : vector<1x9x1x128xbf16> to vector<9x1x128xbf16>
    %7 = vector.shape_cast %4 : vector<9x1x128xbf16> to vector<1x9x1x128xbf16>
    tpu.vector_store %arg10[%c0_4, %c0_5, %c0_6, %c0_7], %7 {strides = array<i32>} : memref<4x9x9x128xbf16, #tpu.memory_space<vmem>>, vector<1x9x1x128xbf16>,
    %cst_8 = arith.constant 0.000000e+00 : bf16
    %8 = vector.broadcast %cst_8 : bf16 to vector<1x9x128xbf16>
    %c1 = arith.constant 1 : index
    %c0_9 = arith.constant 0 : index
    %c0_10 = arith.constant 0 : index
    %c0_11 = arith.constant 0 : index
    %9 = vector.load %arg10[%c1, %c0_9, %c0_10, %c0_11] : memref<4x9x9x128xbf16, #tpu.memory_space<vmem>>, vector<1x1x9x128xbf16>
    %10 = vector.shape_cast %9 : vector<1x1x9x128xbf16> to vector<1x9x128xbf16>
    %11 = vector.shape_cast %8 : vector<1x9x128xbf16> to vector<1x1x9x128xbf16>
    tpu.vector_store %arg10[%c1, %c0_9, %c0_10, %c0_11], %11 {strides = array<i32>} : memref<4x9x9x128xbf16, #tpu.memory_space<vmem>>, vector<1x1x9x128xbf16>,
    %cst_12 = arith.constant 0.000000e+00 : bf16
    %12 = vector.broadcast %cst_12 : bf16 to vector<9x1x128xbf16>
    %c1_13 = arith.constant 1 : index
    %c0_14 = arith.constant 0 : index
    %c8 = arith.constant 8 : index
    %c0_15 = arith.constant 0 : index
    %13 = vector.load %arg10[%c1_13, %c0_14, %c8, %c0_15] : memref<4x9x9x128xbf16, #tpu.memory_space<vmem>>, vector<1x9x1x128xbf16>
    %14 = vector.shape_cast %13 : vector<1x9x1x128xbf16> to vector<9x1x128xbf16>
    %15 = vector.shape_cast %12 : vector<9x1x128xbf16> to vector<1x9x1x128xbf16>
    tpu.vector_store %arg10[%c1_13, %c0_14, %c8, %c0_15], %15 {strides = array<i32>} : memref<4x9x9x128xbf16, #tpu.memory_space<vmem>>, vector<1x9x1x128xbf16>,
    %cst_16 = arith.constant 0.000000e+00 : bf16
    %16 = vector.broadcast %cst_16 : bf16 to vector<1x9x128xbf16>
    %c2 = arith.constant 2 : index
    %c8_17 = arith.constant 8 : index
    %c0_18 = arith.constant 0 : index
    %c0_19 = arith.constant 0 : index
    %17 = vector.load %arg10[%c2, %c8_17, %c0_18, %c0_19] : memref<4x9x9x128xbf16, #tpu.memory_space<vmem>>, vector<1x1x9x128xbf16>
    %18 = vector.shape_cast %17 : vector<1x1x9x128xbf16> to vector<1x9x128xbf16>
    %19 = vector.shape_cast %16 : vector<1x9x128xbf16> to vector<1x1x9x128xbf16>
    tpu.vector_store %arg10[%c2, %c8_17, %c0_18, %c0_19], %19 {strides = array<i32>} : memref<4x9x9x128xbf16, #tpu.memory_space<vmem>>, vector<1x1x9x128xbf16>,
    %cst_20 = arith.constant 0.000000e+00 : bf16
    %20 = vector.broadcast %cst_20 : bf16 to vector<9x1x128xbf16>
    %c2_21 = arith.constant 2 : index
    %c0_22 = arith.constant 0 : index
    %c0_23 = arith.constant 0 : index
    %c0_24 = arith.constant 0 : index
    %21 = vector.load %arg10[%c2_21, %c0_22, %c0_23, %c0_24] : memref<4x9x9x128xbf16, #tpu.memory_space<vmem>>, vector<1x9x1x128xbf16>
    %22 = vector.shape_cast %21 : vector<1x9x1x128xbf16> to vector<9x1x128xbf16>
    %23 = vector.shape_cast %20 : vector<9x1x128xbf16> to vector<1x9x1x128xbf16>
    tpu.vector_store %arg10[%c2_21, %c0_22, %c0_23, %c0_24], %23 {strides = array<i32>} : memref<4x9x9x128xbf16, #tpu.memory_space<vmem>>, vector<1x9x1x128xbf16>,
    %cst_25 = arith.constant 0.000000e+00 : bf16
    %24 = vector.broadcast %cst_25 : bf16 to vector<1x9x128xbf16>
    %c3 = arith.constant 3 : index
    %c8_26 = arith.constant 8 : index
    %c0_27 = arith.constant 0 : index
    %c0_28 = arith.constant 0 : index
    %25 = vector.load %arg10[%c3, %c8_26, %c0_27, %c0_28] : memref<4x9x9x128xbf16, #tpu.memory_space<vmem>>, vector<1x1x9x128xbf16>
    %26 = vector.shape_cast %25 : vector<1x1x9x128xbf16> to vector<1x9x128xbf16>
    %27 = vector.shape_cast %24 : vector<1x9x128xbf16> to vector<1x1x9x128xbf16>
    tpu.vector_store %arg10[%c3, %c8_26, %c0_27, %c0_28], %27 {strides = array<i32>} : memref<4x9x9x128xbf16, #tpu.memory_space<vmem>>, vector<1x1x9x128xbf16>,
    %cst_29 = arith.constant 0.000000e+00 : bf16
    %28 = vector.broadcast %cst_29 : bf16 to vector<9x1x128xbf16>
    %c3_30 = arith.constant 3 : index
    %c0_31 = arith.constant 0 : index
    %c8_32 = arith.constant 8 : index
    %c0_33 = arith.constant 0 : index
    %29 = vector.load %arg10[%c3_30, %c0_31, %c8_32, %c0_33] : memref<4x9x9x128xbf16, #tpu.memory_space<vmem>>, vector<1x9x1x128xbf16>
    %30 = vector.shape_cast %29 : vector<1x9x1x128xbf16> to vector<9x1x128xbf16>
    %31 = vector.shape_cast %28 : vector<9x1x128xbf16> to vector<1x9x1x128xbf16>
    tpu.vector_store %arg10[%c3_30, %c0_31, %c8_32, %c0_33], %31 {strides = array<i32>} : memref<4x9x9x128xbf16, #tpu.memory_space<vmem>>, vector<1x9x1x128xbf16>,
    %cst_34 = arith.constant 0.000000e+00 : bf16
    %32 = vector.broadcast %cst_34 : bf16 to vector<1x10x128xbf16>
    %cst_35 = arith.constant 0.000000e+00 : bf16
    %33 = vector.broadcast %cst_35 : bf16 to vector<10x1x128xbf16>
    %c0_36 = arith.constant 0 : index
    %c0_37 = arith.constant 0 : index
    %c0_38 = arith.constant 0 : index
    %34 = vector.load %arg11[%c0_36, %c0_37, %c0_38] : memref<10x10x128xbf16, #tpu.memory_space<vmem>>, vector<1x10x128xbf16>
    tpu.vector_store %arg11[%c0_36, %c0_37, %c0_38], %32 {strides = array<i32>} : memref<10x10x128xbf16, #tpu.memory_space<vmem>>, vector<1x10x128xbf16>,
    %c9 = arith.constant 9 : index
    %c0_39 = arith.constant 0 : index
    %c0_40 = arith.constant 0 : index
    %35 = vector.load %arg11[%c9, %c0_39, %c0_40] : memref<10x10x128xbf16, #tpu.memory_space<vmem>>, vector<1x10x128xbf16>
    tpu.vector_store %arg11[%c9, %c0_39, %c0_40], %32 {strides = array<i32>} : memref<10x10x128xbf16, #tpu.memory_space<vmem>>, vector<1x10x128xbf16>,
    %c0_41 = arith.constant 0 : index
    %c0_42 = arith.constant 0 : index
    %c0_43 = arith.constant 0 : index
    %36 = vector.load %arg11[%c0_41, %c0_42, %c0_43] : memref<10x10x128xbf16, #tpu.memory_space<vmem>>, vector<10x1x128xbf16>
    tpu.vector_store %arg11[%c0_41, %c0_42, %c0_43], %33 {strides = array<i32>} : memref<10x10x128xbf16, #tpu.memory_space<vmem>>, vector<10x1x128xbf16>,
    %c0_44 = arith.constant 0 : index
    %c9_45 = arith.constant 9 : index
    %c0_46 = arith.constant 0 : index
    %37 = vector.load %arg11[%c0_44, %c9_45, %c0_46] : memref<10x10x128xbf16, #tpu.memory_space<vmem>>, vector<10x1x128xbf16>
    tpu.vector_store %arg11[%c0_44, %c9_45, %c0_46], %33 {strides = array<i32>} : memref<10x10x128xbf16, #tpu.memory_space<vmem>>, vector<10x1x128xbf16>,
    %c0_47 = arith.constant 0 : index
    %c3_48 = arith.constant 3 : index
    %c0_49 = arith.constant 0 : index
    %c0_50 = arith.constant 0 : index
    %c0_51 = arith.constant 0 : index
    %38 = vector.load %arg1[%c0_47, %c3_48, %c0_49, %c0_50, %c0_51] : memref<1x4x8x8x128xbf16, #tpu.memory_space<vmem>>, vector<1x1x8x8x128xbf16>
    %39 = vector.shape_cast %38 : vector<1x1x8x8x128xbf16> to vector<8x8x128xbf16>
    %40 = arith.extf %39 : vector<8x8x128xbf16> to vector<8x8x128xf32>
    %c0_52 = arith.constant 0 : index
    %c0_53 = arith.constant 0 : index
    %41 = vector.load %arg5[%c0_52, %c0_53] : memref<1x128xf32, #tpu.memory_space<vmem>>, vector<1x128xf32>
    %42 = vector.shape_cast %41 : vector<1x128xf32> to vector<1x1x128xf32>
    %43 = vector.broadcast %42 : vector<1x1x128xf32> to vector<8x8x128xf32>
    %44 = arith.mulf %40, %43 : vector<8x8x128xf32>
    %c0_54 = arith.constant 0 : index
    %c0_55 = arith.constant 0 : index
    %45 = vector.load %arg6[%c0_54, %c0_55] : memref<1x128xf32, #tpu.memory_space<vmem>>, vector<1x128xf32>
    %46 = vector.shape_cast %45 : vector<1x128xf32> to vector<1x1x128xf32>
    %47 = vector.broadcast %46 : vector<1x1x128xf32> to vector<8x8x128xf32>
    %48 = arith.addf %44, %47 : vector<8x8x128xf32>
    %cst_56 = arith.constant 0.000000e+00 : f32
    %49 = vector.broadcast %cst_56 : f32 to vector<8x8x128xf32>
    %50 = arith.maximumf %48, %49 : vector<8x8x128xf32>
    %51 = arith.truncf %50 : vector<8x8x128xf32> to vector<8x8x128xbf16>
    %c0_57 = arith.constant 0 : index
    %c1_58 = arith.constant 1 : index
    %c1_59 = arith.constant 1 : index
    %c0_60 = arith.constant 0 : index
    %52 = vector.load %arg10[%c0_57, %c1_58, %c1_59, %c0_60] : memref<4x9x9x128xbf16, #tpu.memory_space<vmem>>, vector<1x8x8x128xbf16>
    %53 = vector.shape_cast %52 : vector<1x8x8x128xbf16> to vector<8x8x128xbf16>
    %54 = vector.shape_cast %51 : vector<8x8x128xbf16> to vector<1x8x8x128xbf16>
    tpu.vector_store %arg10[%c0_57, %c1_58, %c1_59, %c0_60], %54 {strides = array<i32>} : memref<4x9x9x128xbf16, #tpu.memory_space<vmem>>, vector<1x8x8x128xbf16>,
    %c0_61 = arith.constant 0 : index
    %c2_62 = arith.constant 2 : index
    %c0_63 = arith.constant 0 : index
    %c0_64 = arith.constant 0 : index
    %c0_65 = arith.constant 0 : index
    %55 = vector.load %arg1[%c0_61, %c2_62, %c0_63, %c0_64, %c0_65] : memref<1x4x8x8x128xbf16, #tpu.memory_space<vmem>>, vector<1x1x8x8x128xbf16>
    %56 = vector.shape_cast %55 : vector<1x1x8x8x128xbf16> to vector<8x8x128xbf16>
    %57 = arith.extf %56 : vector<8x8x128xbf16> to vector<8x8x128xf32>
    %c0_66 = arith.constant 0 : index
    %c0_67 = arith.constant 0 : index
    %58 = vector.load %arg5[%c0_66, %c0_67] : memref<1x128xf32, #tpu.memory_space<vmem>>, vector<1x128xf32>
    %59 = vector.shape_cast %58 : vector<1x128xf32> to vector<1x1x128xf32>
    %60 = vector.broadcast %59 : vector<1x1x128xf32> to vector<8x8x128xf32>
    %61 = arith.mulf %57, %60 : vector<8x8x128xf32>
    %c0_68 = arith.constant 0 : index
    %c0_69 = arith.constant 0 : index
    %62 = vector.load %arg6[%c0_68, %c0_69] : memref<1x128xf32, #tpu.memory_space<vmem>>, vector<1x128xf32>
    %63 = vector.shape_cast %62 : vector<1x128xf32> to vector<1x1x128xf32>
    %64 = vector.broadcast %63 : vector<1x1x128xf32> to vector<8x8x128xf32>
    %65 = arith.addf %61, %64 : vector<8x8x128xf32>
    %cst_70 = arith.constant 0.000000e+00 : f32
    %66 = vector.broadcast %cst_70 : f32 to vector<8x8x128xf32>
    %67 = arith.maximumf %65, %66 : vector<8x8x128xf32>
    %68 = arith.truncf %67 : vector<8x8x128xf32> to vector<8x8x128xbf16>
    %c1_71 = arith.constant 1 : index
    %c1_72 = arith.constant 1 : index
    %c0_73 = arith.constant 0 : index
    %c0_74 = arith.constant 0 : index
    %69 = vector.load %arg10[%c1_71, %c1_72, %c0_73, %c0_74] : memref<4x9x9x128xbf16, #tpu.memory_space<vmem>>, vector<1x8x8x128xbf16>
    %70 = vector.shape_cast %69 : vector<1x8x8x128xbf16> to vector<8x8x128xbf16>
    %71 = vector.shape_cast %68 : vector<8x8x128xbf16> to vector<1x8x8x128xbf16>
    tpu.vector_store %arg10[%c1_71, %c1_72, %c0_73, %c0_74], %71 {strides = array<i32>} : memref<4x9x9x128xbf16, #tpu.memory_space<vmem>>, vector<1x8x8x128xbf16>,
    %c0_75 = arith.constant 0 : index
    %c1_76 = arith.constant 1 : index
    %c0_77 = arith.constant 0 : index
    %c0_78 = arith.constant 0 : index
    %c0_79 = arith.constant 0 : index
    %72 = vector.load %arg1[%c0_75, %c1_76, %c0_77, %c0_78, %c0_79] : memref<1x4x8x8x128xbf16, #tpu.memory_space<vmem>>, vector<1x1x8x8x128xbf16>
    %73 = vector.shape_cast %72 : vector<1x1x8x8x128xbf16> to vector<8x8x128xbf16>
    %74 = arith.extf %73 : vector<8x8x128xbf16> to vector<8x8x128xf32>
    %c0_80 = arith.constant 0 : index
    %c0_81 = arith.constant 0 : index
    %75 = vector.load %arg5[%c0_80, %c0_81] : memref<1x128xf32, #tpu.memory_space<vmem>>, vector<1x128xf32>
    %76 = vector.shape_cast %75 : vector<1x128xf32> to vector<1x1x128xf32>
    %77 = vector.broadcast %76 : vector<1x1x128xf32> to vector<8x8x128xf32>
    %78 = arith.mulf %74, %77 : vector<8x8x128xf32>
    %c0_82 = arith.constant 0 : index
    %c0_83 = arith.constant 0 : index
    %79 = vector.load %arg6[%c0_82, %c0_83] : memref<1x128xf32, #tpu.memory_space<vmem>>, vector<1x128xf32>
    %80 = vector.shape_cast %79 : vector<1x128xf32> to vector<1x1x128xf32>
    %81 = vector.broadcast %80 : vector<1x1x128xf32> to vector<8x8x128xf32>
    %82 = arith.addf %78, %81 : vector<8x8x128xf32>
    %cst_84 = arith.constant 0.000000e+00 : f32
    %83 = vector.broadcast %cst_84 : f32 to vector<8x8x128xf32>
    %84 = arith.maximumf %82, %83 : vector<8x8x128xf32>
    %85 = arith.truncf %84 : vector<8x8x128xf32> to vector<8x8x128xbf16>
    %c2_85 = arith.constant 2 : index
    %c0_86 = arith.constant 0 : index
    %c1_87 = arith.constant 1 : index
    %c0_88 = arith.constant 0 : index
    %86 = vector.load %arg10[%c2_85, %c0_86, %c1_87, %c0_88] : memref<4x9x9x128xbf16, #tpu.memory_space<vmem>>, vector<1x8x8x128xbf16>
    %87 = vector.shape_cast %86 : vector<1x8x8x128xbf16> to vector<8x8x128xbf16>
    %88 = vector.shape_cast %85 : vector<8x8x128xbf16> to vector<1x8x8x128xbf16>
    tpu.vector_store %arg10[%c2_85, %c0_86, %c1_87, %c0_88], %88 {strides = array<i32>} : memref<4x9x9x128xbf16, #tpu.memory_space<vmem>>, vector<1x8x8x128xbf16>,
    %c0_89 = arith.constant 0 : index
    %c0_90 = arith.constant 0 : index
    %c0_91 = arith.constant 0 : index
    %c0_92 = arith.constant 0 : index
    %c0_93 = arith.constant 0 : index
    %89 = vector.load %arg1[%c0_89, %c0_90, %c0_91, %c0_92, %c0_93] : memref<1x4x8x8x128xbf16, #tpu.memory_space<vmem>>, vector<1x1x8x8x128xbf16>
    %90 = vector.shape_cast %89 : vector<1x1x8x8x128xbf16> to vector<8x8x128xbf16>
    %91 = arith.extf %90 : vector<8x8x128xbf16> to vector<8x8x128xf32>
    %c0_94 = arith.constant 0 : index
    %c0_95 = arith.constant 0 : index
    %92 = vector.load %arg5[%c0_94, %c0_95] : memref<1x128xf32, #tpu.memory_space<vmem>>, vector<1x128xf32>
    %93 = vector.shape_cast %92 : vector<1x128xf32> to vector<1x1x128xf32>
    %94 = vector.broadcast %93 : vector<1x1x128xf32> to vector<8x8x128xf32>
    %95 = arith.mulf %91, %94 : vector<8x8x128xf32>
    %c0_96 = arith.constant 0 : index
    %c0_97 = arith.constant 0 : index
    %96 = vector.load %arg6[%c0_96, %c0_97] : memref<1x128xf32, #tpu.memory_space<vmem>>, vector<1x128xf32>
    %97 = vector.shape_cast %96 : vector<1x128xf32> to vector<1x1x128xf32>
    %98 = vector.broadcast %97 : vector<1x1x128xf32> to vector<8x8x128xf32>
    %99 = arith.addf %95, %98 : vector<8x8x128xf32>
    %cst_98 = arith.constant 0.000000e+00 : f32
    %100 = vector.broadcast %cst_98 : f32 to vector<8x8x128xf32>
    %101 = arith.maximumf %99, %100 : vector<8x8x128xf32>
    %102 = arith.truncf %101 : vector<8x8x128xf32> to vector<8x8x128xbf16>
    %c3_99 = arith.constant 3 : index
    %c0_100 = arith.constant 0 : index
    %c0_101 = arith.constant 0 : index
    %c0_102 = arith.constant 0 : index
    %103 = vector.load %arg10[%c3_99, %c0_100, %c0_101, %c0_102] : memref<4x9x9x128xbf16, #tpu.memory_space<vmem>>, vector<1x8x8x128xbf16>
    %104 = vector.shape_cast %103 : vector<1x8x8x128xbf16> to vector<8x8x128xbf16>
    %105 = vector.shape_cast %102 : vector<8x8x128xbf16> to vector<1x8x8x128xbf16>
    tpu.vector_store %arg10[%c3_99, %c0_100, %c0_101, %c0_102], %105 {strides = array<i32>} : memref<4x9x9x128xbf16, #tpu.memory_space<vmem>>, vector<1x8x8x128xbf16>,
    %c0_103 = arith.constant 0 : index
    %c0_104 = arith.constant 0 : index
    %c0_105 = arith.constant 0 : index
    %c0_106 = arith.constant 0 : index
    %106 = vector.load %arg10[%c0_103, %c0_104, %c0_105, %c0_106] : memref<4x9x9x128xbf16, #tpu.memory_space<vmem>>, vector<1x8x8x128xbf16>
    %107 = vector.shape_cast %106 : vector<1x8x8x128xbf16> to vector<8x8x128xbf16>
    %108 = vector.shape_cast %107 : vector<8x8x128xbf16> to vector<64x128xbf16>
    %c0_107 = arith.constant 0 : index
    %c0_108 = arith.constant 0 : index
    %109 = vector.load %arg12[%c0_107, %c0_108] : memref<64x1152xbf16, #tpu.memory_space<vmem>>, vector<64x128xbf16>
    tpu.vector_store %arg12[%c0_107, %c0_108], %108 {strides = array<i32>} : memref<64x1152xbf16, #tpu.memory_space<vmem>>, vector<64x128xbf16>,
    %c1_109 = arith.constant 1 : index
    %c0_110 = arith.constant 0 : index
    %c0_111 = arith.constant 0 : index
    %c0_112 = arith.constant 0 : index
    %110 = vector.load %arg10[%c1_109, %c0_110, %c0_111, %c0_112] : memref<4x9x9x128xbf16, #tpu.memory_space<vmem>>, vector<1x8x8x128xbf16>
    %111 = vector.shape_cast %110 : vector<1x8x8x128xbf16> to vector<8x8x128xbf16>
    %112 = vector.shape_cast %111 : vector<8x8x128xbf16> to vector<64x128xbf16>
    %c0_113 = arith.constant 0 : index
    %c128 = arith.constant 128 : index
    %113 = vector.load %arg12[%c0_113, %c128] : memref<64x1152xbf16, #tpu.memory_space<vmem>>, vector<64x128xbf16>
    tpu.vector_store %arg12[%c0_113, %c128], %112 {strides = array<i32>} : memref<64x1152xbf16, #tpu.memory_space<vmem>>, vector<64x128xbf16>,
    %c0_114 = arith.constant 0 : index
    %c0_115 = arith.constant 0 : index
    %c1_116 = arith.constant 1 : index
    %c0_117 = arith.constant 0 : index
    %114 = vector.load %arg10[%c0_114, %c0_115, %c1_116, %c0_117] : memref<4x9x9x128xbf16, #tpu.memory_space<vmem>>, vector<1x8x8x128xbf16>
    %115 = vector.shape_cast %114 : vector<1x8x8x128xbf16> to vector<8x8x128xbf16>
    %116 = vector.shape_cast %115 : vector<8x8x128xbf16> to vector<64x128xbf16>
    %c0_118 = arith.constant 0 : index
    %c256 = arith.constant 256 : index
    %117 = vector.load %arg12[%c0_118, %c256] : memref<64x1152xbf16, #tpu.memory_space<vmem>>, vector<64x128xbf16>
    tpu.vector_store %arg12[%c0_118, %c256], %116 {strides = array<i32>} : memref<64x1152xbf16, #tpu.memory_space<vmem>>, vector<64x128xbf16>,
    %c2_119 = arith.constant 2 : index
    %c0_120 = arith.constant 0 : index
    %c0_121 = arith.constant 0 : index
    %c0_122 = arith.constant 0 : index
    %118 = vector.load %arg10[%c2_119, %c0_120, %c0_121, %c0_122] : memref<4x9x9x128xbf16, #tpu.memory_space<vmem>>, vector<1x8x8x128xbf16>
    %119 = vector.shape_cast %118 : vector<1x8x8x128xbf16> to vector<8x8x128xbf16>
    %120 = vector.shape_cast %119 : vector<8x8x128xbf16> to vector<64x128xbf16>
    %c0_123 = arith.constant 0 : index
    %c384 = arith.constant 384 : index
    %121 = vector.load %arg12[%c0_123, %c384] : memref<64x1152xbf16, #tpu.memory_space<vmem>>, vector<64x128xbf16>
    tpu.vector_store %arg12[%c0_123, %c384], %120 {strides = array<i32>} : memref<64x1152xbf16, #tpu.memory_space<vmem>>, vector<64x128xbf16>,
    %c3_124 = arith.constant 3 : index
    %c0_125 = arith.constant 0 : index
    %c0_126 = arith.constant 0 : index
    %c0_127 = arith.constant 0 : index
    %122 = vector.load %arg10[%c3_124, %c0_125, %c0_126, %c0_127] : memref<4x9x9x128xbf16, #tpu.memory_space<vmem>>, vector<1x8x8x128xbf16>
    %123 = vector.shape_cast %122 : vector<1x8x8x128xbf16> to vector<8x8x128xbf16>
    %124 = vector.shape_cast %123 : vector<8x8x128xbf16> to vector<64x128xbf16>
    %c0_128 = arith.constant 0 : index
    %c512 = arith.constant 512 : index
    %125 = vector.load %arg12[%c0_128, %c512] : memref<64x1152xbf16, #tpu.memory_space<vmem>>, vector<64x128xbf16>
    tpu.vector_store %arg12[%c0_128, %c512], %124 {strides = array<i32>} : memref<64x1152xbf16, #tpu.memory_space<vmem>>, vector<64x128xbf16>,
    %c2_129 = arith.constant 2 : index
    %c0_130 = arith.constant 0 : index
    %c1_131 = arith.constant 1 : index
    %c0_132 = arith.constant 0 : index
    %126 = vector.load %arg10[%c2_129, %c0_130, %c1_131, %c0_132] : memref<4x9x9x128xbf16, #tpu.memory_space<vmem>>, vector<1x8x8x128xbf16>
    %127 = vector.shape_cast %126 : vector<1x8x8x128xbf16> to vector<8x8x128xbf16>
    %128 = vector.shape_cast %127 : vector<8x8x128xbf16> to vector<64x128xbf16>
    %c0_133 = arith.constant 0 : index
    %c640 = arith.constant 640 : index
    %129 = vector.load %arg12[%c0_133, %c640] : memref<64x1152xbf16, #tpu.memory_space<vmem>>, vector<64x128xbf16>
    tpu.vector_store %arg12[%c0_133, %c640], %128 {strides = array<i32>} : memref<64x1152xbf16, #tpu.memory_space<vmem>>, vector<64x128xbf16>,
    %c0_134 = arith.constant 0 : index
    %c1_135 = arith.constant 1 : index
    %c0_136 = arith.constant 0 : index
    %c0_137 = arith.constant 0 : index
    %130 = vector.load %arg10[%c0_134, %c1_135, %c0_136, %c0_137] : memref<4x9x9x128xbf16, #tpu.memory_space<vmem>>, vector<1x8x8x128xbf16>
    %131 = vector.shape_cast %130 : vector<1x8x8x128xbf16> to vector<8x8x128xbf16>
    %132 = vector.shape_cast %131 : vector<8x8x128xbf16> to vector<64x128xbf16>
    %c0_138 = arith.constant 0 : index
    %c768 = arith.constant 768 : index
    %133 = vector.load %arg12[%c0_138, %c768] : memref<64x1152xbf16, #tpu.memory_space<vmem>>, vector<64x128xbf16>
    tpu.vector_store %arg12[%c0_138, %c768], %132 {strides = array<i32>} : memref<64x1152xbf16, #tpu.memory_space<vmem>>, vector<64x128xbf16>,
    %c1_139 = arith.constant 1 : index
    %c1_140 = arith.constant 1 : index
    %c0_141 = arith.constant 0 : index
    %c0_142 = arith.constant 0 : index
    %134 = vector.load %arg10[%c1_139, %c1_140, %c0_141, %c0_142] : memref<4x9x9x128xbf16, #tpu.memory_space<vmem>>, vector<1x8x8x128xbf16>
    %135 = vector.shape_cast %134 : vector<1x8x8x128xbf16> to vector<8x8x128xbf16>
    %136 = vector.shape_cast %135 : vector<8x8x128xbf16> to vector<64x128xbf16>
    %c0_143 = arith.constant 0 : index
    %c896 = arith.constant 896 : index
    %137 = vector.load %arg12[%c0_143, %c896] : memref<64x1152xbf16, #tpu.memory_space<vmem>>, vector<64x128xbf16>
    tpu.vector_store %arg12[%c0_143, %c896], %136 {strides = array<i32>} : memref<64x1152xbf16, #tpu.memory_space<vmem>>, vector<64x128xbf16>,
    %c0_144 = arith.constant 0 : index
    %c1_145 = arith.constant 1 : index
    %c1_146 = arith.constant 1 : index
    %c0_147 = arith.constant 0 : index
    %138 = vector.load %arg10[%c0_144, %c1_145, %c1_146, %c0_147] : memref<4x9x9x128xbf16, #tpu.memory_space<vmem>>, vector<1x8x8x128xbf16>
    %139 = vector.shape_cast %138 : vector<1x8x8x128xbf16> to vector<8x8x128xbf16>
    %140 = vector.shape_cast %139 : vector<8x8x128xbf16> to vector<64x128xbf16>
    %c0_148 = arith.constant 0 : index
    %c1024 = arith.constant 1024 : index
    %141 = vector.load %arg12[%c0_148, %c1024] : memref<64x1152xbf16, #tpu.memory_space<vmem>>, vector<64x128xbf16>
    tpu.vector_store %arg12[%c0_148, %c1024], %140 {strides = array<i32>} : memref<64x1152xbf16, #tpu.memory_space<vmem>>, vector<64x128xbf16>,
    %c0_149 = arith.constant 0 : index
    %c512_150 = arith.constant 512 : index
    %142 = vector.load %arg12[%c0_149, %c512_150] : memref<64x1152xbf16, #tpu.memory_space<vmem>>, vector<64x128xbf16>
    %c0_151 = arith.constant 0 : index
    %c0_152 = arith.constant 0 : index
    %143 = vector.load %arg4[%c0_151, %c0_152] : memref<128x128xbf16, #tpu.memory_space<vmem>>, vector<128x128xbf16>
    %cst_153 = arith.constant dense<0.000000e+00> : vector<64x128xf32>
    %144 = tpu.matmul %142, %143, %cst_153 {dimension_numbers = #tpu.dot_dimension_numbers<[1], [0], [0], [1], [0, 0, 1, 1], [], []>} : vector<64x128xbf16>, vector<128x128xbf16>, vector<64x128xf32> -> vector<64x128xf32>
    %c0_154 = arith.constant 0 : index
    %c0_155 = arith.constant 0 : index
    %145 = vector.load %arg13[%c0_154, %c0_155] : memref<64x128xf32, #tpu.memory_space<vmem>>, vector<64x128xf32>
    tpu.vector_store %arg13[%c0_154, %c0_155], %144 {strides = array<i32>} : memref<64x128xf32, #tpu.memory_space<vmem>>, vector<64x128xf32>,
    %c0_156 = arith.constant 0 : index
    %c0_157 = arith.constant 0 : index
    %146 = vector.load %arg12[%c0_156, %c0_157] : memref<64x1152xbf16, #tpu.memory_space<vmem>>, vector<64x1152xbf16>
    %c0_158 = arith.constant 0 : index
    %c0_159 = arith.constant 0 : index
    %147 = vector.load %arg2[%c0_158, %c0_159] : memref<1152x128xbf16, #tpu.memory_space<vmem>>, vector<1152x128xbf16>
    %cst_160 = arith.constant dense<0.000000e+00> : vector<64x128xf32>
    %148 = tpu.matmul %146, %147, %cst_160 {dimension_numbers = #tpu.dot_dimension_numbers<[1], [0], [0], [1], [0, 0, 1, 1], [], []>} : vector<64x1152xbf16>, vector<1152x128xbf16>, vector<64x128xf32> -> vector<64x128xf32>
    %c0_161 = arith.constant 0 : index
    %c0_162 = arith.constant 0 : index
    %149 = vector.load %arg7[%c0_161, %c0_162] : memref<1x128xf32, #tpu.memory_space<vmem>>, vector<1x128xf32>
    %150 = vector.broadcast %149 : vector<1x128xf32> to vector<64x128xf32>
    %151 = arith.mulf %148, %150 : vector<64x128xf32>
    %c0_163 = arith.constant 0 : index
    %c0_164 = arith.constant 0 : index
    %152 = vector.load %arg8[%c0_163, %c0_164] : memref<1x128xf32, #tpu.memory_space<vmem>>, vector<1x128xf32>
    %153 = vector.broadcast %152 : vector<1x128xf32> to vector<64x128xf32>
    %154 = arith.addf %151, %153 : vector<64x128xf32>
    %cst_165 = arith.constant 0.000000e+00 : f32
    %155 = vector.broadcast %cst_165 : f32 to vector<64x128xf32>
    %156 = arith.maximumf %154, %155 : vector<64x128xf32>
    %157 = vector.shape_cast %156 : vector<64x128xf32> to vector<8x8x128xf32>
    %158 = arith.truncf %157 : vector<8x8x128xf32> to vector<8x8x128xbf16>
    %c1_166 = arith.constant 1 : index
    %c1_167 = arith.constant 1 : index
    %c0_168 = arith.constant 0 : index
    %159 = vector.load %arg11[%c1_166, %c1_167, %c0_168] : memref<10x10x128xbf16, #tpu.memory_space<vmem>>, vector<8x8x128xbf16>
    tpu.vector_store %arg11[%c1_166, %c1_167, %c0_168], %158 {strides = array<i32>} : memref<10x10x128xbf16, #tpu.memory_space<vmem>>, vector<8x8x128xbf16>,
    %c0_169 = arith.constant 0 : index
    %c0_170 = arith.constant 0 : index
    %c0_171 = arith.constant 0 : index
    %160 = vector.load %arg11[%c0_169, %c0_170, %c0_171] : memref<10x10x128xbf16, #tpu.memory_space<vmem>>, vector<8x8x128xbf16>
    %161 = vector.shape_cast %160 : vector<8x8x128xbf16> to vector<64x128xbf16>
    %c0_172 = arith.constant 0 : index
    %c0_173 = arith.constant 0 : index
    %162 = vector.load %arg12[%c0_172, %c0_173] : memref<64x1152xbf16, #tpu.memory_space<vmem>>, vector<64x128xbf16>
    tpu.vector_store %arg12[%c0_172, %c0_173], %161 {strides = array<i32>} : memref<64x1152xbf16, #tpu.memory_space<vmem>>, vector<64x128xbf16>,
    %c0_174 = arith.constant 0 : index
    %c1_175 = arith.constant 1 : index
    %c0_176 = arith.constant 0 : index
    %163 = vector.load %arg11[%c0_174, %c1_175, %c0_176] : memref<10x10x128xbf16, #tpu.memory_space<vmem>>, vector<8x8x128xbf16>
    %164 = vector.shape_cast %163 : vector<8x8x128xbf16> to vector<64x128xbf16>
    %c0_177 = arith.constant 0 : index
    %c128_178 = arith.constant 128 : index
    %165 = vector.load %arg12[%c0_177, %c128_178] : memref<64x1152xbf16, #tpu.memory_space<vmem>>, vector<64x128xbf16>
    tpu.vector_store %arg12[%c0_177, %c128_178], %164 {strides = array<i32>} : memref<64x1152xbf16, #tpu.memory_space<vmem>>, vector<64x128xbf16>,
    %c0_179 = arith.constant 0 : index
    %c2_180 = arith.constant 2 : index
    %c0_181 = arith.constant 0 : index
    %166 = vector.load %arg11[%c0_179, %c2_180, %c0_181] : memref<10x10x128xbf16, #tpu.memory_space<vmem>>, vector<8x8x128xbf16>
    %167 = vector.shape_cast %166 : vector<8x8x128xbf16> to vector<64x128xbf16>
    %c0_182 = arith.constant 0 : index
    %c256_183 = arith.constant 256 : index
    %168 = vector.load %arg12[%c0_182, %c256_183] : memref<64x1152xbf16, #tpu.memory_space<vmem>>, vector<64x128xbf16>
    tpu.vector_store %arg12[%c0_182, %c256_183], %167 {strides = array<i32>} : memref<64x1152xbf16, #tpu.memory_space<vmem>>, vector<64x128xbf16>,
    %c1_184 = arith.constant 1 : index
    %c0_185 = arith.constant 0 : index
    %c0_186 = arith.constant 0 : index
    %169 = vector.load %arg11[%c1_184, %c0_185, %c0_186] : memref<10x10x128xbf16, #tpu.memory_space<vmem>>, vector<8x8x128xbf16>
    %170 = vector.shape_cast %169 : vector<8x8x128xbf16> to vector<64x128xbf16>
    %c0_187 = arith.constant 0 : index
    %c384_188 = arith.constant 384 : index
    %171 = vector.load %arg12[%c0_187, %c384_188] : memref<64x1152xbf16, #tpu.memory_space<vmem>>, vector<64x128xbf16>
    tpu.vector_store %arg12[%c0_187, %c384_188], %170 {strides = array<i32>} : memref<64x1152xbf16, #tpu.memory_space<vmem>>, vector<64x128xbf16>,
    %c1_189 = arith.constant 1 : index
    %c1_190 = arith.constant 1 : index
    %c0_191 = arith.constant 0 : index
    %172 = vector.load %arg11[%c1_189, %c1_190, %c0_191] : memref<10x10x128xbf16, #tpu.memory_space<vmem>>, vector<8x8x128xbf16>
    %173 = vector.shape_cast %172 : vector<8x8x128xbf16> to vector<64x128xbf16>
    %c0_192 = arith.constant 0 : index
    %c512_193 = arith.constant 512 : index
    %174 = vector.load %arg12[%c0_192, %c512_193] : memref<64x1152xbf16, #tpu.memory_space<vmem>>, vector<64x128xbf16>
    tpu.vector_store %arg12[%c0_192, %c512_193], %173 {strides = array<i32>} : memref<64x1152xbf16, #tpu.memory_space<vmem>>, vector<64x128xbf16>,
    %c1_194 = arith.constant 1 : index
    %c2_195 = arith.constant 2 : index
    %c0_196 = arith.constant 0 : index
    %175 = vector.load %arg11[%c1_194, %c2_195, %c0_196] : memref<10x10x128xbf16, #tpu.memory_space<vmem>>, vector<8x8x128xbf16>
    %176 = vector.shape_cast %175 : vector<8x8x128xbf16> to vector<64x128xbf16>
    %c0_197 = arith.constant 0 : index
    %c640_198 = arith.constant 640 : index
    %177 = vector.load %arg12[%c0_197, %c640_198] : memref<64x1152xbf16, #tpu.memory_space<vmem>>, vector<64x128xbf16>
    tpu.vector_store %arg12[%c0_197, %c640_198], %176 {strides = array<i32>} : memref<64x1152xbf16, #tpu.memory_space<vmem>>, vector<64x128xbf16>,
    %c2_199 = arith.constant 2 : index
    %c0_200 = arith.constant 0 : index
    %c0_201 = arith.constant 0 : index
    %178 = vector.load %arg11[%c2_199, %c0_200, %c0_201] : memref<10x10x128xbf16, #tpu.memory_space<vmem>>, vector<8x8x128xbf16>
    %179 = vector.shape_cast %178 : vector<8x8x128xbf16> to vector<64x128xbf16>
    %c0_202 = arith.constant 0 : index
    %c768_203 = arith.constant 768 : index
    %180 = vector.load %arg12[%c0_202, %c768_203] : memref<64x1152xbf16, #tpu.memory_space<vmem>>, vector<64x128xbf16>
    tpu.vector_store %arg12[%c0_202, %c768_203], %179 {strides = array<i32>} : memref<64x1152xbf16, #tpu.memory_space<vmem>>, vector<64x128xbf16>,
    %c2_204 = arith.constant 2 : index
    %c1_205 = arith.constant 1 : index
    %c0_206 = arith.constant 0 : index
    %181 = vector.load %arg11[%c2_204, %c1_205, %c0_206] : memref<10x10x128xbf16, #tpu.memory_space<vmem>>, vector<8x8x128xbf16>
    %182 = vector.shape_cast %181 : vector<8x8x128xbf16> to vector<64x128xbf16>
    %c0_207 = arith.constant 0 : index
    %c896_208 = arith.constant 896 : index
    %183 = vector.load %arg12[%c0_207, %c896_208] : memref<64x1152xbf16, #tpu.memory_space<vmem>>, vector<64x128xbf16>
    tpu.vector_store %arg12[%c0_207, %c896_208], %182 {strides = array<i32>} : memref<64x1152xbf16, #tpu.memory_space<vmem>>, vector<64x128xbf16>,
    %c2_209 = arith.constant 2 : index
    %c2_210 = arith.constant 2 : index
    %c0_211 = arith.constant 0 : index
    %184 = vector.load %arg11[%c2_209, %c2_210, %c0_211] : memref<10x10x128xbf16, #tpu.memory_space<vmem>>, vector<8x8x128xbf16>
    %185 = vector.shape_cast %184 : vector<8x8x128xbf16> to vector<64x128xbf16>
    %c0_212 = arith.constant 0 : index
    %c1024_213 = arith.constant 1024 : index
    %186 = vector.load %arg12[%c0_212, %c1024_213] : memref<64x1152xbf16, #tpu.memory_space<vmem>>, vector<64x128xbf16>
    tpu.vector_store %arg12[%c0_212, %c1024_213], %185 {strides = array<i32>} : memref<64x1152xbf16, #tpu.memory_space<vmem>>, vector<64x128xbf16>,
    %c0_214 = arith.constant 0 : index
    %c0_215 = arith.constant 0 : index
    %187 = vector.load %arg12[%c0_214, %c0_215] : memref<64x1152xbf16, #tpu.memory_space<vmem>>, vector<64x1152xbf16>
    %c0_216 = arith.constant 0 : index
    %c0_217 = arith.constant 0 : index
    %188 = vector.load %arg3[%c0_216, %c0_217] : memref<1152x128xbf16, #tpu.memory_space<vmem>>, vector<1152x128xbf16>
    %cst_218 = arith.constant dense<0.000000e+00> : vector<64x128xf32>
    %189 = tpu.matmul %187, %188, %cst_218 {dimension_numbers = #tpu.dot_dimension_numbers<[1], [0], [0], [1], [0, 0, 1, 1], [], []>} : vector<64x1152xbf16>, vector<1152x128xbf16>, vector<64x128xf32> -> vector<64x128xf32>
    %c0_219 = arith.constant 0 : index
    %c0_220 = arith.constant 0 : index
    %190 = vector.load %arg13[%c0_219, %c0_220] : memref<64x128xf32, #tpu.memory_space<vmem>>, vector<64x128xf32>
    %191 = arith.addf %189, %190 : vector<64x128xf32>
    %192 = arith.truncf %191 : vector<64x128xf32> to vector<64x128xbf16>
    %193 = vector.shape_cast %192 : vector<64x128xbf16> to vector<1x8x8x128xbf16>
    %c0_221 = arith.constant 0 : index
    %c0_222 = arith.constant 0 : index
    %c0_223 = arith.constant 0 : index
    %c0_224 = arith.constant 0 : index
    %194 = vector.load %arg9[%c0_221, %c0_222, %c0_223, %c0_224] : memref<1x8x8x128xbf16, #tpu.memory_space<vmem>>, vector<1x8x8x128xbf16>
    tpu.vector_store %arg9[%c0_221, %c0_222, %c0_223, %c0_224], %193 {strides = array<i32>} : memref<1x8x8x128xbf16, #tpu.memory_space<vmem>>, vector<1x8x8x128xbf16>,
    return
  }
  func.func @transform_0(%arg0: i32) -> (i32, i32, i32, i32, i32) {
    %c0_i32 = arith.constant 0 : i32
    %c0_i32_0 = arith.constant 0 : i32
    %c0_i32_1 = arith.constant 0 : i32
    %c0_i32_2 = arith.constant 0 : i32
    %c0_i32_3 = arith.constant 0 : i32
    return %arg0, %c0_i32, %c0_i32_0, %c0_i32_1, %c0_i32_2 : i32, i32, i32, i32, i32
  }
  func.func @transform_1(%arg0: i32) -> (i32, i32) {
    %c0_i32 = arith.constant 0 : i32
    %c0_i32_0 = arith.constant 0 : i32
    %c0_i32_1 = arith.constant 0 : i32
    return %c0_i32, %c0_i32_0 : i32, i32
  }
  func.func @transform_2(%arg0: i32) -> (i32, i32) {
    %c0_i32 = arith.constant 0 : i32
    %c0_i32_0 = arith.constant 0 : i32
    %c0_i32_1 = arith.constant 0 : i32
    return %c0_i32, %c0_i32_0 : i32, i32
  }
  func.func @transform_3(%arg0: i32) -> (i32, i32) {
    %c0_i32 = arith.constant 0 : i32
    %c0_i32_0 = arith.constant 0 : i32
    %c0_i32_1 = arith.constant 0 : i32
    return %c0_i32, %c0_i32_0 : i32, i32
  }
  func.func @transform_4(%arg0: i32) -> (i32, i32) {
    %c0_i32 = arith.constant 0 : i32
    %c0_i32_0 = arith.constant 0 : i32
    %c0_i32_1 = arith.constant 0 : i32
    return %c0_i32, %c0_i32_0 : i32, i32
  }
  func.func @transform_5(%arg0: i32) -> (i32, i32) {
    %c0_i32 = arith.constant 0 : i32
    %c0_i32_0 = arith.constant 0 : i32
    %c0_i32_1 = arith.constant 0 : i32
    return %c0_i32, %c0_i32_0 : i32, i32
  }
  func.func @transform_6(%arg0: i32) -> (i32, i32) {
    %c0_i32 = arith.constant 0 : i32
    %c0_i32_0 = arith.constant 0 : i32
    %c0_i32_1 = arith.constant 0 : i32
    return %c0_i32, %c0_i32_0 : i32, i32
  }
  func.func @transform_7(%arg0: i32) -> (i32, i32) {
    %c0_i32 = arith.constant 0 : i32
    %c0_i32_0 = arith.constant 0 : i32
    %c0_i32_1 = arith.constant 0 : i32
    return %c0_i32, %c0_i32_0 : i32, i32
  }
  func.func @transform_8(%arg0: i32) -> (i32, i32, i32, i32) {
    %c0_i32 = arith.constant 0 : i32
    %c0_i32_0 = arith.constant 0 : i32
    %c0_i32_1 = arith.constant 0 : i32
    %c0_i32_2 = arith.constant 0 : i32
    return %arg0, %c0_i32, %c0_i32_0, %c0_i32_1 : i32, i32, i32, i32
  }
}

</mosaic_0001>

<llo_original>
// kernel: network_block_fwd.3
$region0: #{network_block_fwd.3}
  #allocation0 [shape = 'u32[]', space=smem, size = 0x4, offset = 0x4, fixed_abs, tag = 'smem constant byte address 0x4 - core index']
  #allocation1 [shape = 'u32[144,128]{1,0:T(1,128)}', space=vmem, size = 0x12000, scoped, tag = 'internal scratch']
  #allocation2 [shape = 'bf16[10,10,128]{2,1,0:T(8,128)(2,1)}', space=vmem, size = 0xa000, scoped, tag = 'scratch operand']
  #allocation3 [shape = 'bf16[64,1152]{1,0:T(16,128)(2,1)}', space=vmem, size = 0x24000, scoped, tag = 'scratch operand']
  %s0 = inlined_call_operand.vmem [shape: bf16[2,8,8,128], index: 0, kind: input, shape index: {}]
  %s1 = inlined_call_operand.vmem [shape: bf16[1152,128], index: 1, kind: input, shape index: {}]
  %s2 = inlined_call_operand.vmem [shape: bf16[1152,128], index: 2, kind: input, shape index: {}]
  %s3 = inlined_call_operand.vmem [shape: f32[1,128], index: 3, kind: input, shape index: {}]
  %s4 = inlined_call_operand.vmem [shape: f32[1,128], index: 4, kind: input, shape index: {}]
  %s5 = inlined_call_operand.vmem [shape: f32[1,128], index: 5, kind: input, shape index: {}]
  %s6 = inlined_call_operand.vmem [shape: f32[1,128], index: 6, kind: input, shape index: {}]
  %s7 = inlined_call_operand.vmem [shape: bf16[2,8,8,128], index: 7, kind: output, shape index: {}]
  %s8 = sld [smem:[#allocation0]]
  $region61: #{network_block_fwd.3} parent=0
    _
  %s10 = ssub.s32 1, %s8
  %s11 = scalar_select 0, %s10, %s8
  loop: start=0, step=1, limit=4
  $region2: #{network_block_fwd.3} parent=0 // loop_pre_header
    _
  $region3: #{network_block_fwd.3} parent=0 // loop_header
    %s13 = sphi 0, %s17
    %p14 = scmp.ge.s32.totalorder %s13, 4
    %s23 = sphi 0, %s25
    %s26 = sphi 0, %s23
    %s27 = sphi 0, %s26
    %s43 = sphi 0, %s27
    %s47 = sphi 0, %s47
    %s49 = sphi 0, %s47
    %s50 = sphi 0, %s49
    %s64 = sphi 0, %s50
    %s68 = sphi 0, %s68
    %s70 = sphi 0, %s68
    %s71 = sphi 0, %s70
    %s85 = sphi 0, %s71
    %s89 = sphi 0, %s89
    %s91 = sphi 0, %s89
    %s92 = sphi 0, %s91
    %s106 = sphi 0, %s92
    %s110 = sphi 0, %s110
    %s112 = sphi 0, %s110
    %s113 = sphi 0, %s112
    %s127 = sphi 0, %s113
    %s131 = sphi 0, %s131
    %s133 = sphi 0, %s131
    %s134 = sphi 0, %s133
    %s148 = sphi 0, %s134
    %s152 = sphi 0, %s152
    %s154 = sphi 0, %s152
    %s155 = sphi 0, %s154
    %s169 = sphi 0, %s155
    %s175 = sphi 0, %s177
    %s178 = sphi 0, %s175
    %s179 = sphi 0, %s178
    %s195 = sphi 0, %s179
  $region4: #{network_block_fwd.3} parent=0 // loop_header_branch
    %16 = sbr.rel (%p14) target = $region8
  $region5: #{network_block_fwd.3} parent=0 // loop_body
    %s18 = ssub.s32 %s13, 1
    %s19 = ssub.s32 %s13, 2
    %s20 = sadd.s32 %s13, 1
    %s21 = ssub.s32 %s13, %s20
    %p22 = scmp.eq.s32.totalorder %s21, 0
    %s24 = sadd.s32 %s23, 1
    %s25 = scalar_select %p22, %s23, %s24
    %p28 = pneg %p22
    %p29 = scmp.eq.s32.totalorder %s13, 1
    %p30 = por %p28, %p29
    %p31 = scmp.ne.s32.totalorder %s23, %s26
    %p32 = scmp.eq.s32.totalorder %s13, 0
    %p33 = por %p31, %p32
    %p34 = scmp.ne.s32.totalorder %s23, %s26
    %p35 = scmp.eq.s32.totalorder %s18, 1
    %p36 = por %p34, %p35
    %p37 = scmp.ne.s32.totalorder %s26, %s27
    %p38 = scmp.eq.s32.totalorder %s18, 0
    %p39 = por %p37, %p38
    %p40 = scmp.ne.s32.totalorder %s26, %s27
    %p41 = scmp.eq.s32.totalorder %s19, 1
    %p42 = por %p40, %p41
    %p44 = scmp.ne.s32.totalorder %s27, %s43
    %p45 = scmp.eq.s32.totalorder %s19, 0
    %p46 = por %p44, %p45
    %s48 = sadd.s32 %s47, 1
    %p51 = scmp.eq.s32.totalorder %s13, 1
    %p52 = scmp.ne.s32.totalorder %s47, %s49
    %p53 = scmp.eq.s32.totalorder %s13, 0
    %p54 = por %p52, %p53
    %p55 = scmp.ne.s32.totalorder %s47, %s49
    %p56 = scmp.eq.s32.totalorder %s18, 1
    %p57 = por %p55, %p56
    %p58 = scmp.ne.s32.totalorder %s49, %s50
    %p59 = scmp.eq.s32.totalorder %s18, 0
    %p60 = por %p58, %p59
    %p61 = scmp.ne.s32.totalorder %s49, %s50
    %p62 = scmp.eq.s32.totalorder %s19, 1
    %p63 = por %p61, %p62
    %p65 = scmp.ne.s32.totalorder %s50, %s64
    %p66 = scmp.eq.s32.totalorder %s19, 0
    %p67 = por %p65, %p66
    %s69 = sadd.s32 %s68, 1
    %p72 = scmp.eq.s32.totalorder %s13, 1
    %p73 = scmp.ne.s32.totalorder %s68, %s70
    %p74 = scmp.eq.s32.totalorder %s13, 0
    %p75 = por %p73, %p74
    %p76 = scmp.ne.s32.totalorder %s68, %s70
    %p77 = scmp.eq.s32.totalorder %s18, 1
    %p78 = por %p76, %p77
    %p79 = scmp.ne.s32.totalorder %s70, %s71
    %p80 = scmp.eq.s32.totalorder %s18, 0
    %p81 = por %p79, %p80
    %p82 = scmp.ne.s32.totalorder %s70, %s71
    %p83 = scmp.eq.s32.totalorder %s19, 1
    %p84 = por %p82, %p83
    %p86 = scmp.ne.s32.totalorder %s71, %s85
    %p87 = scmp.eq.s32.totalorder %s19, 0
    %p88 = por %p86, %p87
    %s90 = sadd.s32 %s89, 1
    %p93 = scmp.eq.s32.totalorder %s13, 1
    %p94 = scmp.ne.s32.totalorder %s89, %s91
    %p95 = scmp.eq.s32.totalorder %s13, 0
    %p96 = por %p94, %p95
    %p97 = scmp.ne.s32.totalorder %s89, %s91
    %p98 = scmp.eq.s32.totalorder %s18, 1
    %p99 = por %p97, %p98
    %p100 = scmp.ne.s32.totalorder %s91, %s92
    %p101 = scmp.eq.s32.totalorder %s18, 0
    %p102 = por %p100, %p101
    %p103 = scmp.ne.s32.totalorder %s91, %s92
    %p104 = scmp.eq.s32.totalorder %s19, 1
    %p105 = por %p103, %p104
    %p107 = scmp.ne.s32.totalorder %s92, %s106
    %p108 = scmp.eq.s32.totalorder %s19, 0
    %p109 = por %p107, %p108
    %s111 = sadd.s32 %s110, 1
    %p114 = scmp.eq.s32.totalorder %s13, 1
    %p115 = scmp.ne.s32.totalorder %s110, %s112
    %p116 = scmp.eq.s32.totalorder %s13, 0
    %p117 = por %p115, %p116
    %p118 = scmp.ne.s32.totalorder %s110, %s112
    %p119 = scmp.eq.s32.totalorder %s18, 1
    %p120 = por %p118, %p119
    %p121 = scmp.ne.s32.totalorder %s112, %s113
    %p122 = scmp.eq.s32.totalorder %s18, 0
    %p123 = por %p121, %p122
    %p124 = scmp.ne.s32.totalorder %s112, %s113
    %p125 = scmp.eq.s32.totalorder %s19, 1
    %p126 = por %p124, %p125
    %p128 = scmp.ne.s32.totalorder %s113, %s127
    %p129 = scmp.eq.s32.totalorder %s19, 0
    %p130 = por %p128, %p129
    %s132 = sadd.s32 %s131, 1
    %p135 = scmp.eq.s32.totalorder %s13, 1
    %p136 = scmp.ne.s32.totalorder %s131, %s133
    %p137 = scmp.eq.s32.totalorder %s13, 0
    %p138 = por %p136, %p137
    %p139 = scmp.ne.s32.totalorder %s131, %s133
    %p140 = scmp.eq.s32.totalorder %s18, 1
    %p141 = por %p139, %p140
    %p142 = scmp.ne.s32.totalorder %s133, %s134
    %p143 = scmp.eq.s32.totalorder %s18, 0
    %p144 = por %p142, %p143
    %p145 = scmp.ne.s32.totalorder %s133, %s134
    %p146 = scmp.eq.s32.totalorder %s19, 1
    %p147 = por %p145, %p146
    %p149 = scmp.ne.s32.totalorder %s134, %s148
    %p150 = scmp.eq.s32.totalorder %s19, 0
    %p151 = por %p149, %p150
    %s153 = sadd.s32 %s152, 1
    %p156 = scmp.eq.s32.totalorder %s13, 1
    %p157 = scmp.ne.s32.totalorder %s152, %s154
    %p158 = scmp.eq.s32.totalorder %s13, 0
    %p159 = por %p157, %p158
    %p160 = scmp.ne.s32.totalorder %s152, %s154
    %p161 = scmp.eq.s32.totalorder %s18, 1
    %p162 = por %p160, %p161
    %p163 = scmp.ne.s32.totalorder %s154, %s155
    %p164 = scmp.eq.s32.totalorder %s18, 0
    %p165 = por %p163, %p164
    %p166 = scmp.ne.s32.totalorder %s154, %s155
    %p167 = scmp.eq.s32.totalorder %s19, 1
    %p168 = por %p166, %p167
    %p170 = scmp.ne.s32.totalorder %s155, %s169
    %p171 = scmp.eq.s32.totalorder %s19, 0
    %p172 = por %p170, %p171
    %s173 = ssub.s32 %s13, %s20
    %p174 = scmp.eq.s32.totalorder %s173, 0
    %s176 = sadd.s32 %s175, 1
    %s177 = scalar_select %p174, %s175, %s176
    %p180 = pneg %p174
    %p181 = scmp.eq.s32.totalorder %s13, 1
    %p182 = por %p180, %p181
    %p183 = scmp.ne.s32.totalorder %s175, %s178
    %p184 = scmp.eq.s32.totalorder %s13, 0
    %p185 = por %p183, %p184
    %p186 = scmp.ne.s32.totalorder %s175, %s178
    %p187 = scmp.eq.s32.totalorder %s18, 1
    %p188 = por %p186, %p187
    %p189 = scmp.ne.s32.totalorder %s178, %s179
    %p190 = scmp.eq.s32.totalorder %s18, 0
    %p191 = por %p189, %p190
    %p192 = scmp.ne.s32.totalorder %s178, %s179
    %p193 = scmp.eq.s32.totalorder %s19, 1
    %p194 = por %p192, %p193
    %p196 = scmp.ne.s32.totalorder %s179, %s195
    %p197 = scmp.eq.s32.totalorder %s19, 0
    %p198 = por %p196, %p197
    %p199 = scmp.le.s32.totalorder 1, %s13
    %p200 = scmp.lt.s32.totalorder %s13, 3
    %p201 = pnand %p199, %p200
    %p202 = pneg %p201
    // Predicated region
    $region9: #{network_block_fwd.3} parent=5 // pred_check
      _
    $region10: #{network_block_fwd.3} parent=5 // pred_check_branch
      %204 = sbr.rel (%p201) target = $region12
    $region11: #{network_block_fwd.3} parent=5 // pred_region
      %s205 = ssub.s32 %s13, 1
      // Predicated region
      $region13: #{network_block_fwd.3} parent=11 // pred_check
        %p206 = pneg %p60
      $region14: #{network_block_fwd.3} parent=11 // pred_check_branch
        %208 = sbr.rel (%p206) target = $region16
      $region15: #{network_block_fwd.3} parent=11 // pred_region
        _
      $region16: #{network_block_fwd.3} parent=11 // pred_fallthru
        _
      // Predicated region
      $region17: #{network_block_fwd.3} parent=11 // pred_check
        %p209 = pneg %p81
      $region18: #{network_block_fwd.3} parent=11 // pred_check_branch
        %211 = sbr.rel (%p209) target = $region20
      $region19: #{network_block_fwd.3} parent=11 // pred_region
        _
      $region20: #{network_block_fwd.3} parent=11 // pred_fallthru
        _
      // Predicated region
      $region21: #{network_block_fwd.3} parent=11 // pred_check
        %p212 = pneg %p102
      $region22: #{network_block_fwd.3} parent=11 // pred_check_branch
        %214 = sbr.rel (%p212) target = $region24
      $region23: #{network_block_fwd.3} parent=11 // pred_region
        _
      $region24: #{network_block_fwd.3} parent=11 // pred_fallthru
        _
      // Predicated region
      $region25: #{network_block_fwd.3} parent=11 // pred_check
        %p215 = pneg %p123
      $region26: #{network_block_fwd.3} parent=11 // pred_check_branch
        %217 = sbr.rel (%p215) target = $region28
      $region27: #{network_block_fwd.3} parent=11 // pred_region
        _
      $region28: #{network_block_fwd.3} parent=11 // pred_fallthru
        _
      // Predicated region
      $region29: #{network_block_fwd.3} parent=11 // pred_check
        %p218 = pneg %p144
      $region30: #{network_block_fwd.3} parent=11 // pred_check_branch
        %220 = sbr.rel (%p218) target = $region32
      $region31: #{network_block_fwd.3} parent=11 // pred_region
        _
      $region32: #{network_block_fwd.3} parent=11 // pred_fallthru
        _
      // Predicated region
      $region33: #{network_block_fwd.3} parent=11 // pred_check
        %p221 = pneg %p165
      $region34: #{network_block_fwd.3} parent=11 // pred_check_branch
        %223 = sbr.rel (%p221) target = $region36
      $region35: #{network_block_fwd.3} parent=11 // pred_region
        _
      $region36: #{network_block_fwd.3} parent=11 // pred_fallthru
        _
    $region12: #{network_block_fwd.3} parent=5 // pred_fallthru
      _
    %p224 = scmp.lt.s32.totalorder %s13, 2
    // Predicated region
    $region37: #{network_block_fwd.3} parent=5 // pred_check
      %p225 = pneg %p224
    $region38: #{network_block_fwd.3} parent=5 // pred_check_branch
      %227 = sbr.rel (%p225) target = $region40
    $region39: #{network_block_fwd.3} parent=5 // pred_region
      // Predicated region
      $region41: #{network_block_fwd.3} parent=39 // pred_check
        %p228 = pneg %p33
      $region42: #{network_block_fwd.3} parent=39 // pred_check_branch
        %230 = sbr.rel (%p228) target = $region44
      $region43: #{network_block_fwd.3} parent=39 // pred_region
        %p231 = scmp.lt.s32.totalorder %s13, 1
        %s232 = scalar_select %p231, %s13, 1
        %s233 = smul.addr %s232, 8
        %s234 = smul.addr %s233, 4
        %s235 = scalar_lea.vmem %s0, %s234
      $region44: #{network_block_fwd.3} parent=39 // pred_fallthru
        _
    $region40: #{network_block_fwd.3} parent=5 // pred_fallthru
      _
    %p236 = scmp.le.s32.totalorder 1, %s13
    %p237 = scmp.lt.s32.totalorder %s13, 3
    %p238 = pnand %p236, %p237
    %p239 = pneg %p238
    // Predicated region
    $region45: #{network_block_fwd.3} parent=5 // pred_check
      _
    $region46: #{network_block_fwd.3} parent=5 // pred_check_branch
      %241 = sbr.rel (%p238) target = $region48
    $region47: #{network_block_fwd.3} parent=5 // pred_region
      %s242 = ssub.s32 %s13, 1
      %p243 = scmp.lt.s32.totalorder %s18, 1
      %s244 = scalar_select %p243, %s18, 1
      %s245 = smul.addr %s244, 8
      %s246 = smul.addr %s245, 4
      %s247 = scalar_lea.vmem %s0, %s246
      %p248 = pneg %p39
      %p249 = pneg %p36
      %p250 = pneg %p60
      %p251 = pneg %p57
      %p252 = pneg %p81
      %p253 = pneg %p78
      %p254 = pneg %p102
      %p255 = pneg %p99
      %p256 = pneg %p123
      %p257 = pneg %p120
      %p258 = pneg %p144
      %p259 = pneg %p141
      %p260 = pneg %p165
      %p261 = pneg %p162
      %p262 = pneg %p191
      %p263 = pneg %p188
      %p264 = scmp.lt.s32.totalorder %s18, 1
      %s265 = scalar_select %p264, %s18, 1
      %s266 = smul.addr %s265, 8
      %s267 = smul.addr %s266, 4
      %s268 = scalar_lea.vmem %s7, %s267
      %p269 = scmp.lt.s32.totalorder %s18, 1
      %s270 = scalar_select %p269, %s18, 1
      %s271 = smul.addr %s270, 8
      %s272 = smul.addr %s271, 4
      %s273 = scalar_lea.vmem %s0, %s272
      %p274 = scmp.lt.s32.totalorder %s18, 1
      %s275 = scalar_select %p274, %s18, 1
      %s276 = smul.addr %s275, 8
      %s277 = smul.addr %s276, 4
      %s278 = scalar_lea.vmem %s7, %s277
      %280 = vst [vmem:[#allocation2] sm:$0xf] 0
      %281 = vst [vmem:[#allocation2 + $0x4] sm:$0x1] 0
      %s282 = scalar_lea.vmem [#allocation2], 72
      %283 = vst [vmem:[%s282] sm:$0xf] 0
      %284 = vst [vmem:[%s282 + $0x4] sm:$0x1] 0
      %vm285 = vcmask 1040384
      %vm286 = vsmask.f32 256
      %vm287 = vmand %vm285, %vm286
      %v288 = vld [vmem:[#allocation2] sm:$0x1]
      %v289 = vsel %vm287, 0, %v288
      %290 = vst [vmem:[#allocation2] sm:$0x1] %v289
      %v291 = vld [vmem:[#allocation2 + $0x8] sm:$0x1]
      %v292 = vsel %vm287, 0, %v291
      %293 = vst [vmem:[#allocation2 + $0x8] sm:$0x1] %v292
      %v294 = vld [vmem:[#allocation2 + $0x10] sm:$0x1]
      %v295 = vsel %vm287, 0, %v294
      %296 = vst [vmem:[#allocation2 + $0x10] sm:$0x1] %v295
      %v297 = vld [vmem:[#allocation2 + $0x18] sm:$0x1]
      %v298 = vsel %vm287, 0, %v297
      %299 = vst [vmem:[#allocation2 + $0x18] sm:$0x1] %v298
      %v300 = vld [vmem:[#allocation2 + $0x20] sm:$0x1]
      %v301 = vsel %vm287, 0, %v300
      %302 = vst [vmem:[#allocation2 + $0x20] sm:$0x1] %v301
      %v303 = vld [vmem:[#allocation2 + $0x28] sm:$0x1]
      %v304 = vsel %vm287, 0, %v303
      %305 = vst [vmem:[#allocation2 + $0x28] sm:$0x1] %v304
      %v306 = vld [vmem:[#allocation2 + $0x30] sm:$0x1]
      %v307 = vsel %vm287, 0, %v306
      %308 = vst [vmem:[#allocation2 + $0x30] sm:$0x1] %v307
      %v309 = vld [vmem:[#allocation2 + $0x38] sm:$0x1]
      %v310 = vsel %vm287, 0, %v309
      %311 = vst [vmem:[#allocation2 + $0x38] sm:$0x1] %v310
      %v312 = vld [vmem:[#allocation2 + $0x40] sm:$0x1]
      %v313 = vsel %vm287, 0, %v312
      %314 = vst [vmem:[#allocation2 + $0x40] sm:$0x1] %v313
      %v315 = vld [vmem:[#allocation2 + $0x48] sm:$0x1]
      %v316 = vsel %vm287, 0, %v315
      %317 = vst [vmem:[#allocation2 + $0x48] sm:$0x1] %v316
      %vm318 = vsmask.f32 7938
      %vm319 = vmand %vm285, %vm318
      %v320 = vld [vmem:[#allocation2 + $0x4] sm:$0x1]
      %v321 = vsel %vm319, 0, %v320
      %322 = vst [vmem:[#allocation2 + $0x4] sm:$0x1] %v321
      %v323 = vld [vmem:[#allocation2 + $0xc] sm:$0x1]
      %v324 = vsel %vm319, 0, %v323
      %325 = vst [vmem:[#allocation2 + $0xc] sm:$0x1] %v324
      %v326 = vld [vmem:[#allocation2 + $0x14] sm:$0x1]
      %v327 = vsel %vm319, 0, %v326
      %328 = vst [vmem:[#allocation2 + $0x14] sm:$0x1] %v327
      %v329 = vld [vmem:[#allocation2 + $0x1c] sm:$0x1]
      %v330 = vsel %vm319, 0, %v329
      %331 = vst [vmem:[#allocation2 + $0x1c] sm:$0x1] %v330
      %v332 = vld [vmem:[#allocation2 + $0x24] sm:$0x1]
      %v333 = vsel %vm319, 0, %v332
      %334 = vst [vmem:[#allocation2 + $0x24] sm:$0x1] %v333
      %v335 = vld [vmem:[#allocation2 + $0x2c] sm:$0x1]
      %v336 = vsel %vm319, 0, %v335
      %337 = vst [vmem:[#allocation2 + $0x2c] sm:$0x1] %v336
      %v338 = vld [vmem:[#allocation2 + $0x34] sm:$0x1]
      %v339 = vsel %vm319, 0, %v338
      %340 = vst [vmem:[#allocation2 + $0x34] sm:$0x1] %v339
      %v341 = vld [vmem:[#allocation2 + $0x3c] sm:$0x1]
      %v342 = vsel %vm319, 0, %v341
      %343 = vst [vmem:[#allocation2 + $0x3c] sm:$0x1] %v342
      %v344 = vld [vmem:[#allocation2 + $0x44] sm:$0x1]
      %v345 = vsel %vm319, 0, %v344
      %346 = vst [vmem:[#allocation2 + $0x44] sm:$0x1] %v345
      %v347 = vld [vmem:[#allocation2 + $0x4c] sm:$0x1]
      %v348 = vsel %vm319, 0, %v347
      %349 = vst [vmem:[#allocation2 + $0x4c] sm:$0x1] %v348
      %v350 = vld [vmem:[%s273] sm:$0xf]
      %v351 = vld [vmem:[%s273 + $0x4] sm:$0xf]
      %v352 = vld [vmem:[%s273 + $0x8] sm:$0xf]
      %v353 = vld [vmem:[%s273 + $0xc] sm:$0xf]
      %v354 = vld [vmem:[%s273 + $0x10] sm:$0xf]
      %v355 = vld [vmem:[%s273 + $0x14] sm:$0xf]
      %v356 = vld [vmem:[%s273 + $0x18] sm:$0xf]
      %v357 = vld [vmem:[%s273 + $0x1c] sm:$0xf]
      %v358 = vunpack.c.l.bf16 %v350
      %v359 = vunpack.c.l.bf16 %v351
      %v360 = vunpack.c.l.bf16 %v352
      %v361 = vunpack.c.l.bf16 %v353
      %v362 = vunpack.c.l.bf16 %v354
      %v363 = vunpack.c.l.bf16 %v355
      %v364 = vunpack.c.l.bf16 %v356
      %v365 = vunpack.c.l.bf16 %v357
      %v366 = vld [vmem:[%s3] sm:$0x1]
      %v368 = vlaneseq
      %v369 = vshrl.u32 %v368, 7
      %v370 = vsub.s32 0, %v369
      %v371 = vrot.slane %v366, %v370
      %v373 = vmul.f32 %v358, %v371
      %v374 = vmul.f32 %v359, %v371
      %v375 = vmul.f32 %v360, %v371
      %v376 = vmul.f32 %v361, %v371
      %v377 = vmul.f32 %v362, %v371
      %v378 = vmul.f32 %v363, %v371
      %v379 = vmul.f32 %v364, %v371
      %v380 = vmul.f32 %v365, %v371
      %v381 = vld [vmem:[%s4] sm:$0x1]
      %v383 = vlaneseq
      %v384 = vshrl.u32 %v383, 7
      %v385 = vsub.s32 0, %v384
      %v386 = vrot.slane %v381, %v385
      %v388 = vadd.f32 %v373, %v386
      %v389 = vadd.f32 %v374, %v386
      %v390 = vadd.f32 %v375, %v386
      %v391 = vadd.f32 %v376, %v386
      %v392 = vadd.f32 %v377, %v386
      %v393 = vadd.f32 %v378, %v386
      %v394 = vadd.f32 %v379, %v386
      %v395 = vadd.f32 %v380, %v386
      %v396 = vmax.f32 %v388, 0.0
      %v397 = vmax.f32 %v389, 0.0
      %v398 = vmax.f32 %v390, 0.0
      %v399 = vmax.f32 %v391, 0.0
      %v400 = vmax.f32 %v392, 0.0
      %v401 = vmax.f32 %v393, 0.0
      %v402 = vmax.f32 %v394, 0.0
      %v403 = vmax.f32 %v395, 0.0
      %v404 = vpack.c.bf16 %v396, %v396
      %v405 = vpack.c.bf16 %v397, %v397
      %v406 = vpack.c.bf16 %v398, %v398
      %v407 = vpack.c.bf16 %v399, %v399
      %v408 = vpack.c.bf16 %v400, %v400
      %v409 = vpack.c.bf16 %v401, %v401
      %v410 = vpack.c.bf16 %v402, %v402
      %v411 = vpack.c.bf16 %v403, %v403
      %v420 = vunpack.c.l.b16 %v404
      %v421 = vunpack.c.l.b16 %v405
      %v422 = vunpack.c.l.b16 %v406
      %v423 = vunpack.c.l.b16 %v407
      %v424 = vunpack.c.l.b16 %v408
      %v425 = vunpack.c.l.b16 %v409
      %v426 = vunpack.c.l.b16 %v410
      %v427 = vunpack.c.l.b16 %v411
      %v428 = vpack.c.b16 %v420, %v420
      %v429 = vpack.c.b16 %v421, %v421
      %v430 = vpack.c.b16 %v422, %v422
      %v431 = vpack.c.b16 %v423, %v423
      %v432 = vpack.c.b16 %v424, %v424
      %v433 = vpack.c.b16 %v425, %v425
      %v434 = vpack.c.b16 %v426, %v426
      %v435 = vpack.c.b16 %v427, %v427
      %v437 = vshrl.u32 %v428, 16
      %v439 = vrot.slane %v437, 7
      %v440 = vshll.u32 %v428, 16
      %v442 = vor.u32 %v439, %v440
      %v443 = vrot.slane %v439, 4
      %v445 = vshrl.u32 %v429, 16
      %v447 = vrot.slane %v445, 7
      %v448 = vshll.u32 %v429, 16
      %v450 = vor.u32 %v447, %v448
      %v451 = vrot.slane %v447, 4
      %v453 = vshrl.u32 %v430, 16
      %v455 = vrot.slane %v453, 7
      %v456 = vshll.u32 %v430, 16
      %v458 = vor.u32 %v455, %v456
      %v459 = vrot.slane %v455, 4
      %v461 = vshrl.u32 %v431, 16
      %v463 = vrot.slane %v461, 7
      %v464 = vshll.u32 %v431, 16
      %v466 = vor.u32 %v463, %v464
      %v467 = vrot.slane %v463, 4
      %v469 = vshrl.u32 %v432, 16
      %v471 = vrot.slane %v469, 7
      %v472 = vshll.u32 %v432, 16
      %v474 = vor.u32 %v471, %v472
      %v475 = vrot.slane %v471, 4
      %v477 = vshrl.u32 %v433, 16
      %v479 = vrot.slane %v477, 7
      %v480 = vshll.u32 %v433, 16
      %v482 = vor.u32 %v479, %v480
      %v483 = vrot.slane %v479, 4
      %v485 = vshrl.u32 %v434, 16
      %v487 = vrot.slane %v485, 7
      %v488 = vshll.u32 %v434, 16
      %v490 = vor.u32 %v487, %v488
      %v491 = vrot.slane %v487, 4
      %v493 = vshrl.u32 %v435, 16
      %v495 = vrot.slane %v493, 7
      %v496 = vshll.u32 %v435, 16
      %v498 = vor.u32 %v495, %v496
      %v499 = vrot.slane %v495, 4
      %s516 = scalar_lea.vmem [#allocation2], 8
      %vm517 = vcmask 1043456
      %vm518 = vmand %vm517, %vm318
      %v519 = vld [vmem:[%s516] sm:$0xf]
      %v520 = vsel %vm518, %v442, %v519
      %521 = vst [vmem:[%s516] sm:$0xf] %v520
      %v522 = vld [vmem:[%s516 + $0x4] sm:$0x1]
      %v523 = vsel %vm287, %v443, %v522
      %524 = vst [vmem:[%s516 + $0x4] sm:$0x1] %v523
      %v525 = vld [vmem:[%s516 + $0x8] sm:$0xf]
      %v526 = vsel %vm518, %v450, %v525
      %527 = vst [vmem:[%s516 + $0x8] sm:$0xf] %v526
      %v528 = vld [vmem:[%s516 + $0xc] sm:$0x1]
      %v529 = vsel %vm287, %v451, %v528
      %530 = vst [vmem:[%s516 + $0xc] sm:$0x1] %v529
      %v531 = vld [vmem:[%s516 + $0x10] sm:$0xf]
      %v532 = vsel %vm518, %v458, %v531
      %533 = vst [vmem:[%s516 + $0x10] sm:$0xf] %v532
      %v534 = vld [vmem:[%s516 + $0x14] sm:$0x1]
      %v535 = vsel %vm287, %v459, %v534
      %536 = vst [vmem:[%s516 + $0x14] sm:$0x1] %v535
      %v537 = vld [vmem:[%s516 + $0x18] sm:$0xf]
      %v538 = vsel %vm518, %v466, %v537
      %539 = vst [vmem:[%s516 + $0x18] sm:$0xf] %v538
      %v540 = vld [vmem:[%s516 + $0x1c] sm:$0x1]
      %v541 = vsel %vm287, %v467, %v540
      %542 = vst [vmem:[%s516 + $0x1c] sm:$0x1] %v541
      %v543 = vld [vmem:[%s516 + $0x20] sm:$0xf]
      %v544 = vsel %vm518, %v474, %v543
      %545 = vst [vmem:[%s516 + $0x20] sm:$0xf] %v544
      %v546 = vld [vmem:[%s516 + $0x24] sm:$0x1]
      %v547 = vsel %vm287, %v475, %v546
      %548 = vst [vmem:[%s516 + $0x24] sm:$0x1] %v547
      %v549 = vld [vmem:[%s516 + $0x28] sm:$0xf]
      %v550 = vsel %vm518, %v482, %v549
      %551 = vst [vmem:[%s516 + $0x28] sm:$0xf] %v550
      %v552 = vld [vmem:[%s516 + $0x2c] sm:$0x1]
      %v553 = vsel %vm287, %v483, %v552
      %554 = vst [vmem:[%s516 + $0x2c] sm:$0x1] %v553
      %v555 = vld [vmem:[%s516 + $0x30] sm:$0xf]
      %v556 = vsel %vm518, %v490, %v555
      %557 = vst [vmem:[%s516 + $0x30] sm:$0xf] %v556
      %v558 = vld [vmem:[%s516 + $0x34] sm:$0x1]
      %v559 = vsel %vm287, %v491, %v558
      %560 = vst [vmem:[%s516 + $0x34] sm:$0x1] %v559
      %v561 = vld [vmem:[%s516 + $0x38] sm:$0xf]
      %v562 = vsel %vm518, %v498, %v561
      %563 = vst [vmem:[%s516 + $0x38] sm:$0xf] %v562
      %v564 = vld [vmem:[%s516 + $0x3c] sm:$0x1]
      %v565 = vsel %vm287, %v499, %v564
      %566 = vst [vmem:[%s516 + $0x3c] sm:$0x1] %v565
      %v567 = vld [vmem:[#allocation2] sm:$0xf]
      %v568 = vld [vmem:[#allocation2 + $0x8] sm:$0xf]
      %v569 = vld [vmem:[#allocation2 + $0x10] sm:$0xf]
      %v570 = vld [vmem:[#allocation2 + $0x18] sm:$0xf]
      %v571 = vld [vmem:[#allocation2 + $0x20] sm:$0xf]
      %v572 = vld [vmem:[#allocation2 + $0x28] sm:$0xf]
      %v573 = vld [vmem:[#allocation2 + $0x30] sm:$0xf]
      %v574 = vld [vmem:[#allocation2 + $0x38] sm:$0xf]
      %v583 = vunpack.c.l.b16 %v567
      %v584 = vunpack.c.l.b16 %v568
      %v585 = vunpack.c.l.b16 %v569
      %v586 = vunpack.c.l.b16 %v570
      %v587 = vunpack.c.l.b16 %v571
      %v588 = vunpack.c.l.b16 %v572
      %v589 = vunpack.c.l.b16 %v573
      %v590 = vunpack.c.l.b16 %v574
      %v591 = vpack.c.b16 %v584, %v583
      %v592 = vpack.c.b16 %v586, %v585
      %v593 = vpack.c.b16 %v588, %v587
      %v594 = vpack.c.b16 %v590, %v589
      %599 = vst [vmem:[#allocation3] sm:$0xff] %v591
      %600 = vst [vmem:[#allocation3 + $0x48] sm:$0xff] %v592
      %601 = vst [vmem:[#allocation3 + $0x90] sm:$0xff] %v593
      %602 = vst [vmem:[#allocation3 + $0xd8] sm:$0xff] %v594
      %v603 = vld [vmem:[#allocation2] sm:$0xf]
      %v604 = vld [vmem:[#allocation2 + $0x4] sm:$0x1]
      %v605 = vld [vmem:[#allocation2 + $0x8] sm:$0xf]
      %v606 = vld [vmem:[#allocation2 + $0xc] sm:$0x1]
      %v607 = vld [vmem:[#allocation2 + $0x10] sm:$0xf]
      %v608 = vld [vmem:[#allocation2 + $0x14] sm:$0x1]
      %v609 = vld [vmem:[#allocation2 + $0x18] sm:$0xf]
      %v610 = vld [vmem:[#allocation2 + $0x1c] sm:$0x1]
      %v611 = vld [vmem:[#allocation2 + $0x20] sm:$0xf]
      %v612 = vld [vmem:[#allocation2 + $0x24] sm:$0x1]
      %v613 = vld [vmem:[#allocation2 + $0x28] sm:$0xf]
      %v614 = vld [vmem:[#allocation2 + $0x2c] sm:$0x1]
      %v615 = vld [vmem:[#allocation2 + $0x30] sm:$0xf]
      %v616 = vld [vmem:[#allocation2 + $0x34] sm:$0x1]
      %v617 = vld [vmem:[#allocation2 + $0x38] sm:$0xf]
      %v618 = vld [vmem:[#allocation2 + $0x3c] sm:$0x1]
      %vm619 = vsmask.f32 3328
      %vm620 = vsmask.f32 7440
      %vm621 = vmor %vm619, %vm620
      %v623 = vshrl.u32 %v603, 16
      %v625 = vrot.slane %v623, 4
      %v626 = vshll.u32 %v603, 16
      %v628 = vrot.slane %v626, 5
      %v629 = vor.u32 %v625, %v628
      %v630 = vrot.slane %v629, 4
      %v632 = vshll.u32 %v604, 16
      %v634 = vrot.slane %v632, 5
      %v635 = vsel %vm621, %v630, %v634
      %v637 = vshrl.u32 %v605, 16
      %v639 = vrot.slane %v637, 4
      %v640 = vshll.u32 %v605, 16
      %v642 = vrot.slane %v640, 5
      %v643 = vor.u32 %v639, %v642
      %v644 = vrot.slane %v643, 4
      %v646 = vshll.u32 %v606, 16
      %v648 = vrot.slane %v646, 5
      %v649 = vsel %vm621, %v644, %v648
      %v651 = vshrl.u32 %v607, 16
      %v653 = vrot.slane %v651, 4
      %v654 = vshll.u32 %v607, 16
      %v656 = vrot.slane %v654, 5
      %v657 = vor.u32 %v653, %v656
      %v658 = vrot.slane %v657, 4
      %v660 = vshll.u32 %v608, 16
      %v662 = vrot.slane %v660, 5
      %v663 = vsel %vm621, %v658, %v662
      %v665 = vshrl.u32 %v609, 16
      %v667 = vrot.slane %v665, 4
      %v668 = vshll.u32 %v609, 16
      %v670 = vrot.slane %v668, 5
      %v671 = vor.u32 %v667, %v670
      %v672 = vrot.slane %v671, 4
      %v674 = vshll.u32 %v610, 16
      %v676 = vrot.slane %v674, 5
      %v677 = vsel %vm621, %v672, %v676
      %v679 = vshrl.u32 %v611, 16
      %v681 = vrot.slane %v679, 4
      %v682 = vshll.u32 %v611, 16
      %v684 = vrot.slane %v682, 5
      %v685 = vor.u32 %v681, %v684
      %v686 = vrot.slane %v685, 4
      %v688 = vshll.u32 %v612, 16
      %v690 = vrot.slane %v688, 5
      %v691 = vsel %vm621, %v686, %v690
      %v693 = vshrl.u32 %v613, 16
      %v695 = vrot.slane %v693, 4
      %v696 = vshll.u32 %v613, 16
      %v698 = vrot.slane %v696, 5
      %v699 = vor.u32 %v695, %v698
      %v700 = vrot.slane %v699, 4
      %v702 = vshll.u32 %v614, 16
      %v704 = vrot.slane %v702, 5
      %v705 = vsel %vm621, %v700, %v704
      %v707 = vshrl.u32 %v615, 16
      %v709 = vrot.slane %v707, 4
      %v710 = vshll.u32 %v615, 16
      %v712 = vrot.slane %v710, 5
      %v713 = vor.u32 %v709, %v712
      %v714 = vrot.slane %v713, 4
      %v716 = vshll.u32 %v616, 16
      %v718 = vrot.slane %v716, 5
      %v719 = vsel %vm621, %v714, %v718
      %v721 = vshrl.u32 %v617, 16
      %v723 = vrot.slane %v721, 4
      %v724 = vshll.u32 %v617, 16
      %v726 = vrot.slane %v724, 5
      %v727 = vor.u32 %v723, %v726
      %v728 = vrot.slane %v727, 4
      %v730 = vshll.u32 %v618, 16
      %v732 = vrot.slane %v730, 5
      %v733 = vsel %vm621, %v728, %v732
      %v734 = vunpack.c.l.b16 %v635
      %v735 = vunpack.c.l.b16 %v649
      %v736 = vunpack.c.l.b16 %v663
      %v737 = vunpack.c.l.b16 %v677
      %v738 = vunpack.c.l.b16 %v691
      %v739 = vunpack.c.l.b16 %v705
      %v740 = vunpack.c.l.b16 %v719
      %v741 = vunpack.c.l.b16 %v733
      %v742 = vpack.c.b16 %v735, %v734
      %v743 = vpack.c.b16 %v737, %v736
      %v744 = vpack.c.b16 %v739, %v738
      %v745 = vpack.c.b16 %v741, %v740
      %750 = vst [vmem:[#allocation3 + $0x8] sm:$0xff] %v742
      %751 = vst [vmem:[#allocation3 + $0x50] sm:$0xff] %v743
      %752 = vst [vmem:[#allocation3 + $0x98] sm:$0xff] %v744
      %753 = vst [vmem:[#allocation3 + $0xe0] sm:$0xff] %v745
      %v754 = vld [vmem:[#allocation2] sm:$0xe]
      %v755 = vld [vmem:[#allocation2 + $0x4] sm:$0x1]
      %v756 = vld [vmem:[#allocation2 + $0x8] sm:$0xe]
      %v757 = vld [vmem:[#allocation2 + $0xc] sm:$0x1]
      %v758 = vld [vmem:[#allocation2 + $0x10] sm:$0xe]
      %v759 = vld [vmem:[#allocation2 + $0x14] sm:$0x1]
      %v760 = vld [vmem:[#allocation2 + $0x18] sm:$0xe]
      %v761 = vld [vmem:[#allocation2 + $0x1c] sm:$0x1]
      %v762 = vld [vmem:[#allocation2 + $0x20] sm:$0xe]
      %v763 = vld [vmem:[#allocation2 + $0x24] sm:$0x1]
      %v764 = vld [vmem:[#allocation2 + $0x28] sm:$0xe]
      %v765 = vld [vmem:[#allocation2 + $0x2c] sm:$0x1]
      %v766 = vld [vmem:[#allocation2 + $0x30] sm:$0xe]
      %v767 = vld [vmem:[#allocation2 + $0x34] sm:$0x1]
      %v768 = vld [vmem:[#allocation2 + $0x38] sm:$0xe]
      %v769 = vld [vmem:[#allocation2 + $0x3c] sm:$0x1]
      %vm786 = vcmask 1042432
      %vm787 = vcmask 1046532
      %vm788 = vmor %vm786, %vm787
      %v789 = vrot.slane %v754, 5
      %v790 = vrot.slane %v789, 4
      %v791 = vrot.slane %v755, 5
      %v792 = vsel %vm788, %v790, %v791
      %v793 = vrot.slane %v756, 5
      %v794 = vrot.slane %v793, 4
      %v795 = vrot.slane %v757, 5
      %v796 = vsel %vm788, %v794, %v795
      %v797 = vrot.slane %v758, 5
      %v798 = vrot.slane %v797, 4
      %v799 = vrot.slane %v759, 5
      %v800 = vsel %vm788, %v798, %v799
      %v801 = vrot.slane %v760, 5
      %v802 = vrot.slane %v801, 4
      %v803 = vrot.slane %v761, 5
      %v804 = vsel %vm788, %v802, %v803
      %v805 = vrot.slane %v762, 5
      %v806 = vrot.slane %v805, 4
      %v807 = vrot.slane %v763, 5
      %v808 = vsel %vm788, %v806, %v807
      %v809 = vrot.slane %v764, 5
      %v810 = vrot.slane %v809, 4
      %v811 = vrot.slane %v765, 5
      %v812 = vsel %vm788, %v810, %v811
      %v813 = vrot.slane %v766, 5
      %v814 = vrot.slane %v813, 4
      %v815 = vrot.slane %v767, 5
      %v816 = vsel %vm788, %v814, %v815
      %v817 = vrot.slane %v768, 5
      %v818 = vrot.slane %v817, 4
      %v819 = vrot.slane %v769, 5
      %v820 = vsel %vm788, %v818, %v819
      %v821 = vunpack.c.l.b16 %v792
      %v822 = vunpack.c.l.b16 %v796
      %v823 = vunpack.c.l.b16 %v800
      %v824 = vunpack.c.l.b16 %v804
      %v825 = vunpack.c.l.b16 %v808
      %v826 = vunpack.c.l.b16 %v812
      %v827 = vunpack.c.l.b16 %v816
      %v828 = vunpack.c.l.b16 %v820
      %v829 = vpack.c.b16 %v822, %v821
      %v830 = vpack.c.b16 %v824, %v823
      %v831 = vpack.c.b16 %v826, %v825
      %v832 = vpack.c.b16 %v828, %v827
      %837 = vst [vmem:[#allocation3 + $0x10] sm:$0xff] %v829
      %838 = vst [vmem:[#allocation3 + $0x58] sm:$0xff] %v830
      %839 = vst [vmem:[#allocation3 + $0xa0] sm:$0xff] %v831
      %840 = vst [vmem:[#allocation3 + $0xe8] sm:$0xff] %v832
      %v841 = vld [vmem:[%s516] sm:$0xf]
      %v842 = vld [vmem:[%s516 + $0x8] sm:$0xf]
      %v843 = vld [vmem:[%s516 + $0x10] sm:$0xf]
      %v844 = vld [vmem:[%s516 + $0x18] sm:$0xf]
      %v845 = vld [vmem:[%s516 + $0x20] sm:$0xf]
      %v846 = vld [vmem:[%s516 + $0x28] sm:$0xf]
      %v847 = vld [vmem:[%s516 + $0x30] sm:$0xf]
      %v848 = vld [vmem:[%s516 + $0x38] sm:$0xf]
      %v857 = vunpack.c.l.b16 %v841
      %v858 = vunpack.c.l.b16 %v842
      %v859 = vunpack.c.l.b16 %v843
      %v860 = vunpack.c.l.b16 %v844
      %v861 = vunpack.c.l.b16 %v845
      %v862 = vunpack.c.l.b16 %v846
      %v863 = vunpack.c.l.b16 %v847
      %v864 = vunpack.c.l.b16 %v848
      %v865 = vpack.c.b16 %v858, %v857
      %v866 = vpack.c.b16 %v860, %v859
      %v867 = vpack.c.b16 %v862, %v861
      %v868 = vpack.c.b16 %v864, %v863
      %873 = vst [vmem:[#allocation3 + $0x18] sm:$0xff] %v865
      %874 = vst [vmem:[#allocation3 + $0x60] sm:$0xff] %v866
      %875 = vst [vmem:[#allocation3 + $0xa8] sm:$0xff] %v867
      %876 = vst [vmem:[#allocation3 + $0xf0] sm:$0xff] %v868
      %v877 = vld [vmem:[%s516] sm:$0xf]
      %v878 = vld [vmem:[%s516 + $0x4] sm:$0x1]
      %v879 = vld [vmem:[%s516 + $0x8] sm:$0xf]
      %v880 = vld [vmem:[%s516 + $0xc] sm:$0x1]
      %v881 = vld [vmem:[%s516 + $0x10] sm:$0xf]
      %v882 = vld [vmem:[%s516 + $0x14] sm:$0x1]
      %v883 = vld [vmem:[%s516 + $0x18] sm:$0xf]
      %v884 = vld [vmem:[%s516 + $0x1c] sm:$0x1]
      %v885 = vld [vmem:[%s516 + $0x20] sm:$0xf]
      %v886 = vld [vmem:[%s516 + $0x24] sm:$0x1]
      %v887 = vld [vmem:[%s516 + $0x28] sm:$0xf]
      %v888 = vld [vmem:[%s516 + $0x2c] sm:$0x1]
      %v889 = vld [vmem:[%s516 + $0x30] sm:$0xf]
      %v890 = vld [vmem:[%s516 + $0x34] sm:$0x1]
      %v891 = vld [vmem:[%s516 + $0x38] sm:$0xf]
      %v892 = vld [vmem:[%s516 + $0x3c] sm:$0x1]
      %v894 = vshrl.u32 %v877, 16
      %v896 = vrot.slane %v894, 4
      %v897 = vshll.u32 %v877, 16
      %v899 = vrot.slane %v897, 5
      %v900 = vor.u32 %v896, %v899
      %v901 = vrot.slane %v900, 4
      %v903 = vshll.u32 %v878, 16
      %v905 = vrot.slane %v903, 5
      %v906 = vsel %vm621, %v901, %v905
      %v908 = vshrl.u32 %v879, 16
      %v910 = vrot.slane %v908, 4
      %v911 = vshll.u32 %v879, 16
      %v913 = vrot.slane %v911, 5
      %v914 = vor.u32 %v910, %v913
      %v915 = vrot.slane %v914, 4
      %v917 = vshll.u32 %v880, 16
      %v919 = vrot.slane %v917, 5
      %v920 = vsel %vm621, %v915, %v919
      %v922 = vshrl.u32 %v881, 16
      %v924 = vrot.slane %v922, 4
      %v925 = vshll.u32 %v881, 16
      %v927 = vrot.slane %v925, 5
      %v928 = vor.u32 %v924, %v927
      %v929 = vrot.slane %v928, 4
      %v931 = vshll.u32 %v882, 16
      %v933 = vrot.slane %v931, 5
      %v934 = vsel %vm621, %v929, %v933
      %v936 = vshrl.u32 %v883, 16
      %v938 = vrot.slane %v936, 4
      %v939 = vshll.u32 %v883, 16
      %v941 = vrot.slane %v939, 5
      %v942 = vor.u32 %v938, %v941
      %v943 = vrot.slane %v942, 4
      %v945 = vshll.u32 %v884, 16
      %v947 = vrot.slane %v945, 5
      %v948 = vsel %vm621, %v943, %v947
      %v950 = vshrl.u32 %v885, 16
      %v952 = vrot.slane %v950, 4
      %v953 = vshll.u32 %v885, 16
      %v955 = vrot.slane %v953, 5
      %v956 = vor.u32 %v952, %v955
      %v957 = vrot.slane %v956, 4
      %v959 = vshll.u32 %v886, 16
      %v961 = vrot.slane %v959, 5
      %v962 = vsel %vm621, %v957, %v961
      %v964 = vshrl.u32 %v887, 16
      %v966 = vrot.slane %v964, 4
      %v967 = vshll.u32 %v887, 16
      %v969 = vrot.slane %v967, 5
      %v970 = vor.u32 %v966, %v969
      %v971 = vrot.slane %v970, 4
      %v973 = vshll.u32 %v888, 16
      %v975 = vrot.slane %v973, 5
      %v976 = vsel %vm621, %v971, %v975
      %v978 = vshrl.u32 %v889, 16
      %v980 = vrot.slane %v978, 4
      %v981 = vshll.u32 %v889, 16
      %v983 = vrot.slane %v981, 5
      %v984 = vor.u32 %v980, %v983
      %v985 = vrot.slane %v984, 4
      %v987 = vshll.u32 %v890, 16
      %v989 = vrot.slane %v987, 5
      %v990 = vsel %vm621, %v985, %v989
      %v992 = vshrl.u32 %v891, 16
      %v994 = vrot.slane %v992, 4
      %v995 = vshll.u32 %v891, 16
      %v997 = vrot.slane %v995, 5
      %v998 = vor.u32 %v994, %v997
      %v999 = vrot.slane %v998, 4
      %v1001 = vshll.u32 %v892, 16
      %v1003 = vrot.slane %v1001, 5
      %v1004 = vsel %vm621, %v999, %v1003
      %v1005 = vunpack.c.l.b16 %v906
      %v1006 = vunpack.c.l.b16 %v920
      %v1007 = vunpack.c.l.b16 %v934
      %v1008 = vunpack.c.l.b16 %v948
      %v1009 = vunpack.c.l.b16 %v962
      %v1010 = vunpack.c.l.b16 %v976
      %v1011 = vunpack.c.l.b16 %v990
      %v1012 = vunpack.c.l.b16 %v1004
      %v1013 = vpack.c.b16 %v1006, %v1005
      %v1014 = vpack.c.b16 %v1008, %v1007
      %v1015 = vpack.c.b16 %v1010, %v1009
      %v1016 = vpack.c.b16 %v1012, %v1011
      %1021 = vst [vmem:[#allocation3 + $0x20] sm:$0xff] %v1013
      %1022 = vst [vmem:[#allocation3 + $0x68] sm:$0xff] %v1014
      %1023 = vst [vmem:[#allocation3 + $0xb0] sm:$0xff] %v1015
      %1024 = vst [vmem:[#allocation3 + $0xf8] sm:$0xff] %v1016
      %v1025 = vld [vmem:[%s516] sm:$0xe]
      %v1026 = vld [vmem:[%s516 + $0x4] sm:$0x1]
      %v1027 = vld [vmem:[%s516 + $0x8] sm:$0xe]
      %v1028 = vld [vmem:[%s516 + $0xc] sm:$0x1]
      %v1029 = vld [vmem:[%s516 + $0x10] sm:$0xe]
      %v1030 = vld [vmem:[%s516 + $0x14] sm:$0x1]
      %v1031 = vld [vmem:[%s516 + $0x18] sm:$0xe]
      %v1032 = vld [vmem:[%s516 + $0x1c] sm:$0x1]
      %v1033 = vld [vmem:[%s516 + $0x20] sm:$0xe]
      %v1034 = vld [vmem:[%s516 + $0x24] sm:$0x1]
      %v1035 = vld [vmem:[%s516 + $0x28] sm:$0xe]
      %v1036 = vld [vmem:[%s516 + $0x2c] sm:$0x1]
      %v1037 = vld [vmem:[%s516 + $0x30] sm:$0xe]
      %v1038 = vld [vmem:[%s516 + $0x34] sm:$0x1]
      %v1039 = vld [vmem:[%s516 + $0x38] sm:$0xe]
      %v1040 = vld [vmem:[%s516 + $0x3c] sm:$0x1]
      %v1057 = vrot.slane %v1025, 5
      %v1058 = vrot.slane %v1057, 4
      %v1059 = vrot.slane %v1026, 5
      %v1060 = vsel %vm788, %v1058, %v1059
      %v1061 = vrot.slane %v1027, 5
      %v1062 = vrot.slane %v1061, 4
      %v1063 = vrot.slane %v1028, 5
      %v1064 = vsel %vm788, %v1062, %v1063
      %v1065 = vrot.slane %v1029, 5
      %v1066 = vrot.slane %v1065, 4
      %v1067 = vrot.slane %v1030, 5
      %v1068 = vsel %vm788, %v1066, %v1067
      %v1069 = vrot.slane %v1031, 5
      %v1070 = vrot.slane %v1069, 4
      %v1071 = vrot.slane %v1032, 5
      %v1072 = vsel %vm788, %v1070, %v1071
      %v1073 = vrot.slane %v1033, 5
      %v1074 = vrot.slane %v1073, 4
      %v1075 = vrot.slane %v1034, 5
      %v1076 = vsel %vm788, %v1074, %v1075
      %v1077 = vrot.slane %v1035, 5
      %v1078 = vrot.slane %v1077, 4
      %v1079 = vrot.slane %v1036, 5
      %v1080 = vsel %vm788, %v1078, %v1079
      %v1081 = vrot.slane %v1037, 5
      %v1082 = vrot.slane %v1081, 4
      %v1083 = vrot.slane %v1038, 5
      %v1084 = vsel %vm788, %v1082, %v1083
      %v1085 = vrot.slane %v1039, 5
      %v1086 = vrot.slane %v1085, 4
      %v1087 = vrot.slane %v1040, 5
      %v1088 = vsel %vm788, %v1086, %v1087
      %v1089 = vunpack.c.l.b16 %v1060
      %v1090 = vunpack.c.l.b16 %v1064
      %v1091 = vunpack.c.l.b16 %v1068
      %v1092 = vunpack.c.l.b16 %v1072
      %v1093 = vunpack.c.l.b16 %v1076
      %v1094 = vunpack.c.l.b16 %v1080
      %v1095 = vunpack.c.l.b16 %v1084
      %v1096 = vunpack.c.l.b16 %v1088
      %v1097 = vpack.c.b16 %v1090, %v1089
      %v1098 = vpack.c.b16 %v1092, %v1091
      %v1099 = vpack.c.b16 %v1094, %v1093
      %v1100 = vpack.c.b16 %v1096, %v1095
      %1105 = vst [vmem:[#allocation3 + $0x28] sm:$0xff] %v1097
      %1106 = vst [vmem:[#allocation3 + $0x70] sm:$0xff] %v1098
      %1107 = vst [vmem:[#allocation3 + $0xb8] sm:$0xff] %v1099
      %1108 = vst [vmem:[#allocation3 + $0x100] sm:$0xff] %v1100
      %s1109 = scalar_lea.vmem [#allocation2], 16
      %v1110 = vld [vmem:[%s1109] sm:$0xf]
      %v1111 = vld [vmem:[%s1109 + $0x8] sm:$0xf]
      %v1112 = vld [vmem:[%s1109 + $0x10] sm:$0xf]
      %v1113 = vld [vmem:[%s1109 + $0x18] sm:$0xf]
      %v1114 = vld [vmem:[%s1109 + $0x20] sm:$0xf]
      %v1115 = vld [vmem:[%s1109 + $0x28] sm:$0xf]
      %v1116 = vld [vmem:[%s1109 + $0x30] sm:$0xf]
      %v1117 = vld [vmem:[%s1109 + $0x38] sm:$0xf]
      %v1126 = vunpack.c.l.b16 %v1110
      %v1127 = vunpack.c.l.b16 %v1111
      %v1128 = vunpack.c.l.b16 %v1112
      %v1129 = vunpack.c.l.b16 %v1113
      %v1130 = vunpack.c.l.b16 %v1114
      %v1131 = vunpack.c.l.b16 %v1115
      %v1132 = vunpack.c.l.b16 %v1116
      %v1133 = vunpack.c.l.b16 %v1117
      %v1134 = vpack.c.b16 %v1127, %v1126
      %v1135 = vpack.c.b16 %v1129, %v1128
      %v1136 = vpack.c.b16 %v1131, %v1130
      %v1137 = vpack.c.b16 %v1133, %v1132
      %1142 = vst [vmem:[#allocation3 + $0x30] sm:$0xff] %v1134
      %1143 = vst [vmem:[#allocation3 + $0x78] sm:$0xff] %v1135
      %1144 = vst [vmem:[#allocation3 + $0xc0] sm:$0xff] %v1136
      %1145 = vst [vmem:[#allocation3 + $0x108] sm:$0xff] %v1137
      %v1146 = vld [vmem:[%s1109] sm:$0xf]
      %v1147 = vld [vmem:[%s1109 + $0x4] sm:$0x1]
      %v1148 = vld [vmem:[%s1109 + $0x8] sm:$0xf]
      %v1149 = vld [vmem:[%s1109 + $0xc] sm:$0x1]
      %v1150 = vld [vmem:[%s1109 + $0x10] sm:$0xf]
      %v1151 = vld [vmem:[%s1109 + $0x14] sm:$0x1]
      %v1152 = vld [vmem:[%s1109 + $0x18] sm:$0xf]
      %v1153 = vld [vmem:[%s1109 + $0x1c] sm:$0x1]
      %v1154 = vld [vmem:[%s1109 + $0x20] sm:$0xf]
      %v1155 = vld [vmem:[%s1109 + $0x24] sm:$0x1]
      %v1156 = vld [vmem:[%s1109 + $0x28] sm:$0xf]
      %v1157 = vld [vmem:[%s1109 + $0x2c] sm:$0x1]
      %v1158 = vld [vmem:[%s1109 + $0x30] sm:$0xf]
      %v1159 = vld [vmem:[%s1109 + $0x34] sm:$0x1]
      %v1160 = vld [vmem:[%s1109 + $0x38] sm:$0xf]
      %v1161 = vld [vmem:[%s1109 + $0x3c] sm:$0x1]
      %v1163 = vshrl.u32 %v1146, 16
      %v1165 = vrot.slane %v1163, 4
      %v1166 = vshll.u32 %v1146, 16
      %v1168 = vrot.slane %v1166, 5
      %v1169 = vor.u32 %v1165, %v1168
      %v1170 = vrot.slane %v1169, 4
      %v1172 = vshll.u32 %v1147, 16
      %v1174 = vrot.slane %v1172, 5
      %v1175 = vsel %vm621, %v1170, %v1174
      %v1177 = vshrl.u32 %v1148, 16
      %v1179 = vrot.slane %v1177, 4
      %v1180 = vshll.u32 %v1148, 16
      %v1182 = vrot.slane %v1180, 5
      %v1183 = vor.u32 %v1179, %v1182
      %v1184 = vrot.slane %v1183, 4
      %v1186 = vshll.u32 %v1149, 16
      %v1188 = vrot.slane %v1186, 5
      %v1189 = vsel %vm621, %v1184, %v1188
      %v1191 = vshrl.u32 %v1150, 16
      %v1193 = vrot.slane %v1191, 4
      %v1194 = vshll.u32 %v1150, 16
      %v1196 = vrot.slane %v1194, 5
      %v1197 = vor.u32 %v1193, %v1196
      %v1198 = vrot.slane %v1197, 4
      %v1200 = vshll.u32 %v1151, 16
      %v1202 = vrot.slane %v1200, 5
      %v1203 = vsel %vm621, %v1198, %v1202
      %v1205 = vshrl.u32 %v1152, 16
      %v1207 = vrot.slane %v1205, 4
      %v1208 = vshll.u32 %v1152, 16
      %v1210 = vrot.slane %v1208, 5
      %v1211 = vor.u32 %v1207, %v1210
      %v1212 = vrot.slane %v1211, 4
      %v1214 = vshll.u32 %v1153, 16
      %v1216 = vrot.slane %v1214, 5
      %v1217 = vsel %vm621, %v1212, %v1216
      %v1219 = vshrl.u32 %v1154, 16
      %v1221 = vrot.slane %v1219, 4
      %v1222 = vshll.u32 %v1154, 16
      %v1224 = vrot.slane %v1222, 5
      %v1225 = vor.u32 %v1221, %v1224
      %v1226 = vrot.slane %v1225, 4
      %v1228 = vshll.u32 %v1155, 16
      %v1230 = vrot.slane %v1228, 5
      %v1231 = vsel %vm621, %v1226, %v1230
      %v1233 = vshrl.u32 %v1156, 16
      %v1235 = vrot.slane %v1233, 4
      %v1236 = vshll.u32 %v1156, 16
      %v1238 = vrot.slane %v1236, 5
      %v1239 = vor.u32 %v1235, %v1238
      %v1240 = vrot.slane %v1239, 4
      %v1242 = vshll.u32 %v1157, 16
      %v1244 = vrot.slane %v1242, 5
      %v1245 = vsel %vm621, %v1240, %v1244
      %v1247 = vshrl.u32 %v1158, 16
      %v1249 = vrot.slane %v1247, 4
      %v1250 = vshll.u32 %v1158, 16
      %v1252 = vrot.slane %v1250, 5
      %v1253 = vor.u32 %v1249, %v1252
      %v1254 = vrot.slane %v1253, 4
      %v1256 = vshll.u32 %v1159, 16
      %v1258 = vrot.slane %v1256, 5
      %v1259 = vsel %vm621, %v1254, %v1258
      %v1261 = vshrl.u32 %v1160, 16
      %v1263 = vrot.slane %v1261, 4
      %v1264 = vshll.u32 %v1160, 16
      %v1266 = vrot.slane %v1264, 5
      %v1267 = vor.u32 %v1263, %v1266
      %v1268 = vrot.slane %v1267, 4
      %v1270 = vshll.u32 %v1161, 16
      %v1272 = vrot.slane %v1270, 5
      %v1273 = vsel %vm621, %v1268, %v1272
      %v1274 = vunpack.c.l.b16 %v1175
      %v1275 = vunpack.c.l.b16 %v1189
      %v1276 = vunpack.c.l.b16 %v1203
      %v1277 = vunpack.c.l.b16 %v1217
      %v1278 = vunpack.c.l.b16 %v1231
      %v1279 = vunpack.c.l.b16 %v1245
      %v1280 = vunpack.c.l.b16 %v1259
      %v1281 = vunpack.c.l.b16 %v1273
      %v1282 = vpack.c.b16 %v1275, %v1274
      %v1283 = vpack.c.b16 %v1277, %v1276
      %v1284 = vpack.c.b16 %v1279, %v1278
      %v1285 = vpack.c.b16 %v1281, %v1280
      %1290 = vst [vmem:[#allocation3 + $0x38] sm:$0xff] %v1282
      %1291 = vst [vmem:[#allocation3 + $0x80] sm:$0xff] %v1283
      %1292 = vst [vmem:[#allocation3 + $0xc8] sm:$0xff] %v1284
      %1293 = vst [vmem:[#allocation3 + $0x110] sm:$0xff] %v1285
      %v1294 = vld [vmem:[%s1109] sm:$0xe]
      %v1295 = vld [vmem:[%s1109 + $0x4] sm:$0x1]
      %v1296 = vld [vmem:[%s1109 + $0x8] sm:$0xe]
      %v1297 = vld [vmem:[%s1109 + $0xc] sm:$0x1]
      %v1298 = vld [vmem:[%s1109 + $0x10] sm:$0xe]
      %v1299 = vld [vmem:[%s1109 + $0x14] sm:$0x1]
      %v1300 = vld [vmem:[%s1109 + $0x18] sm:$0xe]
      %v1301 = vld [vmem:[%s1109 + $0x1c] sm:$0x1]
      %v1302 = vld [vmem:[%s1109 + $0x20] sm:$0xe]
      %v1303 = vld [vmem:[%s1109 + $0x24] sm:$0x1]
      %v1304 = vld [vmem:[%s1109 + $0x28] sm:$0xe]
      %v1305 = vld [vmem:[%s1109 + $0x2c] sm:$0x1]
      %v1306 = vld [vmem:[%s1109 + $0x30] sm:$0xe]
      %v1307 = vld [vmem:[%s1109 + $0x34] sm:$0x1]
      %v1308 = vld [vmem:[%s1109 + $0x38] sm:$0xe]
      %v1309 = vld [vmem:[%s1109 + $0x3c] sm:$0x1]
      %v1326 = vrot.slane %v1294, 5
      %v1327 = vrot.slane %v1326, 4
      %v1328 = vrot.slane %v1295, 5
      %v1329 = vsel %vm788, %v1327, %v1328
      %v1330 = vrot.slane %v1296, 5
      %v1331 = vrot.slane %v1330, 4
      %v1332 = vrot.slane %v1297, 5
      %v1333 = vsel %vm788, %v1331, %v1332
      %v1334 = vrot.slane %v1298, 5
      %v1335 = vrot.slane %v1334, 4
      %v1336 = vrot.slane %v1299, 5
      %v1337 = vsel %vm788, %v1335, %v1336
      %v1338 = vrot.slane %v1300, 5
      %v1339 = vrot.slane %v1338, 4
      %v1340 = vrot.slane %v1301, 5
      %v1341 = vsel %vm788, %v1339, %v1340
      %v1342 = vrot.slane %v1302, 5
      %v1343 = vrot.slane %v1342, 4
      %v1344 = vrot.slane %v1303, 5
      %v1345 = vsel %vm788, %v1343, %v1344
      %v1346 = vrot.slane %v1304, 5
      %v1347 = vrot.slane %v1346, 4
      %v1348 = vrot.slane %v1305, 5
      %v1349 = vsel %vm788, %v1347, %v1348
      %v1350 = vrot.slane %v1306, 5
      %v1351 = vrot.slane %v1350, 4
      %v1352 = vrot.slane %v1307, 5
      %v1353 = vsel %vm788, %v1351, %v1352
      %v1354 = vrot.slane %v1308, 5
      %v1355 = vrot.slane %v1354, 4
      %v1356 = vrot.slane %v1309, 5
      %v1357 = vsel %vm788, %v1355, %v1356
      %v1358 = vunpack.c.l.b16 %v1329
      %v1359 = vunpack.c.l.b16 %v1333
      %v1360 = vunpack.c.l.b16 %v1337
      %v1361 = vunpack.c.l.b16 %v1341
      %v1362 = vunpack.c.l.b16 %v1345
      %v1363 = vunpack.c.l.b16 %v1349
      %v1364 = vunpack.c.l.b16 %v1353
      %v1365 = vunpack.c.l.b16 %v1357
      %v1366 = vpack.c.b16 %v1359, %v1358
      %v1367 = vpack.c.b16 %v1361, %v1360
      %v1368 = vpack.c.b16 %v1363, %v1362
      %v1369 = vpack.c.b16 %v1365, %v1364
      %1374 = vst [vmem:[#allocation3 + $0x40] sm:$0xff] %v1366
      %1375 = vst [vmem:[#allocation3 + $0x88] sm:$0xff] %v1367
      %1376 = vst [vmem:[#allocation3 + $0xd0] sm:$0xff] %v1368
      %1377 = vst [vmem:[#allocation3 + $0x118] sm:$0xff] %v1369
      %v1378 = vld [vmem:[#allocation3] sm:$0xff]
      %v1379 = vld [vmem:[#allocation3 + $0x8] sm:$0xff]
      %v1380 = vld [vmem:[#allocation3 + $0x10] sm:$0xff]
      %v1381 = vld [vmem:[#allocation3 + $0x18] sm:$0xff]
      %v1382 = vld [vmem:[#allocation3 + $0x20] sm:$0xff]
      %v1383 = vld [vmem:[#allocation3 + $0x28] sm:$0xff]
      %v1384 = vld [vmem:[#allocation3 + $0x30] sm:$0xff]
      %v1385 = vld [vmem:[#allocation3 + $0x38] sm:$0xff]
      %v1386 = vld [vmem:[#allocation3 + $0x40] sm:$0xff]
      %v1387 = vld [vmem:[#allocation3 + $0x48] sm:$0xff]
      %v1388 = vld [vmem:[#allocation3 + $0x50] sm:$0xff]
      %v1389 = vld [vmem:[#allocation3 + $0x58] sm:$0xff]
      %v1390 = vld [vmem:[#allocation3 + $0x60] sm:$0xff]
      %v1391 = vld [vmem:[#allocation3 + $0x68] sm:$0xff]
      %v1392 = vld [vmem:[#allocation3 + $0x70] sm:$0xff]
      %v1393 = vld [vmem:[#allocation3 + $0x78] sm:$0xff]
      %v1394 = vld [vmem:[#allocation3 + $0x80] sm:$0xff]
      %v1395 = vld [vmem:[#allocation3 + $0x88] sm:$0xff]
      %v1396 = vld [vmem:[#allocation3 + $0x90] sm:$0xff]
      %v1397 = vld [vmem:[#allocation3 + $0x98] sm:$0xff]
      %v1398 = vld [vmem:[#allocation3 + $0xa0] sm:$0xff]
      %v1399 = vld [vmem:[#allocation3 + $0xa8] sm:$0xff]
      %v1400 = vld [vmem:[#allocation3 + $0xb0] sm:$0xff]
      %v1401 = vld [vmem:[#allocation3 + $0xb8] sm:$0xff]
      %v1402 = vld [vmem:[#allocation3 + $0xc0] sm:$0xff]
      %v1403 = vld [vmem:[#allocation3 + $0xc8] sm:$0xff]
      %v1404 = vld [vmem:[#allocation3 + $0xd0] sm:$0xff]
      %v1405 = vld [vmem:[#allocation3 + $0xd8] sm:$0xff]
      %v1406 = vld [vmem:[#allocation3 + $0xe0] sm:$0xff]
      %v1407 = vld [vmem:[#allocation3 + $0xe8] sm:$0xff]
      %v1408 = vld [vmem:[#allocation3 + $0xf0] sm:$0xff]
      %v1409 = vld [vmem:[#allocation3 + $0xf8] sm:$0xff]
      %v1410 = vld [vmem:[#allocation3 + $0x100] sm:$0xff]
      %v1411 = vld [vmem:[#allocation3 + $0x108] sm:$0xff]
      %v1412 = vld [vmem:[#allocation3 + $0x110] sm:$0xff]
      %v1413 = vld [vmem:[#allocation3 + $0x118] sm:$0xff]
      %v1414 = vld [vmem:[%s1] sm:$0xf]
      %v1415 = vld [vmem:[%s1 + $0x4] sm:$0xf]
      %v1416 = vld [vmem:[%s1 + $0x8] sm:$0xf]
      %v1417 = vld [vmem:[%s1 + $0xc] sm:$0xf]
      %v1418 = vld [vmem:[%s1 + $0x10] sm:$0xf]
      %v1419 = vld [vmem:[%s1 + $0x14] sm:$0xf]
      %v1420 = vld [vmem:[%s1 + $0x18] sm:$0xf]
      %v1421 = vld [vmem:[%s1 + $0x1c] sm:$0xf]
      %v1422 = vld [vmem:[%s1 + $0x20] sm:$0xf]
      %v1423 = vld [vmem:[%s1 + $0x24] sm:$0xf]
      %v1424 = vld [vmem:[%s1 + $0x28] sm:$0xf]
      %v1425 = vld [vmem:[%s1 + $0x2c] sm:$0xf]
      %v1426 = vld [vmem:[%s1 + $0x30] sm:$0xf]
      %v1427 = vld [vmem:[%s1 + $0x34] sm:$0xf]
      %v1428 = vld [vmem:[%s1 + $0x38] sm:$0xf]
      %v1429 = vld [vmem:[%s1 + $0x3c] sm:$0xf]
      %v1430 = vld [vmem:[%s1 + $0x40] sm:$0xf]
      %v1431 = vld [vmem:[%s1 + $0x44] sm:$0xf]
      %v1432 = vld [vmem:[%s1 + $0x48] sm:$0xf]
      %v1433 = vld [vmem:[%s1 + $0x4c] sm:$0xf]
      %v1434 = vld [vmem:[%s1 + $0x50] sm:$0xf]
      %v1435 = vld [vmem:[%s1 + $0x54] sm:$0xf]
      %v1436 = vld [vmem:[%s1 + $0x58] sm:$0xf]
      %v1437 = vld [vmem:[%s1 + $0x5c] sm:$0xf]
      %v1438 = vld [vmem:[%s1 + $0x60] sm:$0xf]
      %v1439 = vld [vmem:[%s1 + $0x64] sm:$0xf]
      %v1440 = vld [vmem:[%s1 + $0x68] sm:$0xf]
      %v1441 = vld [vmem:[%s1 + $0x6c] sm:$0xf]
      %v1442 = vld [vmem:[%s1 + $0x70] sm:$0xf]
      %v1443 = vld [vmem:[%s1 + $0x74] sm:$0xf]
      %v1444 = vld [vmem:[%s1 + $0x78] sm:$0xf]
      %v1445 = vld [vmem:[%s1 + $0x7c] sm:$0xf]
      %v1446 = vld [vmem:[%s1 + $0x80] sm:$0xf]
      %v1447 = vld [vmem:[%s1 + $0x84] sm:$0xf]
      %v1448 = vld [vmem:[%s1 + $0x88] sm:$0xf]
      %v1449 = vld [vmem:[%s1 + $0x8c] sm:$0xf]
      %v1450 = vld [vmem:[%s1 + $0x90] sm:$0xf]
      %v1451 = vld [vmem:[%s1 + $0x94] sm:$0xf]
      %v1452 = vld [vmem:[%s1 + $0x98] sm:$0xf]
      %v1453 = vld [vmem:[%s1 + $0x9c] sm:$0xf]
      %v1454 = vld [vmem:[%s1 + $0xa0] sm:$0xf]
      %v1455 = vld [vmem:[%s1 + $0xa4] sm:$0xf]
      %v1456 = vld [vmem:[%s1 + $0xa8] sm:$0xf]
      %v1457 = vld [vmem:[%s1 + $0xac] sm:$0xf]
      %v1458 = vld [vmem:[%s1 + $0xb0] sm:$0xf]
      %v1459 = vld [vmem:[%s1 + $0xb4] sm:$0xf]
      %v1460 = vld [vmem:[%s1 + $0xb8] sm:$0xf]
      %v1461 = vld [vmem:[%s1 + $0xbc] sm:$0xf]
      %v1462 = vld [vmem:[%s1 + $0xc0] sm:$0xf]
      %v1463 = vld [vmem:[%s1 + $0xc4] sm:$0xf]
      %v1464 = vld [vmem:[%s1 + $0xc8] sm:$0xf]
      %v1465 = vld [vmem:[%s1 + $0xcc] sm:$0xf]
      %v1466 = vld [vmem:[%s1 + $0xd0] sm:$0xf]
      %v1467 = vld [vmem:[%s1 + $0xd4] sm:$0xf]
      %v1468 = vld [vmem:[%s1 + $0xd8] sm:$0xf]
      %v1469 = vld [vmem:[%s1 + $0xdc] sm:$0xf]
      %v1470 = vld [vmem:[%s1 + $0xe0] sm:$0xf]
      %v1471 = vld [vmem:[%s1 + $0xe4] sm:$0xf]
      %v1472 = vld [vmem:[%s1 + $0xe8] sm:$0xf]
      %v1473 = vld [vmem:[%s1 + $0xec] sm:$0xf]
      %v1474 = vld [vmem:[%s1 + $0xf0] sm:$0xf]
      %v1475 = vld [vmem:[%s1 + $0xf4] sm:$0xf]
      %v1476 = vld [vmem:[%s1 + $0xf8] sm:$0xf]
      %v1477 = vld [vmem:[%s1 + $0xfc] sm:$0xf]
      %v1478 = vld [vmem:[%s1 + $0x100] sm:$0xf]
      %v1479 = vld [vmem:[%s1 + $0x104] sm:$0xf]
      %v1480 = vld [vmem:[%s1 + $0x108] sm:$0xf]
      %v1481 = vld [vmem:[%s1 + $0x10c] sm:$0xf]
      %v1482 = vld [vmem:[%s1 + $0x110] sm:$0xf]
      %v1483 = vld [vmem:[%s1 + $0x114] sm:$0xf]
      %v1484 = vld [vmem:[%s1 + $0x118] sm:$0xf]
      %v1485 = vld [vmem:[%s1 + $0x11c] sm:$0xf]
      %v1486 = vld [vmem:[%s1 + $0x120] sm:$0xf]
      %v1487 = vld [vmem:[%s1 + $0x124] sm:$0xf]
      %v1488 = vld [vmem:[%s1 + $0x128] sm:$0xf]
      %v1489 = vld [vmem:[%s1 + $0x12c] sm:$0xf]
      %v1490 = vld [vmem:[%s1 + $0x130] sm:$0xf]
      %v1491 = vld [vmem:[%s1 + $0x134] sm:$0xf]
      %v1492 = vld [vmem:[%s1 + $0x138] sm:$0xf]
      %v1493 = vld [vmem:[%s1 + $0x13c] sm:$0xf]
      %v1494 = vld [vmem:[%s1 + $0x140] sm:$0xf]
      %v1495 = vld [vmem:[%s1 + $0x144] sm:$0xf]
      %v1496 = vld [vmem:[%s1 + $0x148] sm:$0xf]
      %v1497 = vld [vmem:[%s1 + $0x14c] sm:$0xf]
      %v1498 = vld [vmem:[%s1 + $0x150] sm:$0xf]
      %v1499 = vld [vmem:[%s1 + $0x154] sm:$0xf]
      %v1500 = vld [vmem:[%s1 + $0x158] sm:$0xf]
      %v1501 = vld [vmem:[%s1 + $0x15c] sm:$0xf]
      %v1502 = vld [vmem:[%s1 + $0x160] sm:$0xf]
      %v1503 = vld [vmem:[%s1 + $0x164] sm:$0xf]
      %v1504 = vld [vmem:[%s1 + $0x168] sm:$0xf]
      %v1505 = vld [vmem:[%s1 + $0x16c] sm:$0xf]
      %v1506 = vld [vmem:[%s1 + $0x170] sm:$0xf]
      %v1507 = vld [vmem:[%s1 + $0x174] sm:$0xf]
      %v1508 = vld [vmem:[%s1 + $0x178] sm:$0xf]
      %v1509 = vld [vmem:[%s1 + $0x17c] sm:$0xf]
      %v1510 = vld [vmem:[%s1 + $0x180] sm:$0xf]
      %v1511 = vld [vmem:[%s1 + $0x184] sm:$0xf]
      %v1512 = vld [vmem:[%s1 + $0x188] sm:$0xf]
      %v1513 = vld [vmem:[%s1 + $0x18c] sm:$0xf]
      %v1514 = vld [vmem:[%s1 + $0x190] sm:$0xf]
      %v1515 = vld [vmem:[%s1 + $0x194] sm:$0xf]
      %v1516 = vld [vmem:[%s1 + $0x198] sm:$0xf]
      %v1517 = vld [vmem:[%s1 + $0x19c] sm:$0xf]
      %v1518 = vld [vmem:[%s1 + $0x1a0] sm:$0xf]
      %v1519 = vld [vmem:[%s1 + $0x1a4] sm:$0xf]
      %v1520 = vld [vmem:[%s1 + $0x1a8] sm:$0xf]
      %v1521 = vld [vmem:[%s1 + $0x1ac] sm:$0xf]
      %v1522 = vld [vmem:[%s1 + $0x1b0] sm:$0xf]
      %v1523 = vld [vmem:[%s1 + $0x1b4] sm:$0xf]
      %v1524 = vld [vmem:[%s1 + $0x1b8] sm:$0xf]
      %v1525 = vld [vmem:[%s1 + $0x1bc] sm:$0xf]
      %v1526 = vld [vmem:[%s1 + $0x1c0] sm:$0xf]
      %v1527 = vld [vmem:[%s1 + $0x1c4] sm:$0xf]
      %v1528 = vld [vmem:[%s1 + $0x1c8] sm:$0xf]
      %v1529 = vld [vmem:[%s1 + $0x1cc] sm:$0xf]
      %v1530 = vld [vmem:[%s1 + $0x1d0] sm:$0xf]
      %v1531 = vld [vmem:[%s1 + $0x1d4] sm:$0xf]
      %v1532 = vld [vmem:[%s1 + $0x1d8] sm:$0xf]
      %v1533 = vld [vmem:[%s1 + $0x1dc] sm:$0xf]
      %v1534 = vld [vmem:[%s1 + $0x1e0] sm:$0xf]
      %v1535 = vld [vmem:[%s1 + $0x1e4] sm:$0xf]
      %v1536 = vld [vmem:[%s1 + $0x1e8] sm:$0xf]
      %v1537 = vld [vmem:[%s1 + $0x1ec] sm:$0xf]
      %v1538 = vld [vmem:[%s1 + $0x1f0] sm:$0xf]
      %v1539 = vld [vmem:[%s1 + $0x1f4] sm:$0xf]
      %v1540 = vld [vmem:[%s1 + $0x1f8] sm:$0xf]
      %v1541 = vld [vmem:[%s1 + $0x1fc] sm:$0xf]
      %v1542 = vld [vmem:[%s1 + $0x200] sm:$0xf]
      %v1543 = vld [vmem:[%s1 + $0x204] sm:$0xf]
      %v1544 = vld [vmem:[%s1 + $0x208] sm:$0xf]
      %v1545 = vld [vmem:[%s1 + $0x20c] sm:$0xf]
      %v1546 = vld [vmem:[%s1 + $0x210] sm:$0xf]
      %v1547 = vld [vmem:[%s1 + $0x214] sm:$0xf]
      %v1548 = vld [vmem:[%s1 + $0x218] sm:$0xf]
      %v1549 = vld [vmem:[%s1 + $0x21c] sm:$0xf]
      %v1550 = vld [vmem:[%s1 + $0x220] sm:$0xf]
      %v1551 = vld [vmem:[%s1 + $0x224] sm:$0xf]
      %v1552 = vld [vmem:[%s1 + $0x228] sm:$0xf]
      %v1553 = vld [vmem:[%s1 + $0x22c] sm:$0xf]
      %v1554 = vld [vmem:[%s1 + $0x230] sm:$0xf]
      %v1555 = vld [vmem:[%s1 + $0x234] sm:$0xf]
      %v1556 = vld [vmem:[%s1 + $0x238] sm:$0xf]
      %v1557 = vld [vmem:[%s1 + $0x23c] sm:$0xf]
      %v1702 = vunpack.c.l.b16 %v1414
      %v1703 = vunpack.c.l.b16 %v1415
      %v1704 = vunpack.c.l.b16 %v1416
      %v1705 = vunpack.c.l.b16 %v1417
      %v1706 = vunpack.c.l.b16 %v1418
      %v1707 = vunpack.c.l.b16 %v1419
      %v1708 = vunpack.c.l.b16 %v1420
      %v1709 = vunpack.c.l.b16 %v1421
      %v1710 = vunpack.c.l.b16 %v1422
      %v1711 = vunpack.c.l.b16 %v1423
      %v1712 = vunpack.c.l.b16 %v1424
      %v1713 = vunpack.c.l.b16 %v1425
      %v1714 = vunpack.c.l.b16 %v1426
      %v1715 = vunpack.c.l.b16 %v1427
      %v1716 = vunpack.c.l.b16 %v1428
      %v1717 = vunpack.c.l.b16 %v1429
      %v1718 = vunpack.c.l.b16 %v1430
      %v1719 = vunpack.c.l.b16 %v1431
      %v1720 = vunpack.c.l.b16 %v1432
      %v1721 = vunpack.c.l.b16 %v1433
      %v1722 = vunpack.c.l.b16 %v1434
      %v1723 = vunpack.c.l.b16 %v1435
      %v1724 = vunpack.c.l.b16 %v1436
      %v1725 = vunpack.c.l.b16 %v1437
      %v1726 = vunpack.c.l.b16 %v1438
      %v1727 = vunpack.c.l.b16 %v1439
      %v1728 = vunpack.c.l.b16 %v1440
      %v1729 = vunpack.c.l.b16 %v1441
      %v1730 = vunpack.c.l.b16 %v1442
      %v1731 = vunpack.c.l.b16 %v1443
      %v1732 = vunpack.c.l.b16 %v1444
      %v1733 = vunpack.c.l.b16 %v1445
      %v1734 = vunpack.c.l.b16 %v1446
      %v1735 = vunpack.c.l.b16 %v1447
      %v1736 = vunpack.c.l.b16 %v1448
      %v1737 = vunpack.c.l.b16 %v1449
      %v1738 = vunpack.c.l.b16 %v1450
      %v1739 = vunpack.c.l.b16 %v1451
      %v1740 = vunpack.c.l.b16 %v1452
      %v1741 = vunpack.c.l.b16 %v1453
      %v1742 = vunpack.c.l.b16 %v1454
      %v1743 = vunpack.c.l.b16 %v1455
      %v1744 = vunpack.c.l.b16 %v1456
      %v1745 = vunpack.c.l.b16 %v1457
      %v1746 = vunpack.c.l.b16 %v1458
      %v1747 = vunpack.c.l.b16 %v1459
      %v1748 = vunpack.c.l.b16 %v1460
      %v1749 = vunpack.c.l.b16 %v1461
      %v1750 = vunpack.c.l.b16 %v1462
      %v1751 = vunpack.c.l.b16 %v1463
      %v1752 = vunpack.c.l.b16 %v1464
      %v1753 = vunpack.c.l.b16 %v1465
      %v1754 = vunpack.c.l.b16 %v1466
      %v1755 = vunpack.c.l.b16 %v1467
      %v1756 = vunpack.c.l.b16 %v1468
      %v1757 = vunpack.c.l.b16 %v1469
      %v1758 = vunpack.c.l.b16 %v1470
      %v1759 = vunpack.c.l.b16 %v1471
      %v1760 = vunpack.c.l.b16 %v1472
      %v1761 = vunpack.c.l.b16 %v1473
      %v1762 = vunpack.c.l.b16 %v1474
      %v1763 = vunpack.c.l.b16 %v1475
      %v1764 = vunpack.c.l.b16 %v1476
      %v1765 = vunpack.c.l.b16 %v1477
      %v1766 = vunpack.c.l.b16 %v1478
      %v1767 = vunpack.c.l.b16 %v1479
      %v1768 = vunpack.c.l.b16 %v1480
      %v1769 = vunpack.c.l.b16 %v1481
      %v1770 = vunpack.c.l.b16 %v1482
      %v1771 = vunpack.c.l.b16 %v1483
      %v1772 = vunpack.c.l.b16 %v1484
      %v1773 = vunpack.c.l.b16 %v1485
      %v1774 = vunpack.c.l.b16 %v1486
      %v1775 = vunpack.c.l.b16 %v1487
      %v1776 = vunpack.c.l.b16 %v1488
      %v1777 = vunpack.c.l.b16 %v1489
      %v1778 = vunpack.c.l.b16 %v1490
      %v1779 = vunpack.c.l.b16 %v1491
      %v1780 = vunpack.c.l.b16 %v1492
      %v1781 = vunpack.c.l.b16 %v1493
      %v1782 = vunpack.c.l.b16 %v1494
      %v1783 = vunpack.c.l.b16 %v1495
      %v1784 = vunpack.c.l.b16 %v1496
      %v1785 = vunpack.c.l.b16 %v1497
      %v1786 = vunpack.c.l.b16 %v1498
      %v1787 = vunpack.c.l.b16 %v1499
      %v1788 = vunpack.c.l.b16 %v1500
      %v1789 = vunpack.c.l.b16 %v1501
      %v1790 = vunpack.c.l.b16 %v1502
      %v1791 = vunpack.c.l.b16 %v1503
      %v1792 = vunpack.c.l.b16 %v1504
      %v1793 = vunpack.c.l.b16 %v1505
      %v1794 = vunpack.c.l.b16 %v1506
      %v1795 = vunpack.c.l.b16 %v1507
      %v1796 = vunpack.c.l.b16 %v1508
      %v1797 = vunpack.c.l.b16 %v1509
      %v1798 = vunpack.c.l.b16 %v1510
      %v1799 = vunpack.c.l.b16 %v1511
      %v1800 = vunpack.c.l.b16 %v1512
      %v1801 = vunpack.c.l.b16 %v1513
      %v1802 = vunpack.c.l.b16 %v1514
      %v1803 = vunpack.c.l.b16 %v1515
      %v1804 = vunpack.c.l.b16 %v1516
      %v1805 = vunpack.c.l.b16 %v1517
      %v1806 = vunpack.c.l.b16 %v1518
      %v1807 = vunpack.c.l.b16 %v1519
      %v1808 = vunpack.c.l.b16 %v1520
      %v1809 = vunpack.c.l.b16 %v1521
      %v1810 = vunpack.c.l.b16 %v1522
      %v1811 = vunpack.c.l.b16 %v1523
      %v1812 = vunpack.c.l.b16 %v1524
      %v1813 = vunpack.c.l.b16 %v1525
      %v1814 = vunpack.c.l.b16 %v1526
      %v1815 = vunpack.c.l.b16 %v1527
      %v1816 = vunpack.c.l.b16 %v1528
      %v1817 = vunpack.c.l.b16 %v1529
      %v1818 = vunpack.c.l.b16 %v1530
      %v1819 = vunpack.c.l.b16 %v1531
      %v1820 = vunpack.c.l.b16 %v1532
      %v1821 = vunpack.c.l.b16 %v1533
      %v1822 = vunpack.c.l.b16 %v1534
      %v1823 = vunpack.c.l.b16 %v1535
      %v1824 = vunpack.c.l.b16 %v1536
      %v1825 = vunpack.c.l.b16 %v1537
      %v1826 = vunpack.c.l.b16 %v1538
      %v1827 = vunpack.c.l.b16 %v1539
      %v1828 = vunpack.c.l.b16 %v1540
      %v1829 = vunpack.c.l.b16 %v1541
      %v1830 = vunpack.c.l.b16 %v1542
      %v1831 = vunpack.c.l.b16 %v1543
      %v1832 = vunpack.c.l.b16 %v1544
      %v1833 = vunpack.c.l.b16 %v1545
      %v1834 = vunpack.c.l.b16 %v1546
      %v1835 = vunpack.c.l.b16 %v1547
      %v1836 = vunpack.c.l.b16 %v1548
      %v1837 = vunpack.c.l.b16 %v1549
      %v1838 = vunpack.c.l.b16 %v1550
      %v1839 = vunpack.c.l.b16 %v1551
      %v1840 = vunpack.c.l.b16 %v1552
      %v1841 = vunpack.c.l.b16 %v1553
      %v1842 = vunpack.c.l.b16 %v1554
      %v1843 = vunpack.c.l.b16 %v1555
      %v1844 = vunpack.c.l.b16 %v1556
      %v1845 = vunpack.c.l.b16 %v1557
      %v1846 = vpack.c.b16 %v1703, %v1702
      %v1847 = vpack.c.b16 %v1705, %v1704
      %v1848 = vpack.c.b16 %v1707, %v1706
      %v1849 = vpack.c.b16 %v1709, %v1708
      %v1850 = vpack.c.b16 %v1711, %v1710
      %v1851 = vpack.c.b16 %v1713, %v1712
      %v1852 = vpack.c.b16 %v1715, %v1714
      %v1853 = vpack.c.b16 %v1717, %v1716
      %v1854 = vpack.c.b16 %v1719, %v1718
      %v1855 = vpack.c.b16 %v1721, %v1720
      %v1856 = vpack.c.b16 %v1723, %v1722
      %v1857 = vpack.c.b16 %v1725, %v1724
      %v1858 = vpack.c.b16 %v1727, %v1726
      %v1859 = vpack.c.b16 %v1729, %v1728
      %v1860 = vpack.c.b16 %v1731, %v1730
      %v1861 = vpack.c.b16 %v1733, %v1732
      %v1862 = vpack.c.b16 %v1735, %v1734
      %v1863 = vpack.c.b16 %v1737, %v1736
      %v1864 = vpack.c.b16 %v1739, %v1738
      %v1865 = vpack.c.b16 %v1741, %v1740
      %v1866 = vpack.c.b16 %v1743, %v1742
      %v1867 = vpack.c.b16 %v1745, %v1744
      %v1868 = vpack.c.b16 %v1747, %v1746
      %v1869 = vpack.c.b16 %v1749, %v1748
      %v1870 = vpack.c.b16 %v1751, %v1750
      %v1871 = vpack.c.b16 %v1753, %v1752
      %v1872 = vpack.c.b16 %v1755, %v1754
      %v1873 = vpack.c.b16 %v1757, %v1756
      %v1874 = vpack.c.b16 %v1759, %v1758
      %v1875 = vpack.c.b16 %v1761, %v1760
      %v1876 = vpack.c.b16 %v1763, %v1762
      %v1877 = vpack.c.b16 %v1765, %v1764
      %v1878 = vpack.c.b16 %v1767, %v1766
      %v1879 = vpack.c.b16 %v1769, %v1768
      %v1880 = vpack.c.b16 %v1771, %v1770
      %v1881 = vpack.c.b16 %v1773, %v1772
      %v1882 = vpack.c.b16 %v1775, %v1774
      %v1883 = vpack.c.b16 %v1777, %v1776
      %v1884 = vpack.c.b16 %v1779, %v1778
      %v1885 = vpack.c.b16 %v1781, %v1780
      %v1886 = vpack.c.b16 %v1783, %v1782
      %v1887 = vpack.c.b16 %v1785, %v1784
      %v1888 = vpack.c.b16 %v1787, %v1786
      %v1889 = vpack.c.b16 %v1789, %v1788
      %v1890 = vpack.c.b16 %v1791, %v1790
      %v1891 = vpack.c.b16 %v1793, %v1792
      %v1892 = vpack.c.b16 %v1795, %v1794
      %v1893 = vpack.c.b16 %v1797, %v1796
      %v1894 = vpack.c.b16 %v1799, %v1798
      %v1895 = vpack.c.b16 %v1801, %v1800
      %v1896 = vpack.c.b16 %v1803, %v1802
      %v1897 = vpack.c.b16 %v1805, %v1804
      %v1898 = vpack.c.b16 %v1807, %v1806
      %v1899 = vpack.c.b16 %v1809, %v1808
      %v1900 = vpack.c.b16 %v1811, %v1810
      %v1901 = vpack.c.b16 %v1813, %v1812
      %v1902 = vpack.c.b16 %v1815, %v1814
      %v1903 = vpack.c.b16 %v1817, %v1816
      %v1904 = vpack.c.b16 %v1819, %v1818
      %v1905 = vpack.c.b16 %v1821, %v1820
      %v1906 = vpack.c.b16 %v1823, %v1822
      %v1907 = vpack.c.b16 %v1825, %v1824
      %v1908 = vpack.c.b16 %v1827, %v1826
      %v1909 = vpack.c.b16 %v1829, %v1828
      %v1910 = vpack.c.b16 %v1831, %v1830
      %v1911 = vpack.c.b16 %v1833, %v1832
      %v1912 = vpack.c.b16 %v1835, %v1834
      %v1913 = vpack.c.b16 %v1837, %v1836
      %v1914 = vpack.c.b16 %v1839, %v1838
      %v1915 = vpack.c.b16 %v1841, %v1840
      %v1916 = vpack.c.b16 %v1843, %v1842
      %v1917 = vpack.c.b16 %v1845, %v1844
      %1990 = vmatprep.subr.bf16.mxu0 0
      %1991 = vmatpush1.bf16.msra.mxu0 %v1846
      %1992 = vmatprep.subr.bf16.mxu0 0
      %1993 = vmatpush1.bf16.msra.mxu0 %v1847
      %1994 = vmatprep.subr.bf16.mxu0 0
      %1995 = vmatpush1.bf16.msra.mxu0 %v1848
      %1996 = vmatprep.subr.bf16.mxu0 0
      %1997 = vmatpush1.bf16.msra.mxu0 %v1849
      %1998 = vmatprep.subr.bf16.mxu0 0
      %1999 = vmatpush1.bf16.msra.mxu0 %v1850
      %2000 = vmatprep.subr.bf16.mxu0 0
      %2001 = vmatpush1.bf16.msra.mxu0 %v1851
      %2002 = vmatprep.subr.bf16.mxu0 0
      %2003 = vmatpush1.bf16.msra.mxu0 %v1852
      %2004 = vmatprep.subr.bf16.mxu0 0
      %2005 = vmatpush1.bf16.msra.mxu0 %v1853
      %2006 = vmatprep.subr.bf16.mxu0 0
      %2007 = vmatpush1.bf16.msra.mxu0 %v1854
      %2008 = vmatprep.subr.bf16.mxu0 0
      %2009 = vmatpush1.bf16.msra.mxu0 %v1855
      %2010 = vmatprep.subr.bf16.mxu0 0
      %2011 = vmatpush1.bf16.msra.mxu0 %v1856
      %2012 = vmatprep.subr.bf16.mxu0 0
      %2013 = vmatpush1.bf16.msra.mxu0 %v1857
      %2014 = vmatprep.subr.bf16.mxu0 0
      %2015 = vmatpush1.bf16.msra.mxu0 %v1858
      %2016 = vmatprep.subr.bf16.mxu0 0
      %2017 = vmatpush1.bf16.msra.mxu0 %v1859
      %2018 = vmatprep.subr.bf16.mxu0 0
      %2019 = vmatpush1.bf16.msra.mxu0 %v1860
      %2020 = vmatprep.subr.bf16.mxu0 0
      %2021 = vmatpush1.bf16.msra.mxu0 %v1861
      %2022 = vmatprep.mubr.bf16.mxu0 %v1379
      %2023 = vmatmul.mubr.bf16.gmra.mrb[0].mxu0 %v1378
      %v2024 = vpop.f32.mrb[0].mxu0
      %v2025 = vadd.f32 0.0, %v2024
      %v2026 = vpop.f32.mrb[0].mxu0
      %v2027 = vpop.f32.mrb[0].mxu0
      %v2028 = vadd.f32 0.0, %v2027
      %v2029 = vpop.f32.mrb[0].mxu0
      %2030 = vmatprep.mubr.bf16.mxu0 %v1388
      %2031 = vmatmul.mubr.bf16.gmra.mrb[0].mxu0 %v1387
      %v2032 = vpop.f32.mrb[0].mxu0
      %v2033 = vadd.f32 0.0, %v2032
      %v2034 = vpop.f32.mrb[0].mxu0
      %v2035 = vpop.f32.mrb[0].mxu0
      %v2036 = vadd.f32 0.0, %v2035
      %v2037 = vpop.f32.mrb[0].mxu0
      %2038 = vmatprep.mubr.bf16.mxu0 %v1397
      %2039 = vmatmul.mubr.bf16.gmra.mrb[0].mxu0 %v1396
      %v2040 = vpop.f32.mrb[0].mxu0
      %v2041 = vadd.f32 0.0, %v2040
      %v2042 = vpop.f32.mrb[0].mxu0
      %v2043 = vpop.f32.mrb[0].mxu0
      %v2044 = vadd.f32 0.0, %v2043
      %v2045 = vpop.f32.mrb[0].mxu0
      %2046 = vmatprep.mubr.bf16.mxu0 %v1406
      %2047 = vmatmul.mubr.bf16.gmra.mrb[0].mxu0 %v1405
      %v2048 = vpop.f32.mrb[0].mxu0
      %v2049 = vadd.f32 0.0, %v2048
      %v2050 = vpop.f32.mrb[0].mxu0
      %v2051 = vpop.f32.mrb[0].mxu0
      %v2052 = vadd.f32 0.0, %v2051
      %v2053 = vpop.f32.mrb[0].mxu0
      %2054 = vdwg.mxu0
      %2055 = vmatprep.subr.bf16.mxu0 0
      %2056 = vmatpush1.bf16.msra.mxu0 %v1862
      %2057 = vmatprep.subr.bf16.mxu0 0
      %2058 = vmatpush1.bf16.msra.mxu0 %v1863
      %2059 = vmatprep.subr.bf16.mxu0 0
      %2060 = vmatpush1.bf16.msra.mxu0 %v1864
      %2061 = vmatprep.subr.bf16.mxu0 0
      %2062 = vmatpush1.bf16.msra.mxu0 %v1865
      %2063 = vmatprep.subr.bf16.mxu0 0
      %2064 = vmatpush1.bf16.msra.mxu0 %v1866
      %2065 = vmatprep.subr.bf16.mxu0 0
      %2066 = vmatpush1.bf16.msra.mxu0 %v1867
      %2067 = vmatprep.subr.bf16.mxu0 0
      %2068 = vmatpush1.bf16.msra.mxu0 %v1868
      %2069 = vmatprep.subr.bf16.mxu0 0
      %2070 = vmatpush1.bf16.msra.mxu0 %v1869
      %2071 = vmatprep.subr.bf16.mxu0 0
      %2072 = vmatpush1.bf16.msra.mxu0 %v1870
      %2073 = vmatprep.subr.bf16.mxu0 0
      %2074 = vmatpush1.bf16.msra.mxu0 %v1871
      %2075 = vmatprep.subr.bf16.mxu0 0
      %2076 = vmatpush1.bf16.msra.mxu0 %v1872
      %2077 = vmatprep.subr.bf16.mxu0 0
      %2078 = vmatpush1.bf16.msra.mxu0 %v1873
      %2079 = vmatprep.subr.bf16.mxu0 0
      %2080 = vmatpush1.bf16.msra.mxu0 %v1874
      %2081 = vmatprep.subr.bf16.mxu0 0
      %2082 = vmatpush1.bf16.msra.mxu0 %v1875
      %2083 = vmatprep.subr.bf16.mxu0 0
      %2084 = vmatpush1.bf16.msra.mxu0 %v1876
      %2085 = vmatprep.subr.bf16.mxu0 0
      %2086 = vmatpush1.bf16.msra.mxu0 %v1877
      %2087 = vmatprep.mubr.bf16.mxu0 %v1381
      %2088 = vmatmul.mubr.bf16.gmra.mrb[0].mxu0 %v1380
      %v2089 = vpop.f32.mrb[0].mxu0
      %v2090 = vadd.f32 %v2025, %v2089
      %v2091 = vpop.f32.mrb[0].mxu0
      %v2092 = vpop.f32.mrb[0].mxu0
      %v2093 = vadd.f32 %v2028, %v2092
      %v2094 = vpop.f32.mrb[0].mxu0
      %2095 = vmatprep.mubr.bf16.mxu0 %v1390
      %2096 = vmatmul.mubr.bf16.gmra.mrb[0].mxu0 %v1389
      %v2097 = vpop.f32.mrb[0].mxu0
      %v2098 = vadd.f32 %v2033, %v2097
      %v2099 = vpop.f32.mrb[0].mxu0
      %v2100 = vpop.f32.mrb[0].mxu0
      %v2101 = vadd.f32 %v2036, %v2100
      %v2102 = vpop.f32.mrb[0].mxu0
      %2103 = vmatprep.mubr.bf16.mxu0 %v1399
      %2104 = vmatmul.mubr.bf16.gmra.mrb[0].mxu0 %v1398
      %v2105 = vpop.f32.mrb[0].mxu0
      %v2106 = vadd.f32 %v2041, %v2105
      %v2107 = vpop.f32.mrb[0].mxu0
      %v2108 = vpop.f32.mrb[0].mxu0
      %v2109 = vadd.f32 %v2044, %v2108
      %v2110 = vpop.f32.mrb[0].mxu0
      %2111 = vmatprep.mubr.bf16.mxu0 %v1408
      %2112 = vmatmul.mubr.bf16.gmra.mrb[0].mxu0 %v1407
      %v2113 = vpop.f32.mrb[0].mxu0
      %v2114 = vadd.f32 %v2049, %v2113
      %v2115 = vpop.f32.mrb[0].mxu0
      %v2116 = vpop.f32.mrb[0].mxu0
      %v2117 = vadd.f32 %v2052, %v2116
      %v2118 = vpop.f32.mrb[0].mxu0
      %2119 = vdwg.mxu0
      %2120 = vmatprep.subr.bf16.mxu0 0
      %2121 = vmatpush1.bf16.msra.mxu0 %v1878
      %2122 = vmatprep.subr.bf16.mxu0 0
      %2123 = vmatpush1.bf16.msra.mxu0 %v1879
      %2124 = vmatprep.subr.bf16.mxu0 0
      %2125 = vmatpush1.bf16.msra.mxu0 %v1880
      %2126 = vmatprep.subr.bf16.mxu0 0
      %2127 = vmatpush1.bf16.msra.mxu0 %v1881
      %2128 = vmatprep.subr.bf16.mxu0 0
      %2129 = vmatpush1.bf16.msra.mxu0 %v1882
      %2130 = vmatprep.subr.bf16.mxu0 0
      %2131 = vmatpush1.bf16.msra.mxu0 %v1883
      %2132 = vmatprep.subr.bf16.mxu0 0
      %2133 = vmatpush1.bf16.msra.mxu0 %v1884
      %2134 = vmatprep.subr.bf16.mxu0 0
      %2135 = vmatpush1.bf16.msra.mxu0 %v1885
      %2136 = vmatprep.subr.bf16.mxu0 0
      %2137 = vmatpush1.bf16.msra.mxu0 %v1886
      %2138 = vmatprep.subr.bf16.mxu0 0
      %2139 = vmatpush1.bf16.msra.mxu0 %v1887
      %2140 = vmatprep.subr.bf16.mxu0 0
      %2141 = vmatpush1.bf16.msra.mxu0 %v1888
      %2142 = vmatprep.subr.bf16.mxu0 0
      %2143 = vmatpush1.bf16.msra.mxu0 %v1889
      %2144 = vmatprep.subr.bf16.mxu0 0
      %2145 = vmatpush1.bf16.msra.mxu0 %v1890
      %2146 = vmatprep.subr.bf16.mxu0 0
      %2147 = vmatpush1.bf16.msra.mxu0 %v1891
      %2148 = vmatprep.subr.bf16.mxu0 0
      %2149 = vmatpush1.bf16.msra.mxu0 %v1892
      %2150 = vmatprep.subr.bf16.mxu0 0
      %2151 = vmatpush1.bf16.msra.mxu0 %v1893
      %2152 = vmatprep.mubr.bf16.mxu0 %v1383
      %2153 = vmatmul.mubr.bf16.gmra.mrb[0].mxu0 %v1382
      %v2154 = vpop.f32.mrb[0].mxu0
      %v2155 = vadd.f32 %v2090, %v2154
      %v2156 = vpop.f32.mrb[0].mxu0
      %v2157 = vpop.f32.mrb[0].mxu0
      %v2158 = vadd.f32 %v2093, %v2157
      %v2159 = vpop.f32.mrb[0].mxu0
      %2160 = vmatprep.mubr.bf16.mxu0 %v1392
      %2161 = vmatmul.mubr.bf16.gmra.mrb[0].mxu0 %v1391
      %v2162 = vpop.f32.mrb[0].mxu0
      %v2163 = vadd.f32 %v2098, %v2162
      %v2164 = vpop.f32.mrb[0].mxu0
      %v2165 = vpop.f32.mrb[0].mxu0
      %v2166 = vadd.f32 %v2101, %v2165
      %v2167 = vpop.f32.mrb[0].mxu0
      %2168 = vmatprep.mubr.bf16.mxu0 %v1401
      %2169 = vmatmul.mubr.bf16.gmra.mrb[0].mxu0 %v1400
      %v2170 = vpop.f32.mrb[0].mxu0
      %v2171 = vadd.f32 %v2106, %v2170
      %v2172 = vpop.f32.mrb[0].mxu0
      %v2173 = vpop.f32.mrb[0].mxu0
      %v2174 = vadd.f32 %v2109, %v2173
      %v2175 = vpop.f32.mrb[0].mxu0
      %2176 = vmatprep.mubr.bf16.mxu0 %v1410
      %2177 = vmatmul.mubr.bf16.gmra.mrb[0].mxu0 %v1409
      %v2178 = vpop.f32.mrb[0].mxu0
      %v2179 = vadd.f32 %v2114, %v2178
      %v2180 = vpop.f32.mrb[0].mxu0
      %v2181 = vpop.f32.mrb[0].mxu0
      %v2182 = vadd.f32 %v2117, %v2181
      %v2183 = vpop.f32.mrb[0].mxu0
      %2184 = vdwg.mxu0
      %2185 = vmatprep.subr.bf16.mxu0 0
      %2186 = vmatpush1.bf16.msra.mxu0 %v1894
      %2187 = vmatprep.subr.bf16.mxu0 0
      %2188 = vmatpush1.bf16.msra.mxu0 %v1895
      %2189 = vmatprep.subr.bf16.mxu0 0
      %2190 = vmatpush1.bf16.msra.mxu0 %v1896
      %2191 = vmatprep.subr.bf16.mxu0 0
      %2192 = vmatpush1.bf16.msra.mxu0 %v1897
      %2193 = vmatprep.subr.bf16.mxu0 0
      %2194 = vmatpush1.bf16.msra.mxu0 %v1898
      %2195 = vmatprep.subr.bf16.mxu0 0
      %2196 = vmatpush1.bf16.msra.mxu0 %v1899
      %2197 = vmatprep.subr.bf16.mxu0 0
      %2198 = vmatpush1.bf16.msra.mxu0 %v1900
      %2199 = vmatprep.subr.bf16.mxu0 0
      %2200 = vmatpush1.bf16.msra.mxu0 %v1901
      %2201 = vmatprep.subr.bf16.mxu0 0
      %2202 = vmatpush1.bf16.msra.mxu0 %v1902
      %2203 = vmatprep.subr.bf16.mxu0 0
      %2204 = vmatpush1.bf16.msra.mxu0 %v1903
      %2205 = vmatprep.subr.bf16.mxu0 0
      %2206 = vmatpush1.bf16.msra.mxu0 %v1904
      %2207 = vmatprep.subr.bf16.mxu0 0
      %2208 = vmatpush1.bf16.msra.mxu0 %v1905
      %2209 = vmatprep.subr.bf16.mxu0 0
      %2210 = vmatpush1.bf16.msra.mxu0 %v1906
      %2211 = vmatprep.subr.bf16.mxu0 0
      %2212 = vmatpush1.bf16.msra.mxu0 %v1907
      %2213 = vmatprep.subr.bf16.mxu0 0
      %2214 = vmatpush1.bf16.msra.mxu0 %v1908
      %2215 = vmatprep.subr.bf16.mxu0 0
      %2216 = vmatpush1.bf16.msra.mxu0 %v1909
      %2217 = vmatprep.mubr.bf16.mxu0 %v1385
      %2218 = vmatmul.mubr.bf16.gmra.mrb[0].mxu0 %v1384
      %v2219 = vpop.f32.mrb[0].mxu0
      %v2220 = vadd.f32 %v2155, %v2219
      %v2221 = vpop.f32.mrb[0].mxu0
      %v2222 = vpop.f32.mrb[0].mxu0
      %v2223 = vadd.f32 %v2158, %v2222
      %v2224 = vpop.f32.mrb[0].mxu0
      %2225 = vmatprep.mubr.bf16.mxu0 %v1394
      %2226 = vmatmul.mubr.bf16.gmra.mrb[0].mxu0 %v1393
      %v2227 = vpop.f32.mrb[0].mxu0
      %v2228 = vadd.f32 %v2163, %v2227
      %v2229 = vpop.f32.mrb[0].mxu0
      %v2230 = vpop.f32.mrb[0].mxu0
      %v2231 = vadd.f32 %v2166, %v2230
      %v2232 = vpop.f32.mrb[0].mxu0
      %2233 = vmatprep.mubr.bf16.mxu0 %v1403
      %2234 = vmatmul.mubr.bf16.gmra.mrb[0].mxu0 %v1402
      %v2235 = vpop.f32.mrb[0].mxu0
      %v2236 = vadd.f32 %v2171, %v2235
      %v2237 = vpop.f32.mrb[0].mxu0
      %v2238 = vpop.f32.mrb[0].mxu0
      %v2239 = vadd.f32 %v2174, %v2238
      %v2240 = vpop.f32.mrb[0].mxu0
      %2241 = vmatprep.mubr.bf16.mxu0 %v1412
      %2242 = vmatmul.mubr.bf16.gmra.mrb[0].mxu0 %v1411
      %v2243 = vpop.f32.mrb[0].mxu0
      %v2244 = vadd.f32 %v2179, %v2243
      %v2245 = vpop.f32.mrb[0].mxu0
      %v2246 = vpop.f32.mrb[0].mxu0
      %v2247 = vadd.f32 %v2182, %v2246
      %v2248 = vpop.f32.mrb[0].mxu0
      %2249 = vdwg.mxu0
      %2250 = vmatprep.subr.bf16.mxu0 0
      %2251 = vmatpush1.bf16.msra.mxu0 %v1910
      %2252 = vmatprep.subr.bf16.mxu0 0
      %2253 = vmatpush1.bf16.msra.mxu0 %v1911
      %2254 = vmatprep.subr.bf16.mxu0 0
      %2255 = vmatpush1.bf16.msra.mxu0 %v1912
      %2256 = vmatprep.subr.bf16.mxu0 0
      %2257 = vmatpush1.bf16.msra.mxu0 %v1913
      %2258 = vmatprep.subr.bf16.mxu0 0
      %2259 = vmatpush1.bf16.msra.mxu0 %v1914
      %2260 = vmatprep.subr.bf16.mxu0 0
      %2261 = vmatpush1.bf16.msra.mxu0 %v1915
      %2262 = vmatprep.subr.bf16.mxu0 0
      %2263 = vmatpush1.bf16.msra.mxu0 %v1916
      %2264 = vmatprep.subr.bf16.mxu0 0
      %2265 = vmatpush1.bf16.msra.mxu0 %v1917
      %2266 = vmatprep.subr.bf16.mxu0 0
      %2267 = vmatpush1.bf16.msra.mxu0 0
      %2268 = vmatprep.subr.bf16.mxu0 0
      %2269 = vmatpush1.bf16.msra.mxu0 0
      %2270 = vmatprep.subr.bf16.mxu0 0
      %2271 = vmatpush1.bf16.msra.mxu0 0
      %2272 = vmatprep.subr.bf16.mxu0 0
      %2273 = vmatpush1.bf16.msra.mxu0 0
      %2274 = vmatprep.subr.bf16.mxu0 0
      %2275 = vmatpush1.bf16.msra.mxu0 0
      %2276 = vmatprep.subr.bf16.mxu0 0
      %2277 = vmatpush1.bf16.msra.mxu0 0
      %2278 = vmatprep.subr.bf16.mxu0 0
      %2279 = vmatpush1.bf16.msra.mxu0 0
      %2280 = vmatprep.subr.bf16.mxu0 0
      %2281 = vmatpush1.bf16.msra.mxu0 0
      %2282 = vmatprep.mubr.bf16.mxu0 0
      %2283 = vmatmul.mubr.bf16.gmra.mrb[0].mxu0 %v1386
      %v2284 = vpop.f32.mrb[0].mxu0
      %v2285 = vadd.f32 %v2220, %v2284
      %v2286 = vpop.f32.mrb[0].mxu0
      %v2287 = vpop.f32.mrb[0].mxu0
      %v2288 = vadd.f32 %v2223, %v2287
      %v2289 = vpop.f32.mrb[0].mxu0
      %2290 = vmatprep.mubr.bf16.mxu0 0
      %2291 = vmatmul.mubr.bf16.gmra.mrb[0].mxu0 %v1395
      %v2292 = vpop.f32.mrb[0].mxu0
      %v2293 = vadd.f32 %v2228, %v2292
      %v2294 = vpop.f32.mrb[0].mxu0
      %v2295 = vpop.f32.mrb[0].mxu0
      %v2296 = vadd.f32 %v2231, %v2295
      %v2297 = vpop.f32.mrb[0].mxu0
      %2298 = vmatprep.mubr.bf16.mxu0 0
      %2299 = vmatmul.mubr.bf16.gmra.mrb[0].mxu0 %v1404
      %v2300 = vpop.f32.mrb[0].mxu0
      %v2301 = vadd.f32 %v2236, %v2300
      %v2302 = vpop.f32.mrb[0].mxu0
      %v2303 = vpop.f32.mrb[0].mxu0
      %v2304 = vadd.f32 %v2239, %v2303
      %v2305 = vpop.f32.mrb[0].mxu0
      %2306 = vmatprep.mubr.bf16.mxu0 0
      %2307 = vmatmul.mubr.bf16.gmra.mrb[0].mxu0 %v1413
      %v2308 = vpop.f32.mrb[0].mxu0
      %v2309 = vadd.f32 %v2244, %v2308
      %v2310 = vpop.f32.mrb[0].mxu0
      %v2311 = vpop.f32.mrb[0].mxu0
      %v2312 = vadd.f32 %v2247, %v2311
      %v2313 = vpop.f32.mrb[0].mxu0
      %2314 = vdwg.mxu0
      %v2315 = vld [vmem:[%s5] sm:$0x1]
      %v2317 = vlaneseq
      %v2318 = vshrl.u32 %v2317, 7
      %v2319 = vsub.s32 0, %v2318
      %v2320 = vrot.slane %v2315, %v2319
      %v2322 = vmul.f32 %v2285, %v2320
      %v2323 = vmul.f32 %v2288, %v2320
      %v2324 = vmul.f32 %v2293, %v2320
      %v2325 = vmul.f32 %v2296, %v2320
      %v2326 = vmul.f32 %v2301, %v2320
      %v2327 = vmul.f32 %v2304, %v2320
      %v2328 = vmul.f32 %v2309, %v2320
      %v2329 = vmul.f32 %v2312, %v2320
      %v2330 = vld [vmem:[%s6] sm:$0x1]
      %v2332 = vlaneseq
      %v2333 = vshrl.u32 %v2332, 7
      %v2334 = vsub.s32 0, %v2333
      %v2335 = vrot.slane %v2330, %v2334
      %v2337 = vadd.f32 %v2322, %v2335
      %v2338 = vadd.f32 %v2323, %v2335
      %v2339 = vadd.f32 %v2324, %v2335
      %v2340 = vadd.f32 %v2325, %v2335
      %v2341 = vadd.f32 %v2326, %v2335
      %v2342 = vadd.f32 %v2327, %v2335
      %v2343 = vadd.f32 %v2328, %v2335
      %v2344 = vadd.f32 %v2329, %v2335
      %v2345 = vmax.f32 %v2337, 0.0
      %v2346 = vmax.f32 %v2338, 0.0
      %v2347 = vmax.f32 %v2339, 0.0
      %v2348 = vmax.f32 %v2340, 0.0
      %v2349 = vmax.f32 %v2341, 0.0
      %v2350 = vmax.f32 %v2342, 0.0
      %v2351 = vmax.f32 %v2343, 0.0
      %v2352 = vmax.f32 %v2344, 0.0
      %v2353 = vpack.c.bf16 %v2345, %v2345
      %v2354 = vpack.c.bf16 %v2346, %v2346
      %v2355 = vpack.c.bf16 %v2347, %v2347
      %v2356 = vpack.c.bf16 %v2348, %v2348
      %v2357 = vpack.c.bf16 %v2349, %v2349
      %v2358 = vpack.c.bf16 %v2350, %v2350
      %v2359 = vpack.c.bf16 %v2351, %v2351
      %v2360 = vpack.c.bf16 %v2352, %v2352
      %v2369 = vunpack.c.l.b16 %v2353
      %v2370 = vunpack.c.l.b16 %v2354
      %v2371 = vunpack.c.l.b16 %v2355
      %v2372 = vunpack.c.l.b16 %v2356
      %v2373 = vunpack.c.l.b16 %v2357
      %v2374 = vunpack.c.l.b16 %v2358
      %v2375 = vunpack.c.l.b16 %v2359
      %v2376 = vunpack.c.l.b16 %v2360
      %v2377 = vpack.c.b16 %v2369, %v2369
      %v2378 = vpack.c.b16 %v2370, %v2370
      %v2379 = vpack.c.b16 %v2371, %v2371
      %v2380 = vpack.c.b16 %v2372, %v2372
      %v2381 = vpack.c.b16 %v2373, %v2373
      %v2382 = vpack.c.b16 %v2374, %v2374
      %v2383 = vpack.c.b16 %v2375, %v2375
      %v2384 = vpack.c.b16 %v2376, %v2376
      %v2386 = vshrl.u32 %v2377, 16
      %v2388 = vrot.slane %v2386, 7
      %v2389 = vshll.u32 %v2377, 16
      %v2391 = vor.u32 %v2388, %v2389
      %v2392 = vrot.slane %v2388, 4
      %v2394 = vshrl.u32 %v2378, 16
      %v2396 = vrot.slane %v2394, 7
      %v2397 = vshll.u32 %v2378, 16
      %v2399 = vor.u32 %v2396, %v2397
      %v2400 = vrot.slane %v2396, 4
      %v2402 = vshrl.u32 %v2379, 16
      %v2404 = vrot.slane %v2402, 7
      %v2405 = vshll.u32 %v2379, 16
      %v2407 = vor.u32 %v2404, %v2405
      %v2408 = vrot.slane %v2404, 4
      %v2410 = vshrl.u32 %v2380, 16
      %v2412 = vrot.slane %v2410, 7
      %v2413 = vshll.u32 %v2380, 16
      %v2415 = vor.u32 %v2412, %v2413
      %v2416 = vrot.slane %v2412, 4
      %v2418 = vshrl.u32 %v2381, 16
      %v2420 = vrot.slane %v2418, 7
      %v2421 = vshll.u32 %v2381, 16
      %v2423 = vor.u32 %v2420, %v2421
      %v2424 = vrot.slane %v2420, 4
      %v2426 = vshrl.u32 %v2382, 16
      %v2428 = vrot.slane %v2426, 7
      %v2429 = vshll.u32 %v2382, 16
      %v2431 = vor.u32 %v2428, %v2429
      %v2432 = vrot.slane %v2428, 4
      %v2434 = vshrl.u32 %v2383, 16
      %v2436 = vrot.slane %v2434, 7
      %v2437 = vshll.u32 %v2383, 16
      %v2439 = vor.u32 %v2436, %v2437
      %v2440 = vrot.slane %v2436, 4
      %v2442 = vshrl.u32 %v2384, 16
      %v2444 = vrot.slane %v2442, 7
      %v2445 = vshll.u32 %v2384, 16
      %v2447 = vor.u32 %v2444, %v2445
      %v2448 = vrot.slane %v2444, 4
      %v2465 = vld [vmem:[%s516] sm:$0xf]
      %v2466 = vsel %vm518, %v2391, %v2465
      %2467 = vst [vmem:[%s516] sm:$0xf] %v2466
      %v2468 = vld [vmem:[%s516 + $0x4] sm:$0x1]
      %v2469 = vsel %vm287, %v2392, %v2468
      %2470 = vst [vmem:[%s516 + $0x4] sm:$0x1] %v2469
      %v2471 = vld [vmem:[%s516 + $0x8] sm:$0xf]
      %v2472 = vsel %vm518, %v2399, %v2471
      %2473 = vst [vmem:[%s516 + $0x8] sm:$0xf] %v2472
      %v2474 = vld [vmem:[%s516 + $0xc] sm:$0x1]
      %v2475 = vsel %vm287, %v2400, %v2474
      %2476 = vst [vmem:[%s516 + $0xc] sm:$0x1] %v2475
      %v2477 = vld [vmem:[%s516 + $0x10] sm:$0xf]
      %v2478 = vsel %vm518, %v2407, %v2477
      %2479 = vst [vmem:[%s516 + $0x10] sm:$0xf] %v2478
      %v2480 = vld [vmem:[%s516 + $0x14] sm:$0x1]
      %v2481 = vsel %vm287, %v2408, %v2480
      %2482 = vst [vmem:[%s516 + $0x14] sm:$0x1] %v2481
      %v2483 = vld [vmem:[%s516 + $0x18] sm:$0xf]
      %v2484 = vsel %vm518, %v2415, %v2483
      %2485 = vst [vmem:[%s516 + $0x18] sm:$0xf] %v2484
      %v2486 = vld [vmem:[%s516 + $0x1c] sm:$0x1]
      %v2487 = vsel %vm287, %v2416, %v2486
      %2488 = vst [vmem:[%s516 + $0x1c] sm:$0x1] %v2487
      %v2489 = vld [vmem:[%s516 + $0x20] sm:$0xf]
      %v2490 = vsel %vm518, %v2423, %v2489
      %2491 = vst [vmem:[%s516 + $0x20] sm:$0xf] %v2490
      %v2492 = vld [vmem:[%s516 + $0x24] sm:$0x1]
      %v2493 = vsel %vm287, %v2424, %v2492
      %2494 = vst [vmem:[%s516 + $0x24] sm:$0x1] %v2493
      %v2495 = vld [vmem:[%s516 + $0x28] sm:$0xf]
      %v2496 = vsel %vm518, %v2431, %v2495
      %2497 = vst [vmem:[%s516 + $0x28] sm:$0xf] %v2496
      %v2498 = vld [vmem:[%s516 + $0x2c] sm:$0x1]
      %v2499 = vsel %vm287, %v2432, %v2498
      %2500 = vst [vmem:[%s516 + $0x2c] sm:$0x1] %v2499
      %v2501 = vld [vmem:[%s516 + $0x30] sm:$0xf]
      %v2502 = vsel %vm518, %v2439, %v2501
      %2503 = vst [vmem:[%s516 + $0x30] sm:$0xf] %v2502
      %v2504 = vld [vmem:[%s516 + $0x34] sm:$0x1]
      %v2505 = vsel %vm287, %v2440, %v2504
      %2506 = vst [vmem:[%s516 + $0x34] sm:$0x1] %v2505
      %v2507 = vld [vmem:[%s516 + $0x38] sm:$0xf]
      %v2508 = vsel %vm518, %v2447, %v2507
      %2509 = vst [vmem:[%s516 + $0x38] sm:$0xf] %v2508
      %v2510 = vld [vmem:[%s516 + $0x3c] sm:$0x1]
      %v2511 = vsel %vm287, %v2448, %v2510
      %2512 = vst [vmem:[%s516 + $0x3c] sm:$0x1] %v2511
      %v2513 = vld [vmem:[#allocation2] sm:$0xf]
      %v2514 = vld [vmem:[#allocation2 + $0x8] sm:$0xf]
      %v2515 = vld [vmem:[#allocation2 + $0x10] sm:$0xf]
      %v2516 = vld [vmem:[#allocation2 + $0x18] sm:$0xf]
      %v2517 = vld [vmem:[#allocation2 + $0x20] sm:$0xf]
      %v2518 = vld [vmem:[#allocation2 + $0x28] sm:$0xf]
      %v2519 = vld [vmem:[#allocation2 + $0x30] sm:$0xf]
      %v2520 = vld [vmem:[#allocation2 + $0x38] sm:$0xf]
      %v2529 = vunpack.c.l.b16 %v2513
      %v2530 = vunpack.c.l.b16 %v2514
      %v2531 = vunpack.c.l.b16 %v2515
      %v2532 = vunpack.c.l.b16 %v2516
      %v2533 = vunpack.c.l.b16 %v2517
      %v2534 = vunpack.c.l.b16 %v2518
      %v2535 = vunpack.c.l.b16 %v2519
      %v2536 = vunpack.c.l.b16 %v2520
      %v2537 = vpack.c.b16 %v2530, %v2529
      %v2538 = vpack.c.b16 %v2532, %v2531
      %v2539 = vpack.c.b16 %v2534, %v2533
      %v2540 = vpack.c.b16 %v2536, %v2535
      %2545 = vst [vmem:[#allocation3] sm:$0xff] %v2537
      %2546 = vst [vmem:[#allocation3 + $0x48] sm:$0xff] %v2538
      %2547 = vst [vmem:[#allocation3 + $0x90] sm:$0xff] %v2539
      %2548 = vst [vmem:[#allocation3 + $0xd8] sm:$0xff] %v2540
      %v2549 = vld [vmem:[#allocation2] sm:$0xf]
      %v2550 = vld [vmem:[#allocation2 + $0x4] sm:$0x1]
      %v2551 = vld [vmem:[#allocation2 + $0x8] sm:$0xf]
      %v2552 = vld [vmem:[#allocation2 + $0xc] sm:$0x1]
      %v2553 = vld [vmem:[#allocation2 + $0x10] sm:$0xf]
      %v2554 = vld [vmem:[#allocation2 + $0x14] sm:$0x1]
      %v2555 = vld [vmem:[#allocation2 + $0x18] sm:$0xf]
      %v2556 = vld [vmem:[#allocation2 + $0x1c] sm:$0x1]
      %v2557 = vld [vmem:[#allocation2 + $0x20] sm:$0xf]
      %v2558 = vld [vmem:[#allocation2 + $0x24] sm:$0x1]
      %v2559 = vld [vmem:[#allocation2 + $0x28] sm:$0xf]
      %v2560 = vld [vmem:[#allocation2 + $0x2c] sm:$0x1]
      %v2561 = vld [vmem:[#allocation2 + $0x30] sm:$0xf]
      %v2562 = vld [vmem:[#allocation2 + $0x34] sm:$0x1]
      %v2563 = vld [vmem:[#allocation2 + $0x38] sm:$0xf]
      %v2564 = vld [vmem:[#allocation2 + $0x3c] sm:$0x1]
      %v2566 = vshrl.u32 %v2549, 16
      %v2568 = vrot.slane %v2566, 4
      %v2569 = vshll.u32 %v2549, 16
      %v2571 = vrot.slane %v2569, 5
      %v2572 = vor.u32 %v2568, %v2571
      %v2573 = vrot.slane %v2572, 4
      %v2575 = vshll.u32 %v2550, 16
      %v2577 = vrot.slane %v2575, 5
      %v2578 = vsel %vm621, %v2573, %v2577
      %v2580 = vshrl.u32 %v2551, 16
      %v2582 = vrot.slane %v2580, 4
      %v2583 = vshll.u32 %v2551, 16
      %v2585 = vrot.slane %v2583, 5
      %v2586 = vor.u32 %v2582, %v2585
      %v2587 = vrot.slane %v2586, 4
      %v2589 = vshll.u32 %v2552, 16
      %v2591 = vrot.slane %v2589, 5
      %v2592 = vsel %vm621, %v2587, %v2591
      %v2594 = vshrl.u32 %v2553, 16
      %v2596 = vrot.slane %v2594, 4
      %v2597 = vshll.u32 %v2553, 16
      %v2599 = vrot.slane %v2597, 5
      %v2600 = vor.u32 %v2596, %v2599
      %v2601 = vrot.slane %v2600, 4
      %v2603 = vshll.u32 %v2554, 16
      %v2605 = vrot.slane %v2603, 5
      %v2606 = vsel %vm621, %v2601, %v2605
      %v2608 = vshrl.u32 %v2555, 16
      %v2610 = vrot.slane %v2608, 4
      %v2611 = vshll.u32 %v2555, 16
      %v2613 = vrot.slane %v2611, 5
      %v2614 = vor.u32 %v2610, %v2613
      %v2615 = vrot.slane %v2614, 4
      %v2617 = vshll.u32 %v2556, 16
      %v2619 = vrot.slane %v2617, 5
      %v2620 = vsel %vm621, %v2615, %v2619
      %v2622 = vshrl.u32 %v2557, 16
      %v2624 = vrot.slane %v2622, 4
      %v2625 = vshll.u32 %v2557, 16
      %v2627 = vrot.slane %v2625, 5
      %v2628 = vor.u32 %v2624, %v2627
      %v2629 = vrot.slane %v2628, 4
      %v2631 = vshll.u32 %v2558, 16
      %v2633 = vrot.slane %v2631, 5
      %v2634 = vsel %vm621, %v2629, %v2633
      %v2636 = vshrl.u32 %v2559, 16
      %v2638 = vrot.slane %v2636, 4
      %v2639 = vshll.u32 %v2559, 16
      %v2641 = vrot.slane %v2639, 5
      %v2642 = vor.u32 %v2638, %v2641
      %v2643 = vrot.slane %v2642, 4
      %v2645 = vshll.u32 %v2560, 16
      %v2647 = vrot.slane %v2645, 5
      %v2648 = vsel %vm621, %v2643, %v2647
      %v2650 = vshrl.u32 %v2561, 16
      %v2652 = vrot.slane %v2650, 4
      %v2653 = vshll.u32 %v2561, 16
      %v2655 = vrot.slane %v2653, 5
      %v2656 = vor.u32 %v2652, %v2655
      %v2657 = vrot.slane %v2656, 4
      %v2659 = vshll.u32 %v2562, 16
      %v2661 = vrot.slane %v2659, 5
      %v2662 = vsel %vm621, %v2657, %v2661
      %v2664 = vshrl.u32 %v2563, 16
      %v2666 = vrot.slane %v2664, 4
      %v2667 = vshll.u32 %v2563, 16
      %v2669 = vrot.slane %v2667, 5
      %v2670 = vor.u32 %v2666, %v2669
      %v2671 = vrot.slane %v2670, 4
      %v2673 = vshll.u32 %v2564, 16
      %v2675 = vrot.slane %v2673, 5
      %v2676 = vsel %vm621, %v2671, %v2675
      %v2677 = vunpack.c.l.b16 %v2578
      %v2678 = vunpack.c.l.b16 %v2592
      %v2679 = vunpack.c.l.b16 %v2606
      %v2680 = vunpack.c.l.b16 %v2620
      %v2681 = vunpack.c.l.b16 %v2634
      %v2682 = vunpack.c.l.b16 %v2648
      %v2683 = vunpack.c.l.b16 %v2662
      %v2684 = vunpack.c.l.b16 %v2676
      %v2685 = vpack.c.b16 %v2678, %v2677
      %v2686 = vpack.c.b16 %v2680, %v2679
      %v2687 = vpack.c.b16 %v2682, %v2681
      %v2688 = vpack.c.b16 %v2684, %v2683
      %2693 = vst [vmem:[#allocation3 + $0x8] sm:$0xff] %v2685
      %2694 = vst [vmem:[#allocation3 + $0x50] sm:$0xff] %v2686
      %2695 = vst [vmem:[#allocation3 + $0x98] sm:$0xff] %v2687
      %2696 = vst [vmem:[#allocation3 + $0xe0] sm:$0xff] %v2688
      %v2697 = vld [vmem:[#allocation2] sm:$0xe]
      %v2698 = vld [vmem:[#allocation2 + $0x4] sm:$0x1]
      %v2699 = vld [vmem:[#allocation2 + $0x8] sm:$0xe]
      %v2700 = vld [vmem:[#allocation2 + $0xc] sm:$0x1]
      %v2701 = vld [vmem:[#allocation2 + $0x10] sm:$0xe]
      %v2702 = vld [vmem:[#allocation2 + $0x14] sm:$0x1]
      %v2703 = vld [vmem:[#allocation2 + $0x18] sm:$0xe]
      %v2704 = vld [vmem:[#allocation2 + $0x1c] sm:$0x1]
      %v2705 = vld [vmem:[#allocation2 + $0x20] sm:$0xe]
      %v2706 = vld [vmem:[#allocation2 + $0x24] sm:$0x1]
      %v2707 = vld [vmem:[#allocation2 + $0x28] sm:$0xe]
      %v2708 = vld [vmem:[#allocation2 + $0x2c] sm:$0x1]
      %v2709 = vld [vmem:[#allocation2 + $0x30] sm:$0xe]
      %v2710 = vld [vmem:[#allocation2 + $0x34] sm:$0x1]
      %v2711 = vld [vmem:[#allocation2 + $0x38] sm:$0xe]
      %v2712 = vld [vmem:[#allocation2 + $0x3c] sm:$0x1]
      %v2729 = vrot.slane %v2697, 5
      %v2730 = vrot.slane %v2729, 4
      %v2731 = vrot.slane %v2698, 5
      %v2732 = vsel %vm788, %v2730, %v2731
      %v2733 = vrot.slane %v2699, 5
      %v2734 = vrot.slane %v2733, 4
      %v2735 = vrot.slane %v2700, 5
      %v2736 = vsel %vm788, %v2734, %v2735
      %v2737 = vrot.slane %v2701, 5
      %v2738 = vrot.slane %v2737, 4
      %v2739 = vrot.slane %v2702, 5
      %v2740 = vsel %vm788, %v2738, %v2739
      %v2741 = vrot.slane %v2703, 5
      %v2742 = vrot.slane %v2741, 4
      %v2743 = vrot.slane %v2704, 5
      %v2744 = vsel %vm788, %v2742, %v2743
      %v2745 = vrot.slane %v2705, 5
      %v2746 = vrot.slane %v2745, 4
      %v2747 = vrot.slane %v2706, 5
      %v2748 = vsel %vm788, %v2746, %v2747
      %v2749 = vrot.slane %v2707, 5
      %v2750 = vrot.slane %v2749, 4
      %v2751 = vrot.slane %v2708, 5
      %v2752 = vsel %vm788, %v2750, %v2751
      %v2753 = vrot.slane %v2709, 5
      %v2754 = vrot.slane %v2753, 4
      %v2755 = vrot.slane %v2710, 5
      %v2756 = vsel %vm788, %v2754, %v2755
      %v2757 = vrot.slane %v2711, 5
      %v2758 = vrot.slane %v2757, 4
      %v2759 = vrot.slane %v2712, 5
      %v2760 = vsel %vm788, %v2758, %v2759
      %v2761 = vunpack.c.l.b16 %v2732
      %v2762 = vunpack.c.l.b16 %v2736
      %v2763 = vunpack.c.l.b16 %v2740
      %v2764 = vunpack.c.l.b16 %v2744
      %v2765 = vunpack.c.l.b16 %v2748
      %v2766 = vunpack.c.l.b16 %v2752
      %v2767 = vunpack.c.l.b16 %v2756
      %v2768 = vunpack.c.l.b16 %v2760
      %v2769 = vpack.c.b16 %v2762, %v2761
      %v2770 = vpack.c.b16 %v2764, %v2763
      %v2771 = vpack.c.b16 %v2766, %v2765
      %v2772 = vpack.c.b16 %v2768, %v2767
      %2777 = vst [vmem:[#allocation3 + $0x10] sm:$0xff] %v2769
      %2778 = vst [vmem:[#allocation3 + $0x58] sm:$0xff] %v2770
      %2779 = vst [vmem:[#allocation3 + $0xa0] sm:$0xff] %v2771
      %2780 = vst [vmem:[#allocation3 + $0xe8] sm:$0xff] %v2772
      %v2781 = vld [vmem:[%s516] sm:$0xf]
      %v2782 = vld [vmem:[%s516 + $0x8] sm:$0xf]
      %v2783 = vld [vmem:[%s516 + $0x10] sm:$0xf]
      %v2784 = vld [vmem:[%s516 + $0x18] sm:$0xf]
      %v2785 = vld [vmem:[%s516 + $0x20] sm:$0xf]
      %v2786 = vld [vmem:[%s516 + $0x28] sm:$0xf]
      %v2787 = vld [vmem:[%s516 + $0x30] sm:$0xf]
      %v2788 = vld [vmem:[%s516 + $0x38] sm:$0xf]
      %v2797 = vunpack.c.l.b16 %v2781
      %v2798 = vunpack.c.l.b16 %v2782
      %v2799 = vunpack.c.l.b16 %v2783
      %v2800 = vunpack.c.l.b16 %v2784
      %v2801 = vunpack.c.l.b16 %v2785
      %v2802 = vunpack.c.l.b16 %v2786
      %v2803 = vunpack.c.l.b16 %v2787
      %v2804 = vunpack.c.l.b16 %v2788
      %v2805 = vpack.c.b16 %v2798, %v2797
      %v2806 = vpack.c.b16 %v2800, %v2799
      %v2807 = vpack.c.b16 %v2802, %v2801
      %v2808 = vpack.c.b16 %v2804, %v2803
      %2813 = vst [vmem:[#allocation3 + $0x18] sm:$0xff] %v2805
      %2814 = vst [vmem:[#allocation3 + $0x60] sm:$0xff] %v2806
      %2815 = vst [vmem:[#allocation3 + $0xa8] sm:$0xff] %v2807
      %2816 = vst [vmem:[#allocation3 + $0xf0] sm:$0xff] %v2808
      %v2817 = vld [vmem:[%s516] sm:$0xf]
      %v2818 = vld [vmem:[%s516 + $0x4] sm:$0x1]
      %v2819 = vld [vmem:[%s516 + $0x8] sm:$0xf]
      %v2820 = vld [vmem:[%s516 + $0xc] sm:$0x1]
      %v2821 = vld [vmem:[%s516 + $0x10] sm:$0xf]
      %v2822 = vld [vmem:[%s516 + $0x14] sm:$0x1]
      %v2823 = vld [vmem:[%s516 + $0x18] sm:$0xf]
      %v2824 = vld [vmem:[%s516 + $0x1c] sm:$0x1]
      %v2825 = vld [vmem:[%s516 + $0x20] sm:$0xf]
      %v2826 = vld [vmem:[%s516 + $0x24] sm:$0x1]
      %v2827 = vld [vmem:[%s516 + $0x28] sm:$0xf]
      %v2828 = vld [vmem:[%s516 + $0x2c] sm:$0x1]
      %v2829 = vld [vmem:[%s516 + $0x30] sm:$0xf]
      %v2830 = vld [vmem:[%s516 + $0x34] sm:$0x1]
      %v2831 = vld [vmem:[%s516 + $0x38] sm:$0xf]
      %v2832 = vld [vmem:[%s516 + $0x3c] sm:$0x1]
      %v2834 = vshrl.u32 %v2817, 16
      %v2836 = vrot.slane %v2834, 4
      %v2837 = vshll.u32 %v2817, 16
      %v2839 = vrot.slane %v2837, 5
      %v2840 = vor.u32 %v2836, %v2839
      %v2841 = vrot.slane %v2840, 4
      %v2843 = vshll.u32 %v2818, 16
      %v2845 = vrot.slane %v2843, 5
      %v2846 = vsel %vm621, %v2841, %v2845
      %v2848 = vshrl.u32 %v2819, 16
      %v2850 = vrot.slane %v2848, 4
      %v2851 = vshll.u32 %v2819, 16
      %v2853 = vrot.slane %v2851, 5
      %v2854 = vor.u32 %v2850, %v2853
      %v2855 = vrot.slane %v2854, 4
      %v2857 = vshll.u32 %v2820, 16
      %v2859 = vrot.slane %v2857, 5
      %v2860 = vsel %vm621, %v2855, %v2859
      %v2862 = vshrl.u32 %v2821, 16
      %v2864 = vrot.slane %v2862, 4
      %v2865 = vshll.u32 %v2821, 16
      %v2867 = vrot.slane %v2865, 5
      %v2868 = vor.u32 %v2864, %v2867
      %v2869 = vrot.slane %v2868, 4
      %v2871 = vshll.u32 %v2822, 16
      %v2873 = vrot.slane %v2871, 5
      %v2874 = vsel %vm621, %v2869, %v2873
      %v2876 = vshrl.u32 %v2823, 16
      %v2878 = vrot.slane %v2876, 4
      %v2879 = vshll.u32 %v2823, 16
      %v2881 = vrot.slane %v2879, 5
      %v2882 = vor.u32 %v2878, %v2881
      %v2883 = vrot.slane %v2882, 4
      %v2885 = vshll.u32 %v2824, 16
      %v2887 = vrot.slane %v2885, 5
      %v2888 = vsel %vm621, %v2883, %v2887
      %v2890 = vshrl.u32 %v2825, 16
      %v2892 = vrot.slane %v2890, 4
      %v2893 = vshll.u32 %v2825, 16
      %v2895 = vrot.slane %v2893, 5
      %v2896 = vor.u32 %v2892, %v2895
      %v2897 = vrot.slane %v2896, 4
      %v2899 = vshll.u32 %v2826, 16
      %v2901 = vrot.slane %v2899, 5
      %v2902 = vsel %vm621, %v2897, %v2901
      %v2904 = vshrl.u32 %v2827, 16
      %v2906 = vrot.slane %v2904, 4
      %v2907 = vshll.u32 %v2827, 16
      %v2909 = vrot.slane %v2907, 5
      %v2910 = vor.u32 %v2906, %v2909
      %v2911 = vrot.slane %v2910, 4
      %v2913 = vshll.u32 %v2828, 16
      %v2915 = vrot.slane %v2913, 5
      %v2916 = vsel %vm621, %v2911, %v2915
      %v2918 = vshrl.u32 %v2829, 16
      %v2920 = vrot.slane %v2918, 4
      %v2921 = vshll.u32 %v2829, 16
      %v2923 = vrot.slane %v2921, 5
      %v2924 = vor.u32 %v2920, %v2923
      %v2925 = vrot.slane %v2924, 4
      %v2927 = vshll.u32 %v2830, 16
      %v2929 = vrot.slane %v2927, 5
      %v2930 = vsel %vm621, %v2925, %v2929
      %v2932 = vshrl.u32 %v2831, 16
      %v2934 = vrot.slane %v2932, 4
      %v2935 = vshll.u32 %v2831, 16
      %v2937 = vrot.slane %v2935, 5
      %v2938 = vor.u32 %v2934, %v2937
      %v2939 = vrot.slane %v2938, 4
      %v2941 = vshll.u32 %v2832, 16
      %v2943 = vrot.slane %v2941, 5
      %v2944 = vsel %vm621, %v2939, %v2943
      %v2945 = vunpack.c.l.b16 %v2846
      %v2946 = vunpack.c.l.b16 %v2860
      %v2947 = vunpack.c.l.b16 %v2874
      %v2948 = vunpack.c.l.b16 %v2888
      %v2949 = vunpack.c.l.b16 %v2902
      %v2950 = vunpack.c.l.b16 %v2916
      %v2951 = vunpack.c.l.b16 %v2930
      %v2952 = vunpack.c.l.b16 %v2944
      %v2953 = vpack.c.b16 %v2946, %v2945
      %v2954 = vpack.c.b16 %v2948, %v2947
      %v2955 = vpack.c.b16 %v2950, %v2949
      %v2956 = vpack.c.b16 %v2952, %v2951
      %2961 = vst [vmem:[#allocation3 + $0x20] sm:$0xff] %v2953
      %2962 = vst [vmem:[#allocation3 + $0x68] sm:$0xff] %v2954
      %2963 = vst [vmem:[#allocation3 + $0xb0] sm:$0xff] %v2955
      %2964 = vst [vmem:[#allocation3 + $0xf8] sm:$0xff] %v2956
      %v2965 = vld [vmem:[%s516] sm:$0xe]
      %v2966 = vld [vmem:[%s516 + $0x4] sm:$0x1]
      %v2967 = vld [vmem:[%s516 + $0x8] sm:$0xe]
      %v2968 = vld [vmem:[%s516 + $0xc] sm:$0x1]
      %v2969 = vld [vmem:[%s516 + $0x10] sm:$0xe]
      %v2970 = vld [vmem:[%s516 + $0x14] sm:$0x1]
      %v2971 = vld [vmem:[%s516 + $0x18] sm:$0xe]
      %v2972 = vld [vmem:[%s516 + $0x1c] sm:$0x1]
      %v2973 = vld [vmem:[%s516 + $0x20] sm:$0xe]
      %v2974 = vld [vmem:[%s516 + $0x24] sm:$0x1]
      %v2975 = vld [vmem:[%s516 + $0x28] sm:$0xe]
      %v2976 = vld [vmem:[%s516 + $0x2c] sm:$0x1]
      %v2977 = vld [vmem:[%s516 + $0x30] sm:$0xe]
      %v2978 = vld [vmem:[%s516 + $0x34] sm:$0x1]
      %v2979 = vld [vmem:[%s516 + $0x38] sm:$0xe]
      %v2980 = vld [vmem:[%s516 + $0x3c] sm:$0x1]
      %v2997 = vrot.slane %v2965, 5
      %v2998 = vrot.slane %v2997, 4
      %v2999 = vrot.slane %v2966, 5
      %v3000 = vsel %vm788, %v2998, %v2999
      %v3001 = vrot.slane %v2967, 5
      %v3002 = vrot.slane %v3001, 4
      %v3003 = vrot.slane %v2968, 5
      %v3004 = vsel %vm788, %v3002, %v3003
      %v3005 = vrot.slane %v2969, 5
      %v3006 = vrot.slane %v3005, 4
      %v3007 = vrot.slane %v2970, 5
      %v3008 = vsel %vm788, %v3006, %v3007
      %v3009 = vrot.slane %v2971, 5
      %v3010 = vrot.slane %v3009, 4
      %v3011 = vrot.slane %v2972, 5
      %v3012 = vsel %vm788, %v3010, %v3011
      %v3013 = vrot.slane %v2973, 5
      %v3014 = vrot.slane %v3013, 4
      %v3015 = vrot.slane %v2974, 5
      %v3016 = vsel %vm788, %v3014, %v3015
      %v3017 = vrot.slane %v2975, 5
      %v3018 = vrot.slane %v3017, 4
      %v3019 = vrot.slane %v2976, 5
      %v3020 = vsel %vm788, %v3018, %v3019
      %v3021 = vrot.slane %v2977, 5
      %v3022 = vrot.slane %v3021, 4
      %v3023 = vrot.slane %v2978, 5
      %v3024 = vsel %vm788, %v3022, %v3023
      %v3025 = vrot.slane %v2979, 5
      %v3026 = vrot.slane %v3025, 4
      %v3027 = vrot.slane %v2980, 5
      %v3028 = vsel %vm788, %v3026, %v3027
      %v3029 = vunpack.c.l.b16 %v3000
      %v3030 = vunpack.c.l.b16 %v3004
      %v3031 = vunpack.c.l.b16 %v3008
      %v3032 = vunpack.c.l.b16 %v3012
      %v3033 = vunpack.c.l.b16 %v3016
      %v3034 = vunpack.c.l.b16 %v3020
      %v3035 = vunpack.c.l.b16 %v3024
      %v3036 = vunpack.c.l.b16 %v3028
      %v3037 = vpack.c.b16 %v3030, %v3029
      %v3038 = vpack.c.b16 %v3032, %v3031
      %v3039 = vpack.c.b16 %v3034, %v3033
      %v3040 = vpack.c.b16 %v3036, %v3035
      %3045 = vst [vmem:[#allocation3 + $0x28] sm:$0xff] %v3037
      %3046 = vst [vmem:[#allocation3 + $0x70] sm:$0xff] %v3038
      %3047 = vst [vmem:[#allocation3 + $0xb8] sm:$0xff] %v3039
      %3048 = vst [vmem:[#allocation3 + $0x100] sm:$0xff] %v3040
      %v3049 = vld [vmem:[%s1109] sm:$0xf]
      %v3050 = vld [vmem:[%s1109 + $0x8] sm:$0xf]
      %v3051 = vld [vmem:[%s1109 + $0x10] sm:$0xf]
      %v3052 = vld [vmem:[%s1109 + $0x18] sm:$0xf]
      %v3053 = vld [vmem:[%s1109 + $0x20] sm:$0xf]
      %v3054 = vld [vmem:[%s1109 + $0x28] sm:$0xf]
      %v3055 = vld [vmem:[%s1109 + $0x30] sm:$0xf]
      %v3056 = vld [vmem:[%s1109 + $0x38] sm:$0xf]
      %v3065 = vunpack.c.l.b16 %v3049
      %v3066 = vunpack.c.l.b16 %v3050
      %v3067 = vunpack.c.l.b16 %v3051
      %v3068 = vunpack.c.l.b16 %v3052
      %v3069 = vunpack.c.l.b16 %v3053
      %v3070 = vunpack.c.l.b16 %v3054
      %v3071 = vunpack.c.l.b16 %v3055
      %v3072 = vunpack.c.l.b16 %v3056
      %v3073 = vpack.c.b16 %v3066, %v3065
      %v3074 = vpack.c.b16 %v3068, %v3067
      %v3075 = vpack.c.b16 %v3070, %v3069
      %v3076 = vpack.c.b16 %v3072, %v3071
      %3081 = vst [vmem:[#allocation3 + $0x30] sm:$0xff] %v3073
      %3082 = vst [vmem:[#allocation3 + $0x78] sm:$0xff] %v3074
      %3083 = vst [vmem:[#allocation3 + $0xc0] sm:$0xff] %v3075
      %3084 = vst [vmem:[#allocation3 + $0x108] sm:$0xff] %v3076
      %v3085 = vld [vmem:[%s1109] sm:$0xf]
      %v3086 = vld [vmem:[%s1109 + $0x4] sm:$0x1]
      %v3087 = vld [vmem:[%s1109 + $0x8] sm:$0xf]
      %v3088 = vld [vmem:[%s1109 + $0xc] sm:$0x1]
      %v3089 = vld [vmem:[%s1109 + $0x10] sm:$0xf]
      %v3090 = vld [vmem:[%s1109 + $0x14] sm:$0x1]
      %v3091 = vld [vmem:[%s1109 + $0x18] sm:$0xf]
      %v3092 = vld [vmem:[%s1109 + $0x1c] sm:$0x1]
      %v3093 = vld [vmem:[%s1109 + $0x20] sm:$0xf]
      %v3094 = vld [vmem:[%s1109 + $0x24] sm:$0x1]
      %v3095 = vld [vmem:[%s1109 + $0x28] sm:$0xf]
      %v3096 = vld [vmem:[%s1109 + $0x2c] sm:$0x1]
      %v3097 = vld [vmem:[%s1109 + $0x30] sm:$0xf]
      %v3098 = vld [vmem:[%s1109 + $0x34] sm:$0x1]
      %v3099 = vld [vmem:[%s1109 + $0x38] sm:$0xf]
      %v3100 = vld [vmem:[%s1109 + $0x3c] sm:$0x1]
      %v3102 = vshrl.u32 %v3085, 16
      %v3104 = vrot.slane %v3102, 4
      %v3105 = vshll.u32 %v3085, 16
      %v3107 = vrot.slane %v3105, 5
      %v3108 = vor.u32 %v3104, %v3107
      %v3109 = vrot.slane %v3108, 4
      %v3111 = vshll.u32 %v3086, 16
      %v3113 = vrot.slane %v3111, 5
      %v3114 = vsel %vm621, %v3109, %v3113
      %v3116 = vshrl.u32 %v3087, 16
      %v3118 = vrot.slane %v3116, 4
      %v3119 = vshll.u32 %v3087, 16
      %v3121 = vrot.slane %v3119, 5
      %v3122 = vor.u32 %v3118, %v3121
      %v3123 = vrot.slane %v3122, 4
      %v3125 = vshll.u32 %v3088, 16
      %v3127 = vrot.slane %v3125, 5
      %v3128 = vsel %vm621, %v3123, %v3127
      %v3130 = vshrl.u32 %v3089, 16
      %v3132 = vrot.slane %v3130, 4
      %v3133 = vshll.u32 %v3089, 16
      %v3135 = vrot.slane %v3133, 5
      %v3136 = vor.u32 %v3132, %v3135
      %v3137 = vrot.slane %v3136, 4
      %v3139 = vshll.u32 %v3090, 16
      %v3141 = vrot.slane %v3139, 5
      %v3142 = vsel %vm621, %v3137, %v3141
      %v3144 = vshrl.u32 %v3091, 16
      %v3146 = vrot.slane %v3144, 4
      %v3147 = vshll.u32 %v3091, 16
      %v3149 = vrot.slane %v3147, 5
      %v3150 = vor.u32 %v3146, %v3149
      %v3151 = vrot.slane %v3150, 4
      %v3153 = vshll.u32 %v3092, 16
      %v3155 = vrot.slane %v3153, 5
      %v3156 = vsel %vm621, %v3151, %v3155
      %v3158 = vshrl.u32 %v3093, 16
      %v3160 = vrot.slane %v3158, 4
      %v3161 = vshll.u32 %v3093, 16
      %v3163 = vrot.slane %v3161, 5
      %v3164 = vor.u32 %v3160, %v3163
      %v3165 = vrot.slane %v3164, 4
      %v3167 = vshll.u32 %v3094, 16
      %v3169 = vrot.slane %v3167, 5
      %v3170 = vsel %vm621, %v3165, %v3169
      %v3172 = vshrl.u32 %v3095, 16
      %v3174 = vrot.slane %v3172, 4
      %v3175 = vshll.u32 %v3095, 16
      %v3177 = vrot.slane %v3175, 5
      %v3178 = vor.u32 %v3174, %v3177
      %v3179 = vrot.slane %v3178, 4
      %v3181 = vshll.u32 %v3096, 16
      %v3183 = vrot.slane %v3181, 5
      %v3184 = vsel %vm621, %v3179, %v3183
      %v3186 = vshrl.u32 %v3097, 16
      %v3188 = vrot.slane %v3186, 4
      %v3189 = vshll.u32 %v3097, 16
      %v3191 = vrot.slane %v3189, 5
      %v3192 = vor.u32 %v3188, %v3191
      %v3193 = vrot.slane %v3192, 4
      %v3195 = vshll.u32 %v3098, 16
      %v3197 = vrot.slane %v3195, 5
      %v3198 = vsel %vm621, %v3193, %v3197
      %v3200 = vshrl.u32 %v3099, 16
      %v3202 = vrot.slane %v3200, 4
      %v3203 = vshll.u32 %v3099, 16
      %v3205 = vrot.slane %v3203, 5
      %v3206 = vor.u32 %v3202, %v3205
      %v3207 = vrot.slane %v3206, 4
      %v3209 = vshll.u32 %v3100, 16
      %v3211 = vrot.slane %v3209, 5
      %v3212 = vsel %vm621, %v3207, %v3211
      %v3213 = vunpack.c.l.b16 %v3114
      %v3214 = vunpack.c.l.b16 %v3128
      %v3215 = vunpack.c.l.b16 %v3142
      %v3216 = vunpack.c.l.b16 %v3156
      %v3217 = vunpack.c.l.b16 %v3170
      %v3218 = vunpack.c.l.b16 %v3184
      %v3219 = vunpack.c.l.b16 %v3198
      %v3220 = vunpack.c.l.b16 %v3212
      %v3221 = vpack.c.b16 %v3214, %v3213
      %v3222 = vpack.c.b16 %v3216, %v3215
      %v3223 = vpack.c.b16 %v3218, %v3217
      %v3224 = vpack.c.b16 %v3220, %v3219
      %3229 = vst [vmem:[#allocation3 + $0x38] sm:$0xff] %v3221
      %3230 = vst [vmem:[#allocation3 + $0x80] sm:$0xff] %v3222
      %3231 = vst [vmem:[#allocation3 + $0xc8] sm:$0xff] %v3223
      %3232 = vst [vmem:[#allocation3 + $0x110] sm:$0xff] %v3224
      %v3233 = vld [vmem:[%s1109] sm:$0xe]
      %v3234 = vld [vmem:[%s1109 + $0x4] sm:$0x1]
      %v3235 = vld [vmem:[%s1109 + $0x8] sm:$0xe]
      %v3236 = vld [vmem:[%s1109 + $0xc] sm:$0x1]
      %v3237 = vld [vmem:[%s1109 + $0x10] sm:$0xe]
      %v3238 = vld [vmem:[%s1109 + $0x14] sm:$0x1]
      %v3239 = vld [vmem:[%s1109 + $0x18] sm:$0xe]
      %v3240 = vld [vmem:[%s1109 + $0x1c] sm:$0x1]
      %v3241 = vld [vmem:[%s1109 + $0x20] sm:$0xe]
      %v3242 = vld [vmem:[%s1109 + $0x24] sm:$0x1]
      %v3243 = vld [vmem:[%s1109 + $0x28] sm:$0xe]
      %v3244 = vld [vmem:[%s1109 + $0x2c] sm:$0x1]
      %v3245 = vld [vmem:[%s1109 + $0x30] sm:$0xe]
      %v3246 = vld [vmem:[%s1109 + $0x34] sm:$0x1]
      %v3247 = vld [vmem:[%s1109 + $0x38] sm:$0xe]
      %v3248 = vld [vmem:[%s1109 + $0x3c] sm:$0x1]
      %v3265 = vrot.slane %v3233, 5
      %v3266 = vrot.slane %v3265, 4
      %v3267 = vrot.slane %v3234, 5
      %v3268 = vsel %vm788, %v3266, %v3267
      %v3269 = vrot.slane %v3235, 5
      %v3270 = vrot.slane %v3269, 4
      %v3271 = vrot.slane %v3236, 5
      %v3272 = vsel %vm788, %v3270, %v3271
      %v3273 = vrot.slane %v3237, 5
      %v3274 = vrot.slane %v3273, 4
      %v3275 = vrot.slane %v3238, 5
      %v3276 = vsel %vm788, %v3274, %v3275
      %v3277 = vrot.slane %v3239, 5
      %v3278 = vrot.slane %v3277, 4
      %v3279 = vrot.slane %v3240, 5
      %v3280 = vsel %vm788, %v3278, %v3279
      %v3281 = vrot.slane %v3241, 5
      %v3282 = vrot.slane %v3281, 4
      %v3283 = vrot.slane %v3242, 5
      %v3284 = vsel %vm788, %v3282, %v3283
      %v3285 = vrot.slane %v3243, 5
      %v3286 = vrot.slane %v3285, 4
      %v3287 = vrot.slane %v3244, 5
      %v3288 = vsel %vm788, %v3286, %v3287
      %v3289 = vrot.slane %v3245, 5
      %v3290 = vrot.slane %v3289, 4
      %v3291 = vrot.slane %v3246, 5
      %v3292 = vsel %vm788, %v3290, %v3291
      %v3293 = vrot.slane %v3247, 5
      %v3294 = vrot.slane %v3293, 4
      %v3295 = vrot.slane %v3248, 5
      %v3296 = vsel %vm788, %v3294, %v3295
      %v3297 = vunpack.c.l.b16 %v3268
      %v3298 = vunpack.c.l.b16 %v3272
      %v3299 = vunpack.c.l.b16 %v3276
      %v3300 = vunpack.c.l.b16 %v3280
      %v3301 = vunpack.c.l.b16 %v3284
      %v3302 = vunpack.c.l.b16 %v3288
      %v3303 = vunpack.c.l.b16 %v3292
      %v3304 = vunpack.c.l.b16 %v3296
      %v3305 = vpack.c.b16 %v3298, %v3297
      %v3306 = vpack.c.b16 %v3300, %v3299
      %v3307 = vpack.c.b16 %v3302, %v3301
      %v3308 = vpack.c.b16 %v3304, %v3303
      %3313 = vst [vmem:[#allocation3 + $0x40] sm:$0xff] %v3305
      %3314 = vst [vmem:[#allocation3 + $0x88] sm:$0xff] %v3306
      %3315 = vst [vmem:[#allocation3 + $0xd0] sm:$0xff] %v3307
      %3316 = vst [vmem:[#allocation3 + $0x118] sm:$0xff] %v3308
      %v3317 = vld [vmem:[#allocation3] sm:$0xff]
      %v3318 = vld [vmem:[#allocation3 + $0x8] sm:$0xff]
      %v3319 = vld [vmem:[#allocation3 + $0x10] sm:$0xff]
      %v3320 = vld [vmem:[#allocation3 + $0x18] sm:$0xff]
      %v3321 = vld [vmem:[#allocation3 + $0x20] sm:$0xff]
      %v3322 = vld [vmem:[#allocation3 + $0x28] sm:$0xff]
      %v3323 = vld [vmem:[#allocation3 + $0x30] sm:$0xff]
      %v3324 = vld [vmem:[#allocation3 + $0x38] sm:$0xff]
      %v3325 = vld [vmem:[#allocation3 + $0x40] sm:$0xff]
      %v3326 = vld [vmem:[#allocation3 + $0x48] sm:$0xff]
      %v3327 = vld [vmem:[#allocation3 + $0x50] sm:$0xff]
      %v3328 = vld [vmem:[#allocation3 + $0x58] sm:$0xff]
      %v3329 = vld [vmem:[#allocation3 + $0x60] sm:$0xff]
      %v3330 = vld [vmem:[#allocation3 + $0x68] sm:$0xff]
      %v3331 = vld [vmem:[#allocation3 + $0x70] sm:$0xff]
      %v3332 = vld [vmem:[#allocation3 + $0x78] sm:$0xff]
      %v3333 = vld [vmem:[#allocation3 + $0x80] sm:$0xff]
      %v3334 = vld [vmem:[#allocation3 + $0x88] sm:$0xff]
      %v3335 = vld [vmem:[#allocation3 + $0x90] sm:$0xff]
      %v3336 = vld [vmem:[#allocation3 + $0x98] sm:$0xff]
      %v3337 = vld [vmem:[#allocation3 + $0xa0] sm:$0xff]
      %v3338 = vld [vmem:[#allocation3 + $0xa8] sm:$0xff]
      %v3339 = vld [vmem:[#allocation3 + $0xb0] sm:$0xff]
      %v3340 = vld [vmem:[#allocation3 + $0xb8] sm:$0xff]
      %v3341 = vld [vmem:[#allocation3 + $0xc0] sm:$0xff]
      %v3342 = vld [vmem:[#allocation3 + $0xc8] sm:$0xff]
      %v3343 = vld [vmem:[#allocation3 + $0xd0] sm:$0xff]
      %v3344 = vld [vmem:[#allocation3 + $0xd8] sm:$0xff]
      %v3345 = vld [vmem:[#allocation3 + $0xe0] sm:$0xff]
      %v3346 = vld [vmem:[#allocation3 + $0xe8] sm:$0xff]
      %v3347 = vld [vmem:[#allocation3 + $0xf0] sm:$0xff]
      %v3348 = vld [vmem:[#allocation3 + $0xf8] sm:$0xff]
      %v3349 = vld [vmem:[#allocation3 + $0x100] sm:$0xff]
      %v3350 = vld [vmem:[#allocation3 + $0x108] sm:$0xff]
      %v3351 = vld [vmem:[#allocation3 + $0x110] sm:$0xff]
      %v3352 = vld [vmem:[#allocation3 + $0x118] sm:$0xff]
      %v3353 = vld [vmem:[%s2] sm:$0xf]
      %v3354 = vld [vmem:[%s2 + $0x4] sm:$0xf]
      %v3355 = vld [vmem:[%s2 + $0x8] sm:$0xf]
      %v3356 = vld [vmem:[%s2 + $0xc] sm:$0xf]
      %v3357 = vld [vmem:[%s2 + $0x10] sm:$0xf]
      %v3358 = vld [vmem:[%s2 + $0x14] sm:$0xf]
      %v3359 = vld [vmem:[%s2 + $0x18] sm:$0xf]
      %v3360 = vld [vmem:[%s2 + $0x1c] sm:$0xf]
      %v3361 = vld [vmem:[%s2 + $0x20] sm:$0xf]
      %v3362 = vld [vmem:[%s2 + $0x24] sm:$0xf]
      %v3363 = vld [vmem:[%s2 + $0x28] sm:$0xf]
      %v3364 = vld [vmem:[%s2 + $0x2c] sm:$0xf]
      %v3365 = vld [vmem:[%s2 + $0x30] sm:$0xf]
      %v3366 = vld [vmem:[%s2 + $0x34] sm:$0xf]
      %v3367 = vld [vmem:[%s2 + $0x38] sm:$0xf]
      %v3368 = vld [vmem:[%s2 + $0x3c] sm:$0xf]
      %v3369 = vld [vmem:[%s2 + $0x40] sm:$0xf]
      %v3370 = vld [vmem:[%s2 + $0x44] sm:$0xf]
      %v3371 = vld [vmem:[%s2 + $0x48] sm:$0xf]
      %v3372 = vld [vmem:[%s2 + $0x4c] sm:$0xf]
      %v3373 = vld [vmem:[%s2 + $0x50] sm:$0xf]
      %v3374 = vld [vmem:[%s2 + $0x54] sm:$0xf]
      %v3375 = vld [vmem:[%s2 + $0x58] sm:$0xf]
      %v3376 = vld [vmem:[%s2 + $0x5c] sm:$0xf]
      %v3377 = vld [vmem:[%s2 + $0x60] sm:$0xf]
      %v3378 = vld [vmem:[%s2 + $0x64] sm:$0xf]
      %v3379 = vld [vmem:[%s2 + $0x68] sm:$0xf]
      %v3380 = vld [vmem:[%s2 + $0x6c] sm:$0xf]
      %v3381 = vld [vmem:[%s2 + $0x70] sm:$0xf]
      %v3382 = vld [vmem:[%s2 + $0x74] sm:$0xf]
      %v3383 = vld [vmem:[%s2 + $0x78] sm:$0xf]
      %v3384 = vld [vmem:[%s2 + $0x7c] sm:$0xf]
      %v3385 = vld [vmem:[%s2 + $0x80] sm:$0xf]
      %v3386 = vld [vmem:[%s2 + $0x84] sm:$0xf]
      %v3387 = vld [vmem:[%s2 + $0x88] sm:$0xf]
      %v3388 = vld [vmem:[%s2 + $0x8c] sm:$0xf]
      %v3389 = vld [vmem:[%s2 + $0x90] sm:$0xf]
      %v3390 = vld [vmem:[%s2 + $0x94] sm:$0xf]
      %v3391 = vld [vmem:[%s2 + $0x98] sm:$0xf]
      %v3392 = vld [vmem:[%s2 + $0x9c] sm:$0xf]
      %v3393 = vld [vmem:[%s2 + $0xa0] sm:$0xf]
      %v3394 = vld [vmem:[%s2 + $0xa4] sm:$0xf]
      %v3395 = vld [vmem:[%s2 + $0xa8] sm:$0xf]
      %v3396 = vld [vmem:[%s2 + $0xac] sm:$0xf]
      %v3397 = vld [vmem:[%s2 + $0xb0] sm:$0xf]
      %v3398 = vld [vmem:[%s2 + $0xb4] sm:$0xf]
      %v3399 = vld [vmem:[%s2 + $0xb8] sm:$0xf]
      %v3400 = vld [vmem:[%s2 + $0xbc] sm:$0xf]
      %v3401 = vld [vmem:[%s2 + $0xc0] sm:$0xf]
      %v3402 = vld [vmem:[%s2 + $0xc4] sm:$0xf]
      %v3403 = vld [vmem:[%s2 + $0xc8] sm:$0xf]
      %v3404 = vld [vmem:[%s2 + $0xcc] sm:$0xf]
      %v3405 = vld [vmem:[%s2 + $0xd0] sm:$0xf]
      %v3406 = vld [vmem:[%s2 + $0xd4] sm:$0xf]
      %v3407 = vld [vmem:[%s2 + $0xd8] sm:$0xf]
      %v3408 = vld [vmem:[%s2 + $0xdc] sm:$0xf]
      %v3409 = vld [vmem:[%s2 + $0xe0] sm:$0xf]
      %v3410 = vld [vmem:[%s2 + $0xe4] sm:$0xf]
      %v3411 = vld [vmem:[%s2 + $0xe8] sm:$0xf]
      %v3412 = vld [vmem:[%s2 + $0xec] sm:$0xf]
      %v3413 = vld [vmem:[%s2 + $0xf0] sm:$0xf]
      %v3414 = vld [vmem:[%s2 + $0xf4] sm:$0xf]
      %v3415 = vld [vmem:[%s2 + $0xf8] sm:$0xf]
      %v3416 = vld [vmem:[%s2 + $0xfc] sm:$0xf]
      %v3417 = vld [vmem:[%s2 + $0x100] sm:$0xf]
      %v3418 = vld [vmem:[%s2 + $0x104] sm:$0xf]
      %v3419 = vld [vmem:[%s2 + $0x108] sm:$0xf]
      %v3420 = vld [vmem:[%s2 + $0x10c] sm:$0xf]
      %v3421 = vld [vmem:[%s2 + $0x110] sm:$0xf]
      %v3422 = vld [vmem:[%s2 + $0x114] sm:$0xf]
      %v3423 = vld [vmem:[%s2 + $0x118] sm:$0xf]
      %v3424 = vld [vmem:[%s2 + $0x11c] sm:$0xf]
      %v3425 = vld [vmem:[%s2 + $0x120] sm:$0xf]
      %v3426 = vld [vmem:[%s2 + $0x124] sm:$0xf]
      %v3427 = vld [vmem:[%s2 + $0x128] sm:$0xf]
      %v3428 = vld [vmem:[%s2 + $0x12c] sm:$0xf]
      %v3429 = vld [vmem:[%s2 + $0x130] sm:$0xf]
      %v3430 = vld [vmem:[%s2 + $0x134] sm:$0xf]
      %v3431 = vld [vmem:[%s2 + $0x138] sm:$0xf]
      %v3432 = vld [vmem:[%s2 + $0x13c] sm:$0xf]
      %v3433 = vld [vmem:[%s2 + $0x140] sm:$0xf]
      %v3434 = vld [vmem:[%s2 + $0x144] sm:$0xf]
      %v3435 = vld [vmem:[%s2 + $0x148] sm:$0xf]
      %v3436 = vld [vmem:[%s2 + $0x14c] sm:$0xf]
      %v3437 = vld [vmem:[%s2 + $0x150] sm:$0xf]
      %v3438 = vld [vmem:[%s2 + $0x154] sm:$0xf]
      %v3439 = vld [vmem:[%s2 + $0x158] sm:$0xf]
      %v3440 = vld [vmem:[%s2 + $0x15c] sm:$0xf]
      %v3441 = vld [vmem:[%s2 + $0x160] sm:$0xf]
      %v3442 = vld [vmem:[%s2 + $0x164] sm:$0xf]
      %v3443 = vld [vmem:[%s2 + $0x168] sm:$0xf]
      %v3444 = vld [vmem:[%s2 + $0x16c] sm:$0xf]
      %v3445 = vld [vmem:[%s2 + $0x170] sm:$0xf]
      %v3446 = vld [vmem:[%s2 + $0x174] sm:$0xf]
      %v3447 = vld [vmem:[%s2 + $0x178] sm:$0xf]
      %v3448 = vld [vmem:[%s2 + $0x17c] sm:$0xf]
      %v3449 = vld [vmem:[%s2 + $0x180] sm:$0xf]
      %v3450 = vld [vmem:[%s2 + $0x184] sm:$0xf]
      %v3451 = vld [vmem:[%s2 + $0x188] sm:$0xf]
      %v3452 = vld [vmem:[%s2 + $0x18c] sm:$0xf]
      %v3453 = vld [vmem:[%s2 + $0x190] sm:$0xf]
      %v3454 = vld [vmem:[%s2 + $0x194] sm:$0xf]
      %v3455 = vld [vmem:[%s2 + $0x198] sm:$0xf]
      %v3456 = vld [vmem:[%s2 + $0x19c] sm:$0xf]
      %v3457 = vld [vmem:[%s2 + $0x1a0] sm:$0xf]
      %v3458 = vld [vmem:[%s2 + $0x1a4] sm:$0xf]
      %v3459 = vld [vmem:[%s2 + $0x1a8] sm:$0xf]
      %v3460 = vld [vmem:[%s2 + $0x1ac] sm:$0xf]
      %v3461 = vld [vmem:[%s2 + $0x1b0] sm:$0xf]
      %v3462 = vld [vmem:[%s2 + $0x1b4] sm:$0xf]
      %v3463 = vld [vmem:[%s2 + $0x1b8] sm:$0xf]
      %v3464 = vld [vmem:[%s2 + $0x1bc] sm:$0xf]
      %v3465 = vld [vmem:[%s2 + $0x1c0] sm:$0xf]
      %v3466 = vld [vmem:[%s2 + $0x1c4] sm:$0xf]
      %v3467 = vld [vmem:[%s2 + $0x1c8] sm:$0xf]
      %v3468 = vld [vmem:[%s2 + $0x1cc] sm:$0xf]
      %v3469 = vld [vmem:[%s2 + $0x1d0] sm:$0xf]
      %v3470 = vld [vmem:[%s2 + $0x1d4] sm:$0xf]
      %v3471 = vld [vmem:[%s2 + $0x1d8] sm:$0xf]
      %v3472 = vld [vmem:[%s2 + $0x1dc] sm:$0xf]
      %v3473 = vld [vmem:[%s2 + $0x1e0] sm:$0xf]
      %v3474 = vld [vmem:[%s2 + $0x1e4] sm:$0xf]
      %v3475 = vld [vmem:[%s2 + $0x1e8] sm:$0xf]
      %v3476 = vld [vmem:[%s2 + $0x1ec] sm:$0xf]
      %v3477 = vld [vmem:[%s2 + $0x1f0] sm:$0xf]
      %v3478 = vld [vmem:[%s2 + $0x1f4] sm:$0xf]
      %v3479 = vld [vmem:[%s2 + $0x1f8] sm:$0xf]
      %v3480 = vld [vmem:[%s2 + $0x1fc] sm:$0xf]
      %v3481 = vld [vmem:[%s2 + $0x200] sm:$0xf]
      %v3482 = vld [vmem:[%s2 + $0x204] sm:$0xf]
      %v3483 = vld [vmem:[%s2 + $0x208] sm:$0xf]
      %v3484 = vld [vmem:[%s2 + $0x20c] sm:$0xf]
      %v3485 = vld [vmem:[%s2 + $0x210] sm:$0xf]
      %v3486 = vld [vmem:[%s2 + $0x214] sm:$0xf]
      %v3487 = vld [vmem:[%s2 + $0x218] sm:$0xf]
      %v3488 = vld [vmem:[%s2 + $0x21c] sm:$0xf]
      %v3489 = vld [vmem:[%s2 + $0x220] sm:$0xf]
      %v3490 = vld [vmem:[%s2 + $0x224] sm:$0xf]
      %v3491 = vld [vmem:[%s2 + $0x228] sm:$0xf]
      %v3492 = vld [vmem:[%s2 + $0x22c] sm:$0xf]
      %v3493 = vld [vmem:[%s2 + $0x230] sm:$0xf]
      %v3494 = vld [vmem:[%s2 + $0x234] sm:$0xf]
      %v3495 = vld [vmem:[%s2 + $0x238] sm:$0xf]
      %v3496 = vld [vmem:[%s2 + $0x23c] sm:$0xf]
      %v3497 = vld [vmem:[%s273] sm:$0xf]
      %v3498 = vld [vmem:[%s273 + $0x4] sm:$0xf]
      %v3499 = vld [vmem:[%s273 + $0x8] sm:$0xf]
      %v3500 = vld [vmem:[%s273 + $0xc] sm:$0xf]
      %v3501 = vld [vmem:[%s273 + $0x10] sm:$0xf]
      %v3502 = vld [vmem:[%s273 + $0x14] sm:$0xf]
      %v3503 = vld [vmem:[%s273 + $0x18] sm:$0xf]
      %v3504 = vld [vmem:[%s273 + $0x1c] sm:$0xf]
      %v3505 = vunpack.c.l.bf16 %v3497
      %v3506 = vunpack.c.l.bf16 %v3498
      %v3507 = vunpack.c.l.bf16 %v3499
      %v3508 = vunpack.c.l.bf16 %v3500
      %v3509 = vunpack.c.l.bf16 %v3501
      %v3510 = vunpack.c.l.bf16 %v3502
      %v3511 = vunpack.c.l.bf16 %v3503
      %v3512 = vunpack.c.l.bf16 %v3504
      %v3657 = vunpack.c.l.b16 %v3353
      %v3658 = vunpack.c.l.b16 %v3354
      %v3659 = vunpack.c.l.b16 %v3355
      %v3660 = vunpack.c.l.b16 %v3356
      %v3661 = vunpack.c.l.b16 %v3357
      %v3662 = vunpack.c.l.b16 %v3358
      %v3663 = vunpack.c.l.b16 %v3359
      %v3664 = vunpack.c.l.b16 %v3360
      %v3665 = vunpack.c.l.b16 %v3361
      %v3666 = vunpack.c.l.b16 %v3362
      %v3667 = vunpack.c.l.b16 %v3363
      %v3668 = vunpack.c.l.b16 %v3364
      %v3669 = vunpack.c.l.b16 %v3365
      %v3670 = vunpack.c.l.b16 %v3366
      %v3671 = vunpack.c.l.b16 %v3367
      %v3672 = vunpack.c.l.b16 %v3368
      %v3673 = vunpack.c.l.b16 %v3369
      %v3674 = vunpack.c.l.b16 %v3370
      %v3675 = vunpack.c.l.b16 %v3371
      %v3676 = vunpack.c.l.b16 %v3372
      %v3677 = vunpack.c.l.b16 %v3373
      %v3678 = vunpack.c.l.b16 %v3374
      %v3679 = vunpack.c.l.b16 %v3375
      %v3680 = vunpack.c.l.b16 %v3376
      %v3681 = vunpack.c.l.b16 %v3377
      %v3682 = vunpack.c.l.b16 %v3378
      %v3683 = vunpack.c.l.b16 %v3379
      %v3684 = vunpack.c.l.b16 %v3380
      %v3685 = vunpack.c.l.b16 %v3381
      %v3686 = vunpack.c.l.b16 %v3382
      %v3687 = vunpack.c.l.b16 %v3383
      %v3688 = vunpack.c.l.b16 %v3384
      %v3689 = vunpack.c.l.b16 %v3385
      %v3690 = vunpack.c.l.b16 %v3386
      %v3691 = vunpack.c.l.b16 %v3387
      %v3692 = vunpack.c.l.b16 %v3388
      %v3693 = vunpack.c.l.b16 %v3389
      %v3694 = vunpack.c.l.b16 %v3390
      %v3695 = vunpack.c.l.b16 %v3391
      %v3696 = vunpack.c.l.b16 %v3392
      %v3697 = vunpack.c.l.b16 %v3393
      %v3698 = vunpack.c.l.b16 %v3394
      %v3699 = vunpack.c.l.b16 %v3395
      %v3700 = vunpack.c.l.b16 %v3396
      %v3701 = vunpack.c.l.b16 %v3397
      %v3702 = vunpack.c.l.b16 %v3398
      %v3703 = vunpack.c.l.b16 %v3399
      %v3704 = vunpack.c.l.b16 %v3400
      %v3705 = vunpack.c.l.b16 %v3401
      %v3706 = vunpack.c.l.b16 %v3402
      %v3707 = vunpack.c.l.b16 %v3403
      %v3708 = vunpack.c.l.b16 %v3404
      %v3709 = vunpack.c.l.b16 %v3405
      %v3710 = vunpack.c.l.b16 %v3406
      %v3711 = vunpack.c.l.b16 %v3407
      %v3712 = vunpack.c.l.b16 %v3408
      %v3713 = vunpack.c.l.b16 %v3409
      %v3714 = vunpack.c.l.b16 %v3410
      %v3715 = vunpack.c.l.b16 %v3411
      %v3716 = vunpack.c.l.b16 %v3412
      %v3717 = vunpack.c.l.b16 %v3413
      %v3718 = vunpack.c.l.b16 %v3414
      %v3719 = vunpack.c.l.b16 %v3415
      %v3720 = vunpack.c.l.b16 %v3416
      %v3721 = vunpack.c.l.b16 %v3417
      %v3722 = vunpack.c.l.b16 %v3418
      %v3723 = vunpack.c.l.b16 %v3419
      %v3724 = vunpack.c.l.b16 %v3420
      %v3725 = vunpack.c.l.b16 %v3421
      %v3726 = vunpack.c.l.b16 %v3422
      %v3727 = vunpack.c.l.b16 %v3423
      %v3728 = vunpack.c.l.b16 %v3424
      %v3729 = vunpack.c.l.b16 %v3425
      %v3730 = vunpack.c.l.b16 %v3426
      %v3731 = vunpack.c.l.b16 %v3427
      %v3732 = vunpack.c.l.b16 %v3428
      %v3733 = vunpack.c.l.b16 %v3429
      %v3734 = vunpack.c.l.b16 %v3430
      %v3735 = vunpack.c.l.b16 %v3431
      %v3736 = vunpack.c.l.b16 %v3432
      %v3737 = vunpack.c.l.b16 %v3433
      %v3738 = vunpack.c.l.b16 %v3434
      %v3739 = vunpack.c.l.b16 %v3435
      %v3740 = vunpack.c.l.b16 %v3436
      %v3741 = vunpack.c.l.b16 %v3437
      %v3742 = vunpack.c.l.b16 %v3438
      %v3743 = vunpack.c.l.b16 %v3439
      %v3744 = vunpack.c.l.b16 %v3440
      %v3745 = vunpack.c.l.b16 %v3441
      %v3746 = vunpack.c.l.b16 %v3442
      %v3747 = vunpack.c.l.b16 %v3443
      %v3748 = vunpack.c.l.b16 %v3444
      %v3749 = vunpack.c.l.b16 %v3445
      %v3750 = vunpack.c.l.b16 %v3446
      %v3751 = vunpack.c.l.b16 %v3447
      %v3752 = vunpack.c.l.b16 %v3448
      %v3753 = vunpack.c.l.b16 %v3449
      %v3754 = vunpack.c.l.b16 %v3450
      %v3755 = vunpack.c.l.b16 %v3451
      %v3756 = vunpack.c.l.b16 %v3452
      %v3757 = vunpack.c.l.b16 %v3453
      %v3758 = vunpack.c.l.b16 %v3454
      %v3759 = vunpack.c.l.b16 %v3455
      %v3760 = vunpack.c.l.b16 %v3456
      %v3761 = vunpack.c.l.b16 %v3457
      %v3762 = vunpack.c.l.b16 %v3458
      %v3763 = vunpack.c.l.b16 %v3459
      %v3764 = vunpack.c.l.b16 %v3460
      %v3765 = vunpack.c.l.b16 %v3461
      %v3766 = vunpack.c.l.b16 %v3462
      %v3767 = vunpack.c.l.b16 %v3463
      %v3768 = vunpack.c.l.b16 %v3464
      %v3769 = vunpack.c.l.b16 %v3465
      %v3770 = vunpack.c.l.b16 %v3466
      %v3771 = vunpack.c.l.b16 %v3467
      %v3772 = vunpack.c.l.b16 %v3468
      %v3773 = vunpack.c.l.b16 %v3469
      %v3774 = vunpack.c.l.b16 %v3470
      %v3775 = vunpack.c.l.b16 %v3471
      %v3776 = vunpack.c.l.b16 %v3472
      %v3777 = vunpack.c.l.b16 %v3473
      %v3778 = vunpack.c.l.b16 %v3474
      %v3779 = vunpack.c.l.b16 %v3475
      %v3780 = vunpack.c.l.b16 %v3476
      %v3781 = vunpack.c.l.b16 %v3477
      %v3782 = vunpack.c.l.b16 %v3478
      %v3783 = vunpack.c.l.b16 %v3479
      %v3784 = vunpack.c.l.b16 %v3480
      %v3785 = vunpack.c.l.b16 %v3481
      %v3786 = vunpack.c.l.b16 %v3482
      %v3787 = vunpack.c.l.b16 %v3483
      %v3788 = vunpack.c.l.b16 %v3484
      %v3789 = vunpack.c.l.b16 %v3485
      %v3790 = vunpack.c.l.b16 %v3486
      %v3791 = vunpack.c.l.b16 %v3487
      %v3792 = vunpack.c.l.b16 %v3488
      %v3793 = vunpack.c.l.b16 %v3489
      %v3794 = vunpack.c.l.b16 %v3490
      %v3795 = vunpack.c.l.b16 %v3491
      %v3796 = vunpack.c.l.b16 %v3492
      %v3797 = vunpack.c.l.b16 %v3493
      %v3798 = vunpack.c.l.b16 %v3494
      %v3799 = vunpack.c.l.b16 %v3495
      %v3800 = vunpack.c.l.b16 %v3496
      %v3801 = vpack.c.b16 %v3658, %v3657
      %v3802 = vpack.c.b16 %v3660, %v3659
      %v3803 = vpack.c.b16 %v3662, %v3661
      %v3804 = vpack.c.b16 %v3664, %v3663
      %v3805 = vpack.c.b16 %v3666, %v3665
      %v3806 = vpack.c.b16 %v3668, %v3667
      %v3807 = vpack.c.b16 %v3670, %v3669
      %v3808 = vpack.c.b16 %v3672, %v3671
      %v3809 = vpack.c.b16 %v3674, %v3673
      %v3810 = vpack.c.b16 %v3676, %v3675
      %v3811 = vpack.c.b16 %v3678, %v3677
      %v3812 = vpack.c.b16 %v3680, %v3679
      %v3813 = vpack.c.b16 %v3682, %v3681
      %v3814 = vpack.c.b16 %v3684, %v3683
      %v3815 = vpack.c.b16 %v3686, %v3685
      %v3816 = vpack.c.b16 %v3688, %v3687
      %v3817 = vpack.c.b16 %v3690, %v3689
      %v3818 = vpack.c.b16 %v3692, %v3691
      %v3819 = vpack.c.b16 %v3694, %v3693
      %v3820 = vpack.c.b16 %v3696, %v3695
      %v3821 = vpack.c.b16 %v3698, %v3697
      %v3822 = vpack.c.b16 %v3700, %v3699
      %v3823 = vpack.c.b16 %v3702, %v3701
      %v3824 = vpack.c.b16 %v3704, %v3703
      %v3825 = vpack.c.b16 %v3706, %v3705
      %v3826 = vpack.c.b16 %v3708, %v3707
      %v3827 = vpack.c.b16 %v3710, %v3709
      %v3828 = vpack.c.b16 %v3712, %v3711
      %v3829 = vpack.c.b16 %v3714, %v3713
      %v3830 = vpack.c.b16 %v3716, %v3715
      %v3831 = vpack.c.b16 %v3718, %v3717
      %v3832 = vpack.c.b16 %v3720, %v3719
      %v3833 = vpack.c.b16 %v3722, %v3721
      %v3834 = vpack.c.b16 %v3724, %v3723
      %v3835 = vpack.c.b16 %v3726, %v3725
      %v3836 = vpack.c.b16 %v3728, %v3727
      %v3837 = vpack.c.b16 %v3730, %v3729
      %v3838 = vpack.c.b16 %v3732, %v3731
      %v3839 = vpack.c.b16 %v3734, %v3733
      %v3840 = vpack.c.b16 %v3736, %v3735
      %v3841 = vpack.c.b16 %v3738, %v3737
      %v3842 = vpack.c.b16 %v3740, %v3739
      %v3843 = vpack.c.b16 %v3742, %v3741
      %v3844 = vpack.c.b16 %v3744, %v3743
      %v3845 = vpack.c.b16 %v3746, %v3745
      %v3846 = vpack.c.b16 %v3748, %v3747
      %v3847 = vpack.c.b16 %v3750, %v3749
      %v3848 = vpack.c.b16 %v3752, %v3751
      %v3849 = vpack.c.b16 %v3754, %v3753
      %v3850 = vpack.c.b16 %v3756, %v3755
      %v3851 = vpack.c.b16 %v3758, %v3757
      %v3852 = vpack.c.b16 %v3760, %v3759
      %v3853 = vpack.c.b16 %v3762, %v3761
      %v3854 = vpack.c.b16 %v3764, %v3763
      %v3855 = vpack.c.b16 %v3766, %v3765
      %v3856 = vpack.c.b16 %v3768, %v3767
      %v3857 = vpack.c.b16 %v3770, %v3769
      %v3858 = vpack.c.b16 %v3772, %v3771
      %v3859 = vpack.c.b16 %v3774, %v3773
      %v3860 = vpack.c.b16 %v3776, %v3775
      %v3861 = vpack.c.b16 %v3778, %v3777
      %v3862 = vpack.c.b16 %v3780, %v3779
      %v3863 = vpack.c.b16 %v3782, %v3781
      %v3864 = vpack.c.b16 %v3784, %v3783
      %v3865 = vpack.c.b16 %v3786, %v3785
      %v3866 = vpack.c.b16 %v3788, %v3787
      %v3867 = vpack.c.b16 %v3790, %v3789
      %v3868 = vpack.c.b16 %v3792, %v3791
      %v3869 = vpack.c.b16 %v3794, %v3793
      %v3870 = vpack.c.b16 %v3796, %v3795
      %v3871 = vpack.c.b16 %v3798, %v3797
      %v3872 = vpack.c.b16 %v3800, %v3799
      %3945 = vmatprep.subr.bf16.mxu0 0
      %3946 = vmatpush1.bf16.msra.mxu0 %v3801
      %3947 = vmatprep.subr.bf16.mxu0 0
      %3948 = vmatpush1.bf16.msra.mxu0 %v3802
      %3949 = vmatprep.subr.bf16.mxu0 0
      %3950 = vmatpush1.bf16.msra.mxu0 %v3803
      %3951 = vmatprep.subr.bf16.mxu0 0
      %3952 = vmatpush1.bf16.msra.mxu0 %v3804
      %3953 = vmatprep.subr.bf16.mxu0 0
      %3954 = vmatpush1.bf16.msra.mxu0 %v3805
      %3955 = vmatprep.subr.bf16.mxu0 0
      %3956 = vmatpush1.bf16.msra.mxu0 %v3806
      %3957 = vmatprep.subr.bf16.mxu0 0
      %3958 = vmatpush1.bf16.msra.mxu0 %v3807
      %3959 = vmatprep.subr.bf16.mxu0 0
      %3960 = vmatpush1.bf16.msra.mxu0 %v3808
      %3961 = vmatprep.subr.bf16.mxu0 0
      %3962 = vmatpush1.bf16.msra.mxu0 %v3809
      %3963 = vmatprep.subr.bf16.mxu0 0
      %3964 = vmatpush1.bf16.msra.mxu0 %v3810
      %3965 = vmatprep.subr.bf16.mxu0 0
      %3966 = vmatpush1.bf16.msra.mxu0 %v3811
      %3967 = vmatprep.subr.bf16.mxu0 0
      %3968 = vmatpush1.bf16.msra.mxu0 %v3812
      %3969 = vmatprep.subr.bf16.mxu0 0
      %3970 = vmatpush1.bf16.msra.mxu0 %v3813
      %3971 = vmatprep.subr.bf16.mxu0 0
      %3972 = vmatpush1.bf16.msra.mxu0 %v3814
      %3973 = vmatprep.subr.bf16.mxu0 0
      %3974 = vmatpush1.bf16.msra.mxu0 %v3815
      %3975 = vmatprep.subr.bf16.mxu0 0
      %3976 = vmatpush1.bf16.msra.mxu0 %v3816
      %3977 = vmatprep.mubr.bf16.mxu0 %v3318
      %3978 = vmatmul.mubr.bf16.gmra.mrb[0].mxu0 %v3317
      %v3979 = vpop.f32.mrb[0].mxu0
      %v3980 = vadd.f32 %v3505, %v3979
      %v3981 = vpop.f32.mrb[0].mxu0
      %v3982 = vpop.f32.mrb[0].mxu0
      %v3983 = vadd.f32 %v3506, %v3982
      %v3984 = vpop.f32.mrb[0].mxu0
      %3985 = vmatprep.mubr.bf16.mxu0 %v3327
      %3986 = vmatmul.mubr.bf16.gmra.mrb[0].mxu0 %v3326
      %v3987 = vpop.f32.mrb[0].mxu0
      %v3988 = vadd.f32 %v3507, %v3987
      %v3989 = vpop.f32.mrb[0].mxu0
      %v3990 = vpop.f32.mrb[0].mxu0
      %v3991 = vadd.f32 %v3508, %v3990
      %v3992 = vpop.f32.mrb[0].mxu0
      %3993 = vmatprep.mubr.bf16.mxu0 %v3336
      %3994 = vmatmul.mubr.bf16.gmra.mrb[0].mxu0 %v3335
      %v3995 = vpop.f32.mrb[0].mxu0
      %v3996 = vadd.f32 %v3509, %v3995
      %v3997 = vpop.f32.mrb[0].mxu0
      %v3998 = vpop.f32.mrb[0].mxu0
      %v3999 = vadd.f32 %v3510, %v3998
      %v4000 = vpop.f32.mrb[0].mxu0
      %4001 = vmatprep.mubr.bf16.mxu0 %v3345
      %4002 = vmatmul.mubr.bf16.gmra.mrb[0].mxu0 %v3344
      %v4003 = vpop.f32.mrb[0].mxu0
      %v4004 = vadd.f32 %v3511, %v4003
      %v4005 = vpop.f32.mrb[0].mxu0
      %v4006 = vpop.f32.mrb[0].mxu0
      %v4007 = vadd.f32 %v3512, %v4006
      %v4008 = vpop.f32.mrb[0].mxu0
      %4009 = vdwg.mxu0
      %4010 = vmatprep.subr.bf16.mxu0 0
      %4011 = vmatpush1.bf16.msra.mxu0 %v3817
      %4012 = vmatprep.subr.bf16.mxu0 0
      %4013 = vmatpush1.bf16.msra.mxu0 %v3818
      %4014 = vmatprep.subr.bf16.mxu0 0
      %4015 = vmatpush1.bf16.msra.mxu0 %v3819
      %4016 = vmatprep.subr.bf16.mxu0 0
      %4017 = vmatpush1.bf16.msra.mxu0 %v3820
      %4018 = vmatprep.subr.bf16.mxu0 0
      %4019 = vmatpush1.bf16.msra.mxu0 %v3821
      %4020 = vmatprep.subr.bf16.mxu0 0
      %4021 = vmatpush1.bf16.msra.mxu0 %v3822
      %4022 = vmatprep.subr.bf16.mxu0 0
      %4023 = vmatpush1.bf16.msra.mxu0 %v3823
      %4024 = vmatprep.subr.bf16.mxu0 0
      %4025 = vmatpush1.bf16.msra.mxu0 %v3824
      %4026 = vmatprep.subr.bf16.mxu0 0
      %4027 = vmatpush1.bf16.msra.mxu0 %v3825
      %4028 = vmatprep.subr.bf16.mxu0 0
      %4029 = vmatpush1.bf16.msra.mxu0 %v3826
      %4030 = vmatprep.subr.bf16.mxu0 0
      %4031 = vmatpush1.bf16.msra.mxu0 %v3827
      %4032 = vmatprep.subr.bf16.mxu0 0
      %4033 = vmatpush1.bf16.msra.mxu0 %v3828
      %4034 = vmatprep.subr.bf16.mxu0 0
      %4035 = vmatpush1.bf16.msra.mxu0 %v3829
      %4036 = vmatprep.subr.bf16.mxu0 0
      %4037 = vmatpush1.bf16.msra.mxu0 %v3830
      %4038 = vmatprep.subr.bf16.mxu0 0
      %4039 = vmatpush1.bf16.msra.mxu0 %v3831
      %4040 = vmatprep.subr.bf16.mxu0 0
      %4041 = vmatpush1.bf16.msra.mxu0 %v3832
      %4042 = vmatprep.mubr.bf16.mxu0 %v3320
      %4043 = vmatmul.mubr.bf16.gmra.mrb[0].mxu0 %v3319
      %v4044 = vpop.f32.mrb[0].mxu0
      %v4045 = vadd.f32 %v3980, %v4044
      %v4046 = vpop.f32.mrb[0].mxu0
      %v4047 = vpop.f32.mrb[0].mxu0
      %v4048 = vadd.f32 %v3983, %v4047
      %v4049 = vpop.f32.mrb[0].mxu0
      %4050 = vmatprep.mubr.bf16.mxu0 %v3329
      %4051 = vmatmul.mubr.bf16.gmra.mrb[0].mxu0 %v3328
      %v4052 = vpop.f32.mrb[0].mxu0
      %v4053 = vadd.f32 %v3988, %v4052
      %v4054 = vpop.f32.mrb[0].mxu0
      %v4055 = vpop.f32.mrb[0].mxu0
      %v4056 = vadd.f32 %v3991, %v4055
      %v4057 = vpop.f32.mrb[0].mxu0
      %4058 = vmatprep.mubr.bf16.mxu0 %v3338
      %4059 = vmatmul.mubr.bf16.gmra.mrb[0].mxu0 %v3337
      %v4060 = vpop.f32.mrb[0].mxu0
      %v4061 = vadd.f32 %v3996, %v4060
      %v4062 = vpop.f32.mrb[0].mxu0
      %v4063 = vpop.f32.mrb[0].mxu0
      %v4064 = vadd.f32 %v3999, %v4063
      %v4065 = vpop.f32.mrb[0].mxu0
      %4066 = vmatprep.mubr.bf16.mxu0 %v3347
      %4067 = vmatmul.mubr.bf16.gmra.mrb[0].mxu0 %v3346
      %v4068 = vpop.f32.mrb[0].mxu0
      %v4069 = vadd.f32 %v4004, %v4068
      %v4070 = vpop.f32.mrb[0].mxu0
      %v4071 = vpop.f32.mrb[0].mxu0
      %v4072 = vadd.f32 %v4007, %v4071
      %v4073 = vpop.f32.mrb[0].mxu0
      %4074 = vdwg.mxu0
      %4075 = vmatprep.subr.bf16.mxu0 0
      %4076 = vmatpush1.bf16.msra.mxu0 %v3833
      %4077 = vmatprep.subr.bf16.mxu0 0
      %4078 = vmatpush1.bf16.msra.mxu0 %v3834
      %4079 = vmatprep.subr.bf16.mxu0 0
      %4080 = vmatpush1.bf16.msra.mxu0 %v3835
      %4081 = vmatprep.subr.bf16.mxu0 0
      %4082 = vmatpush1.bf16.msra.mxu0 %v3836
      %4083 = vmatprep.subr.bf16.mxu0 0
      %4084 = vmatpush1.bf16.msra.mxu0 %v3837
      %4085 = vmatprep.subr.bf16.mxu0 0
      %4086 = vmatpush1.bf16.msra.mxu0 %v3838
      %4087 = vmatprep.subr.bf16.mxu0 0
      %4088 = vmatpush1.bf16.msra.mxu0 %v3839
      %4089 = vmatprep.subr.bf16.mxu0 0
      %4090 = vmatpush1.bf16.msra.mxu0 %v3840
      %4091 = vmatprep.subr.bf16.mxu0 0
      %4092 = vmatpush1.bf16.msra.mxu0 %v3841
      %4093 = vmatprep.subr.bf16.mxu0 0
      %4094 = vmatpush1.bf16.msra.mxu0 %v3842
      %4095 = vmatprep.subr.bf16.mxu0 0
      %4096 = vmatpush1.bf16.msra.mxu0 %v3843
      %4097 = vmatprep.subr.bf16.mxu0 0
      %4098 = vmatpush1.bf16.msra.mxu0 %v3844
      %4099 = vmatprep.subr.bf16.mxu0 0
      %4100 = vmatpush1.bf16.msra.mxu0 %v3845
      %4101 = vmatprep.subr.bf16.mxu0 0
      %4102 = vmatpush1.bf16.msra.mxu0 %v3846
      %4103 = vmatprep.subr.bf16.mxu0 0
      %4104 = vmatpush1.bf16.msra.mxu0 %v3847
      %4105 = vmatprep.subr.bf16.mxu0 0
      %4106 = vmatpush1.bf16.msra.mxu0 %v3848
      %4107 = vmatprep.mubr.bf16.mxu0 %v3322
      %4108 = vmatmul.mubr.bf16.gmra.mrb[0].mxu0 %v3321
      %v4109 = vpop.f32.mrb[0].mxu0
      %v4110 = vadd.f32 %v4045, %v4109
      %v4111 = vpop.f32.mrb[0].mxu0
      %v4112 = vpop.f32.mrb[0].mxu0
      %v4113 = vadd.f32 %v4048, %v4112
      %v4114 = vpop.f32.mrb[0].mxu0
      %4115 = vmatprep.mubr.bf16.mxu0 %v3331
      %4116 = vmatmul.mubr.bf16.gmra.mrb[0].mxu0 %v3330
      %v4117 = vpop.f32.mrb[0].mxu0
      %v4118 = vadd.f32 %v4053, %v4117
      %v4119 = vpop.f32.mrb[0].mxu0
      %v4120 = vpop.f32.mrb[0].mxu0
      %v4121 = vadd.f32 %v4056, %v4120
      %v4122 = vpop.f32.mrb[0].mxu0
      %4123 = vmatprep.mubr.bf16.mxu0 %v3340
      %4124 = vmatmul.mubr.bf16.gmra.mrb[0].mxu0 %v3339
      %v4125 = vpop.f32.mrb[0].mxu0
      %v4126 = vadd.f32 %v4061, %v4125
      %v4127 = vpop.f32.mrb[0].mxu0
      %v4128 = vpop.f32.mrb[0].mxu0
      %v4129 = vadd.f32 %v4064, %v4128
      %v4130 = vpop.f32.mrb[0].mxu0
      %4131 = vmatprep.mubr.bf16.mxu0 %v3349
      %4132 = vmatmul.mubr.bf16.gmra.mrb[0].mxu0 %v3348
      %v4133 = vpop.f32.mrb[0].mxu0
      %v4134 = vadd.f32 %v4069, %v4133
      %v4135 = vpop.f32.mrb[0].mxu0
      %v4136 = vpop.f32.mrb[0].mxu0
      %v4137 = vadd.f32 %v4072, %v4136
      %v4138 = vpop.f32.mrb[0].mxu0
      %4139 = vdwg.mxu0
      %4140 = vmatprep.subr.bf16.mxu0 0
      %4141 = vmatpush1.bf16.msra.mxu0 %v3849
      %4142 = vmatprep.subr.bf16.mxu0 0
      %4143 = vmatpush1.bf16.msra.mxu0 %v3850
      %4144 = vmatprep.subr.bf16.mxu0 0
      %4145 = vmatpush1.bf16.msra.mxu0 %v3851
      %4146 = vmatprep.subr.bf16.mxu0 0
      %4147 = vmatpush1.bf16.msra.mxu0 %v3852
      %4148 = vmatprep.subr.bf16.mxu0 0
      %4149 = vmatpush1.bf16.msra.mxu0 %v3853
      %4150 = vmatprep.subr.bf16.mxu0 0
      %4151 = vmatpush1.bf16.msra.mxu0 %v3854
      %4152 = vmatprep.subr.bf16.mxu0 0
      %4153 = vmatpush1.bf16.msra.mxu0 %v3855
      %4154 = vmatprep.subr.bf16.mxu0 0
      %4155 = vmatpush1.bf16.msra.mxu0 %v3856
      %4156 = vmatprep.subr.bf16.mxu0 0
      %4157 = vmatpush1.bf16.msra.mxu0 %v3857
      %4158 = vmatprep.subr.bf16.mxu0 0
      %4159 = vmatpush1.bf16.msra.mxu0 %v3858
      %4160 = vmatprep.subr.bf16.mxu0 0
      %4161 = vmatpush1.bf16.msra.mxu0 %v3859
      %4162 = vmatprep.subr.bf16.mxu0 0
      %4163 = vmatpush1.bf16.msra.mxu0 %v3860
      %4164 = vmatprep.subr.bf16.mxu0 0
      %4165 = vmatpush1.bf16.msra.mxu0 %v3861
      %4166 = vmatprep.subr.bf16.mxu0 0
      %4167 = vmatpush1.bf16.msra.mxu0 %v3862
      %4168 = vmatprep.subr.bf16.mxu0 0
      %4169 = vmatpush1.bf16.msra.mxu0 %v3863
      %4170 = vmatprep.subr.bf16.mxu0 0
      %4171 = vmatpush1.bf16.msra.mxu0 %v3864
      %4172 = vmatprep.mubr.bf16.mxu0 %v3324
      %4173 = vmatmul.mubr.bf16.gmra.mrb[0].mxu0 %v3323
      %v4174 = vpop.f32.mrb[0].mxu0
      %v4175 = vadd.f32 %v4110, %v4174
      %v4176 = vpop.f32.mrb[0].mxu0
      %v4177 = vpop.f32.mrb[0].mxu0
      %v4178 = vadd.f32 %v4113, %v4177
      %v4179 = vpop.f32.mrb[0].mxu0
      %4180 = vmatprep.mubr.bf16.mxu0 %v3333
      %4181 = vmatmul.mubr.bf16.gmra.mrb[0].mxu0 %v3332
      %v4182 = vpop.f32.mrb[0].mxu0
      %v4183 = vadd.f32 %v4118, %v4182
      %v4184 = vpop.f32.mrb[0].mxu0
      %v4185 = vpop.f32.mrb[0].mxu0
      %v4186 = vadd.f32 %v4121, %v4185
      %v4187 = vpop.f32.mrb[0].mxu0
      %4188 = vmatprep.mubr.bf16.mxu0 %v3342
      %4189 = vmatmul.mubr.bf16.gmra.mrb[0].mxu0 %v3341
      %v4190 = vpop.f32.mrb[0].mxu0
      %v4191 = vadd.f32 %v4126, %v4190
      %v4192 = vpop.f32.mrb[0].mxu0
      %v4193 = vpop.f32.mrb[0].mxu0
      %v4194 = vadd.f32 %v4129, %v4193
      %v4195 = vpop.f32.mrb[0].mxu0
      %4196 = vmatprep.mubr.bf16.mxu0 %v3351
      %4197 = vmatmul.mubr.bf16.gmra.mrb[0].mxu0 %v3350
      %v4198 = vpop.f32.mrb[0].mxu0
      %v4199 = vadd.f32 %v4134, %v4198
      %v4200 = vpop.f32.mrb[0].mxu0
      %v4201 = vpop.f32.mrb[0].mxu0
      %v4202 = vadd.f32 %v4137, %v4201
      %v4203 = vpop.f32.mrb[0].mxu0
      %4204 = vdwg.mxu0
      %4205 = vmatprep.subr.bf16.mxu0 0
      %4206 = vmatpush1.bf16.msra.mxu0 %v3865
      %4207 = vmatprep.subr.bf16.mxu0 0
      %4208 = vmatpush1.bf16.msra.mxu0 %v3866
      %4209 = vmatprep.subr.bf16.mxu0 0
      %4210 = vmatpush1.bf16.msra.mxu0 %v3867
      %4211 = vmatprep.subr.bf16.mxu0 0
      %4212 = vmatpush1.bf16.msra.mxu0 %v3868
      %4213 = vmatprep.subr.bf16.mxu0 0
      %4214 = vmatpush1.bf16.msra.mxu0 %v3869
      %4215 = vmatprep.subr.bf16.mxu0 0
      %4216 = vmatpush1.bf16.msra.mxu0 %v3870
      %4217 = vmatprep.subr.bf16.mxu0 0
      %4218 = vmatpush1.bf16.msra.mxu0 %v3871
      %4219 = vmatprep.subr.bf16.mxu0 0
      %4220 = vmatpush1.bf16.msra.mxu0 %v3872
      %4221 = vmatprep.subr.bf16.mxu0 0
      %4222 = vmatpush1.bf16.msra.mxu0 0
      %4223 = vmatprep.subr.bf16.mxu0 0
      %4224 = vmatpush1.bf16.msra.mxu0 0
      %4225 = vmatprep.subr.bf16.mxu0 0
      %4226 = vmatpush1.bf16.msra.mxu0 0
      %4227 = vmatprep.subr.bf16.mxu0 0
      %4228 = vmatpush1.bf16.msra.mxu0 0
      %4229 = vmatprep.subr.bf16.mxu0 0
      %4230 = vmatpush1.bf16.msra.mxu0 0
      %4231 = vmatprep.subr.bf16.mxu0 0
      %4232 = vmatpush1.bf16.msra.mxu0 0
      %4233 = vmatprep.subr.bf16.mxu0 0
      %4234 = vmatpush1.bf16.msra.mxu0 0
      %4235 = vmatprep.subr.bf16.mxu0 0
      %4236 = vmatpush1.bf16.msra.mxu0 0
      %4237 = vmatprep.mubr.bf16.mxu0 0
      %4238 = vmatmul.mubr.bf16.gmra.mrb[0].mxu0 %v3325
      %v4239 = vpop.f32.mrb[0].mxu0
      %v4240 = vadd.f32 %v4175, %v4239
      %v4241 = vpop.f32.mrb[0].mxu0
      %v4242 = vpop.f32.mrb[0].mxu0
      %v4243 = vadd.f32 %v4178, %v4242
      %v4244 = vpop.f32.mrb[0].mxu0
      %4245 = vmatprep.mubr.bf16.mxu0 0
      %4246 = vmatmul.mubr.bf16.gmra.mrb[0].mxu0 %v3334
      %v4247 = vpop.f32.mrb[0].mxu0
      %v4248 = vadd.f32 %v4183, %v4247
      %v4249 = vpop.f32.mrb[0].mxu0
      %v4250 = vpop.f32.mrb[0].mxu0
      %v4251 = vadd.f32 %v4186, %v4250
      %v4252 = vpop.f32.mrb[0].mxu0
      %4253 = vmatprep.mubr.bf16.mxu0 0
      %4254 = vmatmul.mubr.bf16.gmra.mrb[0].mxu0 %v3343
      %v4255 = vpop.f32.mrb[0].mxu0
      %v4256 = vadd.f32 %v4191, %v4255
      %v4257 = vpop.f32.mrb[0].mxu0
      %v4258 = vpop.f32.mrb[0].mxu0
      %v4259 = vadd.f32 %v4194, %v4258
      %v4260 = vpop.f32.mrb[0].mxu0
      %4261 = vmatprep.mubr.bf16.mxu0 0
      %4262 = vmatmul.mubr.bf16.gmra.mrb[0].mxu0 %v3352
      %v4263 = vpop.f32.mrb[0].mxu0
      %v4264 = vadd.f32 %v4199, %v4263
      %v4265 = vpop.f32.mrb[0].mxu0
      %v4266 = vpop.f32.mrb[0].mxu0
      %v4267 = vadd.f32 %v4202, %v4266
      %v4268 = vpop.f32.mrb[0].mxu0
      %4269 = vdwg.mxu0
      %v4270 = vpack.c.bf16 %v4243, %v4240
      %v4271 = vpack.c.bf16 %v4251, %v4248
      %v4272 = vpack.c.bf16 %v4259, %v4256
      %v4273 = vpack.c.bf16 %v4267, %v4264
      %v4278 = vunpack.c.l.b16 %v4270
      %v4279 = vunpack.c.h.b16 %v4270
      %v4280 = vunpack.c.l.b16 %v4271
      %v4281 = vunpack.c.h.b16 %v4271
      %v4282 = vunpack.c.l.b16 %v4272
      %v4283 = vunpack.c.h.b16 %v4272
      %v4284 = vunpack.c.l.b16 %v4273
      %v4285 = vunpack.c.h.b16 %v4273
      %v4286 = vpack.c.b16 %v4278, %v4278
      %v4287 = vpack.c.b16 %v4279, %v4279
      %v4288 = vpack.c.b16 %v4280, %v4280
      %v4289 = vpack.c.b16 %v4281, %v4281
      %v4290 = vpack.c.b16 %v4282, %v4282
      %v4291 = vpack.c.b16 %v4283, %v4283
      %v4292 = vpack.c.b16 %v4284, %v4284
      %v4293 = vpack.c.b16 %v4285, %v4285
      %4302 = vst [vmem:[%s278] sm:$0xf] %v4286
      %4303 = vst [vmem:[%s278 + $0x4] sm:$0xf] %v4287
      %4304 = vst [vmem:[%s278 + $0x8] sm:$0xf] %v4288
      %4305 = vst [vmem:[%s278 + $0xc] sm:$0xf] %v4289
      %4306 = vst [vmem:[%s278 + $0x10] sm:$0xf] %v4290
      %4307 = vst [vmem:[%s278 + $0x14] sm:$0xf] %v4291
      %4308 = vst [vmem:[%s278 + $0x18] sm:$0xf] %v4292
      %4309 = vst [vmem:[%s278 + $0x1c] sm:$0xf] %v4293
      %p4310 = scmp.lt.s32.totalorder %s18, 1
      %s4311 = scalar_select %p4310, %s18, 1
      %s4312 = smul.addr %s4311, 8
      %s4313 = smul.addr %s4312, 4
      %s4314 = scalar_lea.vmem %s7, %s4313
      // Predicated region
      $region49: #{network_block_fwd.3} parent=47 // pred_check
        %p4315 = pneg %p188
      $region50: #{network_block_fwd.3} parent=47 // pred_check_branch
        %4317 = sbr.rel (%p4315) target = $region52
      $region51: #{network_block_fwd.3} parent=47 // pred_region
        _
      $region52: #{network_block_fwd.3} parent=47 // pred_fallthru
        _
    $region48: #{network_block_fwd.3} parent=5 // pred_fallthru
      _
    %p4318 = scmp.le.s32.totalorder 2, %s13
    // Predicated region
    $region53: #{network_block_fwd.3} parent=5 // pred_check
      %p4319 = pneg %p4318
    $region54: #{network_block_fwd.3} parent=5 // pred_check_branch
      %4321 = sbr.rel (%p4319) target = $region56
    $region55: #{network_block_fwd.3} parent=5 // pred_region
      %s4322 = ssub.s32 %s13, 2
      // Predicated region
      $region57: #{network_block_fwd.3} parent=55 // pred_check
        %p4323 = pneg %p194
      $region58: #{network_block_fwd.3} parent=55 // pred_check_branch
        %4325 = sbr.rel (%p4323) target = $region60
      $region59: #{network_block_fwd.3} parent=55 // pred_region
        %p4326 = scmp.lt.s32.totalorder %s19, 1
        %s4327 = scalar_select %p4326, %s19, 1
        %s4328 = smul.addr %s4327, 8
        %s4329 = smul.addr %s4328, 4
        %s4330 = scalar_lea.vmem %s7, %s4329
      $region60: #{network_block_fwd.3} parent=55 // pred_fallthru
        _
    $region56: #{network_block_fwd.3} parent=5 // pred_fallthru
      _
  $region6: #{network_block_fwd.3} parent=0 // loop_footer
    %s17 = sadd.s32 1, %s13
  $region7: #{network_block_fwd.3} parent=0 // loop_footer_branch
    %12 = sbr.rel target = $region3
  $region8: #{network_block_fwd.3} parent=0 // loop_exit
    _

// kernel: network_block_fwd.2
$region0: #{network_block_fwd.2}
  #allocation0 [shape = 'u32[]', space=smem, size = 0x4, offset = 0x4, fixed_abs, tag = 'smem constant byte address 0x4 - core index']
  #allocation1 [shape = 'u32[144,128]{1,0:T(1,128)}', space=vmem, size = 0x12000, scoped, tag = 'internal scratch']
  #allocation2 [shape = 'bf16[4,9,9,128]{3,2,1,0:T(8,128)(2,1)}', space=vmem, size = 0x24000, scoped, tag = 'scratch operand']
  #allocation3 [shape = 'bf16[10,10,128]{2,1,0:T(8,128)(2,1)}', space=vmem, size = 0xa000, scoped, tag = 'scratch operand']
  #allocation4 [shape = 'bf16[64,1152]{1,0:T(16,128)(2,1)}', space=vmem, size = 0x24000, scoped, tag = 'scratch operand']
  #allocation5 [shape = 'f32[64,128]{1,0:T(8,128)}', space=vmem, size = 0x8000, scoped, tag = 'scratch operand']
  %s0 = inlined_call_operand.vmem [shape: bf16[2,4,8,8,128], index: 0, kind: input, shape index: {}]
  %s1 = inlined_call_operand.vmem [shape: bf16[1152,128], index: 1, kind: input, shape index: {}]
  %s2 = inlined_call_operand.vmem [shape: bf16[1152,128], index: 2, kind: input, shape index: {}]
  %s3 = inlined_call_operand.vmem [shape: bf16[128,128], index: 3, kind: input, shape index: {}]
  %s4 = inlined_call_operand.vmem [shape: f32[1,128], index: 4, kind: input, shape index: {}]
  %s5 = inlined_call_operand.vmem [shape: f32[1,128], index: 5, kind: input, shape index: {}]
  %s6 = inlined_call_operand.vmem [shape: f32[1,128], index: 6, kind: input, shape index: {}]
  %s7 = inlined_call_operand.vmem [shape: f32[1,128], index: 7, kind: input, shape index: {}]
  %s8 = inlined_call_operand.vmem [shape: bf16[2,8,8,128], index: 8, kind: output, shape index: {}]
  %s9 = sld [smem:[#allocation0]]
  $region65: #{network_block_fwd.2} parent=0
    _
  %s11 = ssub.s32 1, %s9
  %s12 = scalar_select 0, %s11, %s9
  loop: start=0, step=1, limit=4
  $region2: #{network_block_fwd.2} parent=0 // loop_pre_header
    _
  $region3: #{network_block_fwd.2} parent=0 // loop_header
    %s14 = sphi 0, %s18
    %p15 = scmp.ge.s32.totalorder %s14, 4
    %s24 = sphi 0, %s26
    %s27 = sphi 0, %s24
    %s28 = sphi 0, %s27
    %s44 = sphi 0, %s28
    %s48 = sphi 0, %s48
    %s50 = sphi 0, %s48
    %s51 = sphi 0, %s50
    %s65 = sphi 0, %s51
    %s69 = sphi 0, %s69
    %s71 = sphi 0, %s69
    %s72 = sphi 0, %s71
    %s86 = sphi 0, %s72
    %s90 = sphi 0, %s90
    %s92 = sphi 0, %s90
    %s93 = sphi 0, %s92
    %s107 = sphi 0, %s93
    %s111 = sphi 0, %s111
    %s113 = sphi 0, %s111
    %s114 = sphi 0, %s113
    %s128 = sphi 0, %s114
    %s132 = sphi 0, %s132
    %s134 = sphi 0, %s132
    %s135 = sphi 0, %s134
    %s149 = sphi 0, %s135
    %s153 = sphi 0, %s153
    %s155 = sphi 0, %s153
    %s156 = sphi 0, %s155
    %s170 = sphi 0, %s156
    %s174 = sphi 0, %s174
    %s176 = sphi 0, %s174
    %s177 = sphi 0, %s176
    %s191 = sphi 0, %s177
    %s197 = sphi 0, %s199
    %s200 = sphi 0, %s197
    %s201 = sphi 0, %s200
    %s217 = sphi 0, %s201
  $region4: #{network_block_fwd.2} parent=0 // loop_header_branch
    %17 = sbr.rel (%p15) target = $region8
  $region5: #{network_block_fwd.2} parent=0 // loop_body
    %s19 = ssub.s32 %s14, 1
    %s20 = ssub.s32 %s14, 2
    %s21 = sadd.s32 %s14, 1
    %s22 = ssub.s32 %s14, %s21
    %p23 = scmp.eq.s32.totalorder %s22, 0
    %s25 = sadd.s32 %s24, 1
    %s26 = scalar_select %p23, %s24, %s25
    %p29 = pneg %p23
    %p30 = scmp.eq.s32.totalorder %s14, 1
    %p31 = por %p29, %p30
    %p32 = scmp.ne.s32.totalorder %s24, %s27
    %p33 = scmp.eq.s32.totalorder %s14, 0
    %p34 = por %p32, %p33
    %p35 = scmp.ne.s32.totalorder %s24, %s27
    %p36 = scmp.eq.s32.totalorder %s19, 1
    %p37 = por %p35, %p36
    %p38 = scmp.ne.s32.totalorder %s27, %s28
    %p39 = scmp.eq.s32.totalorder %s19, 0
    %p40 = por %p38, %p39
    %p41 = scmp.ne.s32.totalorder %s27, %s28
    %p42 = scmp.eq.s32.totalorder %s20, 1
    %p43 = por %p41, %p42
    %p45 = scmp.ne.s32.totalorder %s28, %s44
    %p46 = scmp.eq.s32.totalorder %s20, 0
    %p47 = por %p45, %p46
    %s49 = sadd.s32 %s48, 1
    %p52 = scmp.eq.s32.totalorder %s14, 1
    %p53 = scmp.ne.s32.totalorder %s48, %s50
    %p54 = scmp.eq.s32.totalorder %s14, 0
    %p55 = por %p53, %p54
    %p56 = scmp.ne.s32.totalorder %s48, %s50
    %p57 = scmp.eq.s32.totalorder %s19, 1
    %p58 = por %p56, %p57
    %p59 = scmp.ne.s32.totalorder %s50, %s51
    %p60 = scmp.eq.s32.totalorder %s19, 0
    %p61 = por %p59, %p60
    %p62 = scmp.ne.s32.totalorder %s50, %s51
    %p63 = scmp.eq.s32.totalorder %s20, 1
    %p64 = por %p62, %p63
    %p66 = scmp.ne.s32.totalorder %s51, %s65
    %p67 = scmp.eq.s32.totalorder %s20, 0
    %p68 = por %p66, %p67
    %s70 = sadd.s32 %s69, 1
    %p73 = scmp.eq.s32.totalorder %s14, 1
    %p74 = scmp.ne.s32.totalorder %s69, %s71
    %p75 = scmp.eq.s32.totalorder %s14, 0
    %p76 = por %p74, %p75
    %p77 = scmp.ne.s32.totalorder %s69, %s71
    %p78 = scmp.eq.s32.totalorder %s19, 1
    %p79 = por %p77, %p78
    %p80 = scmp.ne.s32.totalorder %s71, %s72
    %p81 = scmp.eq.s32.totalorder %s19, 0
    %p82 = por %p80, %p81
    %p83 = scmp.ne.s32.totalorder %s71, %s72
    %p84 = scmp.eq.s32.totalorder %s20, 1
    %p85 = por %p83, %p84
    %p87 = scmp.ne.s32.totalorder %s72, %s86
    %p88 = scmp.eq.s32.totalorder %s20, 0
    %p89 = por %p87, %p88
    %s91 = sadd.s32 %s90, 1
    %p94 = scmp.eq.s32.totalorder %s14, 1
    %p95 = scmp.ne.s32.totalorder %s90, %s92
    %p96 = scmp.eq.s32.totalorder %s14, 0
    %p97 = por %p95, %p96
    %p98 = scmp.ne.s32.totalorder %s90, %s92
    %p99 = scmp.eq.s32.totalorder %s19, 1
    %p100 = por %p98, %p99
    %p101 = scmp.ne.s32.totalorder %s92, %s93
    %p102 = scmp.eq.s32.totalorder %s19, 0
    %p103 = por %p101, %p102
    %p104 = scmp.ne.s32.totalorder %s92, %s93
    %p105 = scmp.eq.s32.totalorder %s20, 1
    %p106 = por %p104, %p105
    %p108 = scmp.ne.s32.totalorder %s93, %s107
    %p109 = scmp.eq.s32.totalorder %s20, 0
    %p110 = por %p108, %p109
    %s112 = sadd.s32 %s111, 1
    %p115 = scmp.eq.s32.totalorder %s14, 1
    %p116 = scmp.ne.s32.totalorder %s111, %s113
    %p117 = scmp.eq.s32.totalorder %s14, 0
    %p118 = por %p116, %p117
    %p119 = scmp.ne.s32.totalorder %s111, %s113
    %p120 = scmp.eq.s32.totalorder %s19, 1
    %p121 = por %p119, %p120
    %p122 = scmp.ne.s32.totalorder %s113, %s114
    %p123 = scmp.eq.s32.totalorder %s19, 0
    %p124 = por %p122, %p123
    %p125 = scmp.ne.s32.totalorder %s113, %s114
    %p126 = scmp.eq.s32.totalorder %s20, 1
    %p127 = por %p125, %p126
    %p129 = scmp.ne.s32.totalorder %s114, %s128
    %p130 = scmp.eq.s32.totalorder %s20, 0
    %p131 = por %p129, %p130
    %s133 = sadd.s32 %s132, 1
    %p136 = scmp.eq.s32.totalorder %s14, 1
    %p137 = scmp.ne.s32.totalorder %s132, %s134
    %p138 = scmp.eq.s32.totalorder %s14, 0
    %p139 = por %p137, %p138
    %p140 = scmp.ne.s32.totalorder %s132, %s134
    %p141 = scmp.eq.s32.totalorder %s19, 1
    %p142 = por %p140, %p141
    %p143 = scmp.ne.s32.totalorder %s134, %s135
    %p144 = scmp.eq.s32.totalorder %s19, 0
    %p145 = por %p143, %p144
    %p146 = scmp.ne.s32.totalorder %s134, %s135
    %p147 = scmp.eq.s32.totalorder %s20, 1
    %p148 = por %p146, %p147
    %p150 = scmp.ne.s32.totalorder %s135, %s149
    %p151 = scmp.eq.s32.totalorder %s20, 0
    %p152 = por %p150, %p151
    %s154 = sadd.s32 %s153, 1
    %p157 = scmp.eq.s32.totalorder %s14, 1
    %p158 = scmp.ne.s32.totalorder %s153, %s155
    %p159 = scmp.eq.s32.totalorder %s14, 0
    %p160 = por %p158, %p159
    %p161 = scmp.ne.s32.totalorder %s153, %s155
    %p162 = scmp.eq.s32.totalorder %s19, 1
    %p163 = por %p161, %p162
    %p164 = scmp.ne.s32.totalorder %s155, %s156
    %p165 = scmp.eq.s32.totalorder %s19, 0
    %p166 = por %p164, %p165
    %p167 = scmp.ne.s32.totalorder %s155, %s156
    %p168 = scmp.eq.s32.totalorder %s20, 1
    %p169 = por %p167, %p168
    %p171 = scmp.ne.s32.totalorder %s156, %s170
    %p172 = scmp.eq.s32.totalorder %s20, 0
    %p173 = por %p171, %p172
    %s175 = sadd.s32 %s174, 1
    %p178 = scmp.eq.s32.totalorder %s14, 1
    %p179 = scmp.ne.s32.totalorder %s174, %s176
    %p180 = scmp.eq.s32.totalorder %s14, 0
    %p181 = por %p179, %p180
    %p182 = scmp.ne.s32.totalorder %s174, %s176
    %p183 = scmp.eq.s32.totalorder %s19, 1
    %p184 = por %p182, %p183
    %p185 = scmp.ne.s32.totalorder %s176, %s177
    %p186 = scmp.eq.s32.totalorder %s19, 0
    %p187 = por %p185, %p186
    %p188 = scmp.ne.s32.totalorder %s176, %s177
    %p189 = scmp.eq.s32.totalorder %s20, 1
    %p190 = por %p188, %p189
    %p192 = scmp.ne.s32.totalorder %s177, %s191
    %p193 = scmp.eq.s32.totalorder %s20, 0
    %p194 = por %p192, %p193
    %s195 = ssub.s32 %s14, %s21
    %p196 = scmp.eq.s32.totalorder %s195, 0
    %s198 = sadd.s32 %s197, 1
    %s199 = scalar_select %p196, %s197, %s198
    %p202 = pneg %p196
    %p203 = scmp.eq.s32.totalorder %s14, 1
    %p204 = por %p202, %p203
    %p205 = scmp.ne.s32.totalorder %s197, %s200
    %p206 = scmp.eq.s32.totalorder %s14, 0
    %p207 = por %p205, %p206
    %p208 = scmp.ne.s32.totalorder %s197, %s200
    %p209 = scmp.eq.s32.totalorder %s19, 1
    %p210 = por %p208, %p209
    %p211 = scmp.ne.s32.totalorder %s200, %s201
    %p212 = scmp.eq.s32.totalorder %s19, 0
    %p213 = por %p211, %p212
    %p214 = scmp.ne.s32.totalorder %s200, %s201
    %p215 = scmp.eq.s32.totalorder %s20, 1
    %p216 = por %p214, %p215
    %p218 = scmp.ne.s32.totalorder %s201, %s217
    %p219 = scmp.eq.s32.totalorder %s20, 0
    %p220 = por %p218, %p219
    %p221 = scmp.le.s32.totalorder 1, %s14
    %p222 = scmp.lt.s32.totalorder %s14, 3
    %p223 = pnand %p221, %p222
    %p224 = pneg %p223
    // Predicated region
    $region9: #{network_block_fwd.2} parent=5 // pred_check
      _
    $region10: #{network_block_fwd.2} parent=5 // pred_check_branch
      %226 = sbr.rel (%p223) target = $region12
    $region11: #{network_block_fwd.2} parent=5 // pred_region
      %s227 = ssub.s32 %s14, 1
      // Predicated region
      $region13: #{network_block_fwd.2} parent=11 // pred_check
        %p228 = pneg %p61
      $region14: #{network_block_fwd.2} parent=11 // pred_check_branch
        %230 = sbr.rel (%p228) target = $region16
      $region15: #{network_block_fwd.2} parent=11 // pred_region
        _
      $region16: #{network_block_fwd.2} parent=11 // pred_fallthru
        _
      // Predicated region
      $region17: #{network_block_fwd.2} parent=11 // pred_check
        %p231 = pneg %p82
      $region18: #{network_block_fwd.2} parent=11 // pred_check_branch
        %233 = sbr.rel (%p231) target = $region20
      $region19: #{network_block_fwd.2} parent=11 // pred_region
        _
      $region20: #{network_block_fwd.2} parent=11 // pred_fallthru
        _
      // Predicated region
      $region21: #{network_block_fwd.2} parent=11 // pred_check
        %p234 = pneg %p103
      $region22: #{network_block_fwd.2} parent=11 // pred_check_branch
        %236 = sbr.rel (%p234) target = $region24
      $region23: #{network_block_fwd.2} parent=11 // pred_region
        _
      $region24: #{network_block_fwd.2} parent=11 // pred_fallthru
        _
      // Predicated region
      $region25: #{network_block_fwd.2} parent=11 // pred_check
        %p237 = pneg %p124
      $region26: #{network_block_fwd.2} parent=11 // pred_check_branch
        %239 = sbr.rel (%p237) target = $region28
      $region27: #{network_block_fwd.2} parent=11 // pred_region
        _
      $region28: #{network_block_fwd.2} parent=11 // pred_fallthru
        _
      // Predicated region
      $region29: #{network_block_fwd.2} parent=11 // pred_check
        %p240 = pneg %p145
      $region30: #{network_block_fwd.2} parent=11 // pred_check_branch
        %242 = sbr.rel (%p240) target = $region32
      $region31: #{network_block_fwd.2} parent=11 // pred_region
        _
      $region32: #{network_block_fwd.2} parent=11 // pred_fallthru
        _
      // Predicated region
      $region33: #{network_block_fwd.2} parent=11 // pred_check
        %p243 = pneg %p166
      $region34: #{network_block_fwd.2} parent=11 // pred_check_branch
        %245 = sbr.rel (%p243) target = $region36
      $region35: #{network_block_fwd.2} parent=11 // pred_region
        _
      $region36: #{network_block_fwd.2} parent=11 // pred_fallthru
        _
      // Predicated region
      $region37: #{network_block_fwd.2} parent=11 // pred_check
        %p246 = pneg %p187
      $region38: #{network_block_fwd.2} parent=11 // pred_check_branch
        %248 = sbr.rel (%p246) target = $region40
      $region39: #{network_block_fwd.2} parent=11 // pred_region
        _
      $region40: #{network_block_fwd.2} parent=11 // pred_fallthru
        _
    $region12: #{network_block_fwd.2} parent=5 // pred_fallthru
      _
    %p249 = scmp.lt.s32.totalorder %s14, 2
    // Predicated region
    $region41: #{network_block_fwd.2} parent=5 // pred_check
      %p250 = pneg %p249
    $region42: #{network_block_fwd.2} parent=5 // pred_check_branch
      %252 = sbr.rel (%p250) target = $region44
    $region43: #{network_block_fwd.2} parent=5 // pred_region
      // Predicated region
      $region45: #{network_block_fwd.2} parent=43 // pred_check
        %p253 = pneg %p34
      $region46: #{network_block_fwd.2} parent=43 // pred_check_branch
        %255 = sbr.rel (%p253) target = $region48
      $region47: #{network_block_fwd.2} parent=43 // pred_region
        %p256 = scmp.lt.s32.totalorder %s14, 1
        %s257 = scalar_select %p256, %s14, 1
        %s258 = smul.addr %s257, 32
        %s259 = smul.addr %s258, 4
        %s260 = scalar_lea.vmem %s0, %s259
      $region48: #{network_block_fwd.2} parent=43 // pred_fallthru
        _
    $region44: #{network_block_fwd.2} parent=5 // pred_fallthru
      _
    %p261 = scmp.le.s32.totalorder 1, %s14
    %p262 = scmp.lt.s32.totalorder %s14, 3
    %p263 = pnand %p261, %p262
    %p264 = pneg %p263
    // Predicated region
    $region49: #{network_block_fwd.2} parent=5 // pred_check
      _
    $region50: #{network_block_fwd.2} parent=5 // pred_check_branch
      %266 = sbr.rel (%p263) target = $region52
    $region51: #{network_block_fwd.2} parent=5 // pred_region
      %s267 = ssub.s32 %s14, 1
      %p268 = scmp.lt.s32.totalorder %s19, 1
      %s269 = scalar_select %p268, %s19, 1
      %s270 = smul.addr %s269, 32
      %s271 = smul.addr %s270, 4
      %s272 = scalar_lea.vmem %s0, %s271
      %p273 = pneg %p40
      %p274 = pneg %p37
      %p275 = pneg %p61
      %p276 = pneg %p58
      %p277 = pneg %p82
      %p278 = pneg %p79
      %p279 = pneg %p103
      %p280 = pneg %p100
      %p281 = pneg %p124
      %p282 = pneg %p121
      %p283 = pneg %p145
      %p284 = pneg %p142
      %p285 = pneg %p166
      %p286 = pneg %p163
      %p287 = pneg %p187
      %p288 = pneg %p184
      %p289 = pneg %p213
      %p290 = pneg %p210
      %p291 = scmp.lt.s32.totalorder %s19, 1
      %s292 = scalar_select %p291, %s19, 1
      %s293 = smul.addr %s292, 8
      %s294 = smul.addr %s293, 4
      %s295 = scalar_lea.vmem %s8, %s294
      %p296 = scmp.lt.s32.totalorder %s19, 1
      %s297 = scalar_select %p296, %s19, 1
      %s298 = smul.addr %s297, 32
      %s299 = smul.addr %s298, 4
      %s300 = scalar_lea.vmem %s0, %s299
      %p301 = scmp.lt.s32.totalorder %s19, 1
      %s302 = scalar_select %p301, %s19, 1
      %s303 = smul.addr %s302, 8
      %s304 = smul.addr %s303, 4
      %s305 = scalar_lea.vmem %s8, %s304
      %307 = vst [vmem:[#allocation2] sm:$0xf] 0
      %vm308 = vcmask 1040384
      %vm309 = vsmask.f32 256
      %vm310 = vmand %vm308, %vm309
      %v311 = vld [vmem:[#allocation2 + $0x4] sm:$0x1]
      %v312 = vsel %vm310, 0, %v311
      %313 = vst [vmem:[#allocation2 + $0x4] sm:$0x1] %v312
      %v314 = vld [vmem:[#allocation2] sm:$0x1]
      %v315 = vsel %vm310, 0, %v314
      %316 = vst [vmem:[#allocation2] sm:$0x1] %v315
      %v317 = vld [vmem:[#allocation2 + $0x8] sm:$0x1]
      %v318 = vsel %vm310, 0, %v317
      %319 = vst [vmem:[#allocation2 + $0x8] sm:$0x1] %v318
      %v320 = vld [vmem:[#allocation2 + $0x10] sm:$0x1]
      %v321 = vsel %vm310, 0, %v320
      %322 = vst [vmem:[#allocation2 + $0x10] sm:$0x1] %v321
      %v323 = vld [vmem:[#allocation2 + $0x18] sm:$0x1]
      %v324 = vsel %vm310, 0, %v323
      %325 = vst [vmem:[#allocation2 + $0x18] sm:$0x1] %v324
      %v326 = vld [vmem:[#allocation2 + $0x20] sm:$0x1]
      %v327 = vsel %vm310, 0, %v326
      %328 = vst [vmem:[#allocation2 + $0x20] sm:$0x1] %v327
      %v329 = vld [vmem:[#allocation2 + $0x28] sm:$0x1]
      %v330 = vsel %vm310, 0, %v329
      %331 = vst [vmem:[#allocation2 + $0x28] sm:$0x1] %v330
      %v332 = vld [vmem:[#allocation2 + $0x30] sm:$0x1]
      %v333 = vsel %vm310, 0, %v332
      %334 = vst [vmem:[#allocation2 + $0x30] sm:$0x1] %v333
      %v335 = vld [vmem:[#allocation2 + $0x38] sm:$0x1]
      %v336 = vsel %vm310, 0, %v335
      %337 = vst [vmem:[#allocation2 + $0x38] sm:$0x1] %v336
      %v338 = vld [vmem:[#allocation2 + $0x40] sm:$0x1]
      %v339 = vsel %vm310, 0, %v338
      %340 = vst [vmem:[#allocation2 + $0x40] sm:$0x1] %v339
      %s341 = scalar_lea.vmem [#allocation2], 72
      %342 = vst [vmem:[%s341] sm:$0xf] 0
      %v343 = vld [vmem:[%s341 + $0x4] sm:$0x1]
      %v344 = vsel %vm310, 0, %v343
      %345 = vst [vmem:[%s341 + $0x4] sm:$0x1] %v344
      %v346 = vld [vmem:[%s341 + $0x4] sm:$0x1]
      %v347 = vsel %vm310, 0, %v346
      %348 = vst [vmem:[%s341 + $0x4] sm:$0x1] %v347
      %v349 = vld [vmem:[%s341 + $0xc] sm:$0x1]
      %v350 = vsel %vm310, 0, %v349
      %351 = vst [vmem:[%s341 + $0xc] sm:$0x1] %v350
      %v352 = vld [vmem:[%s341 + $0x14] sm:$0x1]
      %v353 = vsel %vm310, 0, %v352
      %354 = vst [vmem:[%s341 + $0x14] sm:$0x1] %v353
      %v355 = vld [vmem:[%s341 + $0x1c] sm:$0x1]
      %v356 = vsel %vm310, 0, %v355
      %357 = vst [vmem:[%s341 + $0x1c] sm:$0x1] %v356
      %v358 = vld [vmem:[%s341 + $0x24] sm:$0x1]
      %v359 = vsel %vm310, 0, %v358
      %360 = vst [vmem:[%s341 + $0x24] sm:$0x1] %v359
      %v361 = vld [vmem:[%s341 + $0x2c] sm:$0x1]
      %v362 = vsel %vm310, 0, %v361
      %363 = vst [vmem:[%s341 + $0x2c] sm:$0x1] %v362
      %v364 = vld [vmem:[%s341 + $0x34] sm:$0x1]
      %v365 = vsel %vm310, 0, %v364
      %366 = vst [vmem:[%s341 + $0x34] sm:$0x1] %v365
      %v367 = vld [vmem:[%s341 + $0x3c] sm:$0x1]
      %v368 = vsel %vm310, 0, %v367
      %369 = vst [vmem:[%s341 + $0x3c] sm:$0x1] %v368
      %v370 = vld [vmem:[%s341 + $0x44] sm:$0x1]
      %v371 = vsel %vm310, 0, %v370
      %372 = vst [vmem:[%s341 + $0x44] sm:$0x1] %v371
      %s373 = scalar_lea.vmem [#allocation2], 208
      %374 = vst [vmem:[%s373] sm:$0xf] 0
      %v375 = vld [vmem:[%s373 + $0x4] sm:$0x1]
      %v376 = vsel %vm310, 0, %v375
      %377 = vst [vmem:[%s373 + $0x4] sm:$0x1] %v376
      %s378 = scalar_lea.vmem [#allocation2], 144
      %v379 = vld [vmem:[%s378] sm:$0x1]
      %v380 = vsel %vm310, 0, %v379
      %381 = vst [vmem:[%s378] sm:$0x1] %v380
      %v382 = vld [vmem:[%s378 + $0x8] sm:$0x1]
      %v383 = vsel %vm310, 0, %v382
      %384 = vst [vmem:[%s378 + $0x8] sm:$0x1] %v383
      %v385 = vld [vmem:[%s378 + $0x10] sm:$0x1]
      %v386 = vsel %vm310, 0, %v385
      %387 = vst [vmem:[%s378 + $0x10] sm:$0x1] %v386
      %v388 = vld [vmem:[%s378 + $0x18] sm:$0x1]
      %v389 = vsel %vm310, 0, %v388
      %390 = vst [vmem:[%s378 + $0x18] sm:$0x1] %v389
      %v391 = vld [vmem:[%s378 + $0x20] sm:$0x1]
      %v392 = vsel %vm310, 0, %v391
      %393 = vst [vmem:[%s378 + $0x20] sm:$0x1] %v392
      %v394 = vld [vmem:[%s378 + $0x28] sm:$0x1]
      %v395 = vsel %vm310, 0, %v394
      %396 = vst [vmem:[%s378 + $0x28] sm:$0x1] %v395
      %v397 = vld [vmem:[%s378 + $0x30] sm:$0x1]
      %v398 = vsel %vm310, 0, %v397
      %399 = vst [vmem:[%s378 + $0x30] sm:$0x1] %v398
      %v400 = vld [vmem:[%s378 + $0x38] sm:$0x1]
      %v401 = vsel %vm310, 0, %v400
      %402 = vst [vmem:[%s378 + $0x38] sm:$0x1] %v401
      %v403 = vld [vmem:[%s378 + $0x40] sm:$0x1]
      %v404 = vsel %vm310, 0, %v403
      %405 = vst [vmem:[%s378 + $0x40] sm:$0x1] %v404
      %s406 = scalar_lea.vmem [#allocation2], 280
      %407 = vst [vmem:[%s406] sm:$0xf] 0
      %v408 = vld [vmem:[%s406 + $0x4] sm:$0x1]
      %v409 = vsel %vm310, 0, %v408
      %410 = vst [vmem:[%s406 + $0x4] sm:$0x1] %v409
      %s411 = scalar_lea.vmem [#allocation2], 216
      %v412 = vld [vmem:[%s411 + $0x4] sm:$0x1]
      %v413 = vsel %vm310, 0, %v412
      %414 = vst [vmem:[%s411 + $0x4] sm:$0x1] %v413
      %v415 = vld [vmem:[%s411 + $0xc] sm:$0x1]
      %v416 = vsel %vm310, 0, %v415
      %417 = vst [vmem:[%s411 + $0xc] sm:$0x1] %v416
      %v418 = vld [vmem:[%s411 + $0x14] sm:$0x1]
      %v419 = vsel %vm310, 0, %v418
      %420 = vst [vmem:[%s411 + $0x14] sm:$0x1] %v419
      %v421 = vld [vmem:[%s411 + $0x1c] sm:$0x1]
      %v422 = vsel %vm310, 0, %v421
      %423 = vst [vmem:[%s411 + $0x1c] sm:$0x1] %v422
      %v424 = vld [vmem:[%s411 + $0x24] sm:$0x1]
      %v425 = vsel %vm310, 0, %v424
      %426 = vst [vmem:[%s411 + $0x24] sm:$0x1] %v425
      %v427 = vld [vmem:[%s411 + $0x2c] sm:$0x1]
      %v428 = vsel %vm310, 0, %v427
      %429 = vst [vmem:[%s411 + $0x2c] sm:$0x1] %v428
      %v430 = vld [vmem:[%s411 + $0x34] sm:$0x1]
      %v431 = vsel %vm310, 0, %v430
      %432 = vst [vmem:[%s411 + $0x34] sm:$0x1] %v431
      %v433 = vld [vmem:[%s411 + $0x3c] sm:$0x1]
      %v434 = vsel %vm310, 0, %v433
      %435 = vst [vmem:[%s411 + $0x3c] sm:$0x1] %v434
      %v436 = vld [vmem:[%s411 + $0x44] sm:$0x1]
      %v437 = vsel %vm310, 0, %v436
      %438 = vst [vmem:[%s411 + $0x44] sm:$0x1] %v437
      %439 = vst [vmem:[#allocation3] sm:$0xf] 0
      %440 = vst [vmem:[#allocation3 + $0x4] sm:$0x1] 0
      %s441 = scalar_lea.vmem [#allocation3], 72
      %442 = vst [vmem:[%s441] sm:$0xf] 0
      %443 = vst [vmem:[%s441 + $0x4] sm:$0x1] 0
      %v444 = vld [vmem:[#allocation3] sm:$0x1]
      %v445 = vsel %vm310, 0, %v444
      %446 = vst [vmem:[#allocation3] sm:$0x1] %v445
      %v447 = vld [vmem:[#allocation3 + $0x8] sm:$0x1]
      %v448 = vsel %vm310, 0, %v447
      %449 = vst [vmem:[#allocation3 + $0x8] sm:$0x1] %v448
      %v450 = vld [vmem:[#allocation3 + $0x10] sm:$0x1]
      %v451 = vsel %vm310, 0, %v450
      %452 = vst [vmem:[#allocation3 + $0x10] sm:$0x1] %v451
      %v453 = vld [vmem:[#allocation3 + $0x18] sm:$0x1]
      %v454 = vsel %vm310, 0, %v453
      %455 = vst [vmem:[#allocation3 + $0x18] sm:$0x1] %v454
      %v456 = vld [vmem:[#allocation3 + $0x20] sm:$0x1]
      %v457 = vsel %vm310, 0, %v456
      %458 = vst [vmem:[#allocation3 + $0x20] sm:$0x1] %v457
      %v459 = vld [vmem:[#allocation3 + $0x28] sm:$0x1]
      %v460 = vsel %vm310, 0, %v459
      %461 = vst [vmem:[#allocation3 + $0x28] sm:$0x1] %v460
      %v462 = vld [vmem:[#allocation3 + $0x30] sm:$0x1]
      %v463 = vsel %vm310, 0, %v462
      %464 = vst [vmem:[#allocation3 + $0x30] sm:$0x1] %v463
      %v465 = vld [vmem:[#allocation3 + $0x38] sm:$0x1]
      %v466 = vsel %vm310, 0, %v465
      %467 = vst [vmem:[#allocation3 + $0x38] sm:$0x1] %v466
      %v468 = vld [vmem:[#allocation3 + $0x40] sm:$0x1]
      %v469 = vsel %vm310, 0, %v468
      %470 = vst [vmem:[#allocation3 + $0x40] sm:$0x1] %v469
      %v471 = vld [vmem:[#allocation3 + $0x48] sm:$0x1]
      %v472 = vsel %vm310, 0, %v471
      %473 = vst [vmem:[#allocation3 + $0x48] sm:$0x1] %v472
      %vm474 = vsmask.f32 7938
      %vm475 = vmand %vm308, %vm474
      %v476 = vld [vmem:[#allocation3 + $0x4] sm:$0x1]
      %v477 = vsel %vm475, 0, %v476
      %478 = vst [vmem:[#allocation3 + $0x4] sm:$0x1] %v477
      %v479 = vld [vmem:[#allocation3 + $0xc] sm:$0x1]
      %v480 = vsel %vm475, 0, %v479
      %481 = vst [vmem:[#allocation3 + $0xc] sm:$0x1] %v480
      %v482 = vld [vmem:[#allocation3 + $0x14] sm:$0x1]
      %v483 = vsel %vm475, 0, %v482
      %484 = vst [vmem:[#allocation3 + $0x14] sm:$0x1] %v483
      %v485 = vld [vmem:[#allocation3 + $0x1c] sm:$0x1]
      %v486 = vsel %vm475, 0, %v485
      %487 = vst [vmem:[#allocation3 + $0x1c] sm:$0x1] %v486
      %v488 = vld [vmem:[#allocation3 + $0x24] sm:$0x1]
      %v489 = vsel %vm475, 0, %v488
      %490 = vst [vmem:[#allocation3 + $0x24] sm:$0x1] %v489
      %v491 = vld [vmem:[#allocation3 + $0x2c] sm:$0x1]
      %v492 = vsel %vm475, 0, %v491
      %493 = vst [vmem:[#allocation3 + $0x2c] sm:$0x1] %v492
      %v494 = vld [vmem:[#allocation3 + $0x34] sm:$0x1]
      %v495 = vsel %vm475, 0, %v494
      %496 = vst [vmem:[#allocation3 + $0x34] sm:$0x1] %v495
      %v497 = vld [vmem:[#allocation3 + $0x3c] sm:$0x1]
      %v498 = vsel %vm475, 0, %v497
      %499 = vst [vmem:[#allocation3 + $0x3c] sm:$0x1] %v498
      %v500 = vld [vmem:[#allocation3 + $0x44] sm:$0x1]
      %v501 = vsel %vm475, 0, %v500
      %502 = vst [vmem:[#allocation3 + $0x44] sm:$0x1] %v501
      %v503 = vld [vmem:[#allocation3 + $0x4c] sm:$0x1]
      %v504 = vsel %vm475, 0, %v503
      %505 = vst [vmem:[#allocation3 + $0x4c] sm:$0x1] %v504
      %s506 = scalar_lea.vmem %s300, 96
      %v507 = vld [vmem:[%s506] sm:$0xf]
      %v508 = vld [vmem:[%s506 + $0x4] sm:$0xf]
      %v509 = vld [vmem:[%s506 + $0x8] sm:$0xf]
      %v510 = vld [vmem:[%s506 + $0xc] sm:$0xf]
      %v511 = vld [vmem:[%s506 + $0x10] sm:$0xf]
      %v512 = vld [vmem:[%s506 + $0x14] sm:$0xf]
      %v513 = vld [vmem:[%s506 + $0x18] sm:$0xf]
      %v514 = vld [vmem:[%s506 + $0x1c] sm:$0xf]
      %v515 = vunpack.c.l.bf16 %v507
      %v516 = vunpack.c.l.bf16 %v508
      %v517 = vunpack.c.l.bf16 %v509
      %v518 = vunpack.c.l.bf16 %v510
      %v519 = vunpack.c.l.bf16 %v511
      %v520 = vunpack.c.l.bf16 %v512
      %v521 = vunpack.c.l.bf16 %v513
      %v522 = vunpack.c.l.bf16 %v514
      %v523 = vld [vmem:[%s4] sm:$0x1]
      %v525 = vlaneseq
      %v526 = vshrl.u32 %v525, 7
      %v527 = vsub.s32 0, %v526
      %v528 = vrot.slane %v523, %v527
      %v530 = vmul.f32 %v515, %v528
      %v531 = vmul.f32 %v516, %v528
      %v532 = vmul.f32 %v517, %v528
      %v533 = vmul.f32 %v518, %v528
      %v534 = vmul.f32 %v519, %v528
      %v535 = vmul.f32 %v520, %v528
      %v536 = vmul.f32 %v521, %v528
      %v537 = vmul.f32 %v522, %v528
      %v538 = vld [vmem:[%s5] sm:$0x1]
      %v540 = vlaneseq
      %v541 = vshrl.u32 %v540, 7
      %v542 = vsub.s32 0, %v541
      %v543 = vrot.slane %v538, %v542
      %v545 = vadd.f32 %v530, %v543
      %v546 = vadd.f32 %v531, %v543
      %v547 = vadd.f32 %v532, %v543
      %v548 = vadd.f32 %v533, %v543
      %v549 = vadd.f32 %v534, %v543
      %v550 = vadd.f32 %v535, %v543
      %v551 = vadd.f32 %v536, %v543
      %v552 = vadd.f32 %v537, %v543
      %v553 = vmax.f32 %v545, 0.0
      %v554 = vmax.f32 %v546, 0.0
      %v555 = vmax.f32 %v547, 0.0
      %v556 = vmax.f32 %v548, 0.0
      %v557 = vmax.f32 %v549, 0.0
      %v558 = vmax.f32 %v550, 0.0
      %v559 = vmax.f32 %v551, 0.0
      %v560 = vmax.f32 %v552, 0.0
      %v561 = vpack.c.bf16 %v553, %v553
      %v562 = vpack.c.bf16 %v554, %v554
      %v563 = vpack.c.bf16 %v555, %v555
      %v564 = vpack.c.bf16 %v556, %v556
      %v565 = vpack.c.bf16 %v557, %v557
      %v566 = vpack.c.bf16 %v558, %v558
      %v567 = vpack.c.bf16 %v559, %v559
      %v568 = vpack.c.bf16 %v560, %v560
      %v577 = vunpack.c.l.b16 %v561
      %v578 = vunpack.c.l.b16 %v562
      %v579 = vunpack.c.l.b16 %v563
      %v580 = vunpack.c.l.b16 %v564
      %v581 = vunpack.c.l.b16 %v565
      %v582 = vunpack.c.l.b16 %v566
      %v583 = vunpack.c.l.b16 %v567
      %v584 = vunpack.c.l.b16 %v568
      %v585 = vpack.c.b16 %v577, %v577
      %v586 = vpack.c.b16 %v578, %v578
      %v587 = vpack.c.b16 %v579, %v579
      %v588 = vpack.c.b16 %v580, %v580
      %v589 = vpack.c.b16 %v581, %v581
      %v590 = vpack.c.b16 %v582, %v582
      %v591 = vpack.c.b16 %v583, %v583
      %v592 = vpack.c.b16 %v584, %v584
      %v594 = vshrl.u32 %v585, 16
      %v596 = vrot.slane %v594, 7
      %v597 = vshll.u32 %v585, 16
      %v599 = vor.u32 %v596, %v597
      %v600 = vrot.slane %v596, 4
      %v602 = vshrl.u32 %v586, 16
      %v604 = vrot.slane %v602, 7
      %v605 = vshll.u32 %v586, 16
      %v607 = vor.u32 %v604, %v605
      %v608 = vrot.slane %v604, 4
      %v610 = vshrl.u32 %v587, 16
      %v612 = vrot.slane %v610, 7
      %v613 = vshll.u32 %v587, 16
      %v615 = vor.u32 %v612, %v613
      %v616 = vrot.slane %v612, 4
      %v618 = vshrl.u32 %v588, 16
      %v620 = vrot.slane %v618, 7
      %v621 = vshll.u32 %v588, 16
      %v623 = vor.u32 %v620, %v621
      %v624 = vrot.slane %v620, 4
      %v626 = vshrl.u32 %v589, 16
      %v628 = vrot.slane %v626, 7
      %v629 = vshll.u32 %v589, 16
      %v631 = vor.u32 %v628, %v629
      %v632 = vrot.slane %v628, 4
      %v634 = vshrl.u32 %v590, 16
      %v636 = vrot.slane %v634, 7
      %v637 = vshll.u32 %v590, 16
      %v639 = vor.u32 %v636, %v637
      %v640 = vrot.slane %v636, 4
      %v642 = vshrl.u32 %v591, 16
      %v644 = vrot.slane %v642, 7
      %v645 = vshll.u32 %v591, 16
      %v647 = vor.u32 %v644, %v645
      %v648 = vrot.slane %v644, 4
      %v650 = vshrl.u32 %v592, 16
      %v652 = vrot.slane %v650, 7
      %v653 = vshll.u32 %v592, 16
      %v655 = vor.u32 %v652, %v653
      %v656 = vrot.slane %v652, 4
      %s673 = scalar_lea.vmem [#allocation2], 8
      %vm674 = vcmask 1043456
      %vm675 = vmand %vm674, %vm474
      %v676 = vld [vmem:[%s673] sm:$0xf]
      %v677 = vsel %vm675, %v599, %v676
      %678 = vst [vmem:[%s673] sm:$0xf] %v677
      %v679 = vld [vmem:[%s673 + $0x4] sm:$0x1]
      %v680 = vsel %vm310, %v600, %v679
      %681 = vst [vmem:[%s673 + $0x4] sm:$0x1] %v680
      %v682 = vld [vmem:[%s673 + $0x8] sm:$0xf]
      %v683 = vsel %vm675, %v607, %v682
      %684 = vst [vmem:[%s673 + $0x8] sm:$0xf] %v683
      %v685 = vld [vmem:[%s673 + $0xc] sm:$0x1]
      %v686 = vsel %vm310, %v608, %v685
      %687 = vst [vmem:[%s673 + $0xc] sm:$0x1] %v686
      %v688 = vld [vmem:[%s673 + $0x10] sm:$0xf]
      %v689 = vsel %vm675, %v615, %v688
      %690 = vst [vmem:[%s673 + $0x10] sm:$0xf] %v689
      %v691 = vld [vmem:[%s673 + $0x14] sm:$0x1]
      %v692 = vsel %vm310, %v616, %v691
      %693 = vst [vmem:[%s673 + $0x14] sm:$0x1] %v692
      %v694 = vld [vmem:[%s673 + $0x18] sm:$0xf]
      %v695 = vsel %vm675, %v623, %v694
      %696 = vst [vmem:[%s673 + $0x18] sm:$0xf] %v695
      %v697 = vld [vmem:[%s673 + $0x1c] sm:$0x1]
      %v698 = vsel %vm310, %v624, %v697
      %699 = vst [vmem:[%s673 + $0x1c] sm:$0x1] %v698
      %v700 = vld [vmem:[%s673 + $0x20] sm:$0xf]
      %v701 = vsel %vm675, %v631, %v700
      %702 = vst [vmem:[%s673 + $0x20] sm:$0xf] %v701
      %v703 = vld [vmem:[%s673 + $0x24] sm:$0x1]
      %v704 = vsel %vm310, %v632, %v703
      %705 = vst [vmem:[%s673 + $0x24] sm:$0x1] %v704
      %v706 = vld [vmem:[%s673 + $0x28] sm:$0xf]
      %v707 = vsel %vm675, %v639, %v706
      %708 = vst [vmem:[%s673 + $0x28] sm:$0xf] %v707
      %v709 = vld [vmem:[%s673 + $0x2c] sm:$0x1]
      %v710 = vsel %vm310, %v640, %v709
      %711 = vst [vmem:[%s673 + $0x2c] sm:$0x1] %v710
      %v712 = vld [vmem:[%s673 + $0x30] sm:$0xf]
      %v713 = vsel %vm675, %v647, %v712
      %714 = vst [vmem:[%s673 + $0x30] sm:$0xf] %v713
      %v715 = vld [vmem:[%s673 + $0x34] sm:$0x1]
      %v716 = vsel %vm310, %v648, %v715
      %717 = vst [vmem:[%s673 + $0x34] sm:$0x1] %v716
      %v718 = vld [vmem:[%s673 + $0x38] sm:$0xf]
      %v719 = vsel %vm675, %v655, %v718
      %720 = vst [vmem:[%s673 + $0x38] sm:$0xf] %v719
      %v721 = vld [vmem:[%s673 + $0x3c] sm:$0x1]
      %v722 = vsel %vm310, %v656, %v721
      %723 = vst [vmem:[%s673 + $0x3c] sm:$0x1] %v722
      %s724 = scalar_lea.vmem %s300, 64
      %v725 = vld [vmem:[%s724] sm:$0xf]
      %v726 = vld [vmem:[%s724 + $0x4] sm:$0xf]
      %v727 = vld [vmem:[%s724 + $0x8] sm:$0xf]
      %v728 = vld [vmem:[%s724 + $0xc] sm:$0xf]
      %v729 = vld [vmem:[%s724 + $0x10] sm:$0xf]
      %v730 = vld [vmem:[%s724 + $0x14] sm:$0xf]
      %v731 = vld [vmem:[%s724 + $0x18] sm:$0xf]
      %v732 = vld [vmem:[%s724 + $0x1c] sm:$0xf]
      %v733 = vunpack.c.l.bf16 %v725
      %v734 = vunpack.c.l.bf16 %v726
      %v735 = vunpack.c.l.bf16 %v727
      %v736 = vunpack.c.l.bf16 %v728
      %v737 = vunpack.c.l.bf16 %v729
      %v738 = vunpack.c.l.bf16 %v730
      %v739 = vunpack.c.l.bf16 %v731
      %v740 = vunpack.c.l.bf16 %v732
      %v741 = vld [vmem:[%s4] sm:$0x1]
      %v743 = vlaneseq
      %v744 = vshrl.u32 %v743, 7
      %v745 = vsub.s32 0, %v744
      %v746 = vrot.slane %v741, %v745
      %v748 = vmul.f32 %v733, %v746
      %v749 = vmul.f32 %v734, %v746
      %v750 = vmul.f32 %v735, %v746
      %v751 = vmul.f32 %v736, %v746
      %v752 = vmul.f32 %v737, %v746
      %v753 = vmul.f32 %v738, %v746
      %v754 = vmul.f32 %v739, %v746
      %v755 = vmul.f32 %v740, %v746
      %v756 = vld [vmem:[%s5] sm:$0x1]
      %v758 = vlaneseq
      %v759 = vshrl.u32 %v758, 7
      %v760 = vsub.s32 0, %v759
      %v761 = vrot.slane %v756, %v760
      %v763 = vadd.f32 %v748, %v761
      %v764 = vadd.f32 %v749, %v761
      %v765 = vadd.f32 %v750, %v761
      %v766 = vadd.f32 %v751, %v761
      %v767 = vadd.f32 %v752, %v761
      %v768 = vadd.f32 %v753, %v761
      %v769 = vadd.f32 %v754, %v761
      %v770 = vadd.f32 %v755, %v761
      %v771 = vmax.f32 %v763, 0.0
      %v772 = vmax.f32 %v764, 0.0
      %v773 = vmax.f32 %v765, 0.0
      %v774 = vmax.f32 %v766, 0.0
      %v775 = vmax.f32 %v767, 0.0
      %v776 = vmax.f32 %v768, 0.0
      %v777 = vmax.f32 %v769, 0.0
      %v778 = vmax.f32 %v770, 0.0
      %v779 = vpack.c.bf16 %v771, %v771
      %v780 = vpack.c.bf16 %v772, %v772
      %v781 = vpack.c.bf16 %v773, %v773
      %v782 = vpack.c.bf16 %v774, %v774
      %v783 = vpack.c.bf16 %v775, %v775
      %v784 = vpack.c.bf16 %v776, %v776
      %v785 = vpack.c.bf16 %v777, %v777
      %v786 = vpack.c.bf16 %v778, %v778
      %s787 = scalar_lea.vmem [#allocation2], 80
      %788 = vst [vmem:[%s787] sm:$0xf] %v779
      %789 = vst [vmem:[%s787 + $0x8] sm:$0xf] %v780
      %790 = vst [vmem:[%s787 + $0x10] sm:$0xf] %v781
      %791 = vst [vmem:[%s787 + $0x18] sm:$0xf] %v782
      %792 = vst [vmem:[%s787 + $0x20] sm:$0xf] %v783
      %793 = vst [vmem:[%s787 + $0x28] sm:$0xf] %v784
      %794 = vst [vmem:[%s787 + $0x30] sm:$0xf] %v785
      %795 = vst [vmem:[%s787 + $0x38] sm:$0xf] %v786
      %s796 = scalar_lea.vmem %s300, 32
      %v797 = vld [vmem:[%s796] sm:$0xf]
      %v798 = vld [vmem:[%s796 + $0x4] sm:$0xf]
      %v799 = vld [vmem:[%s796 + $0x8] sm:$0xf]
      %v800 = vld [vmem:[%s796 + $0xc] sm:$0xf]
      %v801 = vld [vmem:[%s796 + $0x10] sm:$0xf]
      %v802 = vld [vmem:[%s796 + $0x14] sm:$0xf]
      %v803 = vld [vmem:[%s796 + $0x18] sm:$0xf]
      %v804 = vld [vmem:[%s796 + $0x1c] sm:$0xf]
      %v805 = vunpack.c.l.bf16 %v797
      %v806 = vunpack.c.l.bf16 %v798
      %v807 = vunpack.c.l.bf16 %v799
      %v808 = vunpack.c.l.bf16 %v800
      %v809 = vunpack.c.l.bf16 %v801
      %v810 = vunpack.c.l.bf16 %v802
      %v811 = vunpack.c.l.bf16 %v803
      %v812 = vunpack.c.l.bf16 %v804
      %v813 = vld [vmem:[%s4] sm:$0x1]
      %v815 = vlaneseq
      %v816 = vshrl.u32 %v815, 7
      %v817 = vsub.s32 0, %v816
      %v818 = vrot.slane %v813, %v817
      %v820 = vmul.f32 %v805, %v818
      %v821 = vmul.f32 %v806, %v818
      %v822 = vmul.f32 %v807, %v818
      %v823 = vmul.f32 %v808, %v818
      %v824 = vmul.f32 %v809, %v818
      %v825 = vmul.f32 %v810, %v818
      %v826 = vmul.f32 %v811, %v818
      %v827 = vmul.f32 %v812, %v818
      %v828 = vld [vmem:[%s5] sm:$0x1]
      %v830 = vlaneseq
      %v831 = vshrl.u32 %v830, 7
      %v832 = vsub.s32 0, %v831
      %v833 = vrot.slane %v828, %v832
      %v835 = vadd.f32 %v820, %v833
      %v836 = vadd.f32 %v821, %v833
      %v837 = vadd.f32 %v822, %v833
      %v838 = vadd.f32 %v823, %v833
      %v839 = vadd.f32 %v824, %v833
      %v840 = vadd.f32 %v825, %v833
      %v841 = vadd.f32 %v826, %v833
      %v842 = vadd.f32 %v827, %v833
      %v843 = vmax.f32 %v835, 0.0
      %v844 = vmax.f32 %v836, 0.0
      %v845 = vmax.f32 %v837, 0.0
      %v846 = vmax.f32 %v838, 0.0
      %v847 = vmax.f32 %v839, 0.0
      %v848 = vmax.f32 %v840, 0.0
      %v849 = vmax.f32 %v841, 0.0
      %v850 = vmax.f32 %v842, 0.0
      %v851 = vpack.c.bf16 %v843, %v843
      %v852 = vpack.c.bf16 %v844, %v844
      %v853 = vpack.c.bf16 %v845, %v845
      %v854 = vpack.c.bf16 %v846, %v846
      %v855 = vpack.c.bf16 %v847, %v847
      %v856 = vpack.c.bf16 %v848, %v848
      %v857 = vpack.c.bf16 %v849, %v849
      %v858 = vpack.c.bf16 %v850, %v850
      %v867 = vunpack.c.l.b16 %v851
      %v868 = vunpack.c.l.b16 %v852
      %v869 = vunpack.c.l.b16 %v853
      %v870 = vunpack.c.l.b16 %v854
      %v871 = vunpack.c.l.b16 %v855
      %v872 = vunpack.c.l.b16 %v856
      %v873 = vunpack.c.l.b16 %v857
      %v874 = vunpack.c.l.b16 %v858
      %v875 = vpack.c.b16 %v867, %v867
      %v876 = vpack.c.b16 %v868, %v868
      %v877 = vpack.c.b16 %v869, %v869
      %v878 = vpack.c.b16 %v870, %v870
      %v879 = vpack.c.b16 %v871, %v871
      %v880 = vpack.c.b16 %v872, %v872
      %v881 = vpack.c.b16 %v873, %v873
      %v882 = vpack.c.b16 %v874, %v874
      %v884 = vshrl.u32 %v875, 16
      %v886 = vrot.slane %v884, 7
      %v887 = vshll.u32 %v875, 16
      %v889 = vor.u32 %v886, %v887
      %v890 = vrot.slane %v886, 4
      %v892 = vshrl.u32 %v876, 16
      %v894 = vrot.slane %v892, 7
      %v895 = vshll.u32 %v876, 16
      %v897 = vor.u32 %v894, %v895
      %v898 = vrot.slane %v894, 4
      %v900 = vshrl.u32 %v877, 16
      %v902 = vrot.slane %v900, 7
      %v903 = vshll.u32 %v877, 16
      %v905 = vor.u32 %v902, %v903
      %v906 = vrot.slane %v902, 4
      %v908 = vshrl.u32 %v878, 16
      %v910 = vrot.slane %v908, 7
      %v911 = vshll.u32 %v878, 16
      %v913 = vor.u32 %v910, %v911
      %v914 = vrot.slane %v910, 4
      %v916 = vshrl.u32 %v879, 16
      %v918 = vrot.slane %v916, 7
      %v919 = vshll.u32 %v879, 16
      %v921 = vor.u32 %v918, %v919
      %v922 = vrot.slane %v918, 4
      %v924 = vshrl.u32 %v880, 16
      %v926 = vrot.slane %v924, 7
      %v927 = vshll.u32 %v880, 16
      %v929 = vor.u32 %v926, %v927
      %v930 = vrot.slane %v926, 4
      %v932 = vshrl.u32 %v881, 16
      %v934 = vrot.slane %v932, 7
      %v935 = vshll.u32 %v881, 16
      %v937 = vor.u32 %v934, %v935
      %v938 = vrot.slane %v934, 4
      %v940 = vshrl.u32 %v882, 16
      %v942 = vrot.slane %v940, 7
      %v943 = vshll.u32 %v882, 16
      %v945 = vor.u32 %v942, %v943
      %v946 = vrot.slane %v942, 4
      %v963 = vld [vmem:[%s378] sm:$0xf]
      %v964 = vsel %vm675, %v889, %v963
      %965 = vst [vmem:[%s378] sm:$0xf] %v964
      %v966 = vld [vmem:[%s378 + $0x4] sm:$0x1]
      %v967 = vsel %vm310, %v890, %v966
      %968 = vst [vmem:[%s378 + $0x4] sm:$0x1] %v967
      %v969 = vld [vmem:[%s378 + $0x8] sm:$0xf]
      %v970 = vsel %vm675, %v897, %v969
      %971 = vst [vmem:[%s378 + $0x8] sm:$0xf] %v970
      %v972 = vld [vmem:[%s378 + $0xc] sm:$0x1]
      %v973 = vsel %vm310, %v898, %v972
      %974 = vst [vmem:[%s378 + $0xc] sm:$0x1] %v973
      %v975 = vld [vmem:[%s378 + $0x10] sm:$0xf]
      %v976 = vsel %vm675, %v905, %v975
      %977 = vst [vmem:[%s378 + $0x10] sm:$0xf] %v976
      %v978 = vld [vmem:[%s378 + $0x14] sm:$0x1]
      %v979 = vsel %vm310, %v906, %v978
      %980 = vst [vmem:[%s378 + $0x14] sm:$0x1] %v979
      %v981 = vld [vmem:[%s378 + $0x18] sm:$0xf]
      %v982 = vsel %vm675, %v913, %v981
      %983 = vst [vmem:[%s378 + $0x18] sm:$0xf] %v982
      %v984 = vld [vmem:[%s378 + $0x1c] sm:$0x1]
      %v985 = vsel %vm310, %v914, %v984
      %986 = vst [vmem:[%s378 + $0x1c] sm:$0x1] %v985
      %v987 = vld [vmem:[%s378 + $0x20] sm:$0xf]
      %v988 = vsel %vm675, %v921, %v987
      %989 = vst [vmem:[%s378 + $0x20] sm:$0xf] %v988
      %v990 = vld [vmem:[%s378 + $0x24] sm:$0x1]
      %v991 = vsel %vm310, %v922, %v990
      %992 = vst [vmem:[%s378 + $0x24] sm:$0x1] %v991
      %v993 = vld [vmem:[%s378 + $0x28] sm:$0xf]
      %v994 = vsel %vm675, %v929, %v993
      %995 = vst [vmem:[%s378 + $0x28] sm:$0xf] %v994
      %v996 = vld [vmem:[%s378 + $0x2c] sm:$0x1]
      %v997 = vsel %vm310, %v930, %v996
      %998 = vst [vmem:[%s378 + $0x2c] sm:$0x1] %v997
      %v999 = vld [vmem:[%s378 + $0x30] sm:$0xf]
      %v1000 = vsel %vm675, %v937, %v999
      %1001 = vst [vmem:[%s378 + $0x30] sm:$0xf] %v1000
      %v1002 = vld [vmem:[%s378 + $0x34] sm:$0x1]
      %v1003 = vsel %vm310, %v938, %v1002
      %1004 = vst [vmem:[%s378 + $0x34] sm:$0x1] %v1003
      %v1005 = vld [vmem:[%s378 + $0x38] sm:$0xf]
      %v1006 = vsel %vm675, %v945, %v1005
      %1007 = vst [vmem:[%s378 + $0x38] sm:$0xf] %v1006
      %v1008 = vld [vmem:[%s378 + $0x3c] sm:$0x1]
      %v1009 = vsel %vm310, %v946, %v1008
      %1010 = vst [vmem:[%s378 + $0x3c] sm:$0x1] %v1009
      %v1011 = vld [vmem:[%s300] sm:$0xf]
      %v1012 = vld [vmem:[%s300 + $0x4] sm:$0xf]
      %v1013 = vld [vmem:[%s300 + $0x8] sm:$0xf]
      %v1014 = vld [vmem:[%s300 + $0xc] sm:$0xf]
      %v1015 = vld [vmem:[%s300 + $0x10] sm:$0xf]
      %v1016 = vld [vmem:[%s300 + $0x14] sm:$0xf]
      %v1017 = vld [vmem:[%s300 + $0x18] sm:$0xf]
      %v1018 = vld [vmem:[%s300 + $0x1c] sm:$0xf]
      %v1019 = vunpack.c.l.bf16 %v1011
      %v1020 = vunpack.c.l.bf16 %v1012
      %v1021 = vunpack.c.l.bf16 %v1013
      %v1022 = vunpack.c.l.bf16 %v1014
      %v1023 = vunpack.c.l.bf16 %v1015
      %v1024 = vunpack.c.l.bf16 %v1016
      %v1025 = vunpack.c.l.bf16 %v1017
      %v1026 = vunpack.c.l.bf16 %v1018
      %v1027 = vld [vmem:[%s4] sm:$0x1]
      %v1029 = vlaneseq
      %v1030 = vshrl.u32 %v1029, 7
      %v1031 = vsub.s32 0, %v1030
      %v1032 = vrot.slane %v1027, %v1031
      %v1034 = vmul.f32 %v1019, %v1032
      %v1035 = vmul.f32 %v1020, %v1032
      %v1036 = vmul.f32 %v1021, %v1032
      %v1037 = vmul.f32 %v1022, %v1032
      %v1038 = vmul.f32 %v1023, %v1032
      %v1039 = vmul.f32 %v1024, %v1032
      %v1040 = vmul.f32 %v1025, %v1032
      %v1041 = vmul.f32 %v1026, %v1032
      %v1042 = vld [vmem:[%s5] sm:$0x1]
      %v1044 = vlaneseq
      %v1045 = vshrl.u32 %v1044, 7
      %v1046 = vsub.s32 0, %v1045
      %v1047 = vrot.slane %v1042, %v1046
      %v1049 = vadd.f32 %v1034, %v1047
      %v1050 = vadd.f32 %v1035, %v1047
      %v1051 = vadd.f32 %v1036, %v1047
      %v1052 = vadd.f32 %v1037, %v1047
      %v1053 = vadd.f32 %v1038, %v1047
      %v1054 = vadd.f32 %v1039, %v1047
      %v1055 = vadd.f32 %v1040, %v1047
      %v1056 = vadd.f32 %v1041, %v1047
      %v1057 = vmax.f32 %v1049, 0.0
      %v1058 = vmax.f32 %v1050, 0.0
      %v1059 = vmax.f32 %v1051, 0.0
      %v1060 = vmax.f32 %v1052, 0.0
      %v1061 = vmax.f32 %v1053, 0.0
      %v1062 = vmax.f32 %v1054, 0.0
      %v1063 = vmax.f32 %v1055, 0.0
      %v1064 = vmax.f32 %v1056, 0.0
      %v1065 = vpack.c.bf16 %v1057, %v1057
      %v1066 = vpack.c.bf16 %v1058, %v1058
      %v1067 = vpack.c.bf16 %v1059, %v1059
      %v1068 = vpack.c.bf16 %v1060, %v1060
      %v1069 = vpack.c.bf16 %v1061, %v1061
      %v1070 = vpack.c.bf16 %v1062, %v1062
      %v1071 = vpack.c.bf16 %v1063, %v1063
      %v1072 = vpack.c.bf16 %v1064, %v1064
      %1073 = vst [vmem:[%s411] sm:$0xf] %v1065
      %1074 = vst [vmem:[%s411 + $0x8] sm:$0xf] %v1066
      %1075 = vst [vmem:[%s411 + $0x10] sm:$0xf] %v1067
      %1076 = vst [vmem:[%s411 + $0x18] sm:$0xf] %v1068
      %1077 = vst [vmem:[%s411 + $0x20] sm:$0xf] %v1069
      %1078 = vst [vmem:[%s411 + $0x28] sm:$0xf] %v1070
      %1079 = vst [vmem:[%s411 + $0x30] sm:$0xf] %v1071
      %1080 = vst [vmem:[%s411 + $0x38] sm:$0xf] %v1072
      %v1081 = vld [vmem:[#allocation2] sm:$0xf]
      %v1082 = vld [vmem:[#allocation2 + $0x8] sm:$0xf]
      %v1083 = vld [vmem:[#allocation2 + $0x10] sm:$0xf]
      %v1084 = vld [vmem:[#allocation2 + $0x18] sm:$0xf]
      %v1085 = vld [vmem:[#allocation2 + $0x20] sm:$0xf]
      %v1086 = vld [vmem:[#allocation2 + $0x28] sm:$0xf]
      %v1087 = vld [vmem:[#allocation2 + $0x30] sm:$0xf]
      %v1088 = vld [vmem:[#allocation2 + $0x38] sm:$0xf]
      %v1097 = vunpack.c.l.b16 %v1081
      %v1098 = vunpack.c.l.b16 %v1082
      %v1099 = vunpack.c.l.b16 %v1083
      %v1100 = vunpack.c.l.b16 %v1084
      %v1101 = vunpack.c.l.b16 %v1085
      %v1102 = vunpack.c.l.b16 %v1086
      %v1103 = vunpack.c.l.b16 %v1087
      %v1104 = vunpack.c.l.b16 %v1088
      %v1105 = vpack.c.b16 %v1098, %v1097
      %v1106 = vpack.c.b16 %v1100, %v1099
      %v1107 = vpack.c.b16 %v1102, %v1101
      %v1108 = vpack.c.b16 %v1104, %v1103
      %1113 = vst [vmem:[#allocation4] sm:$0xff] %v1105
      %1114 = vst [vmem:[#allocation4 + $0x48] sm:$0xff] %v1106
      %1115 = vst [vmem:[#allocation4 + $0x90] sm:$0xff] %v1107
      %1116 = vst [vmem:[#allocation4 + $0xd8] sm:$0xff] %v1108
      %v1117 = vld [vmem:[%s341] sm:$0xf]
      %v1118 = vld [vmem:[%s341 + $0x8] sm:$0xf]
      %v1119 = vld [vmem:[%s341 + $0x10] sm:$0xf]
      %v1120 = vld [vmem:[%s341 + $0x18] sm:$0xf]
      %v1121 = vld [vmem:[%s341 + $0x20] sm:$0xf]
      %v1122 = vld [vmem:[%s341 + $0x28] sm:$0xf]
      %v1123 = vld [vmem:[%s341 + $0x30] sm:$0xf]
      %v1124 = vld [vmem:[%s341 + $0x38] sm:$0xf]
      %v1133 = vunpack.c.l.b16 %v1117
      %v1134 = vunpack.c.l.b16 %v1118
      %v1135 = vunpack.c.l.b16 %v1119
      %v1136 = vunpack.c.l.b16 %v1120
      %v1137 = vunpack.c.l.b16 %v1121
      %v1138 = vunpack.c.l.b16 %v1122
      %v1139 = vunpack.c.l.b16 %v1123
      %v1140 = vunpack.c.l.b16 %v1124
      %v1141 = vpack.c.b16 %v1134, %v1133
      %v1142 = vpack.c.b16 %v1136, %v1135
      %v1143 = vpack.c.b16 %v1138, %v1137
      %v1144 = vpack.c.b16 %v1140, %v1139
      %1149 = vst [vmem:[#allocation4 + $0x8] sm:$0xff] %v1141
      %1150 = vst [vmem:[#allocation4 + $0x50] sm:$0xff] %v1142
      %1151 = vst [vmem:[#allocation4 + $0x98] sm:$0xff] %v1143
      %1152 = vst [vmem:[#allocation4 + $0xe0] sm:$0xff] %v1144
      %v1153 = vld [vmem:[#allocation2] sm:$0xf]
      %v1154 = vld [vmem:[#allocation2 + $0x4] sm:$0x1]
      %v1155 = vld [vmem:[#allocation2 + $0x8] sm:$0xf]
      %v1156 = vld [vmem:[#allocation2 + $0xc] sm:$0x1]
      %v1157 = vld [vmem:[#allocation2 + $0x10] sm:$0xf]
      %v1158 = vld [vmem:[#allocation2 + $0x14] sm:$0x1]
      %v1159 = vld [vmem:[#allocation2 + $0x18] sm:$0xf]
      %v1160 = vld [vmem:[#allocation2 + $0x1c] sm:$0x1]
      %v1161 = vld [vmem:[#allocation2 + $0x20] sm:$0xf]
      %v1162 = vld [vmem:[#allocation2 + $0x24] sm:$0x1]
      %v1163 = vld [vmem:[#allocation2 + $0x28] sm:$0xf]
      %v1164 = vld [vmem:[#allocation2 + $0x2c] sm:$0x1]
      %v1165 = vld [vmem:[#allocation2 + $0x30] sm:$0xf]
      %v1166 = vld [vmem:[#allocation2 + $0x34] sm:$0x1]
      %v1167 = vld [vmem:[#allocation2 + $0x38] sm:$0xf]
      %v1168 = vld [vmem:[#allocation2 + $0x3c] sm:$0x1]
      %vm1169 = vsmask.f32 3328
      %vm1170 = vsmask.f32 7440
      %vm1171 = vmor %vm1169, %vm1170
      %v1173 = vshrl.u32 %v1153, 16
      %v1175 = vrot.slane %v1173, 4
      %v1176 = vshll.u32 %v1153, 16
      %v1178 = vrot.slane %v1176, 5
      %v1179 = vor.u32 %v1175, %v1178
      %v1180 = vrot.slane %v1179, 4
      %v1182 = vshll.u32 %v1154, 16
      %v1184 = vrot.slane %v1182, 5
      %v1185 = vsel %vm1171, %v1180, %v1184
      %v1187 = vshrl.u32 %v1155, 16
      %v1189 = vrot.slane %v1187, 4
      %v1190 = vshll.u32 %v1155, 16
      %v1192 = vrot.slane %v1190, 5
      %v1193 = vor.u32 %v1189, %v1192
      %v1194 = vrot.slane %v1193, 4
      %v1196 = vshll.u32 %v1156, 16
      %v1198 = vrot.slane %v1196, 5
      %v1199 = vsel %vm1171, %v1194, %v1198
      %v1201 = vshrl.u32 %v1157, 16
      %v1203 = vrot.slane %v1201, 4
      %v1204 = vshll.u32 %v1157, 16
      %v1206 = vrot.slane %v1204, 5
      %v1207 = vor.u32 %v1203, %v1206
      %v1208 = vrot.slane %v1207, 4
      %v1210 = vshll.u32 %v1158, 16
      %v1212 = vrot.slane %v1210, 5
      %v1213 = vsel %vm1171, %v1208, %v1212
      %v1215 = vshrl.u32 %v1159, 16
      %v1217 = vrot.slane %v1215, 4
      %v1218 = vshll.u32 %v1159, 16
      %v1220 = vrot.slane %v1218, 5
      %v1221 = vor.u32 %v1217, %v1220
      %v1222 = vrot.slane %v1221, 4
      %v1224 = vshll.u32 %v1160, 16
      %v1226 = vrot.slane %v1224, 5
      %v1227 = vsel %vm1171, %v1222, %v1226
      %v1229 = vshrl.u32 %v1161, 16
      %v1231 = vrot.slane %v1229, 4
      %v1232 = vshll.u32 %v1161, 16
      %v1234 = vrot.slane %v1232, 5
      %v1235 = vor.u32 %v1231, %v1234
      %v1236 = vrot.slane %v1235, 4
      %v1238 = vshll.u32 %v1162, 16
      %v1240 = vrot.slane %v1238, 5
      %v1241 = vsel %vm1171, %v1236, %v1240
      %v1243 = vshrl.u32 %v1163, 16
      %v1245 = vrot.slane %v1243, 4
      %v1246 = vshll.u32 %v1163, 16
      %v1248 = vrot.slane %v1246, 5
      %v1249 = vor.u32 %v1245, %v1248
      %v1250 = vrot.slane %v1249, 4
      %v1252 = vshll.u32 %v1164, 16
      %v1254 = vrot.slane %v1252, 5
      %v1255 = vsel %vm1171, %v1250, %v1254
      %v1257 = vshrl.u32 %v1165, 16
      %v1259 = vrot.slane %v1257, 4
      %v1260 = vshll.u32 %v1165, 16
      %v1262 = vrot.slane %v1260, 5
      %v1263 = vor.u32 %v1259, %v1262
      %v1264 = vrot.slane %v1263, 4
      %v1266 = vshll.u32 %v1166, 16
      %v1268 = vrot.slane %v1266, 5
      %v1269 = vsel %vm1171, %v1264, %v1268
      %v1271 = vshrl.u32 %v1167, 16
      %v1273 = vrot.slane %v1271, 4
      %v1274 = vshll.u32 %v1167, 16
      %v1276 = vrot.slane %v1274, 5
      %v1277 = vor.u32 %v1273, %v1276
      %v1278 = vrot.slane %v1277, 4
      %v1280 = vshll.u32 %v1168, 16
      %v1282 = vrot.slane %v1280, 5
      %v1283 = vsel %vm1171, %v1278, %v1282
      %v1284 = vunpack.c.l.b16 %v1185
      %v1285 = vunpack.c.l.b16 %v1199
      %v1286 = vunpack.c.l.b16 %v1213
      %v1287 = vunpack.c.l.b16 %v1227
      %v1288 = vunpack.c.l.b16 %v1241
      %v1289 = vunpack.c.l.b16 %v1255
      %v1290 = vunpack.c.l.b16 %v1269
      %v1291 = vunpack.c.l.b16 %v1283
      %v1292 = vpack.c.b16 %v1285, %v1284
      %v1293 = vpack.c.b16 %v1287, %v1286
      %v1294 = vpack.c.b16 %v1289, %v1288
      %v1295 = vpack.c.b16 %v1291, %v1290
      %1300 = vst [vmem:[#allocation4 + $0x10] sm:$0xff] %v1292
      %1301 = vst [vmem:[#allocation4 + $0x58] sm:$0xff] %v1293
      %1302 = vst [vmem:[#allocation4 + $0xa0] sm:$0xff] %v1294
      %1303 = vst [vmem:[#allocation4 + $0xe8] sm:$0xff] %v1295
      %v1304 = vld [vmem:[%s378] sm:$0xf]
      %v1305 = vld [vmem:[%s378 + $0x8] sm:$0xf]
      %v1306 = vld [vmem:[%s378 + $0x10] sm:$0xf]
      %v1307 = vld [vmem:[%s378 + $0x18] sm:$0xf]
      %v1308 = vld [vmem:[%s378 + $0x20] sm:$0xf]
      %v1309 = vld [vmem:[%s378 + $0x28] sm:$0xf]
      %v1310 = vld [vmem:[%s378 + $0x30] sm:$0xf]
      %v1311 = vld [vmem:[%s378 + $0x38] sm:$0xf]
      %v1320 = vunpack.c.l.b16 %v1304
      %v1321 = vunpack.c.l.b16 %v1305
      %v1322 = vunpack.c.l.b16 %v1306
      %v1323 = vunpack.c.l.b16 %v1307
      %v1324 = vunpack.c.l.b16 %v1308
      %v1325 = vunpack.c.l.b16 %v1309
      %v1326 = vunpack.c.l.b16 %v1310
      %v1327 = vunpack.c.l.b16 %v1311
      %v1328 = vpack.c.b16 %v1321, %v1320
      %v1329 = vpack.c.b16 %v1323, %v1322
      %v1330 = vpack.c.b16 %v1325, %v1324
      %v1331 = vpack.c.b16 %v1327, %v1326
      %1336 = vst [vmem:[#allocation4 + $0x18] sm:$0xff] %v1328
      %1337 = vst [vmem:[#allocation4 + $0x60] sm:$0xff] %v1329
      %1338 = vst [vmem:[#allocation4 + $0xa8] sm:$0xff] %v1330
      %1339 = vst [vmem:[#allocation4 + $0xf0] sm:$0xff] %v1331
      %v1340 = vld [vmem:[%s411] sm:$0xf]
      %v1341 = vld [vmem:[%s411 + $0x8] sm:$0xf]
      %v1342 = vld [vmem:[%s411 + $0x10] sm:$0xf]
      %v1343 = vld [vmem:[%s411 + $0x18] sm:$0xf]
      %v1344 = vld [vmem:[%s411 + $0x20] sm:$0xf]
      %v1345 = vld [vmem:[%s411 + $0x28] sm:$0xf]
      %v1346 = vld [vmem:[%s411 + $0x30] sm:$0xf]
      %v1347 = vld [vmem:[%s411 + $0x38] sm:$0xf]
      %v1356 = vunpack.c.l.b16 %v1340
      %v1357 = vunpack.c.l.b16 %v1341
      %v1358 = vunpack.c.l.b16 %v1342
      %v1359 = vunpack.c.l.b16 %v1343
      %v1360 = vunpack.c.l.b16 %v1344
      %v1361 = vunpack.c.l.b16 %v1345
      %v1362 = vunpack.c.l.b16 %v1346
      %v1363 = vunpack.c.l.b16 %v1347
      %v1364 = vpack.c.b16 %v1357, %v1356
      %v1365 = vpack.c.b16 %v1359, %v1358
      %v1366 = vpack.c.b16 %v1361, %v1360
      %v1367 = vpack.c.b16 %v1363, %v1362
      %1372 = vst [vmem:[#allocation4 + $0x20] sm:$0xff] %v1364
      %1373 = vst [vmem:[#allocation4 + $0x68] sm:$0xff] %v1365
      %1374 = vst [vmem:[#allocation4 + $0xb0] sm:$0xff] %v1366
      %1375 = vst [vmem:[#allocation4 + $0xf8] sm:$0xff] %v1367
      %v1376 = vld [vmem:[%s378] sm:$0xf]
      %v1377 = vld [vmem:[%s378 + $0x4] sm:$0x1]
      %v1378 = vld [vmem:[%s378 + $0x8] sm:$0xf]
      %v1379 = vld [vmem:[%s378 + $0xc] sm:$0x1]
      %v1380 = vld [vmem:[%s378 + $0x10] sm:$0xf]
      %v1381 = vld [vmem:[%s378 + $0x14] sm:$0x1]
      %v1382 = vld [vmem:[%s378 + $0x18] sm:$0xf]
      %v1383 = vld [vmem:[%s378 + $0x1c] sm:$0x1]
      %v1384 = vld [vmem:[%s378 + $0x20] sm:$0xf]
      %v1385 = vld [vmem:[%s378 + $0x24] sm:$0x1]
      %v1386 = vld [vmem:[%s378 + $0x28] sm:$0xf]
      %v1387 = vld [vmem:[%s378 + $0x2c] sm:$0x1]
      %v1388 = vld [vmem:[%s378 + $0x30] sm:$0xf]
      %v1389 = vld [vmem:[%s378 + $0x34] sm:$0x1]
      %v1390 = vld [vmem:[%s378 + $0x38] sm:$0xf]
      %v1391 = vld [vmem:[%s378 + $0x3c] sm:$0x1]
      %v1393 = vshrl.u32 %v1376, 16
      %v1395 = vrot.slane %v1393, 4
      %v1396 = vshll.u32 %v1376, 16
      %v1398 = vrot.slane %v1396, 5
      %v1399 = vor.u32 %v1395, %v1398
      %v1400 = vrot.slane %v1399, 4
      %v1402 = vshll.u32 %v1377, 16
      %v1404 = vrot.slane %v1402, 5
      %v1405 = vsel %vm1171, %v1400, %v1404
      %v1407 = vshrl.u32 %v1378, 16
      %v1409 = vrot.slane %v1407, 4
      %v1410 = vshll.u32 %v1378, 16
      %v1412 = vrot.slane %v1410, 5
      %v1413 = vor.u32 %v1409, %v1412
      %v1414 = vrot.slane %v1413, 4
      %v1416 = vshll.u32 %v1379, 16
      %v1418 = vrot.slane %v1416, 5
      %v1419 = vsel %vm1171, %v1414, %v1418
      %v1421 = vshrl.u32 %v1380, 16
      %v1423 = vrot.slane %v1421, 4
      %v1424 = vshll.u32 %v1380, 16
      %v1426 = vrot.slane %v1424, 5
      %v1427 = vor.u32 %v1423, %v1426
      %v1428 = vrot.slane %v1427, 4
      %v1430 = vshll.u32 %v1381, 16
      %v1432 = vrot.slane %v1430, 5
      %v1433 = vsel %vm1171, %v1428, %v1432
      %v1435 = vshrl.u32 %v1382, 16
      %v1437 = vrot.slane %v1435, 4
      %v1438 = vshll.u32 %v1382, 16
      %v1440 = vrot.slane %v1438, 5
      %v1441 = vor.u32 %v1437, %v1440
      %v1442 = vrot.slane %v1441, 4
      %v1444 = vshll.u32 %v1383, 16
      %v1446 = vrot.slane %v1444, 5
      %v1447 = vsel %vm1171, %v1442, %v1446
      %v1449 = vshrl.u32 %v1384, 16
      %v1451 = vrot.slane %v1449, 4
      %v1452 = vshll.u32 %v1384, 16
      %v1454 = vrot.slane %v1452, 5
      %v1455 = vor.u32 %v1451, %v1454
      %v1456 = vrot.slane %v1455, 4
      %v1458 = vshll.u32 %v1385, 16
      %v1460 = vrot.slane %v1458, 5
      %v1461 = vsel %vm1171, %v1456, %v1460
      %v1463 = vshrl.u32 %v1386, 16
      %v1465 = vrot.slane %v1463, 4
      %v1466 = vshll.u32 %v1386, 16
      %v1468 = vrot.slane %v1466, 5
      %v1469 = vor.u32 %v1465, %v1468
      %v1470 = vrot.slane %v1469, 4
      %v1472 = vshll.u32 %v1387, 16
      %v1474 = vrot.slane %v1472, 5
      %v1475 = vsel %vm1171, %v1470, %v1474
      %v1477 = vshrl.u32 %v1388, 16
      %v1479 = vrot.slane %v1477, 4
      %v1480 = vshll.u32 %v1388, 16
      %v1482 = vrot.slane %v1480, 5
      %v1483 = vor.u32 %v1479, %v1482
      %v1484 = vrot.slane %v1483, 4
      %v1486 = vshll.u32 %v1389, 16
      %v1488 = vrot.slane %v1486, 5
      %v1489 = vsel %vm1171, %v1484, %v1488
      %v1491 = vshrl.u32 %v1390, 16
      %v1493 = vrot.slane %v1491, 4
      %v1494 = vshll.u32 %v1390, 16
      %v1496 = vrot.slane %v1494, 5
      %v1497 = vor.u32 %v1493, %v1496
      %v1498 = vrot.slane %v1497, 4
      %v1500 = vshll.u32 %v1391, 16
      %v1502 = vrot.slane %v1500, 5
      %v1503 = vsel %vm1171, %v1498, %v1502
      %v1504 = vunpack.c.l.b16 %v1405
      %v1505 = vunpack.c.l.b16 %v1419
      %v1506 = vunpack.c.l.b16 %v1433
      %v1507 = vunpack.c.l.b16 %v1447
      %v1508 = vunpack.c.l.b16 %v1461
      %v1509 = vunpack.c.l.b16 %v1475
      %v1510 = vunpack.c.l.b16 %v1489
      %v1511 = vunpack.c.l.b16 %v1503
      %v1512 = vpack.c.b16 %v1505, %v1504
      %v1513 = vpack.c.b16 %v1507, %v1506
      %v1514 = vpack.c.b16 %v1509, %v1508
      %v1515 = vpack.c.b16 %v1511, %v1510
      %1520 = vst [vmem:[#allocation4 + $0x28] sm:$0xff] %v1512
      %1521 = vst [vmem:[#allocation4 + $0x70] sm:$0xff] %v1513
      %1522 = vst [vmem:[#allocation4 + $0xb8] sm:$0xff] %v1514
      %1523 = vst [vmem:[#allocation4 + $0x100] sm:$0xff] %v1515
      %v1524 = vld [vmem:[%s673] sm:$0xf]
      %v1525 = vld [vmem:[%s673 + $0x8] sm:$0xf]
      %v1526 = vld [vmem:[%s673 + $0x10] sm:$0xf]
      %v1527 = vld [vmem:[%s673 + $0x18] sm:$0xf]
      %v1528 = vld [vmem:[%s673 + $0x20] sm:$0xf]
      %v1529 = vld [vmem:[%s673 + $0x28] sm:$0xf]
      %v1530 = vld [vmem:[%s673 + $0x30] sm:$0xf]
      %v1531 = vld [vmem:[%s673 + $0x38] sm:$0xf]
      %v1540 = vunpack.c.l.b16 %v1524
      %v1541 = vunpack.c.l.b16 %v1525
      %v1542 = vunpack.c.l.b16 %v1526
      %v1543 = vunpack.c.l.b16 %v1527
      %v1544 = vunpack.c.l.b16 %v1528
      %v1545 = vunpack.c.l.b16 %v1529
      %v1546 = vunpack.c.l.b16 %v1530
      %v1547 = vunpack.c.l.b16 %v1531
      %v1548 = vpack.c.b16 %v1541, %v1540
      %v1549 = vpack.c.b16 %v1543, %v1542
      %v1550 = vpack.c.b16 %v1545, %v1544
      %v1551 = vpack.c.b16 %v1547, %v1546
      %1556 = vst [vmem:[#allocation4 + $0x30] sm:$0xff] %v1548
      %1557 = vst [vmem:[#allocation4 + $0x78] sm:$0xff] %v1549
      %1558 = vst [vmem:[#allocation4 + $0xc0] sm:$0xff] %v1550
      %1559 = vst [vmem:[#allocation4 + $0x108] sm:$0xff] %v1551
      %v1560 = vld [vmem:[%s787] sm:$0xf]
      %v1561 = vld [vmem:[%s787 + $0x8] sm:$0xf]
      %v1562 = vld [vmem:[%s787 + $0x10] sm:$0xf]
      %v1563 = vld [vmem:[%s787 + $0x18] sm:$0xf]
      %v1564 = vld [vmem:[%s787 + $0x20] sm:$0xf]
      %v1565 = vld [vmem:[%s787 + $0x28] sm:$0xf]
      %v1566 = vld [vmem:[%s787 + $0x30] sm:$0xf]
      %v1567 = vld [vmem:[%s787 + $0x38] sm:$0xf]
      %v1576 = vunpack.c.l.b16 %v1560
      %v1577 = vunpack.c.l.b16 %v1561
      %v1578 = vunpack.c.l.b16 %v1562
      %v1579 = vunpack.c.l.b16 %v1563
      %v1580 = vunpack.c.l.b16 %v1564
      %v1581 = vunpack.c.l.b16 %v1565
      %v1582 = vunpack.c.l.b16 %v1566
      %v1583 = vunpack.c.l.b16 %v1567
      %v1584 = vpack.c.b16 %v1577, %v1576
      %v1585 = vpack.c.b16 %v1579, %v1578
      %v1586 = vpack.c.b16 %v1581, %v1580
      %v1587 = vpack.c.b16 %v1583, %v1582
      %1592 = vst [vmem:[#allocation4 + $0x38] sm:$0xff] %v1584
      %1593 = vst [vmem:[#allocation4 + $0x80] sm:$0xff] %v1585
      %1594 = vst [vmem:[#allocation4 + $0xc8] sm:$0xff] %v1586
      %1595 = vst [vmem:[#allocation4 + $0x110] sm:$0xff] %v1587
      %v1596 = vld [vmem:[%s673] sm:$0xf]
      %v1597 = vld [vmem:[%s673 + $0x4] sm:$0x1]
      %v1598 = vld [vmem:[%s673 + $0x8] sm:$0xf]
      %v1599 = vld [vmem:[%s673 + $0xc] sm:$0x1]
      %v1600 = vld [vmem:[%s673 + $0x10] sm:$0xf]
      %v1601 = vld [vmem:[%s673 + $0x14] sm:$0x1]
      %v1602 = vld [vmem:[%s673 + $0x18] sm:$0xf]
      %v1603 = vld [vmem:[%s673 + $0x1c] sm:$0x1]
      %v1604 = vld [vmem:[%s673 + $0x20] sm:$0xf]
      %v1605 = vld [vmem:[%s673 + $0x24] sm:$0x1]
      %v1606 = vld [vmem:[%s673 + $0x28] sm:$0xf]
      %v1607 = vld [vmem:[%s673 + $0x2c] sm:$0x1]
      %v1608 = vld [vmem:[%s673 + $0x30] sm:$0xf]
      %v1609 = vld [vmem:[%s673 + $0x34] sm:$0x1]
      %v1610 = vld [vmem:[%s673 + $0x38] sm:$0xf]
      %v1611 = vld [vmem:[%s673 + $0x3c] sm:$0x1]
      %v1613 = vshrl.u32 %v1596, 16
      %v1615 = vrot.slane %v1613, 4
      %v1616 = vshll.u32 %v1596, 16
      %v1618 = vrot.slane %v1616, 5
      %v1619 = vor.u32 %v1615, %v1618
      %v1620 = vrot.slane %v1619, 4
      %v1622 = vshll.u32 %v1597, 16
      %v1624 = vrot.slane %v1622, 5
      %v1625 = vsel %vm1171, %v1620, %v1624
      %v1627 = vshrl.u32 %v1598, 16
      %v1629 = vrot.slane %v1627, 4
      %v1630 = vshll.u32 %v1598, 16
      %v1632 = vrot.slane %v1630, 5
      %v1633 = vor.u32 %v1629, %v1632
      %v1634 = vrot.slane %v1633, 4
      %v1636 = vshll.u32 %v1599, 16
      %v1638 = vrot.slane %v1636, 5
      %v1639 = vsel %vm1171, %v1634, %v1638
      %v1641 = vshrl.u32 %v1600, 16
      %v1643 = vrot.slane %v1641, 4
      %v1644 = vshll.u32 %v1600, 16
      %v1646 = vrot.slane %v1644, 5
      %v1647 = vor.u32 %v1643, %v1646
      %v1648 = vrot.slane %v1647, 4
      %v1650 = vshll.u32 %v1601, 16
      %v1652 = vrot.slane %v1650, 5
      %v1653 = vsel %vm1171, %v1648, %v1652
      %v1655 = vshrl.u32 %v1602, 16
      %v1657 = vrot.slane %v1655, 4
      %v1658 = vshll.u32 %v1602, 16
      %v1660 = vrot.slane %v1658, 5
      %v1661 = vor.u32 %v1657, %v1660
      %v1662 = vrot.slane %v1661, 4
      %v1664 = vshll.u32 %v1603, 16
      %v1666 = vrot.slane %v1664, 5
      %v1667 = vsel %vm1171, %v1662, %v1666
      %v1669 = vshrl.u32 %v1604, 16
      %v1671 = vrot.slane %v1669, 4
      %v1672 = vshll.u32 %v1604, 16
      %v1674 = vrot.slane %v1672, 5
      %v1675 = vor.u32 %v1671, %v1674
      %v1676 = vrot.slane %v1675, 4
      %v1678 = vshll.u32 %v1605, 16
      %v1680 = vrot.slane %v1678, 5
      %v1681 = vsel %vm1171, %v1676, %v1680
      %v1683 = vshrl.u32 %v1606, 16
      %v1685 = vrot.slane %v1683, 4
      %v1686 = vshll.u32 %v1606, 16
      %v1688 = vrot.slane %v1686, 5
      %v1689 = vor.u32 %v1685, %v1688
      %v1690 = vrot.slane %v1689, 4
      %v1692 = vshll.u32 %v1607, 16
      %v1694 = vrot.slane %v1692, 5
      %v1695 = vsel %vm1171, %v1690, %v1694
      %v1697 = vshrl.u32 %v1608, 16
      %v1699 = vrot.slane %v1697, 4
      %v1700 = vshll.u32 %v1608, 16
      %v1702 = vrot.slane %v1700, 5
      %v1703 = vor.u32 %v1699, %v1702
      %v1704 = vrot.slane %v1703, 4
      %v1706 = vshll.u32 %v1609, 16
      %v1708 = vrot.slane %v1706, 5
      %v1709 = vsel %vm1171, %v1704, %v1708
      %v1711 = vshrl.u32 %v1610, 16
      %v1713 = vrot.slane %v1711, 4
      %v1714 = vshll.u32 %v1610, 16
      %v1716 = vrot.slane %v1714, 5
      %v1717 = vor.u32 %v1713, %v1716
      %v1718 = vrot.slane %v1717, 4
      %v1720 = vshll.u32 %v1611, 16
      %v1722 = vrot.slane %v1720, 5
      %v1723 = vsel %vm1171, %v1718, %v1722
      %v1724 = vunpack.c.l.b16 %v1625
      %v1725 = vunpack.c.l.b16 %v1639
      %v1726 = vunpack.c.l.b16 %v1653
      %v1727 = vunpack.c.l.b16 %v1667
      %v1728 = vunpack.c.l.b16 %v1681
      %v1729 = vunpack.c.l.b16 %v1695
      %v1730 = vunpack.c.l.b16 %v1709
      %v1731 = vunpack.c.l.b16 %v1723
      %v1732 = vpack.c.b16 %v1725, %v1724
      %v1733 = vpack.c.b16 %v1727, %v1726
      %v1734 = vpack.c.b16 %v1729, %v1728
      %v1735 = vpack.c.b16 %v1731, %v1730
      %1740 = vst [vmem:[#allocation4 + $0x40] sm:$0xff] %v1732
      %1741 = vst [vmem:[#allocation4 + $0x88] sm:$0xff] %v1733
      %1742 = vst [vmem:[#allocation4 + $0xd0] sm:$0xff] %v1734
      %1743 = vst [vmem:[#allocation4 + $0x118] sm:$0xff] %v1735
      %v1744 = vld [vmem:[#allocation4 + $0x20] sm:$0xff]
      %v1745 = vld [vmem:[#allocation4 + $0x68] sm:$0xff]
      %v1746 = vld [vmem:[#allocation4 + $0xb0] sm:$0xff]
      %v1747 = vld [vmem:[#allocation4 + $0xf8] sm:$0xff]
      %v1748 = vld [vmem:[%s3] sm:$0xf]
      %v1749 = vld [vmem:[%s3 + $0x4] sm:$0xf]
      %v1750 = vld [vmem:[%s3 + $0x8] sm:$0xf]
      %v1751 = vld [vmem:[%s3 + $0xc] sm:$0xf]
      %v1752 = vld [vmem:[%s3 + $0x10] sm:$0xf]
      %v1753 = vld [vmem:[%s3 + $0x14] sm:$0xf]
      %v1754 = vld [vmem:[%s3 + $0x18] sm:$0xf]
      %v1755 = vld [vmem:[%s3 + $0x1c] sm:$0xf]
      %v1756 = vld [vmem:[%s3 + $0x20] sm:$0xf]
      %v1757 = vld [vmem:[%s3 + $0x24] sm:$0xf]
      %v1758 = vld [vmem:[%s3 + $0x28] sm:$0xf]
      %v1759 = vld [vmem:[%s3 + $0x2c] sm:$0xf]
      %v1760 = vld [vmem:[%s3 + $0x30] sm:$0xf]
      %v1761 = vld [vmem:[%s3 + $0x34] sm:$0xf]
      %v1762 = vld [vmem:[%s3 + $0x38] sm:$0xf]
      %v1763 = vld [vmem:[%s3 + $0x3c] sm:$0xf]
      %v1780 = vunpack.c.l.b16 %v1748
      %v1781 = vunpack.c.l.b16 %v1749
      %v1782 = vunpack.c.l.b16 %v1750
      %v1783 = vunpack.c.l.b16 %v1751
      %v1784 = vunpack.c.l.b16 %v1752
      %v1785 = vunpack.c.l.b16 %v1753
      %v1786 = vunpack.c.l.b16 %v1754
      %v1787 = vunpack.c.l.b16 %v1755
      %v1788 = vunpack.c.l.b16 %v1756
      %v1789 = vunpack.c.l.b16 %v1757
      %v1790 = vunpack.c.l.b16 %v1758
      %v1791 = vunpack.c.l.b16 %v1759
      %v1792 = vunpack.c.l.b16 %v1760
      %v1793 = vunpack.c.l.b16 %v1761
      %v1794 = vunpack.c.l.b16 %v1762
      %v1795 = vunpack.c.l.b16 %v1763
      %v1796 = vpack.c.b16 %v1781, %v1780
      %v1797 = vpack.c.b16 %v1783, %v1782
      %v1798 = vpack.c.b16 %v1785, %v1784
      %v1799 = vpack.c.b16 %v1787, %v1786
      %v1800 = vpack.c.b16 %v1789, %v1788
      %v1801 = vpack.c.b16 %v1791, %v1790
      %v1802 = vpack.c.b16 %v1793, %v1792
      %v1803 = vpack.c.b16 %v1795, %v1794
      %1812 = vmatprep.subr.bf16.mxu0 0
      %1813 = vmatpush1.bf16.msra.mxu0 %v1796
      %1814 = vmatprep.subr.bf16.mxu0 0
      %1815 = vmatpush1.bf16.msra.mxu0 %v1797
      %1816 = vmatprep.subr.bf16.mxu0 0
      %1817 = vmatpush1.bf16.msra.mxu0 %v1798
      %1818 = vmatprep.subr.bf16.mxu0 0
      %1819 = vmatpush1.bf16.msra.mxu0 %v1799
      %1820 = vmatprep.subr.bf16.mxu0 0
      %1821 = vmatpush1.bf16.msra.mxu0 %v1800
      %1822 = vmatprep.subr.bf16.mxu0 0
      %1823 = vmatpush1.bf16.msra.mxu0 %v1801
      %1824 = vmatprep.subr.bf16.mxu0 0
      %1825 = vmatpush1.bf16.msra.mxu0 %v1802
      %1826 = vmatprep.subr.bf16.mxu0 0
      %1827 = vmatpush1.bf16.msra.mxu0 %v1803
      %1828 = vmatprep.subr.bf16.mxu0 0
      %1829 = vmatpush1.bf16.msra.mxu0 0
      %1830 = vmatprep.subr.bf16.mxu0 0
      %1831 = vmatpush1.bf16.msra.mxu0 0
      %1832 = vmatprep.subr.bf16.mxu0 0
      %1833 = vmatpush1.bf16.msra.mxu0 0
      %1834 = vmatprep.subr.bf16.mxu0 0
      %1835 = vmatpush1.bf16.msra.mxu0 0
      %1836 = vmatprep.subr.bf16.mxu0 0
      %1837 = vmatpush1.bf16.msra.mxu0 0
      %1838 = vmatprep.subr.bf16.mxu0 0
      %1839 = vmatpush1.bf16.msra.mxu0 0
      %1840 = vmatprep.subr.bf16.mxu0 0
      %1841 = vmatpush1.bf16.msra.mxu0 0
      %1842 = vmatprep.subr.bf16.mxu0 0
      %1843 = vmatpush1.bf16.msra.mxu0 0
      %1844 = vmatprep.mubr.bf16.mxu0 0
      %1845 = vmatmul.mubr.bf16.gmra.mrb[0].mxu0 %v1744
      %v1846 = vpop.f32.mrb[0].mxu0
      %v1847 = vadd.f32 0.0, %v1846
      %v1848 = vpop.f32.mrb[0].mxu0
      %v1849 = vpop.f32.mrb[0].mxu0
      %v1850 = vadd.f32 0.0, %v1849
      %v1851 = vpop.f32.mrb[0].mxu0
      %1852 = vmatprep.mubr.bf16.mxu0 0
      %1853 = vmatmul.mubr.bf16.gmra.mrb[0].mxu0 %v1745
      %v1854 = vpop.f32.mrb[0].mxu0
      %v1855 = vadd.f32 0.0, %v1854
      %v1856 = vpop.f32.mrb[0].mxu0
      %v1857 = vpop.f32.mrb[0].mxu0
      %v1858 = vadd.f32 0.0, %v1857
      %v1859 = vpop.f32.mrb[0].mxu0
      %1860 = vmatprep.mubr.bf16.mxu0 0
      %1861 = vmatmul.mubr.bf16.gmra.mrb[0].mxu0 %v1746
      %v1862 = vpop.f32.mrb[0].mxu0
      %v1863 = vadd.f32 0.0, %v1862
      %v1864 = vpop.f32.mrb[0].mxu0
      %v1865 = vpop.f32.mrb[0].mxu0
      %v1866 = vadd.f32 0.0, %v1865
      %v1867 = vpop.f32.mrb[0].mxu0
      %1868 = vmatprep.mubr.bf16.mxu0 0
      %1869 = vmatmul.mubr.bf16.gmra.mrb[0].mxu0 %v1747
      %v1870 = vpop.f32.mrb[0].mxu0
      %v1871 = vadd.f32 0.0, %v1870
      %v1872 = vpop.f32.mrb[0].mxu0
      %v1873 = vpop.f32.mrb[0].mxu0
      %v1874 = vadd.f32 0.0, %v1873
      %v1875 = vpop.f32.mrb[0].mxu0
      %1876 = vdwg.mxu0
      %1877 = vst [vmem:[#allocation5] sm:$0xff] %v1847
      %1878 = vst [vmem:[#allocation5 + $0x8] sm:$0xff] %v1850
      %1879 = vst [vmem:[#allocation5 + $0x10] sm:$0xff] %v1855
      %1880 = vst [vmem:[#allocation5 + $0x18] sm:$0xff] %v1858
      %1881 = vst [vmem:[#allocation5 + $0x20] sm:$0xff] %v1863
      %1882 = vst [vmem:[#allocation5 + $0x28] sm:$0xff] %v1866
      %1883 = vst [vmem:[#allocation5 + $0x30] sm:$0xff] %v1871
      %1884 = vst [vmem:[#allocation5 + $0x38] sm:$0xff] %v1874
      %v1885 = vld [vmem:[#allocation4] sm:$0xff]
      %v1886 = vld [vmem:[#allocation4 + $0x8] sm:$0xff]
      %v1887 = vld [vmem:[#allocation4 + $0x10] sm:$0xff]
      %v1888 = vld [vmem:[#allocation4 + $0x18] sm:$0xff]
      %v1889 = vld [vmem:[#allocation4 + $0x20] sm:$0xff]
      %v1890 = vld [vmem:[#allocation4 + $0x28] sm:$0xff]
      %v1891 = vld [vmem:[#allocation4 + $0x30] sm:$0xff]
      %v1892 = vld [vmem:[#allocation4 + $0x38] sm:$0xff]
      %v1893 = vld [vmem:[#allocation4 + $0x40] sm:$0xff]
      %v1894 = vld [vmem:[#allocation4 + $0x48] sm:$0xff]
      %v1895 = vld [vmem:[#allocation4 + $0x50] sm:$0xff]
      %v1896 = vld [vmem:[#allocation4 + $0x58] sm:$0xff]
      %v1897 = vld [vmem:[#allocation4 + $0x60] sm:$0xff]
      %v1898 = vld [vmem:[#allocation4 + $0x68] sm:$0xff]
      %v1899 = vld [vmem:[#allocation4 + $0x70] sm:$0xff]
      %v1900 = vld [vmem:[#allocation4 + $0x78] sm:$0xff]
      %v1901 = vld [vmem:[#allocation4 + $0x80] sm:$0xff]
      %v1902 = vld [vmem:[#allocation4 + $0x88] sm:$0xff]
      %v1903 = vld [vmem:[#allocation4 + $0x90] sm:$0xff]
      %v1904 = vld [vmem:[#allocation4 + $0x98] sm:$0xff]
      %v1905 = vld [vmem:[#allocation4 + $0xa0] sm:$0xff]
      %v1906 = vld [vmem:[#allocation4 + $0xa8] sm:$0xff]
      %v1907 = vld [vmem:[#allocation4 + $0xb0] sm:$0xff]
      %v1908 = vld [vmem:[#allocation4 + $0xb8] sm:$0xff]
      %v1909 = vld [vmem:[#allocation4 + $0xc0] sm:$0xff]
      %v1910 = vld [vmem:[#allocation4 + $0xc8] sm:$0xff]
      %v1911 = vld [vmem:[#allocation4 + $0xd0] sm:$0xff]
      %v1912 = vld [vmem:[#allocation4 + $0xd8] sm:$0xff]
      %v1913 = vld [vmem:[#allocation4 + $0xe0] sm:$0xff]
      %v1914 = vld [vmem:[#allocation4 + $0xe8] sm:$0xff]
      %v1915 = vld [vmem:[#allocation4 + $0xf0] sm:$0xff]
      %v1916 = vld [vmem:[#allocation4 + $0xf8] sm:$0xff]
      %v1917 = vld [vmem:[#allocation4 + $0x100] sm:$0xff]
      %v1918 = vld [vmem:[#allocation4 + $0x108] sm:$0xff]
      %v1919 = vld [vmem:[#allocation4 + $0x110] sm:$0xff]
      %v1920 = vld [vmem:[#allocation4 + $0x118] sm:$0xff]
      %v1921 = vld [vmem:[%s1] sm:$0xf]
      %v1922 = vld [vmem:[%s1 + $0x4] sm:$0xf]
      %v1923 = vld [vmem:[%s1 + $0x8] sm:$0xf]
      %v1924 = vld [vmem:[%s1 + $0xc] sm:$0xf]
      %v1925 = vld [vmem:[%s1 + $0x10] sm:$0xf]
      %v1926 = vld [vmem:[%s1 + $0x14] sm:$0xf]
      %v1927 = vld [vmem:[%s1 + $0x18] sm:$0xf]
      %v1928 = vld [vmem:[%s1 + $0x1c] sm:$0xf]
      %v1929 = vld [vmem:[%s1 + $0x20] sm:$0xf]
      %v1930 = vld [vmem:[%s1 + $0x24] sm:$0xf]
      %v1931 = vld [vmem:[%s1 + $0x28] sm:$0xf]
      %v1932 = vld [vmem:[%s1 + $0x2c] sm:$0xf]
      %v1933 = vld [vmem:[%s1 + $0x30] sm:$0xf]
      %v1934 = vld [vmem:[%s1 + $0x34] sm:$0xf]
      %v1935 = vld [vmem:[%s1 + $0x38] sm:$0xf]
      %v1936 = vld [vmem:[%s1 + $0x3c] sm:$0xf]
      %v1937 = vld [vmem:[%s1 + $0x40] sm:$0xf]
      %v1938 = vld [vmem:[%s1 + $0x44] sm:$0xf]
      %v1939 = vld [vmem:[%s1 + $0x48] sm:$0xf]
      %v1940 = vld [vmem:[%s1 + $0x4c] sm:$0xf]
      %v1941 = vld [vmem:[%s1 + $0x50] sm:$0xf]
      %v1942 = vld [vmem:[%s1 + $0x54] sm:$0xf]
      %v1943 = vld [vmem:[%s1 + $0x58] sm:$0xf]
      %v1944 = vld [vmem:[%s1 + $0x5c] sm:$0xf]
      %v1945 = vld [vmem:[%s1 + $0x60] sm:$0xf]
      %v1946 = vld [vmem:[%s1 + $0x64] sm:$0xf]
      %v1947 = vld [vmem:[%s1 + $0x68] sm:$0xf]
      %v1948 = vld [vmem:[%s1 + $0x6c] sm:$0xf]
      %v1949 = vld [vmem:[%s1 + $0x70] sm:$0xf]
      %v1950 = vld [vmem:[%s1 + $0x74] sm:$0xf]
      %v1951 = vld [vmem:[%s1 + $0x78] sm:$0xf]
      %v1952 = vld [vmem:[%s1 + $0x7c] sm:$0xf]
      %v1953 = vld [vmem:[%s1 + $0x80] sm:$0xf]
      %v1954 = vld [vmem:[%s1 + $0x84] sm:$0xf]
      %v1955 = vld [vmem:[%s1 + $0x88] sm:$0xf]
      %v1956 = vld [vmem:[%s1 + $0x8c] sm:$0xf]
      %v1957 = vld [vmem:[%s1 + $0x90] sm:$0xf]
      %v1958 = vld [vmem:[%s1 + $0x94] sm:$0xf]
      %v1959 = vld [vmem:[%s1 + $0x98] sm:$0xf]
      %v1960 = vld [vmem:[%s1 + $0x9c] sm:$0xf]
      %v1961 = vld [vmem:[%s1 + $0xa0] sm:$0xf]
      %v1962 = vld [vmem:[%s1 + $0xa4] sm:$0xf]
      %v1963 = vld [vmem:[%s1 + $0xa8] sm:$0xf]
      %v1964 = vld [vmem:[%s1 + $0xac] sm:$0xf]
      %v1965 = vld [vmem:[%s1 + $0xb0] sm:$0xf]
      %v1966 = vld [vmem:[%s1 + $0xb4] sm:$0xf]
      %v1967 = vld [vmem:[%s1 + $0xb8] sm:$0xf]
      %v1968 = vld [vmem:[%s1 + $0xbc] sm:$0xf]
      %v1969 = vld [vmem:[%s1 + $0xc0] sm:$0xf]
      %v1970 = vld [vmem:[%s1 + $0xc4] sm:$0xf]
      %v1971 = vld [vmem:[%s1 + $0xc8] sm:$0xf]
      %v1972 = vld [vmem:[%s1 + $0xcc] sm:$0xf]
      %v1973 = vld [vmem:[%s1 + $0xd0] sm:$0xf]
      %v1974 = vld [vmem:[%s1 + $0xd4] sm:$0xf]
      %v1975 = vld [vmem:[%s1 + $0xd8] sm:$0xf]
      %v1976 = vld [vmem:[%s1 + $0xdc] sm:$0xf]
      %v1977 = vld [vmem:[%s1 + $0xe0] sm:$0xf]
      %v1978 = vld [vmem:[%s1 + $0xe4] sm:$0xf]
      %v1979 = vld [vmem:[%s1 + $0xe8] sm:$0xf]
      %v1980 = vld [vmem:[%s1 + $0xec] sm:$0xf]
      %v1981 = vld [vmem:[%s1 + $0xf0] sm:$0xf]
      %v1982 = vld [vmem:[%s1 + $0xf4] sm:$0xf]
      %v1983 = vld [vmem:[%s1 + $0xf8] sm:$0xf]
      %v1984 = vld [vmem:[%s1 + $0xfc] sm:$0xf]
      %v1985 = vld [vmem:[%s1 + $0x100] sm:$0xf]
      %v1986 = vld [vmem:[%s1 + $0x104] sm:$0xf]
      %v1987 = vld [vmem:[%s1 + $0x108] sm:$0xf]
      %v1988 = vld [vmem:[%s1 + $0x10c] sm:$0xf]
      %v1989 = vld [vmem:[%s1 + $0x110] sm:$0xf]
      %v1990 = vld [vmem:[%s1 + $0x114] sm:$0xf]
      %v1991 = vld [vmem:[%s1 + $0x118] sm:$0xf]
      %v1992 = vld [vmem:[%s1 + $0x11c] sm:$0xf]
      %v1993 = vld [vmem:[%s1 + $0x120] sm:$0xf]
      %v1994 = vld [vmem:[%s1 + $0x124] sm:$0xf]
      %v1995 = vld [vmem:[%s1 + $0x128] sm:$0xf]
      %v1996 = vld [vmem:[%s1 + $0x12c] sm:$0xf]
      %v1997 = vld [vmem:[%s1 + $0x130] sm:$0xf]
      %v1998 = vld [vmem:[%s1 + $0x134] sm:$0xf]
      %v1999 = vld [vmem:[%s1 + $0x138] sm:$0xf]
      %v2000 = vld [vmem:[%s1 + $0x13c] sm:$0xf]
      %v2001 = vld [vmem:[%s1 + $0x140] sm:$0xf]
      %v2002 = vld [vmem:[%s1 + $0x144] sm:$0xf]
      %v2003 = vld [vmem:[%s1 + $0x148] sm:$0xf]
      %v2004 = vld [vmem:[%s1 + $0x14c] sm:$0xf]
      %v2005 = vld [vmem:[%s1 + $0x150] sm:$0xf]
      %v2006 = vld [vmem:[%s1 + $0x154] sm:$0xf]
      %v2007 = vld [vmem:[%s1 + $0x158] sm:$0xf]
      %v2008 = vld [vmem:[%s1 + $0x15c] sm:$0xf]
      %v2009 = vld [vmem:[%s1 + $0x160] sm:$0xf]
      %v2010 = vld [vmem:[%s1 + $0x164] sm:$0xf]
      %v2011 = vld [vmem:[%s1 + $0x168] sm:$0xf]
      %v2012 = vld [vmem:[%s1 + $0x16c] sm:$0xf]
      %v2013 = vld [vmem:[%s1 + $0x170] sm:$0xf]
      %v2014 = vld [vmem:[%s1 + $0x174] sm:$0xf]
      %v2015 = vld [vmem:[%s1 + $0x178] sm:$0xf]
      %v2016 = vld [vmem:[%s1 + $0x17c] sm:$0xf]
      %v2017 = vld [vmem:[%s1 + $0x180] sm:$0xf]
      %v2018 = vld [vmem:[%s1 + $0x184] sm:$0xf]
      %v2019 = vld [vmem:[%s1 + $0x188] sm:$0xf]
      %v2020 = vld [vmem:[%s1 + $0x18c] sm:$0xf]
      %v2021 = vld [vmem:[%s1 + $0x190] sm:$0xf]
      %v2022 = vld [vmem:[%s1 + $0x194] sm:$0xf]
      %v2023 = vld [vmem:[%s1 + $0x198] sm:$0xf]
      %v2024 = vld [vmem:[%s1 + $0x19c] sm:$0xf]
      %v2025 = vld [vmem:[%s1 + $0x1a0] sm:$0xf]
      %v2026 = vld [vmem:[%s1 + $0x1a4] sm:$0xf]
      %v2027 = vld [vmem:[%s1 + $0x1a8] sm:$0xf]
      %v2028 = vld [vmem:[%s1 + $0x1ac] sm:$0xf]
      %v2029 = vld [vmem:[%s1 + $0x1b0] sm:$0xf]
      %v2030 = vld [vmem:[%s1 + $0x1b4] sm:$0xf]
      %v2031 = vld [vmem:[%s1 + $0x1b8] sm:$0xf]
      %v2032 = vld [vmem:[%s1 + $0x1bc] sm:$0xf]
      %v2033 = vld [vmem:[%s1 + $0x1c0] sm:$0xf]
      %v2034 = vld [vmem:[%s1 + $0x1c4] sm:$0xf]
      %v2035 = vld [vmem:[%s1 + $0x1c8] sm:$0xf]
      %v2036 = vld [vmem:[%s1 + $0x1cc] sm:$0xf]
      %v2037 = vld [vmem:[%s1 + $0x1d0] sm:$0xf]
      %v2038 = vld [vmem:[%s1 + $0x1d4] sm:$0xf]
      %v2039 = vld [vmem:[%s1 + $0x1d8] sm:$0xf]
      %v2040 = vld [vmem:[%s1 + $0x1dc] sm:$0xf]
      %v2041 = vld [vmem:[%s1 + $0x1e0] sm:$0xf]
      %v2042 = vld [vmem:[%s1 + $0x1e4] sm:$0xf]
      %v2043 = vld [vmem:[%s1 + $0x1e8] sm:$0xf]
      %v2044 = vld [vmem:[%s1 + $0x1ec] sm:$0xf]
      %v2045 = vld [vmem:[%s1 + $0x1f0] sm:$0xf]
      %v2046 = vld [vmem:[%s1 + $0x1f4] sm:$0xf]
      %v2047 = vld [vmem:[%s1 + $0x1f8] sm:$0xf]
      %v2048 = vld [vmem:[%s1 + $0x1fc] sm:$0xf]
      %v2049 = vld [vmem:[%s1 + $0x200] sm:$0xf]
      %v2050 = vld [vmem:[%s1 + $0x204] sm:$0xf]
      %v2051 = vld [vmem:[%s1 + $0x208] sm:$0xf]
      %v2052 = vld [vmem:[%s1 + $0x20c] sm:$0xf]
      %v2053 = vld [vmem:[%s1 + $0x210] sm:$0xf]
      %v2054 = vld [vmem:[%s1 + $0x214] sm:$0xf]
      %v2055 = vld [vmem:[%s1 + $0x218] sm:$0xf]
      %v2056 = vld [vmem:[%s1 + $0x21c] sm:$0xf]
      %v2057 = vld [vmem:[%s1 + $0x220] sm:$0xf]
      %v2058 = vld [vmem:[%s1 + $0x224] sm:$0xf]
      %v2059 = vld [vmem:[%s1 + $0x228] sm:$0xf]
      %v2060 = vld [vmem:[%s1 + $0x22c] sm:$0xf]
      %v2061 = vld [vmem:[%s1 + $0x230] sm:$0xf]
      %v2062 = vld [vmem:[%s1 + $0x234] sm:$0xf]
      %v2063 = vld [vmem:[%s1 + $0x238] sm:$0xf]
      %v2064 = vld [vmem:[%s1 + $0x23c] sm:$0xf]
      %v2209 = vunpack.c.l.b16 %v1921
      %v2210 = vunpack.c.l.b16 %v1922
      %v2211 = vunpack.c.l.b16 %v1923
      %v2212 = vunpack.c.l.b16 %v1924
      %v2213 = vunpack.c.l.b16 %v1925
      %v2214 = vunpack.c.l.b16 %v1926
      %v2215 = vunpack.c.l.b16 %v1927
      %v2216 = vunpack.c.l.b16 %v1928
      %v2217 = vunpack.c.l.b16 %v1929
      %v2218 = vunpack.c.l.b16 %v1930
      %v2219 = vunpack.c.l.b16 %v1931
      %v2220 = vunpack.c.l.b16 %v1932
      %v2221 = vunpack.c.l.b16 %v1933
      %v2222 = vunpack.c.l.b16 %v1934
      %v2223 = vunpack.c.l.b16 %v1935
      %v2224 = vunpack.c.l.b16 %v1936
      %v2225 = vunpack.c.l.b16 %v1937
      %v2226 = vunpack.c.l.b16 %v1938
      %v2227 = vunpack.c.l.b16 %v1939
      %v2228 = vunpack.c.l.b16 %v1940
      %v2229 = vunpack.c.l.b16 %v1941
      %v2230 = vunpack.c.l.b16 %v1942
      %v2231 = vunpack.c.l.b16 %v1943
      %v2232 = vunpack.c.l.b16 %v1944
      %v2233 = vunpack.c.l.b16 %v1945
      %v2234 = vunpack.c.l.b16 %v1946
      %v2235 = vunpack.c.l.b16 %v1947
      %v2236 = vunpack.c.l.b16 %v1948
      %v2237 = vunpack.c.l.b16 %v1949
      %v2238 = vunpack.c.l.b16 %v1950
      %v2239 = vunpack.c.l.b16 %v1951
      %v2240 = vunpack.c.l.b16 %v1952
      %v2241 = vunpack.c.l.b16 %v1953
      %v2242 = vunpack.c.l.b16 %v1954
      %v2243 = vunpack.c.l.b16 %v1955
      %v2244 = vunpack.c.l.b16 %v1956
      %v2245 = vunpack.c.l.b16 %v1957
      %v2246 = vunpack.c.l.b16 %v1958
      %v2247 = vunpack.c.l.b16 %v1959
      %v2248 = vunpack.c.l.b16 %v1960
      %v2249 = vunpack.c.l.b16 %v1961
      %v2250 = vunpack.c.l.b16 %v1962
      %v2251 = vunpack.c.l.b16 %v1963
      %v2252 = vunpack.c.l.b16 %v1964
      %v2253 = vunpack.c.l.b16 %v1965
      %v2254 = vunpack.c.l.b16 %v1966
      %v2255 = vunpack.c.l.b16 %v1967
      %v2256 = vunpack.c.l.b16 %v1968
      %v2257 = vunpack.c.l.b16 %v1969
      %v2258 = vunpack.c.l.b16 %v1970
      %v2259 = vunpack.c.l.b16 %v1971
      %v2260 = vunpack.c.l.b16 %v1972
      %v2261 = vunpack.c.l.b16 %v1973
      %v2262 = vunpack.c.l.b16 %v1974
      %v2263 = vunpack.c.l.b16 %v1975
      %v2264 = vunpack.c.l.b16 %v1976
      %v2265 = vunpack.c.l.b16 %v1977
      %v2266 = vunpack.c.l.b16 %v1978
      %v2267 = vunpack.c.l.b16 %v1979
      %v2268 = vunpack.c.l.b16 %v1980
      %v2269 = vunpack.c.l.b16 %v1981
      %v2270 = vunpack.c.l.b16 %v1982
      %v2271 = vunpack.c.l.b16 %v1983
      %v2272 = vunpack.c.l.b16 %v1984
      %v2273 = vunpack.c.l.b16 %v1985
      %v2274 = vunpack.c.l.b16 %v1986
      %v2275 = vunpack.c.l.b16 %v1987
      %v2276 = vunpack.c.l.b16 %v1988
      %v2277 = vunpack.c.l.b16 %v1989
      %v2278 = vunpack.c.l.b16 %v1990
      %v2279 = vunpack.c.l.b16 %v1991
      %v2280 = vunpack.c.l.b16 %v1992
      %v2281 = vunpack.c.l.b16 %v1993
      %v2282 = vunpack.c.l.b16 %v1994
      %v2283 = vunpack.c.l.b16 %v1995
      %v2284 = vunpack.c.l.b16 %v1996
      %v2285 = vunpack.c.l.b16 %v1997
      %v2286 = vunpack.c.l.b16 %v1998
      %v2287 = vunpack.c.l.b16 %v1999
      %v2288 = vunpack.c.l.b16 %v2000
      %v2289 = vunpack.c.l.b16 %v2001
      %v2290 = vunpack.c.l.b16 %v2002
      %v2291 = vunpack.c.l.b16 %v2003
      %v2292 = vunpack.c.l.b16 %v2004
      %v2293 = vunpack.c.l.b16 %v2005
      %v2294 = vunpack.c.l.b16 %v2006
      %v2295 = vunpack.c.l.b16 %v2007
      %v2296 = vunpack.c.l.b16 %v2008
      %v2297 = vunpack.c.l.b16 %v2009
      %v2298 = vunpack.c.l.b16 %v2010
      %v2299 = vunpack.c.l.b16 %v2011
      %v2300 = vunpack.c.l.b16 %v2012
      %v2301 = vunpack.c.l.b16 %v2013
      %v2302 = vunpack.c.l.b16 %v2014
      %v2303 = vunpack.c.l.b16 %v2015
      %v2304 = vunpack.c.l.b16 %v2016
      %v2305 = vunpack.c.l.b16 %v2017
      %v2306 = vunpack.c.l.b16 %v2018
      %v2307 = vunpack.c.l.b16 %v2019
      %v2308 = vunpack.c.l.b16 %v2020
      %v2309 = vunpack.c.l.b16 %v2021
      %v2310 = vunpack.c.l.b16 %v2022
      %v2311 = vunpack.c.l.b16 %v2023
      %v2312 = vunpack.c.l.b16 %v2024
      %v2313 = vunpack.c.l.b16 %v2025
      %v2314 = vunpack.c.l.b16 %v2026
      %v2315 = vunpack.c.l.b16 %v2027
      %v2316 = vunpack.c.l.b16 %v2028
      %v2317 = vunpack.c.l.b16 %v2029
      %v2318 = vunpack.c.l.b16 %v2030
      %v2319 = vunpack.c.l.b16 %v2031
      %v2320 = vunpack.c.l.b16 %v2032
      %v2321 = vunpack.c.l.b16 %v2033
      %v2322 = vunpack.c.l.b16 %v2034
      %v2323 = vunpack.c.l.b16 %v2035
      %v2324 = vunpack.c.l.b16 %v2036
      %v2325 = vunpack.c.l.b16 %v2037
      %v2326 = vunpack.c.l.b16 %v2038
      %v2327 = vunpack.c.l.b16 %v2039
      %v2328 = vunpack.c.l.b16 %v2040
      %v2329 = vunpack.c.l.b16 %v2041
      %v2330 = vunpack.c.l.b16 %v2042
      %v2331 = vunpack.c.l.b16 %v2043
      %v2332 = vunpack.c.l.b16 %v2044
      %v2333 = vunpack.c.l.b16 %v2045
      %v2334 = vunpack.c.l.b16 %v2046
      %v2335 = vunpack.c.l.b16 %v2047
      %v2336 = vunpack.c.l.b16 %v2048
      %v2337 = vunpack.c.l.b16 %v2049
      %v2338 = vunpack.c.l.b16 %v2050
      %v2339 = vunpack.c.l.b16 %v2051
      %v2340 = vunpack.c.l.b16 %v2052
      %v2341 = vunpack.c.l.b16 %v2053
      %v2342 = vunpack.c.l.b16 %v2054
      %v2343 = vunpack.c.l.b16 %v2055
      %v2344 = vunpack.c.l.b16 %v2056
      %v2345 = vunpack.c.l.b16 %v2057
      %v2346 = vunpack.c.l.b16 %v2058
      %v2347 = vunpack.c.l.b16 %v2059
      %v2348 = vunpack.c.l.b16 %v2060
      %v2349 = vunpack.c.l.b16 %v2061
      %v2350 = vunpack.c.l.b16 %v2062
      %v2351 = vunpack.c.l.b16 %v2063
      %v2352 = vunpack.c.l.b16 %v2064
      %v2353 = vpack.c.b16 %v2210, %v2209
      %v2354 = vpack.c.b16 %v2212, %v2211
      %v2355 = vpack.c.b16 %v2214, %v2213
      %v2356 = vpack.c.b16 %v2216, %v2215
      %v2357 = vpack.c.b16 %v2218, %v2217
      %v2358 = vpack.c.b16 %v2220, %v2219
      %v2359 = vpack.c.b16 %v2222, %v2221
      %v2360 = vpack.c.b16 %v2224, %v2223
      %v2361 = vpack.c.b16 %v2226, %v2225
      %v2362 = vpack.c.b16 %v2228, %v2227
      %v2363 = vpack.c.b16 %v2230, %v2229
      %v2364 = vpack.c.b16 %v2232, %v2231
      %v2365 = vpack.c.b16 %v2234, %v2233
      %v2366 = vpack.c.b16 %v2236, %v2235
      %v2367 = vpack.c.b16 %v2238, %v2237
      %v2368 = vpack.c.b16 %v2240, %v2239
      %v2369 = vpack.c.b16 %v2242, %v2241
      %v2370 = vpack.c.b16 %v2244, %v2243
      %v2371 = vpack.c.b16 %v2246, %v2245
      %v2372 = vpack.c.b16 %v2248, %v2247
      %v2373 = vpack.c.b16 %v2250, %v2249
      %v2374 = vpack.c.b16 %v2252, %v2251
      %v2375 = vpack.c.b16 %v2254, %v2253
      %v2376 = vpack.c.b16 %v2256, %v2255
      %v2377 = vpack.c.b16 %v2258, %v2257
      %v2378 = vpack.c.b16 %v2260, %v2259
      %v2379 = vpack.c.b16 %v2262, %v2261
      %v2380 = vpack.c.b16 %v2264, %v2263
      %v2381 = vpack.c.b16 %v2266, %v2265
      %v2382 = vpack.c.b16 %v2268, %v2267
      %v2383 = vpack.c.b16 %v2270, %v2269
      %v2384 = vpack.c.b16 %v2272, %v2271
      %v2385 = vpack.c.b16 %v2274, %v2273
      %v2386 = vpack.c.b16 %v2276, %v2275
      %v2387 = vpack.c.b16 %v2278, %v2277
      %v2388 = vpack.c.b16 %v2280, %v2279
      %v2389 = vpack.c.b16 %v2282, %v2281
      %v2390 = vpack.c.b16 %v2284, %v2283
      %v2391 = vpack.c.b16 %v2286, %v2285
      %v2392 = vpack.c.b16 %v2288, %v2287
      %v2393 = vpack.c.b16 %v2290, %v2289
      %v2394 = vpack.c.b16 %v2292, %v2291
      %v2395 = vpack.c.b16 %v2294, %v2293
      %v2396 = vpack.c.b16 %v2296, %v2295
      %v2397 = vpack.c.b16 %v2298, %v2297
      %v2398 = vpack.c.b16 %v2300, %v2299
      %v2399 = vpack.c.b16 %v2302, %v2301
      %v2400 = vpack.c.b16 %v2304, %v2303
      %v2401 = vpack.c.b16 %v2306, %v2305
      %v2402 = vpack.c.b16 %v2308, %v2307
      %v2403 = vpack.c.b16 %v2310, %v2309
      %v2404 = vpack.c.b16 %v2312, %v2311
      %v2405 = vpack.c.b16 %v2314, %v2313
      %v2406 = vpack.c.b16 %v2316, %v2315
      %v2407 = vpack.c.b16 %v2318, %v2317
      %v2408 = vpack.c.b16 %v2320, %v2319
      %v2409 = vpack.c.b16 %v2322, %v2321
      %v2410 = vpack.c.b16 %v2324, %v2323
      %v2411 = vpack.c.b16 %v2326, %v2325
      %v2412 = vpack.c.b16 %v2328, %v2327
      %v2413 = vpack.c.b16 %v2330, %v2329
      %v2414 = vpack.c.b16 %v2332, %v2331
      %v2415 = vpack.c.b16 %v2334, %v2333
      %v2416 = vpack.c.b16 %v2336, %v2335
      %v2417 = vpack.c.b16 %v2338, %v2337
      %v2418 = vpack.c.b16 %v2340, %v2339
      %v2419 = vpack.c.b16 %v2342, %v2341
      %v2420 = vpack.c.b16 %v2344, %v2343
      %v2421 = vpack.c.b16 %v2346, %v2345
      %v2422 = vpack.c.b16 %v2348, %v2347
      %v2423 = vpack.c.b16 %v2350, %v2349
      %v2424 = vpack.c.b16 %v2352, %v2351
      %2497 = vmatprep.subr.bf16.mxu0 0
      %2498 = vmatpush1.bf16.msra.mxu0 %v2353
      %2499 = vmatprep.subr.bf16.mxu0 0
      %2500 = vmatpush1.bf16.msra.mxu0 %v2354
      %2501 = vmatprep.subr.bf16.mxu0 0
      %2502 = vmatpush1.bf16.msra.mxu0 %v2355
      %2503 = vmatprep.subr.bf16.mxu0 0
      %2504 = vmatpush1.bf16.msra.mxu0 %v2356
      %2505 = vmatprep.subr.bf16.mxu0 0
      %2506 = vmatpush1.bf16.msra.mxu0 %v2357
      %2507 = vmatprep.subr.bf16.mxu0 0
      %2508 = vmatpush1.bf16.msra.mxu0 %v2358
      %2509 = vmatprep.subr.bf16.mxu0 0
      %2510 = vmatpush1.bf16.msra.mxu0 %v2359
      %2511 = vmatprep.subr.bf16.mxu0 0
      %2512 = vmatpush1.bf16.msra.mxu0 %v2360
      %2513 = vmatprep.subr.bf16.mxu0 0
      %2514 = vmatpush1.bf16.msra.mxu0 %v2361
      %2515 = vmatprep.subr.bf16.mxu0 0
      %2516 = vmatpush1.bf16.msra.mxu0 %v2362
      %2517 = vmatprep.subr.bf16.mxu0 0
      %2518 = vmatpush1.bf16.msra.mxu0 %v2363
      %2519 = vmatprep.subr.bf16.mxu0 0
      %2520 = vmatpush1.bf16.msra.mxu0 %v2364
      %2521 = vmatprep.subr.bf16.mxu0 0
      %2522 = vmatpush1.bf16.msra.mxu0 %v2365
      %2523 = vmatprep.subr.bf16.mxu0 0
      %2524 = vmatpush1.bf16.msra.mxu0 %v2366
      %2525 = vmatprep.subr.bf16.mxu0 0
      %2526 = vmatpush1.bf16.msra.mxu0 %v2367
      %2527 = vmatprep.subr.bf16.mxu0 0
      %2528 = vmatpush1.bf16.msra.mxu0 %v2368
      %2529 = vmatprep.mubr.bf16.mxu0 %v1886
      %2530 = vmatmul.mubr.bf16.gmra.mrb[0].mxu0 %v1885
      %v2531 = vpop.f32.mrb[0].mxu0
      %v2532 = vadd.f32 0.0, %v2531
      %v2533 = vpop.f32.mrb[0].mxu0
      %v2534 = vpop.f32.mrb[0].mxu0
      %v2535 = vadd.f32 0.0, %v2534
      %v2536 = vpop.f32.mrb[0].mxu0
      %2537 = vmatprep.mubr.bf16.mxu0 %v1895
      %2538 = vmatmul.mubr.bf16.gmra.mrb[0].mxu0 %v1894
      %v2539 = vpop.f32.mrb[0].mxu0
      %v2540 = vadd.f32 0.0, %v2539
      %v2541 = vpop.f32.mrb[0].mxu0
      %v2542 = vpop.f32.mrb[0].mxu0
      %v2543 = vadd.f32 0.0, %v2542
      %v2544 = vpop.f32.mrb[0].mxu0
      %2545 = vmatprep.mubr.bf16.mxu0 %v1904
      %2546 = vmatmul.mubr.bf16.gmra.mrb[0].mxu0 %v1903
      %v2547 = vpop.f32.mrb[0].mxu0
      %v2548 = vadd.f32 0.0, %v2547
      %v2549 = vpop.f32.mrb[0].mxu0
      %v2550 = vpop.f32.mrb[0].mxu0
      %v2551 = vadd.f32 0.0, %v2550
      %v2552 = vpop.f32.mrb[0].mxu0
      %2553 = vmatprep.mubr.bf16.mxu0 %v1913
      %2554 = vmatmul.mubr.bf16.gmra.mrb[0].mxu0 %v1912
      %v2555 = vpop.f32.mrb[0].mxu0
      %v2556 = vadd.f32 0.0, %v2555
      %v2557 = vpop.f32.mrb[0].mxu0
      %v2558 = vpop.f32.mrb[0].mxu0
      %v2559 = vadd.f32 0.0, %v2558
      %v2560 = vpop.f32.mrb[0].mxu0
      %2561 = vdwg.mxu0
      %2562 = vmatprep.subr.bf16.mxu0 0
      %2563 = vmatpush1.bf16.msra.mxu0 %v2369
      %2564 = vmatprep.subr.bf16.mxu0 0
      %2565 = vmatpush1.bf16.msra.mxu0 %v2370
      %2566 = vmatprep.subr.bf16.mxu0 0
      %2567 = vmatpush1.bf16.msra.mxu0 %v2371
      %2568 = vmatprep.subr.bf16.mxu0 0
      %2569 = vmatpush1.bf16.msra.mxu0 %v2372
      %2570 = vmatprep.subr.bf16.mxu0 0
      %2571 = vmatpush1.bf16.msra.mxu0 %v2373
      %2572 = vmatprep.subr.bf16.mxu0 0
      %2573 = vmatpush1.bf16.msra.mxu0 %v2374
      %2574 = vmatprep.subr.bf16.mxu0 0
      %2575 = vmatpush1.bf16.msra.mxu0 %v2375
      %2576 = vmatprep.subr.bf16.mxu0 0
      %2577 = vmatpush1.bf16.msra.mxu0 %v2376
      %2578 = vmatprep.subr.bf16.mxu0 0
      %2579 = vmatpush1.bf16.msra.mxu0 %v2377
      %2580 = vmatprep.subr.bf16.mxu0 0
      %2581 = vmatpush1.bf16.msra.mxu0 %v2378
      %2582 = vmatprep.subr.bf16.mxu0 0
      %2583 = vmatpush1.bf16.msra.mxu0 %v2379
      %2584 = vmatprep.subr.bf16.mxu0 0
      %2585 = vmatpush1.bf16.msra.mxu0 %v2380
      %2586 = vmatprep.subr.bf16.mxu0 0
      %2587 = vmatpush1.bf16.msra.mxu0 %v2381
      %2588 = vmatprep.subr.bf16.mxu0 0
      %2589 = vmatpush1.bf16.msra.mxu0 %v2382
      %2590 = vmatprep.subr.bf16.mxu0 0
      %2591 = vmatpush1.bf16.msra.mxu0 %v2383
      %2592 = vmatprep.subr.bf16.mxu0 0
      %2593 = vmatpush1.bf16.msra.mxu0 %v2384
      %2594 = vmatprep.mubr.bf16.mxu0 %v1888
      %2595 = vmatmul.mubr.bf16.gmra.mrb[0].mxu0 %v1887
      %v2596 = vpop.f32.mrb[0].mxu0
      %v2597 = vadd.f32 %v2532, %v2596
      %v2598 = vpop.f32.mrb[0].mxu0
      %v2599 = vpop.f32.mrb[0].mxu0
      %v2600 = vadd.f32 %v2535, %v2599
      %v2601 = vpop.f32.mrb[0].mxu0
      %2602 = vmatprep.mubr.bf16.mxu0 %v1897
      %2603 = vmatmul.mubr.bf16.gmra.mrb[0].mxu0 %v1896
      %v2604 = vpop.f32.mrb[0].mxu0
      %v2605 = vadd.f32 %v2540, %v2604
      %v2606 = vpop.f32.mrb[0].mxu0
      %v2607 = vpop.f32.mrb[0].mxu0
      %v2608 = vadd.f32 %v2543, %v2607
      %v2609 = vpop.f32.mrb[0].mxu0
      %2610 = vmatprep.mubr.bf16.mxu0 %v1906
      %2611 = vmatmul.mubr.bf16.gmra.mrb[0].mxu0 %v1905
      %v2612 = vpop.f32.mrb[0].mxu0
      %v2613 = vadd.f32 %v2548, %v2612
      %v2614 = vpop.f32.mrb[0].mxu0
      %v2615 = vpop.f32.mrb[0].mxu0
      %v2616 = vadd.f32 %v2551, %v2615
      %v2617 = vpop.f32.mrb[0].mxu0
      %2618 = vmatprep.mubr.bf16.mxu0 %v1915
      %2619 = vmatmul.mubr.bf16.gmra.mrb[0].mxu0 %v1914
      %v2620 = vpop.f32.mrb[0].mxu0
      %v2621 = vadd.f32 %v2556, %v2620
      %v2622 = vpop.f32.mrb[0].mxu0
      %v2623 = vpop.f32.mrb[0].mxu0
      %v2624 = vadd.f32 %v2559, %v2623
      %v2625 = vpop.f32.mrb[0].mxu0
      %2626 = vdwg.mxu0
      %2627 = vmatprep.subr.bf16.mxu0 0
      %2628 = vmatpush1.bf16.msra.mxu0 %v2385
      %2629 = vmatprep.subr.bf16.mxu0 0
      %2630 = vmatpush1.bf16.msra.mxu0 %v2386
      %2631 = vmatprep.subr.bf16.mxu0 0
      %2632 = vmatpush1.bf16.msra.mxu0 %v2387
      %2633 = vmatprep.subr.bf16.mxu0 0
      %2634 = vmatpush1.bf16.msra.mxu0 %v2388
      %2635 = vmatprep.subr.bf16.mxu0 0
      %2636 = vmatpush1.bf16.msra.mxu0 %v2389
      %2637 = vmatprep.subr.bf16.mxu0 0
      %2638 = vmatpush1.bf16.msra.mxu0 %v2390
      %2639 = vmatprep.subr.bf16.mxu0 0
      %2640 = vmatpush1.bf16.msra.mxu0 %v2391
      %2641 = vmatprep.subr.bf16.mxu0 0
      %2642 = vmatpush1.bf16.msra.mxu0 %v2392
      %2643 = vmatprep.subr.bf16.mxu0 0
      %2644 = vmatpush1.bf16.msra.mxu0 %v2393
      %2645 = vmatprep.subr.bf16.mxu0 0
      %2646 = vmatpush1.bf16.msra.mxu0 %v2394
      %2647 = vmatprep.subr.bf16.mxu0 0
      %2648 = vmatpush1.bf16.msra.mxu0 %v2395
      %2649 = vmatprep.subr.bf16.mxu0 0
      %2650 = vmatpush1.bf16.msra.mxu0 %v2396
      %2651 = vmatprep.subr.bf16.mxu0 0
      %2652 = vmatpush1.bf16.msra.mxu0 %v2397
      %2653 = vmatprep.subr.bf16.mxu0 0
      %2654 = vmatpush1.bf16.msra.mxu0 %v2398
      %2655 = vmatprep.subr.bf16.mxu0 0
      %2656 = vmatpush1.bf16.msra.mxu0 %v2399
      %2657 = vmatprep.subr.bf16.mxu0 0
      %2658 = vmatpush1.bf16.msra.mxu0 %v2400
      %2659 = vmatprep.mubr.bf16.mxu0 %v1890
      %2660 = vmatmul.mubr.bf16.gmra.mrb[0].mxu0 %v1889
      %v2661 = vpop.f32.mrb[0].mxu0
      %v2662 = vadd.f32 %v2597, %v2661
      %v2663 = vpop.f32.mrb[0].mxu0
      %v2664 = vpop.f32.mrb[0].mxu0
      %v2665 = vadd.f32 %v2600, %v2664
      %v2666 = vpop.f32.mrb[0].mxu0
      %2667 = vmatprep.mubr.bf16.mxu0 %v1899
      %2668 = vmatmul.mubr.bf16.gmra.mrb[0].mxu0 %v1898
      %v2669 = vpop.f32.mrb[0].mxu0
      %v2670 = vadd.f32 %v2605, %v2669
      %v2671 = vpop.f32.mrb[0].mxu0
      %v2672 = vpop.f32.mrb[0].mxu0
      %v2673 = vadd.f32 %v2608, %v2672
      %v2674 = vpop.f32.mrb[0].mxu0
      %2675 = vmatprep.mubr.bf16.mxu0 %v1908
      %2676 = vmatmul.mubr.bf16.gmra.mrb[0].mxu0 %v1907
      %v2677 = vpop.f32.mrb[0].mxu0
      %v2678 = vadd.f32 %v2613, %v2677
      %v2679 = vpop.f32.mrb[0].mxu0
      %v2680 = vpop.f32.mrb[0].mxu0
      %v2681 = vadd.f32 %v2616, %v2680
      %v2682 = vpop.f32.mrb[0].mxu0
      %2683 = vmatprep.mubr.bf16.mxu0 %v1917
      %2684 = vmatmul.mubr.bf16.gmra.mrb[0].mxu0 %v1916
      %v2685 = vpop.f32.mrb[0].mxu0
      %v2686 = vadd.f32 %v2621, %v2685
      %v2687 = vpop.f32.mrb[0].mxu0
      %v2688 = vpop.f32.mrb[0].mxu0
      %v2689 = vadd.f32 %v2624, %v2688
      %v2690 = vpop.f32.mrb[0].mxu0
      %2691 = vdwg.mxu0
      %2692 = vmatprep.subr.bf16.mxu0 0
      %2693 = vmatpush1.bf16.msra.mxu0 %v2401
      %2694 = vmatprep.subr.bf16.mxu0 0
      %2695 = vmatpush1.bf16.msra.mxu0 %v2402
      %2696 = vmatprep.subr.bf16.mxu0 0
      %2697 = vmatpush1.bf16.msra.mxu0 %v2403
      %2698 = vmatprep.subr.bf16.mxu0 0
      %2699 = vmatpush1.bf16.msra.mxu0 %v2404
      %2700 = vmatprep.subr.bf16.mxu0 0
      %2701 = vmatpush1.bf16.msra.mxu0 %v2405
      %2702 = vmatprep.subr.bf16.mxu0 0
      %2703 = vmatpush1.bf16.msra.mxu0 %v2406
      %2704 = vmatprep.subr.bf16.mxu0 0
      %2705 = vmatpush1.bf16.msra.mxu0 %v2407
      %2706 = vmatprep.subr.bf16.mxu0 0
      %2707 = vmatpush1.bf16.msra.mxu0 %v2408
      %2708 = vmatprep.subr.bf16.mxu0 0
      %2709 = vmatpush1.bf16.msra.mxu0 %v2409
      %2710 = vmatprep.subr.bf16.mxu0 0
      %2711 = vmatpush1.bf16.msra.mxu0 %v2410
      %2712 = vmatprep.subr.bf16.mxu0 0
      %2713 = vmatpush1.bf16.msra.mxu0 %v2411
      %2714 = vmatprep.subr.bf16.mxu0 0
      %2715 = vmatpush1.bf16.msra.mxu0 %v2412
      %2716 = vmatprep.subr.bf16.mxu0 0
      %2717 = vmatpush1.bf16.msra.mxu0 %v2413
      %2718 = vmatprep.subr.bf16.mxu0 0
      %2719 = vmatpush1.bf16.msra.mxu0 %v2414
      %2720 = vmatprep.subr.bf16.mxu0 0
      %2721 = vmatpush1.bf16.msra.mxu0 %v2415
      %2722 = vmatprep.subr.bf16.mxu0 0
      %2723 = vmatpush1.bf16.msra.mxu0 %v2416
      %2724 = vmatprep.mubr.bf16.mxu0 %v1892
      %2725 = vmatmul.mubr.bf16.gmra.mrb[0].mxu0 %v1891
      %v2726 = vpop.f32.mrb[0].mxu0
      %v2727 = vadd.f32 %v2662, %v2726
      %v2728 = vpop.f32.mrb[0].mxu0
      %v2729 = vpop.f32.mrb[0].mxu0
      %v2730 = vadd.f32 %v2665, %v2729
      %v2731 = vpop.f32.mrb[0].mxu0
      %2732 = vmatprep.mubr.bf16.mxu0 %v1901
      %2733 = vmatmul.mubr.bf16.gmra.mrb[0].mxu0 %v1900
      %v2734 = vpop.f32.mrb[0].mxu0
      %v2735 = vadd.f32 %v2670, %v2734
      %v2736 = vpop.f32.mrb[0].mxu0
      %v2737 = vpop.f32.mrb[0].mxu0
      %v2738 = vadd.f32 %v2673, %v2737
      %v2739 = vpop.f32.mrb[0].mxu0
      %2740 = vmatprep.mubr.bf16.mxu0 %v1910
      %2741 = vmatmul.mubr.bf16.gmra.mrb[0].mxu0 %v1909
      %v2742 = vpop.f32.mrb[0].mxu0
      %v2743 = vadd.f32 %v2678, %v2742
      %v2744 = vpop.f32.mrb[0].mxu0
      %v2745 = vpop.f32.mrb[0].mxu0
      %v2746 = vadd.f32 %v2681, %v2745
      %v2747 = vpop.f32.mrb[0].mxu0
      %2748 = vmatprep.mubr.bf16.mxu0 %v1919
      %2749 = vmatmul.mubr.bf16.gmra.mrb[0].mxu0 %v1918
      %v2750 = vpop.f32.mrb[0].mxu0
      %v2751 = vadd.f32 %v2686, %v2750
      %v2752 = vpop.f32.mrb[0].mxu0
      %v2753 = vpop.f32.mrb[0].mxu0
      %v2754 = vadd.f32 %v2689, %v2753
      %v2755 = vpop.f32.mrb[0].mxu0
      %2756 = vdwg.mxu0
      %2757 = vmatprep.subr.bf16.mxu0 0
      %2758 = vmatpush1.bf16.msra.mxu0 %v2417
      %2759 = vmatprep.subr.bf16.mxu0 0
      %2760 = vmatpush1.bf16.msra.mxu0 %v2418
      %2761 = vmatprep.subr.bf16.mxu0 0
      %2762 = vmatpush1.bf16.msra.mxu0 %v2419
      %2763 = vmatprep.subr.bf16.mxu0 0
      %2764 = vmatpush1.bf16.msra.mxu0 %v2420
      %2765 = vmatprep.subr.bf16.mxu0 0
      %2766 = vmatpush1.bf16.msra.mxu0 %v2421
      %2767 = vmatprep.subr.bf16.mxu0 0
      %2768 = vmatpush1.bf16.msra.mxu0 %v2422
      %2769 = vmatprep.subr.bf16.mxu0 0
      %2770 = vmatpush1.bf16.msra.mxu0 %v2423
      %2771 = vmatprep.subr.bf16.mxu0 0
      %2772 = vmatpush1.bf16.msra.mxu0 %v2424
      %2773 = vmatprep.subr.bf16.mxu0 0
      %2774 = vmatpush1.bf16.msra.mxu0 0
      %2775 = vmatprep.subr.bf16.mxu0 0
      %2776 = vmatpush1.bf16.msra.mxu0 0
      %2777 = vmatprep.subr.bf16.mxu0 0
      %2778 = vmatpush1.bf16.msra.mxu0 0
      %2779 = vmatprep.subr.bf16.mxu0 0
      %2780 = vmatpush1.bf16.msra.mxu0 0
      %2781 = vmatprep.subr.bf16.mxu0 0
      %2782 = vmatpush1.bf16.msra.mxu0 0
      %2783 = vmatprep.subr.bf16.mxu0 0
      %2784 = vmatpush1.bf16.msra.mxu0 0
      %2785 = vmatprep.subr.bf16.mxu0 0
      %2786 = vmatpush1.bf16.msra.mxu0 0
      %2787 = vmatprep.subr.bf16.mxu0 0
      %2788 = vmatpush1.bf16.msra.mxu0 0
      %2789 = vmatprep.mubr.bf16.mxu0 0
      %2790 = vmatmul.mubr.bf16.gmra.mrb[0].mxu0 %v1893
      %v2791 = vpop.f32.mrb[0].mxu0
      %v2792 = vadd.f32 %v2727, %v2791
      %v2793 = vpop.f32.mrb[0].mxu0
      %v2794 = vpop.f32.mrb[0].mxu0
      %v2795 = vadd.f32 %v2730, %v2794
      %v2796 = vpop.f32.mrb[0].mxu0
      %2797 = vmatprep.mubr.bf16.mxu0 0
      %2798 = vmatmul.mubr.bf16.gmra.mrb[0].mxu0 %v1902
      %v2799 = vpop.f32.mrb[0].mxu0
      %v2800 = vadd.f32 %v2735, %v2799
      %v2801 = vpop.f32.mrb[0].mxu0
      %v2802 = vpop.f32.mrb[0].mxu0
      %v2803 = vadd.f32 %v2738, %v2802
      %v2804 = vpop.f32.mrb[0].mxu0
      %2805 = vmatprep.mubr.bf16.mxu0 0
      %2806 = vmatmul.mubr.bf16.gmra.mrb[0].mxu0 %v1911
      %v2807 = vpop.f32.mrb[0].mxu0
      %v2808 = vadd.f32 %v2743, %v2807
      %v2809 = vpop.f32.mrb[0].mxu0
      %v2810 = vpop.f32.mrb[0].mxu0
      %v2811 = vadd.f32 %v2746, %v2810
      %v2812 = vpop.f32.mrb[0].mxu0
      %2813 = vmatprep.mubr.bf16.mxu0 0
      %2814 = vmatmul.mubr.bf16.gmra.mrb[0].mxu0 %v1920
      %v2815 = vpop.f32.mrb[0].mxu0
      %v2816 = vadd.f32 %v2751, %v2815
      %v2817 = vpop.f32.mrb[0].mxu0
      %v2818 = vpop.f32.mrb[0].mxu0
      %v2819 = vadd.f32 %v2754, %v2818
      %v2820 = vpop.f32.mrb[0].mxu0
      %2821 = vdwg.mxu0
      %v2822 = vld [vmem:[%s6] sm:$0x1]
      %v2824 = vlaneseq
      %v2825 = vshrl.u32 %v2824, 7
      %v2826 = vsub.s32 0, %v2825
      %v2827 = vrot.slane %v2822, %v2826
      %v2829 = vmul.f32 %v2792, %v2827
      %v2830 = vmul.f32 %v2795, %v2827
      %v2831 = vmul.f32 %v2800, %v2827
      %v2832 = vmul.f32 %v2803, %v2827
      %v2833 = vmul.f32 %v2808, %v2827
      %v2834 = vmul.f32 %v2811, %v2827
      %v2835 = vmul.f32 %v2816, %v2827
      %v2836 = vmul.f32 %v2819, %v2827
      %v2837 = vld [vmem:[%s7] sm:$0x1]
      %v2839 = vlaneseq
      %v2840 = vshrl.u32 %v2839, 7
      %v2841 = vsub.s32 0, %v2840
      %v2842 = vrot.slane %v2837, %v2841
      %v2844 = vadd.f32 %v2829, %v2842
      %v2845 = vadd.f32 %v2830, %v2842
      %v2846 = vadd.f32 %v2831, %v2842
      %v2847 = vadd.f32 %v2832, %v2842
      %v2848 = vadd.f32 %v2833, %v2842
      %v2849 = vadd.f32 %v2834, %v2842
      %v2850 = vadd.f32 %v2835, %v2842
      %v2851 = vadd.f32 %v2836, %v2842
      %v2852 = vmax.f32 %v2844, 0.0
      %v2853 = vmax.f32 %v2845, 0.0
      %v2854 = vmax.f32 %v2846, 0.0
      %v2855 = vmax.f32 %v2847, 0.0
      %v2856 = vmax.f32 %v2848, 0.0
      %v2857 = vmax.f32 %v2849, 0.0
      %v2858 = vmax.f32 %v2850, 0.0
      %v2859 = vmax.f32 %v2851, 0.0
      %v2860 = vpack.c.bf16 %v2852, %v2852
      %v2861 = vpack.c.bf16 %v2853, %v2853
      %v2862 = vpack.c.bf16 %v2854, %v2854
      %v2863 = vpack.c.bf16 %v2855, %v2855
      %v2864 = vpack.c.bf16 %v2856, %v2856
      %v2865 = vpack.c.bf16 %v2857, %v2857
      %v2866 = vpack.c.bf16 %v2858, %v2858
      %v2867 = vpack.c.bf16 %v2859, %v2859
      %v2876 = vunpack.c.l.b16 %v2860
      %v2877 = vunpack.c.l.b16 %v2861
      %v2878 = vunpack.c.l.b16 %v2862
      %v2879 = vunpack.c.l.b16 %v2863
      %v2880 = vunpack.c.l.b16 %v2864
      %v2881 = vunpack.c.l.b16 %v2865
      %v2882 = vunpack.c.l.b16 %v2866
      %v2883 = vunpack.c.l.b16 %v2867
      %v2884 = vpack.c.b16 %v2876, %v2876
      %v2885 = vpack.c.b16 %v2877, %v2877
      %v2886 = vpack.c.b16 %v2878, %v2878
      %v2887 = vpack.c.b16 %v2879, %v2879
      %v2888 = vpack.c.b16 %v2880, %v2880
      %v2889 = vpack.c.b16 %v2881, %v2881
      %v2890 = vpack.c.b16 %v2882, %v2882
      %v2891 = vpack.c.b16 %v2883, %v2883
      %v2893 = vshrl.u32 %v2884, 16
      %v2895 = vrot.slane %v2893, 7
      %v2896 = vshll.u32 %v2884, 16
      %v2898 = vor.u32 %v2895, %v2896
      %v2899 = vrot.slane %v2895, 4
      %v2901 = vshrl.u32 %v2885, 16
      %v2903 = vrot.slane %v2901, 7
      %v2904 = vshll.u32 %v2885, 16
      %v2906 = vor.u32 %v2903, %v2904
      %v2907 = vrot.slane %v2903, 4
      %v2909 = vshrl.u32 %v2886, 16
      %v2911 = vrot.slane %v2909, 7
      %v2912 = vshll.u32 %v2886, 16
      %v2914 = vor.u32 %v2911, %v2912
      %v2915 = vrot.slane %v2911, 4
      %v2917 = vshrl.u32 %v2887, 16
      %v2919 = vrot.slane %v2917, 7
      %v2920 = vshll.u32 %v2887, 16
      %v2922 = vor.u32 %v2919, %v2920
      %v2923 = vrot.slane %v2919, 4
      %v2925 = vshrl.u32 %v2888, 16
      %v2927 = vrot.slane %v2925, 7
      %v2928 = vshll.u32 %v2888, 16
      %v2930 = vor.u32 %v2927, %v2928
      %v2931 = vrot.slane %v2927, 4
      %v2933 = vshrl.u32 %v2889, 16
      %v2935 = vrot.slane %v2933, 7
      %v2936 = vshll.u32 %v2889, 16
      %v2938 = vor.u32 %v2935, %v2936
      %v2939 = vrot.slane %v2935, 4
      %v2941 = vshrl.u32 %v2890, 16
      %v2943 = vrot.slane %v2941, 7
      %v2944 = vshll.u32 %v2890, 16
      %v2946 = vor.u32 %v2943, %v2944
      %v2947 = vrot.slane %v2943, 4
      %v2949 = vshrl.u32 %v2891, 16
      %v2951 = vrot.slane %v2949, 7
      %v2952 = vshll.u32 %v2891, 16
      %v2954 = vor.u32 %v2951, %v2952
      %v2955 = vrot.slane %v2951, 4
      %s2972 = scalar_lea.vmem [#allocation3], 8
      %v2973 = vld [vmem:[%s2972] sm:$0xf]
      %v2974 = vsel %vm675, %v2898, %v2973
      %2975 = vst [vmem:[%s2972] sm:$0xf] %v2974
      %v2976 = vld [vmem:[%s2972 + $0x4] sm:$0x1]
      %v2977 = vsel %vm310, %v2899, %v2976
      %2978 = vst [vmem:[%s2972 + $0x4] sm:$0x1] %v2977
      %v2979 = vld [vmem:[%s2972 + $0x8] sm:$0xf]
      %v2980 = vsel %vm675, %v2906, %v2979
      %2981 = vst [vmem:[%s2972 + $0x8] sm:$0xf] %v2980
      %v2982 = vld [vmem:[%s2972 + $0xc] sm:$0x1]
      %v2983 = vsel %vm310, %v2907, %v2982
      %2984 = vst [vmem:[%s2972 + $0xc] sm:$0x1] %v2983
      %v2985 = vld [vmem:[%s2972 + $0x10] sm:$0xf]
      %v2986 = vsel %vm675, %v2914, %v2985
      %2987 = vst [vmem:[%s2972 + $0x10] sm:$0xf] %v2986
      %v2988 = vld [vmem:[%s2972 + $0x14] sm:$0x1]
      %v2989 = vsel %vm310, %v2915, %v2988
      %2990 = vst [vmem:[%s2972 + $0x14] sm:$0x1] %v2989
      %v2991 = vld [vmem:[%s2972 + $0x18] sm:$0xf]
      %v2992 = vsel %vm675, %v2922, %v2991
      %2993 = vst [vmem:[%s2972 + $0x18] sm:$0xf] %v2992
      %v2994 = vld [vmem:[%s2972 + $0x1c] sm:$0x1]
      %v2995 = vsel %vm310, %v2923, %v2994
      %2996 = vst [vmem:[%s2972 + $0x1c] sm:$0x1] %v2995
      %v2997 = vld [vmem:[%s2972 + $0x20] sm:$0xf]
      %v2998 = vsel %vm675, %v2930, %v2997
      %2999 = vst [vmem:[%s2972 + $0x20] sm:$0xf] %v2998
      %v3000 = vld [vmem:[%s2972 + $0x24] sm:$0x1]
      %v3001 = vsel %vm310, %v2931, %v3000
      %3002 = vst [vmem:[%s2972 + $0x24] sm:$0x1] %v3001
      %v3003 = vld [vmem:[%s2972 + $0x28] sm:$0xf]
      %v3004 = vsel %vm675, %v2938, %v3003
      %3005 = vst [vmem:[%s2972 + $0x28] sm:$0xf] %v3004
      %v3006 = vld [vmem:[%s2972 + $0x2c] sm:$0x1]
      %v3007 = vsel %vm310, %v2939, %v3006
      %3008 = vst [vmem:[%s2972 + $0x2c] sm:$0x1] %v3007
      %v3009 = vld [vmem:[%s2972 + $0x30] sm:$0xf]
      %v3010 = vsel %vm675, %v2946, %v3009
      %3011 = vst [vmem:[%s2972 + $0x30] sm:$0xf] %v3010
      %v3012 = vld [vmem:[%s2972 + $0x34] sm:$0x1]
      %v3013 = vsel %vm310, %v2947, %v3012
      %3014 = vst [vmem:[%s2972 + $0x34] sm:$0x1] %v3013
      %v3015 = vld [vmem:[%s2972 + $0x38] sm:$0xf]
      %v3016 = vsel %vm675, %v2954, %v3015
      %3017 = vst [vmem:[%s2972 + $0x38] sm:$0xf] %v3016
      %v3018 = vld [vmem:[%s2972 + $0x3c] sm:$0x1]
      %v3019 = vsel %vm310, %v2955, %v3018
      %3020 = vst [vmem:[%s2972 + $0x3c] sm:$0x1] %v3019
      %v3021 = vld [vmem:[#allocation3] sm:$0xf]
      %v3022 = vld [vmem:[#allocation3 + $0x8] sm:$0xf]
      %v3023 = vld [vmem:[#allocation3 + $0x10] sm:$0xf]
      %v3024 = vld [vmem:[#allocation3 + $0x18] sm:$0xf]
      %v3025 = vld [vmem:[#allocation3 + $0x20] sm:$0xf]
      %v3026 = vld [vmem:[#allocation3 + $0x28] sm:$0xf]
      %v3027 = vld [vmem:[#allocation3 + $0x30] sm:$0xf]
      %v3028 = vld [vmem:[#allocation3 + $0x38] sm:$0xf]
      %v3037 = vunpack.c.l.b16 %v3021
      %v3038 = vunpack.c.l.b16 %v3022
      %v3039 = vunpack.c.l.b16 %v3023
      %v3040 = vunpack.c.l.b16 %v3024
      %v3041 = vunpack.c.l.b16 %v3025
      %v3042 = vunpack.c.l.b16 %v3026
      %v3043 = vunpack.c.l.b16 %v3027
      %v3044 = vunpack.c.l.b16 %v3028
      %v3045 = vpack.c.b16 %v3038, %v3037
      %v3046 = vpack.c.b16 %v3040, %v3039
      %v3047 = vpack.c.b16 %v3042, %v3041
      %v3048 = vpack.c.b16 %v3044, %v3043
      %3053 = vst [vmem:[#allocation4] sm:$0xff] %v3045
      %3054 = vst [vmem:[#allocation4 + $0x48] sm:$0xff] %v3046
      %3055 = vst [vmem:[#allocation4 + $0x90] sm:$0xff] %v3047
      %3056 = vst [vmem:[#allocation4 + $0xd8] sm:$0xff] %v3048
      %v3057 = vld [vmem:[#allocation3] sm:$0xf]
      %v3058 = vld [vmem:[#allocation3 + $0x4] sm:$0x1]
      %v3059 = vld [vmem:[#allocation3 + $0x8] sm:$0xf]
      %v3060 = vld [vmem:[#allocation3 + $0xc] sm:$0x1]
      %v3061 = vld [vmem:[#allocation3 + $0x10] sm:$0xf]
      %v3062 = vld [vmem:[#allocation3 + $0x14] sm:$0x1]
      %v3063 = vld [vmem:[#allocation3 + $0x18] sm:$0xf]
      %v3064 = vld [vmem:[#allocation3 + $0x1c] sm:$0x1]
      %v3065 = vld [vmem:[#allocation3 + $0x20] sm:$0xf]
      %v3066 = vld [vmem:[#allocation3 + $0x24] sm:$0x1]
      %v3067 = vld [vmem:[#allocation3 + $0x28] sm:$0xf]
      %v3068 = vld [vmem:[#allocation3 + $0x2c] sm:$0x1]
      %v3069 = vld [vmem:[#allocation3 + $0x30] sm:$0xf]
      %v3070 = vld [vmem:[#allocation3 + $0x34] sm:$0x1]
      %v3071 = vld [vmem:[#allocation3 + $0x38] sm:$0xf]
      %v3072 = vld [vmem:[#allocation3 + $0x3c] sm:$0x1]
      %v3074 = vshrl.u32 %v3057, 16
      %v3076 = vrot.slane %v3074, 4
      %v3077 = vshll.u32 %v3057, 16
      %v3079 = vrot.slane %v3077, 5
      %v3080 = vor.u32 %v3076, %v3079
      %v3081 = vrot.slane %v3080, 4
      %v3083 = vshll.u32 %v3058, 16
      %v3085 = vrot.slane %v3083, 5
      %v3086 = vsel %vm1171, %v3081, %v3085
      %v3088 = vshrl.u32 %v3059, 16
      %v3090 = vrot.slane %v3088, 4
      %v3091 = vshll.u32 %v3059, 16
      %v3093 = vrot.slane %v3091, 5
      %v3094 = vor.u32 %v3090, %v3093
      %v3095 = vrot.slane %v3094, 4
      %v3097 = vshll.u32 %v3060, 16
      %v3099 = vrot.slane %v3097, 5
      %v3100 = vsel %vm1171, %v3095, %v3099
      %v3102 = vshrl.u32 %v3061, 16
      %v3104 = vrot.slane %v3102, 4
      %v3105 = vshll.u32 %v3061, 16
      %v3107 = vrot.slane %v3105, 5
      %v3108 = vor.u32 %v3104, %v3107
      %v3109 = vrot.slane %v3108, 4
      %v3111 = vshll.u32 %v3062, 16
      %v3113 = vrot.slane %v3111, 5
      %v3114 = vsel %vm1171, %v3109, %v3113
      %v3116 = vshrl.u32 %v3063, 16
      %v3118 = vrot.slane %v3116, 4
      %v3119 = vshll.u32 %v3063, 16
      %v3121 = vrot.slane %v3119, 5
      %v3122 = vor.u32 %v3118, %v3121
      %v3123 = vrot.slane %v3122, 4
      %v3125 = vshll.u32 %v3064, 16
      %v3127 = vrot.slane %v3125, 5
      %v3128 = vsel %vm1171, %v3123, %v3127
      %v3130 = vshrl.u32 %v3065, 16
      %v3132 = vrot.slane %v3130, 4
      %v3133 = vshll.u32 %v3065, 16
      %v3135 = vrot.slane %v3133, 5
      %v3136 = vor.u32 %v3132, %v3135
      %v3137 = vrot.slane %v3136, 4
      %v3139 = vshll.u32 %v3066, 16
      %v3141 = vrot.slane %v3139, 5
      %v3142 = vsel %vm1171, %v3137, %v3141
      %v3144 = vshrl.u32 %v3067, 16
      %v3146 = vrot.slane %v3144, 4
      %v3147 = vshll.u32 %v3067, 16
      %v3149 = vrot.slane %v3147, 5
      %v3150 = vor.u32 %v3146, %v3149
      %v3151 = vrot.slane %v3150, 4
      %v3153 = vshll.u32 %v3068, 16
      %v3155 = vrot.slane %v3153, 5
      %v3156 = vsel %vm1171, %v3151, %v3155
      %v3158 = vshrl.u32 %v3069, 16
      %v3160 = vrot.slane %v3158, 4
      %v3161 = vshll.u32 %v3069, 16
      %v3163 = vrot.slane %v3161, 5
      %v3164 = vor.u32 %v3160, %v3163
      %v3165 = vrot.slane %v3164, 4
      %v3167 = vshll.u32 %v3070, 16
      %v3169 = vrot.slane %v3167, 5
      %v3170 = vsel %vm1171, %v3165, %v3169
      %v3172 = vshrl.u32 %v3071, 16
      %v3174 = vrot.slane %v3172, 4
      %v3175 = vshll.u32 %v3071, 16
      %v3177 = vrot.slane %v3175, 5
      %v3178 = vor.u32 %v3174, %v3177
      %v3179 = vrot.slane %v3178, 4
      %v3181 = vshll.u32 %v3072, 16
      %v3183 = vrot.slane %v3181, 5
      %v3184 = vsel %vm1171, %v3179, %v3183
      %v3185 = vunpack.c.l.b16 %v3086
      %v3186 = vunpack.c.l.b16 %v3100
      %v3187 = vunpack.c.l.b16 %v3114
      %v3188 = vunpack.c.l.b16 %v3128
      %v3189 = vunpack.c.l.b16 %v3142
      %v3190 = vunpack.c.l.b16 %v3156
      %v3191 = vunpack.c.l.b16 %v3170
      %v3192 = vunpack.c.l.b16 %v3184
      %v3193 = vpack.c.b16 %v3186, %v3185
      %v3194 = vpack.c.b16 %v3188, %v3187
      %v3195 = vpack.c.b16 %v3190, %v3189
      %v3196 = vpack.c.b16 %v3192, %v3191
      %3201 = vst [vmem:[#allocation4 + $0x8] sm:$0xff] %v3193
      %3202 = vst [vmem:[#allocation4 + $0x50] sm:$0xff] %v3194
      %3203 = vst [vmem:[#allocation4 + $0x98] sm:$0xff] %v3195
      %3204 = vst [vmem:[#allocation4 + $0xe0] sm:$0xff] %v3196
      %v3205 = vld [vmem:[#allocation3] sm:$0xe]
      %v3206 = vld [vmem:[#allocation3 + $0x4] sm:$0x1]
      %v3207 = vld [vmem:[#allocation3 + $0x8] sm:$0xe]
      %v3208 = vld [vmem:[#allocation3 + $0xc] sm:$0x1]
      %v3209 = vld [vmem:[#allocation3 + $0x10] sm:$0xe]
      %v3210 = vld [vmem:[#allocation3 + $0x14] sm:$0x1]
      %v3211 = vld [vmem:[#allocation3 + $0x18] sm:$0xe]
      %v3212 = vld [vmem:[#allocation3 + $0x1c] sm:$0x1]
      %v3213 = vld [vmem:[#allocation3 + $0x20] sm:$0xe]
      %v3214 = vld [vmem:[#allocation3 + $0x24] sm:$0x1]
      %v3215 = vld [vmem:[#allocation3 + $0x28] sm:$0xe]
      %v3216 = vld [vmem:[#allocation3 + $0x2c] sm:$0x1]
      %v3217 = vld [vmem:[#allocation3 + $0x30] sm:$0xe]
      %v3218 = vld [vmem:[#allocation3 + $0x34] sm:$0x1]
      %v3219 = vld [vmem:[#allocation3 + $0x38] sm:$0xe]
      %v3220 = vld [vmem:[#allocation3 + $0x3c] sm:$0x1]
      %vm3237 = vcmask 1042432
      %vm3238 = vcmask 1046532
      %vm3239 = vmor %vm3237, %vm3238
      %v3240 = vrot.slane %v3205, 5
      %v3241 = vrot.slane %v3240, 4
      %v3242 = vrot.slane %v3206, 5
      %v3243 = vsel %vm3239, %v3241, %v3242
      %v3244 = vrot.slane %v3207, 5
      %v3245 = vrot.slane %v3244, 4
      %v3246 = vrot.slane %v3208, 5
      %v3247 = vsel %vm3239, %v3245, %v3246
      %v3248 = vrot.slane %v3209, 5
      %v3249 = vrot.slane %v3248, 4
      %v3250 = vrot.slane %v3210, 5
      %v3251 = vsel %vm3239, %v3249, %v3250
      %v3252 = vrot.slane %v3211, 5
      %v3253 = vrot.slane %v3252, 4
      %v3254 = vrot.slane %v3212, 5
      %v3255 = vsel %vm3239, %v3253, %v3254
      %v3256 = vrot.slane %v3213, 5
      %v3257 = vrot.slane %v3256, 4
      %v3258 = vrot.slane %v3214, 5
      %v3259 = vsel %vm3239, %v3257, %v3258
      %v3260 = vrot.slane %v3215, 5
      %v3261 = vrot.slane %v3260, 4
      %v3262 = vrot.slane %v3216, 5
      %v3263 = vsel %vm3239, %v3261, %v3262
      %v3264 = vrot.slane %v3217, 5
      %v3265 = vrot.slane %v3264, 4
      %v3266 = vrot.slane %v3218, 5
      %v3267 = vsel %vm3239, %v3265, %v3266
      %v3268 = vrot.slane %v3219, 5
      %v3269 = vrot.slane %v3268, 4
      %v3270 = vrot.slane %v3220, 5
      %v3271 = vsel %vm3239, %v3269, %v3270
      %v3272 = vunpack.c.l.b16 %v3243
      %v3273 = vunpack.c.l.b16 %v3247
      %v3274 = vunpack.c.l.b16 %v3251
      %v3275 = vunpack.c.l.b16 %v3255
      %v3276 = vunpack.c.l.b16 %v3259
      %v3277 = vunpack.c.l.b16 %v3263
      %v3278 = vunpack.c.l.b16 %v3267
      %v3279 = vunpack.c.l.b16 %v3271
      %v3280 = vpack.c.b16 %v3273, %v3272
      %v3281 = vpack.c.b16 %v3275, %v3274
      %v3282 = vpack.c.b16 %v3277, %v3276
      %v3283 = vpack.c.b16 %v3279, %v3278
      %3288 = vst [vmem:[#allocation4 + $0x10] sm:$0xff] %v3280
      %3289 = vst [vmem:[#allocation4 + $0x58] sm:$0xff] %v3281
      %3290 = vst [vmem:[#allocation4 + $0xa0] sm:$0xff] %v3282
      %3291 = vst [vmem:[#allocation4 + $0xe8] sm:$0xff] %v3283
      %v3292 = vld [vmem:[%s2972] sm:$0xf]
      %v3293 = vld [vmem:[%s2972 + $0x8] sm:$0xf]
      %v3294 = vld [vmem:[%s2972 + $0x10] sm:$0xf]
      %v3295 = vld [vmem:[%s2972 + $0x18] sm:$0xf]
      %v3296 = vld [vmem:[%s2972 + $0x20] sm:$0xf]
      %v3297 = vld [vmem:[%s2972 + $0x28] sm:$0xf]
      %v3298 = vld [vmem:[%s2972 + $0x30] sm:$0xf]
      %v3299 = vld [vmem:[%s2972 + $0x38] sm:$0xf]
      %v3308 = vunpack.c.l.b16 %v3292
      %v3309 = vunpack.c.l.b16 %v3293
      %v3310 = vunpack.c.l.b16 %v3294
      %v3311 = vunpack.c.l.b16 %v3295
      %v3312 = vunpack.c.l.b16 %v3296
      %v3313 = vunpack.c.l.b16 %v3297
      %v3314 = vunpack.c.l.b16 %v3298
      %v3315 = vunpack.c.l.b16 %v3299
      %v3316 = vpack.c.b16 %v3309, %v3308
      %v3317 = vpack.c.b16 %v3311, %v3310
      %v3318 = vpack.c.b16 %v3313, %v3312
      %v3319 = vpack.c.b16 %v3315, %v3314
      %3324 = vst [vmem:[#allocation4 + $0x18] sm:$0xff] %v3316
      %3325 = vst [vmem:[#allocation4 + $0x60] sm:$0xff] %v3317
      %3326 = vst [vmem:[#allocation4 + $0xa8] sm:$0xff] %v3318
      %3327 = vst [vmem:[#allocation4 + $0xf0] sm:$0xff] %v3319
      %v3328 = vld [vmem:[%s2972] sm:$0xf]
      %v3329 = vld [vmem:[%s2972 + $0x4] sm:$0x1]
      %v3330 = vld [vmem:[%s2972 + $0x8] sm:$0xf]
      %v3331 = vld [vmem:[%s2972 + $0xc] sm:$0x1]
      %v3332 = vld [vmem:[%s2972 + $0x10] sm:$0xf]
      %v3333 = vld [vmem:[%s2972 + $0x14] sm:$0x1]
      %v3334 = vld [vmem:[%s2972 + $0x18] sm:$0xf]
      %v3335 = vld [vmem:[%s2972 + $0x1c] sm:$0x1]
      %v3336 = vld [vmem:[%s2972 + $0x20] sm:$0xf]
      %v3337 = vld [vmem:[%s2972 + $0x24] sm:$0x1]
      %v3338 = vld [vmem:[%s2972 + $0x28] sm:$0xf]
      %v3339 = vld [vmem:[%s2972 + $0x2c] sm:$0x1]
      %v3340 = vld [vmem:[%s2972 + $0x30] sm:$0xf]
      %v3341 = vld [vmem:[%s2972 + $0x34] sm:$0x1]
      %v3342 = vld [vmem:[%s2972 + $0x38] sm:$0xf]
      %v3343 = vld [vmem:[%s2972 + $0x3c] sm:$0x1]
      %v3345 = vshrl.u32 %v3328, 16
      %v3347 = vrot.slane %v3345, 4
      %v3348 = vshll.u32 %v3328, 16
      %v3350 = vrot.slane %v3348, 5
      %v3351 = vor.u32 %v3347, %v3350
      %v3352 = vrot.slane %v3351, 4
      %v3354 = vshll.u32 %v3329, 16
      %v3356 = vrot.slane %v3354, 5
      %v3357 = vsel %vm1171, %v3352, %v3356
      %v3359 = vshrl.u32 %v3330, 16
      %v3361 = vrot.slane %v3359, 4
      %v3362 = vshll.u32 %v3330, 16
      %v3364 = vrot.slane %v3362, 5
      %v3365 = vor.u32 %v3361, %v3364
      %v3366 = vrot.slane %v3365, 4
      %v3368 = vshll.u32 %v3331, 16
      %v3370 = vrot.slane %v3368, 5
      %v3371 = vsel %vm1171, %v3366, %v3370
      %v3373 = vshrl.u32 %v3332, 16
      %v3375 = vrot.slane %v3373, 4
      %v3376 = vshll.u32 %v3332, 16
      %v3378 = vrot.slane %v3376, 5
      %v3379 = vor.u32 %v3375, %v3378
      %v3380 = vrot.slane %v3379, 4
      %v3382 = vshll.u32 %v3333, 16
      %v3384 = vrot.slane %v3382, 5
      %v3385 = vsel %vm1171, %v3380, %v3384
      %v3387 = vshrl.u32 %v3334, 16
      %v3389 = vrot.slane %v3387, 4
      %v3390 = vshll.u32 %v3334, 16
      %v3392 = vrot.slane %v3390, 5
      %v3393 = vor.u32 %v3389, %v3392
      %v3394 = vrot.slane %v3393, 4
      %v3396 = vshll.u32 %v3335, 16
      %v3398 = vrot.slane %v3396, 5
      %v3399 = vsel %vm1171, %v3394, %v3398
      %v3401 = vshrl.u32 %v3336, 16
      %v3403 = vrot.slane %v3401, 4
      %v3404 = vshll.u32 %v3336, 16
      %v3406 = vrot.slane %v3404, 5
      %v3407 = vor.u32 %v3403, %v3406
      %v3408 = vrot.slane %v3407, 4
      %v3410 = vshll.u32 %v3337, 16
      %v3412 = vrot.slane %v3410, 5
      %v3413 = vsel %vm1171, %v3408, %v3412
      %v3415 = vshrl.u32 %v3338, 16
      %v3417 = vrot.slane %v3415, 4
      %v3418 = vshll.u32 %v3338, 16
      %v3420 = vrot.slane %v3418, 5
      %v3421 = vor.u32 %v3417, %v3420
      %v3422 = vrot.slane %v3421, 4
      %v3424 = vshll.u32 %v3339, 16
      %v3426 = vrot.slane %v3424, 5
      %v3427 = vsel %vm1171, %v3422, %v3426
      %v3429 = vshrl.u32 %v3340, 16
      %v3431 = vrot.slane %v3429, 4
      %v3432 = vshll.u32 %v3340, 16
      %v3434 = vrot.slane %v3432, 5
      %v3435 = vor.u32 %v3431, %v3434
      %v3436 = vrot.slane %v3435, 4
      %v3438 = vshll.u32 %v3341, 16
      %v3440 = vrot.slane %v3438, 5
      %v3441 = vsel %vm1171, %v3436, %v3440
      %v3443 = vshrl.u32 %v3342, 16
      %v3445 = vrot.slane %v3443, 4
      %v3446 = vshll.u32 %v3342, 16
      %v3448 = vrot.slane %v3446, 5
      %v3449 = vor.u32 %v3445, %v3448
      %v3450 = vrot.slane %v3449, 4
      %v3452 = vshll.u32 %v3343, 16
      %v3454 = vrot.slane %v3452, 5
      %v3455 = vsel %vm1171, %v3450, %v3454
      %v3456 = vunpack.c.l.b16 %v3357
      %v3457 = vunpack.c.l.b16 %v3371
      %v3458 = vunpack.c.l.b16 %v3385
      %v3459 = vunpack.c.l.b16 %v3399
      %v3460 = vunpack.c.l.b16 %v3413
      %v3461 = vunpack.c.l.b16 %v3427
      %v3462 = vunpack.c.l.b16 %v3441
      %v3463 = vunpack.c.l.b16 %v3455
      %v3464 = vpack.c.b16 %v3457, %v3456
      %v3465 = vpack.c.b16 %v3459, %v3458
      %v3466 = vpack.c.b16 %v3461, %v3460
      %v3467 = vpack.c.b16 %v3463, %v3462
      %3472 = vst [vmem:[#allocation4 + $0x20] sm:$0xff] %v3464
      %3473 = vst [vmem:[#allocation4 + $0x68] sm:$0xff] %v3465
      %3474 = vst [vmem:[#allocation4 + $0xb0] sm:$0xff] %v3466
      %3475 = vst [vmem:[#allocation4 + $0xf8] sm:$0xff] %v3467
      %v3476 = vld [vmem:[%s2972] sm:$0xe]
      %v3477 = vld [vmem:[%s2972 + $0x4] sm:$0x1]
      %v3478 = vld [vmem:[%s2972 + $0x8] sm:$0xe]
      %v3479 = vld [vmem:[%s2972 + $0xc] sm:$0x1]
      %v3480 = vld [vmem:[%s2972 + $0x10] sm:$0xe]
      %v3481 = vld [vmem:[%s2972 + $0x14] sm:$0x1]
      %v3482 = vld [vmem:[%s2972 + $0x18] sm:$0xe]
      %v3483 = vld [vmem:[%s2972 + $0x1c] sm:$0x1]
      %v3484 = vld [vmem:[%s2972 + $0x20] sm:$0xe]
      %v3485 = vld [vmem:[%s2972 + $0x24] sm:$0x1]
      %v3486 = vld [vmem:[%s2972 + $0x28] sm:$0xe]
      %v3487 = vld [vmem:[%s2972 + $0x2c] sm:$0x1]
      %v3488 = vld [vmem:[%s2972 + $0x30] sm:$0xe]
      %v3489 = vld [vmem:[%s2972 + $0x34] sm:$0x1]
      %v3490 = vld [vmem:[%s2972 + $0x38] sm:$0xe]
      %v3491 = vld [vmem:[%s2972 + $0x3c] sm:$0x1]
      %v3508 = vrot.slane %v3476, 5
      %v3509 = vrot.slane %v3508, 4
      %v3510 = vrot.slane %v3477, 5
      %v3511 = vsel %vm3239, %v3509, %v3510
      %v3512 = vrot.slane %v3478, 5
      %v3513 = vrot.slane %v3512, 4
      %v3514 = vrot.slane %v3479, 5
      %v3515 = vsel %vm3239, %v3513, %v3514
      %v3516 = vrot.slane %v3480, 5
      %v3517 = vrot.slane %v3516, 4
      %v3518 = vrot.slane %v3481, 5
      %v3519 = vsel %vm3239, %v3517, %v3518
      %v3520 = vrot.slane %v3482, 5
      %v3521 = vrot.slane %v3520, 4
      %v3522 = vrot.slane %v3483, 5
      %v3523 = vsel %vm3239, %v3521, %v3522
      %v3524 = vrot.slane %v3484, 5
      %v3525 = vrot.slane %v3524, 4
      %v3526 = vrot.slane %v3485, 5
      %v3527 = vsel %vm3239, %v3525, %v3526
      %v3528 = vrot.slane %v3486, 5
      %v3529 = vrot.slane %v3528, 4
      %v3530 = vrot.slane %v3487, 5
      %v3531 = vsel %vm3239, %v3529, %v3530
      %v3532 = vrot.slane %v3488, 5
      %v3533 = vrot.slane %v3532, 4
      %v3534 = vrot.slane %v3489, 5
      %v3535 = vsel %vm3239, %v3533, %v3534
      %v3536 = vrot.slane %v3490, 5
      %v3537 = vrot.slane %v3536, 4
      %v3538 = vrot.slane %v3491, 5
      %v3539 = vsel %vm3239, %v3537, %v3538
      %v3540 = vunpack.c.l.b16 %v3511
      %v3541 = vunpack.c.l.b16 %v3515
      %v3542 = vunpack.c.l.b16 %v3519
      %v3543 = vunpack.c.l.b16 %v3523
      %v3544 = vunpack.c.l.b16 %v3527
      %v3545 = vunpack.c.l.b16 %v3531
      %v3546 = vunpack.c.l.b16 %v3535
      %v3547 = vunpack.c.l.b16 %v3539
      %v3548 = vpack.c.b16 %v3541, %v3540
      %v3549 = vpack.c.b16 %v3543, %v3542
      %v3550 = vpack.c.b16 %v3545, %v3544
      %v3551 = vpack.c.b16 %v3547, %v3546
      %3556 = vst [vmem:[#allocation4 + $0x28] sm:$0xff] %v3548
      %3557 = vst [vmem:[#allocation4 + $0x70] sm:$0xff] %v3549
      %3558 = vst [vmem:[#allocation4 + $0xb8] sm:$0xff] %v3550
      %3559 = vst [vmem:[#allocation4 + $0x100] sm:$0xff] %v3551
      %s3560 = scalar_lea.vmem [#allocation3], 16
      %v3561 = vld [vmem:[%s3560] sm:$0xf]
      %v3562 = vld [vmem:[%s3560 + $0x8] sm:$0xf]
      %v3563 = vld [vmem:[%s3560 + $0x10] sm:$0xf]
      %v3564 = vld [vmem:[%s3560 + $0x18] sm:$0xf]
      %v3565 = vld [vmem:[%s3560 + $0x20] sm:$0xf]
      %v3566 = vld [vmem:[%s3560 + $0x28] sm:$0xf]
      %v3567 = vld [vmem:[%s3560 + $0x30] sm:$0xf]
      %v3568 = vld [vmem:[%s3560 + $0x38] sm:$0xf]
      %v3577 = vunpack.c.l.b16 %v3561
      %v3578 = vunpack.c.l.b16 %v3562
      %v3579 = vunpack.c.l.b16 %v3563
      %v3580 = vunpack.c.l.b16 %v3564
      %v3581 = vunpack.c.l.b16 %v3565
      %v3582 = vunpack.c.l.b16 %v3566
      %v3583 = vunpack.c.l.b16 %v3567
      %v3584 = vunpack.c.l.b16 %v3568
      %v3585 = vpack.c.b16 %v3578, %v3577
      %v3586 = vpack.c.b16 %v3580, %v3579
      %v3587 = vpack.c.b16 %v3582, %v3581
      %v3588 = vpack.c.b16 %v3584, %v3583
      %3593 = vst [vmem:[#allocation4 + $0x30] sm:$0xff] %v3585
      %3594 = vst [vmem:[#allocation4 + $0x78] sm:$0xff] %v3586
      %3595 = vst [vmem:[#allocation4 + $0xc0] sm:$0xff] %v3587
      %3596 = vst [vmem:[#allocation4 + $0x108] sm:$0xff] %v3588
      %v3597 = vld [vmem:[%s3560] sm:$0xf]
      %v3598 = vld [vmem:[%s3560 + $0x4] sm:$0x1]
      %v3599 = vld [vmem:[%s3560 + $0x8] sm:$0xf]
      %v3600 = vld [vmem:[%s3560 + $0xc] sm:$0x1]
      %v3601 = vld [vmem:[%s3560 + $0x10] sm:$0xf]
      %v3602 = vld [vmem:[%s3560 + $0x14] sm:$0x1]
      %v3603 = vld [vmem:[%s3560 + $0x18] sm:$0xf]
      %v3604 = vld [vmem:[%s3560 + $0x1c] sm:$0x1]
      %v3605 = vld [vmem:[%s3560 + $0x20] sm:$0xf]
      %v3606 = vld [vmem:[%s3560 + $0x24] sm:$0x1]
      %v3607 = vld [vmem:[%s3560 + $0x28] sm:$0xf]
      %v3608 = vld [vmem:[%s3560 + $0x2c] sm:$0x1]
      %v3609 = vld [vmem:[%s3560 + $0x30] sm:$0xf]
      %v3610 = vld [vmem:[%s3560 + $0x34] sm:$0x1]
      %v3611 = vld [vmem:[%s3560 + $0x38] sm:$0xf]
      %v3612 = vld [vmem:[%s3560 + $0x3c] sm:$0x1]
      %v3614 = vshrl.u32 %v3597, 16
      %v3616 = vrot.slane %v3614, 4
      %v3617 = vshll.u32 %v3597, 16
      %v3619 = vrot.slane %v3617, 5
      %v3620 = vor.u32 %v3616, %v3619
      %v3621 = vrot.slane %v3620, 4
      %v3623 = vshll.u32 %v3598, 16
      %v3625 = vrot.slane %v3623, 5
      %v3626 = vsel %vm1171, %v3621, %v3625
      %v3628 = vshrl.u32 %v3599, 16
      %v3630 = vrot.slane %v3628, 4
      %v3631 = vshll.u32 %v3599, 16
      %v3633 = vrot.slane %v3631, 5
      %v3634 = vor.u32 %v3630, %v3633
      %v3635 = vrot.slane %v3634, 4
      %v3637 = vshll.u32 %v3600, 16
      %v3639 = vrot.slane %v3637, 5
      %v3640 = vsel %vm1171, %v3635, %v3639
      %v3642 = vshrl.u32 %v3601, 16
      %v3644 = vrot.slane %v3642, 4
      %v3645 = vshll.u32 %v3601, 16
      %v3647 = vrot.slane %v3645, 5
      %v3648 = vor.u32 %v3644, %v3647
      %v3649 = vrot.slane %v3648, 4
      %v3651 = vshll.u32 %v3602, 16
      %v3653 = vrot.slane %v3651, 5
      %v3654 = vsel %vm1171, %v3649, %v3653
      %v3656 = vshrl.u32 %v3603, 16
      %v3658 = vrot.slane %v3656, 4
      %v3659 = vshll.u32 %v3603, 16
      %v3661 = vrot.slane %v3659, 5
      %v3662 = vor.u32 %v3658, %v3661
      %v3663 = vrot.slane %v3662, 4
      %v3665 = vshll.u32 %v3604, 16
      %v3667 = vrot.slane %v3665, 5
      %v3668 = vsel %vm1171, %v3663, %v3667
      %v3670 = vshrl.u32 %v3605, 16
      %v3672 = vrot.slane %v3670, 4
      %v3673 = vshll.u32 %v3605, 16
      %v3675 = vrot.slane %v3673, 5
      %v3676 = vor.u32 %v3672, %v3675
      %v3677 = vrot.slane %v3676, 4
      %v3679 = vshll.u32 %v3606, 16
      %v3681 = vrot.slane %v3679, 5
      %v3682 = vsel %vm1171, %v3677, %v3681
      %v3684 = vshrl.u32 %v3607, 16
      %v3686 = vrot.slane %v3684, 4
      %v3687 = vshll.u32 %v3607, 16
      %v3689 = vrot.slane %v3687, 5
      %v3690 = vor.u32 %v3686, %v3689
      %v3691 = vrot.slane %v3690, 4
      %v3693 = vshll.u32 %v3608, 16
      %v3695 = vrot.slane %v3693, 5
      %v3696 = vsel %vm1171, %v3691, %v3695
      %v3698 = vshrl.u32 %v3609, 16
      %v3700 = vrot.slane %v3698, 4
      %v3701 = vshll.u32 %v3609, 16
      %v3703 = vrot.slane %v3701, 5
      %v3704 = vor.u32 %v3700, %v3703
      %v3705 = vrot.slane %v3704, 4
      %v3707 = vshll.u32 %v3610, 16
      %v3709 = vrot.slane %v3707, 5
      %v3710 = vsel %vm1171, %v3705, %v3709
      %v3712 = vshrl.u32 %v3611, 16
      %v3714 = vrot.slane %v3712, 4
      %v3715 = vshll.u32 %v3611, 16
      %v3717 = vrot.slane %v3715, 5
      %v3718 = vor.u32 %v3714, %v3717
      %v3719 = vrot.slane %v3718, 4
      %v3721 = vshll.u32 %v3612, 16
      %v3723 = vrot.slane %v3721, 5
      %v3724 = vsel %vm1171, %v3719, %v3723
      %v3725 = vunpack.c.l.b16 %v3626
      %v3726 = vunpack.c.l.b16 %v3640
      %v3727 = vunpack.c.l.b16 %v3654
      %v3728 = vunpack.c.l.b16 %v3668
      %v3729 = vunpack.c.l.b16 %v3682
      %v3730 = vunpack.c.l.b16 %v3696
      %v3731 = vunpack.c.l.b16 %v3710
      %v3732 = vunpack.c.l.b16 %v3724
      %v3733 = vpack.c.b16 %v3726, %v3725
      %v3734 = vpack.c.b16 %v3728, %v3727
      %v3735 = vpack.c.b16 %v3730, %v3729
      %v3736 = vpack.c.b16 %v3732, %v3731
      %3741 = vst [vmem:[#allocation4 + $0x38] sm:$0xff] %v3733
      %3742 = vst [vmem:[#allocation4 + $0x80] sm:$0xff] %v3734
      %3743 = vst [vmem:[#allocation4 + $0xc8] sm:$0xff] %v3735
      %3744 = vst [vmem:[#allocation4 + $0x110] sm:$0xff] %v3736
      %v3745 = vld [vmem:[%s3560] sm:$0xe]
      %v3746 = vld [vmem:[%s3560 + $0x4] sm:$0x1]
      %v3747 = vld [vmem:[%s3560 + $0x8] sm:$0xe]
      %v3748 = vld [vmem:[%s3560 + $0xc] sm:$0x1]
      %v3749 = vld [vmem:[%s3560 + $0x10] sm:$0xe]
      %v3750 = vld [vmem:[%s3560 + $0x14] sm:$0x1]
      %v3751 = vld [vmem:[%s3560 + $0x18] sm:$0xe]
      %v3752 = vld [vmem:[%s3560 + $0x1c] sm:$0x1]
      %v3753 = vld [vmem:[%s3560 + $0x20] sm:$0xe]
      %v3754 = vld [vmem:[%s3560 + $0x24] sm:$0x1]
      %v3755 = vld [vmem:[%s3560 + $0x28] sm:$0xe]
      %v3756 = vld [vmem:[%s3560 + $0x2c] sm:$0x1]
      %v3757 = vld [vmem:[%s3560 + $0x30] sm:$0xe]
      %v3758 = vld [vmem:[%s3560 + $0x34] sm:$0x1]
      %v3759 = vld [vmem:[%s3560 + $0x38] sm:$0xe]
      %v3760 = vld [vmem:[%s3560 + $0x3c] sm:$0x1]
      %v3777 = vrot.slane %v3745, 5
      %v3778 = vrot.slane %v3777, 4
      %v3779 = vrot.slane %v3746, 5
      %v3780 = vsel %vm3239, %v3778, %v3779
      %v3781 = vrot.slane %v3747, 5
      %v3782 = vrot.slane %v3781, 4
      %v3783 = vrot.slane %v3748, 5
      %v3784 = vsel %vm3239, %v3782, %v3783
      %v3785 = vrot.slane %v3749, 5
      %v3786 = vrot.slane %v3785, 4
      %v3787 = vrot.slane %v3750, 5
      %v3788 = vsel %vm3239, %v3786, %v3787
      %v3789 = vrot.slane %v3751, 5
      %v3790 = vrot.slane %v3789, 4
      %v3791 = vrot.slane %v3752, 5
      %v3792 = vsel %vm3239, %v3790, %v3791
      %v3793 = vrot.slane %v3753, 5
      %v3794 = vrot.slane %v3793, 4
      %v3795 = vrot.slane %v3754, 5
      %v3796 = vsel %vm3239, %v3794, %v3795
      %v3797 = vrot.slane %v3755, 5
      %v3798 = vrot.slane %v3797, 4
      %v3799 = vrot.slane %v3756, 5
      %v3800 = vsel %vm3239, %v3798, %v3799
      %v3801 = vrot.slane %v3757, 5
      %v3802 = vrot.slane %v3801, 4
      %v3803 = vrot.slane %v3758, 5
      %v3804 = vsel %vm3239, %v3802, %v3803
      %v3805 = vrot.slane %v3759, 5
      %v3806 = vrot.slane %v3805, 4
      %v3807 = vrot.slane %v3760, 5
      %v3808 = vsel %vm3239, %v3806, %v3807
      %v3809 = vunpack.c.l.b16 %v3780
      %v3810 = vunpack.c.l.b16 %v3784
      %v3811 = vunpack.c.l.b16 %v3788
      %v3812 = vunpack.c.l.b16 %v3792
      %v3813 = vunpack.c.l.b16 %v3796
      %v3814 = vunpack.c.l.b16 %v3800
      %v3815 = vunpack.c.l.b16 %v3804
      %v3816 = vunpack.c.l.b16 %v3808
      %v3817 = vpack.c.b16 %v3810, %v3809
      %v3818 = vpack.c.b16 %v3812, %v3811
      %v3819 = vpack.c.b16 %v3814, %v3813
      %v3820 = vpack.c.b16 %v3816, %v3815
      %3825 = vst [vmem:[#allocation4 + $0x40] sm:$0xff] %v3817
      %3826 = vst [vmem:[#allocation4 + $0x88] sm:$0xff] %v3818
      %3827 = vst [vmem:[#allocation4 + $0xd0] sm:$0xff] %v3819
      %3828 = vst [vmem:[#allocation4 + $0x118] sm:$0xff] %v3820
      %v3829 = vld [vmem:[#allocation4] sm:$0xff]
      %v3830 = vld [vmem:[#allocation4 + $0x8] sm:$0xff]
      %v3831 = vld [vmem:[#allocation4 + $0x10] sm:$0xff]
      %v3832 = vld [vmem:[#allocation4 + $0x18] sm:$0xff]
      %v3833 = vld [vmem:[#allocation4 + $0x20] sm:$0xff]
      %v3834 = vld [vmem:[#allocation4 + $0x28] sm:$0xff]
      %v3835 = vld [vmem:[#allocation4 + $0x30] sm:$0xff]
      %v3836 = vld [vmem:[#allocation4 + $0x38] sm:$0xff]
      %v3837 = vld [vmem:[#allocation4 + $0x40] sm:$0xff]
      %v3838 = vld [vmem:[#allocation4 + $0x48] sm:$0xff]
      %v3839 = vld [vmem:[#allocation4 + $0x50] sm:$0xff]
      %v3840 = vld [vmem:[#allocation4 + $0x58] sm:$0xff]
      %v3841 = vld [vmem:[#allocation4 + $0x60] sm:$0xff]
      %v3842 = vld [vmem:[#allocation4 + $0x68] sm:$0xff]
      %v3843 = vld [vmem:[#allocation4 + $0x70] sm:$0xff]
      %v3844 = vld [vmem:[#allocation4 + $0x78] sm:$0xff]
      %v3845 = vld [vmem:[#allocation4 + $0x80] sm:$0xff]
      %v3846 = vld [vmem:[#allocation4 + $0x88] sm:$0xff]
      %v3847 = vld [vmem:[#allocation4 + $0x90] sm:$0xff]
      %v3848 = vld [vmem:[#allocation4 + $0x98] sm:$0xff]
      %v3849 = vld [vmem:[#allocation4 + $0xa0] sm:$0xff]
      %v3850 = vld [vmem:[#allocation4 + $0xa8] sm:$0xff]
      %v3851 = vld [vmem:[#allocation4 + $0xb0] sm:$0xff]
      %v3852 = vld [vmem:[#allocation4 + $0xb8] sm:$0xff]
      %v3853 = vld [vmem:[#allocation4 + $0xc0] sm:$0xff]
      %v3854 = vld [vmem:[#allocation4 + $0xc8] sm:$0xff]
      %v3855 = vld [vmem:[#allocation4 + $0xd0] sm:$0xff]
      %v3856 = vld [vmem:[#allocation4 + $0xd8] sm:$0xff]
      %v3857 = vld [vmem:[#allocation4 + $0xe0] sm:$0xff]
      %v3858 = vld [vmem:[#allocation4 + $0xe8] sm:$0xff]
      %v3859 = vld [vmem:[#allocation4 + $0xf0] sm:$0xff]
      %v3860 = vld [vmem:[#allocation4 + $0xf8] sm:$0xff]
      %v3861 = vld [vmem:[#allocation4 + $0x100] sm:$0xff]
      %v3862 = vld [vmem:[#allocation4 + $0x108] sm:$0xff]
      %v3863 = vld [vmem:[#allocation4 + $0x110] sm:$0xff]
      %v3864 = vld [vmem:[#allocation4 + $0x118] sm:$0xff]
      %v3865 = vld [vmem:[%s2] sm:$0xf]
      %v3866 = vld [vmem:[%s2 + $0x4] sm:$0xf]
      %v3867 = vld [vmem:[%s2 + $0x8] sm:$0xf]
      %v3868 = vld [vmem:[%s2 + $0xc] sm:$0xf]
      %v3869 = vld [vmem:[%s2 + $0x10] sm:$0xf]
      %v3870 = vld [vmem:[%s2 + $0x14] sm:$0xf]
      %v3871 = vld [vmem:[%s2 + $0x18] sm:$0xf]
      %v3872 = vld [vmem:[%s2 + $0x1c] sm:$0xf]
      %v3873 = vld [vmem:[%s2 + $0x20] sm:$0xf]
      %v3874 = vld [vmem:[%s2 + $0x24] sm:$0xf]
      %v3875 = vld [vmem:[%s2 + $0x28] sm:$0xf]
      %v3876 = vld [vmem:[%s2 + $0x2c] sm:$0xf]
      %v3877 = vld [vmem:[%s2 + $0x30] sm:$0xf]
      %v3878 = vld [vmem:[%s2 + $0x34] sm:$0xf]
      %v3879 = vld [vmem:[%s2 + $0x38] sm:$0xf]
      %v3880 = vld [vmem:[%s2 + $0x3c] sm:$0xf]
      %v3881 = vld [vmem:[%s2 + $0x40] sm:$0xf]
      %v3882 = vld [vmem:[%s2 + $0x44] sm:$0xf]
      %v3883 = vld [vmem:[%s2 + $0x48] sm:$0xf]
      %v3884 = vld [vmem:[%s2 + $0x4c] sm:$0xf]
      %v3885 = vld [vmem:[%s2 + $0x50] sm:$0xf]
      %v3886 = vld [vmem:[%s2 + $0x54] sm:$0xf]
      %v3887 = vld [vmem:[%s2 + $0x58] sm:$0xf]
      %v3888 = vld [vmem:[%s2 + $0x5c] sm:$0xf]
      %v3889 = vld [vmem:[%s2 + $0x60] sm:$0xf]
      %v3890 = vld [vmem:[%s2 + $0x64] sm:$0xf]
      %v3891 = vld [vmem:[%s2 + $0x68] sm:$0xf]
      %v3892 = vld [vmem:[%s2 + $0x6c] sm:$0xf]
      %v3893 = vld [vmem:[%s2 + $0x70] sm:$0xf]
      %v3894 = vld [vmem:[%s2 + $0x74] sm:$0xf]
      %v3895 = vld [vmem:[%s2 + $0x78] sm:$0xf]
      %v3896 = vld [vmem:[%s2 + $0x7c] sm:$0xf]
      %v3897 = vld [vmem:[%s2 + $0x80] sm:$0xf]
      %v3898 = vld [vmem:[%s2 + $0x84] sm:$0xf]
      %v3899 = vld [vmem:[%s2 + $0x88] sm:$0xf]
      %v3900 = vld [vmem:[%s2 + $0x8c] sm:$0xf]
      %v3901 = vld [vmem:[%s2 + $0x90] sm:$0xf]
      %v3902 = vld [vmem:[%s2 + $0x94] sm:$0xf]
      %v3903 = vld [vmem:[%s2 + $0x98] sm:$0xf]
      %v3904 = vld [vmem:[%s2 + $0x9c] sm:$0xf]
      %v3905 = vld [vmem:[%s2 + $0xa0] sm:$0xf]
      %v3906 = vld [vmem:[%s2 + $0xa4] sm:$0xf]
      %v3907 = vld [vmem:[%s2 + $0xa8] sm:$0xf]
      %v3908 = vld [vmem:[%s2 + $0xac] sm:$0xf]
      %v3909 = vld [vmem:[%s2 + $0xb0] sm:$0xf]
      %v3910 = vld [vmem:[%s2 + $0xb4] sm:$0xf]
      %v3911 = vld [vmem:[%s2 + $0xb8] sm:$0xf]
      %v3912 = vld [vmem:[%s2 + $0xbc] sm:$0xf]
      %v3913 = vld [vmem:[%s2 + $0xc0] sm:$0xf]
      %v3914 = vld [vmem:[%s2 + $0xc4] sm:$0xf]
      %v3915 = vld [vmem:[%s2 + $0xc8] sm:$0xf]
      %v3916 = vld [vmem:[%s2 + $0xcc] sm:$0xf]
      %v3917 = vld [vmem:[%s2 + $0xd0] sm:$0xf]
      %v3918 = vld [vmem:[%s2 + $0xd4] sm:$0xf]
      %v3919 = vld [vmem:[%s2 + $0xd8] sm:$0xf]
      %v3920 = vld [vmem:[%s2 + $0xdc] sm:$0xf]
      %v3921 = vld [vmem:[%s2 + $0xe0] sm:$0xf]
      %v3922 = vld [vmem:[%s2 + $0xe4] sm:$0xf]
      %v3923 = vld [vmem:[%s2 + $0xe8] sm:$0xf]
      %v3924 = vld [vmem:[%s2 + $0xec] sm:$0xf]
      %v3925 = vld [vmem:[%s2 + $0xf0] sm:$0xf]
      %v3926 = vld [vmem:[%s2 + $0xf4] sm:$0xf]
      %v3927 = vld [vmem:[%s2 + $0xf8] sm:$0xf]
      %v3928 = vld [vmem:[%s2 + $0xfc] sm:$0xf]
      %v3929 = vld [vmem:[%s2 + $0x100] sm:$0xf]
      %v3930 = vld [vmem:[%s2 + $0x104] sm:$0xf]
      %v3931 = vld [vmem:[%s2 + $0x108] sm:$0xf]
      %v3932 = vld [vmem:[%s2 + $0x10c] sm:$0xf]
      %v3933 = vld [vmem:[%s2 + $0x110] sm:$0xf]
      %v3934 = vld [vmem:[%s2 + $0x114] sm:$0xf]
      %v3935 = vld [vmem:[%s2 + $0x118] sm:$0xf]
      %v3936 = vld [vmem:[%s2 + $0x11c] sm:$0xf]
      %v3937 = vld [vmem:[%s2 + $0x120] sm:$0xf]
      %v3938 = vld [vmem:[%s2 + $0x124] sm:$0xf]
      %v3939 = vld [vmem:[%s2 + $0x128] sm:$0xf]
      %v3940 = vld [vmem:[%s2 + $0x12c] sm:$0xf]
      %v3941 = vld [vmem:[%s2 + $0x130] sm:$0xf]
      %v3942 = vld [vmem:[%s2 + $0x134] sm:$0xf]
      %v3943 = vld [vmem:[%s2 + $0x138] sm:$0xf]
      %v3944 = vld [vmem:[%s2 + $0x13c] sm:$0xf]
      %v3945 = vld [vmem:[%s2 + $0x140] sm:$0xf]
      %v3946 = vld [vmem:[%s2 + $0x144] sm:$0xf]
      %v3947 = vld [vmem:[%s2 + $0x148] sm:$0xf]
      %v3948 = vld [vmem:[%s2 + $0x14c] sm:$0xf]
      %v3949 = vld [vmem:[%s2 + $0x150] sm:$0xf]
      %v3950 = vld [vmem:[%s2 + $0x154] sm:$0xf]
      %v3951 = vld [vmem:[%s2 + $0x158] sm:$0xf]
      %v3952 = vld [vmem:[%s2 + $0x15c] sm:$0xf]
      %v3953 = vld [vmem:[%s2 + $0x160] sm:$0xf]
      %v3954 = vld [vmem:[%s2 + $0x164] sm:$0xf]
      %v3955 = vld [vmem:[%s2 + $0x168] sm:$0xf]
      %v3956 = vld [vmem:[%s2 + $0x16c] sm:$0xf]
      %v3957 = vld [vmem:[%s2 + $0x170] sm:$0xf]
      %v3958 = vld [vmem:[%s2 + $0x174] sm:$0xf]
      %v3959 = vld [vmem:[%s2 + $0x178] sm:$0xf]
      %v3960 = vld [vmem:[%s2 + $0x17c] sm:$0xf]
      %v3961 = vld [vmem:[%s2 + $0x180] sm:$0xf]
      %v3962 = vld [vmem:[%s2 + $0x184] sm:$0xf]
      %v3963 = vld [vmem:[%s2 + $0x188] sm:$0xf]
      %v3964 = vld [vmem:[%s2 + $0x18c] sm:$0xf]
      %v3965 = vld [vmem:[%s2 + $0x190] sm:$0xf]
      %v3966 = vld [vmem:[%s2 + $0x194] sm:$0xf]
      %v3967 = vld [vmem:[%s2 + $0x198] sm:$0xf]
      %v3968 = vld [vmem:[%s2 + $0x19c] sm:$0xf]
      %v3969 = vld [vmem:[%s2 + $0x1a0] sm:$0xf]
      %v3970 = vld [vmem:[%s2 + $0x1a4] sm:$0xf]
      %v3971 = vld [vmem:[%s2 + $0x1a8] sm:$0xf]
      %v3972 = vld [vmem:[%s2 + $0x1ac] sm:$0xf]
      %v3973 = vld [vmem:[%s2 + $0x1b0] sm:$0xf]
      %v3974 = vld [vmem:[%s2 + $0x1b4] sm:$0xf]
      %v3975 = vld [vmem:[%s2 + $0x1b8] sm:$0xf]
      %v3976 = vld [vmem:[%s2 + $0x1bc] sm:$0xf]
      %v3977 = vld [vmem:[%s2 + $0x1c0] sm:$0xf]
      %v3978 = vld [vmem:[%s2 + $0x1c4] sm:$0xf]
      %v3979 = vld [vmem:[%s2 + $0x1c8] sm:$0xf]
      %v3980 = vld [vmem:[%s2 + $0x1cc] sm:$0xf]
      %v3981 = vld [vmem:[%s2 + $0x1d0] sm:$0xf]
      %v3982 = vld [vmem:[%s2 + $0x1d4] sm:$0xf]
      %v3983 = vld [vmem:[%s2 + $0x1d8] sm:$0xf]
      %v3984 = vld [vmem:[%s2 + $0x1dc] sm:$0xf]
      %v3985 = vld [vmem:[%s2 + $0x1e0] sm:$0xf]
      %v3986 = vld [vmem:[%s2 + $0x1e4] sm:$0xf]
      %v3987 = vld [vmem:[%s2 + $0x1e8] sm:$0xf]
      %v3988 = vld [vmem:[%s2 + $0x1ec] sm:$0xf]
      %v3989 = vld [vmem:[%s2 + $0x1f0] sm:$0xf]
      %v3990 = vld [vmem:[%s2 + $0x1f4] sm:$0xf]
      %v3991 = vld [vmem:[%s2 + $0x1f8] sm:$0xf]
      %v3992 = vld [vmem:[%s2 + $0x1fc] sm:$0xf]
      %v3993 = vld [vmem:[%s2 + $0x200] sm:$0xf]
      %v3994 = vld [vmem:[%s2 + $0x204] sm:$0xf]
      %v3995 = vld [vmem:[%s2 + $0x208] sm:$0xf]
      %v3996 = vld [vmem:[%s2 + $0x20c] sm:$0xf]
      %v3997 = vld [vmem:[%s2 + $0x210] sm:$0xf]
      %v3998 = vld [vmem:[%s2 + $0x214] sm:$0xf]
      %v3999 = vld [vmem:[%s2 + $0x218] sm:$0xf]
      %v4000 = vld [vmem:[%s2 + $0x21c] sm:$0xf]
      %v4001 = vld [vmem:[%s2 + $0x220] sm:$0xf]
      %v4002 = vld [vmem:[%s2 + $0x224] sm:$0xf]
      %v4003 = vld [vmem:[%s2 + $0x228] sm:$0xf]
      %v4004 = vld [vmem:[%s2 + $0x22c] sm:$0xf]
      %v4005 = vld [vmem:[%s2 + $0x230] sm:$0xf]
      %v4006 = vld [vmem:[%s2 + $0x234] sm:$0xf]
      %v4007 = vld [vmem:[%s2 + $0x238] sm:$0xf]
      %v4008 = vld [vmem:[%s2 + $0x23c] sm:$0xf]
      %v4009 = vld [vmem:[#allocation5] sm:$0xff]
      %v4010 = vld [vmem:[#allocation5 + $0x8] sm:$0xff]
      %v4011 = vld [vmem:[#allocation5 + $0x10] sm:$0xff]
      %v4012 = vld [vmem:[#allocation5 + $0x18] sm:$0xff]
      %v4013 = vld [vmem:[#allocation5 + $0x20] sm:$0xff]
      %v4014 = vld [vmem:[#allocation5 + $0x28] sm:$0xff]
      %v4015 = vld [vmem:[#allocation5 + $0x30] sm:$0xff]
      %v4016 = vld [vmem:[#allocation5 + $0x38] sm:$0xff]
      %v4161 = vunpack.c.l.b16 %v3865
      %v4162 = vunpack.c.l.b16 %v3866
      %v4163 = vunpack.c.l.b16 %v3867
      %v4164 = vunpack.c.l.b16 %v3868
      %v4165 = vunpack.c.l.b16 %v3869
      %v4166 = vunpack.c.l.b16 %v3870
      %v4167 = vunpack.c.l.b16 %v3871
      %v4168 = vunpack.c.l.b16 %v3872
      %v4169 = vunpack.c.l.b16 %v3873
      %v4170 = vunpack.c.l.b16 %v3874
      %v4171 = vunpack.c.l.b16 %v3875
      %v4172 = vunpack.c.l.b16 %v3876
      %v4173 = vunpack.c.l.b16 %v3877
      %v4174 = vunpack.c.l.b16 %v3878
      %v4175 = vunpack.c.l.b16 %v3879
      %v4176 = vunpack.c.l.b16 %v3880
      %v4177 = vunpack.c.l.b16 %v3881
      %v4178 = vunpack.c.l.b16 %v3882
      %v4179 = vunpack.c.l.b16 %v3883
      %v4180 = vunpack.c.l.b16 %v3884
      %v4181 = vunpack.c.l.b16 %v3885
      %v4182 = vunpack.c.l.b16 %v3886
      %v4183 = vunpack.c.l.b16 %v3887
      %v4184 = vunpack.c.l.b16 %v3888
      %v4185 = vunpack.c.l.b16 %v3889
      %v4186 = vunpack.c.l.b16 %v3890
      %v4187 = vunpack.c.l.b16 %v3891
      %v4188 = vunpack.c.l.b16 %v3892
      %v4189 = vunpack.c.l.b16 %v3893
      %v4190 = vunpack.c.l.b16 %v3894
      %v4191 = vunpack.c.l.b16 %v3895
      %v4192 = vunpack.c.l.b16 %v3896
      %v4193 = vunpack.c.l.b16 %v3897
      %v4194 = vunpack.c.l.b16 %v3898
      %v4195 = vunpack.c.l.b16 %v3899
      %v4196 = vunpack.c.l.b16 %v3900
      %v4197 = vunpack.c.l.b16 %v3901
      %v4198 = vunpack.c.l.b16 %v3902
      %v4199 = vunpack.c.l.b16 %v3903
      %v4200 = vunpack.c.l.b16 %v3904
      %v4201 = vunpack.c.l.b16 %v3905
      %v4202 = vunpack.c.l.b16 %v3906
      %v4203 = vunpack.c.l.b16 %v3907
      %v4204 = vunpack.c.l.b16 %v3908
      %v4205 = vunpack.c.l.b16 %v3909
      %v4206 = vunpack.c.l.b16 %v3910
      %v4207 = vunpack.c.l.b16 %v3911
      %v4208 = vunpack.c.l.b16 %v3912
      %v4209 = vunpack.c.l.b16 %v3913
      %v4210 = vunpack.c.l.b16 %v3914
      %v4211 = vunpack.c.l.b16 %v3915
      %v4212 = vunpack.c.l.b16 %v3916
      %v4213 = vunpack.c.l.b16 %v3917
      %v4214 = vunpack.c.l.b16 %v3918
      %v4215 = vunpack.c.l.b16 %v3919
      %v4216 = vunpack.c.l.b16 %v3920
      %v4217 = vunpack.c.l.b16 %v3921
      %v4218 = vunpack.c.l.b16 %v3922
      %v4219 = vunpack.c.l.b16 %v3923
      %v4220 = vunpack.c.l.b16 %v3924
      %v4221 = vunpack.c.l.b16 %v3925
      %v4222 = vunpack.c.l.b16 %v3926
      %v4223 = vunpack.c.l.b16 %v3927
      %v4224 = vunpack.c.l.b16 %v3928
      %v4225 = vunpack.c.l.b16 %v3929
      %v4226 = vunpack.c.l.b16 %v3930
      %v4227 = vunpack.c.l.b16 %v3931
      %v4228 = vunpack.c.l.b16 %v3932
      %v4229 = vunpack.c.l.b16 %v3933
      %v4230 = vunpack.c.l.b16 %v3934
      %v4231 = vunpack.c.l.b16 %v3935
      %v4232 = vunpack.c.l.b16 %v3936
      %v4233 = vunpack.c.l.b16 %v3937
      %v4234 = vunpack.c.l.b16 %v3938
      %v4235 = vunpack.c.l.b16 %v3939
      %v4236 = vunpack.c.l.b16 %v3940
      %v4237 = vunpack.c.l.b16 %v3941
      %v4238 = vunpack.c.l.b16 %v3942
      %v4239 = vunpack.c.l.b16 %v3943
      %v4240 = vunpack.c.l.b16 %v3944
      %v4241 = vunpack.c.l.b16 %v3945
      %v4242 = vunpack.c.l.b16 %v3946
      %v4243 = vunpack.c.l.b16 %v3947
      %v4244 = vunpack.c.l.b16 %v3948
      %v4245 = vunpack.c.l.b16 %v3949
      %v4246 = vunpack.c.l.b16 %v3950
      %v4247 = vunpack.c.l.b16 %v3951
      %v4248 = vunpack.c.l.b16 %v3952
      %v4249 = vunpack.c.l.b16 %v3953
      %v4250 = vunpack.c.l.b16 %v3954
      %v4251 = vunpack.c.l.b16 %v3955
      %v4252 = vunpack.c.l.b16 %v3956
      %v4253 = vunpack.c.l.b16 %v3957
      %v4254 = vunpack.c.l.b16 %v3958
      %v4255 = vunpack.c.l.b16 %v3959
      %v4256 = vunpack.c.l.b16 %v3960
      %v4257 = vunpack.c.l.b16 %v3961
      %v4258 = vunpack.c.l.b16 %v3962
      %v4259 = vunpack.c.l.b16 %v3963
      %v4260 = vunpack.c.l.b16 %v3964
      %v4261 = vunpack.c.l.b16 %v3965
      %v4262 = vunpack.c.l.b16 %v3966
      %v4263 = vunpack.c.l.b16 %v3967
      %v4264 = vunpack.c.l.b16 %v3968
      %v4265 = vunpack.c.l.b16 %v3969
      %v4266 = vunpack.c.l.b16 %v3970
      %v4267 = vunpack.c.l.b16 %v3971
      %v4268 = vunpack.c.l.b16 %v3972
      %v4269 = vunpack.c.l.b16 %v3973
      %v4270 = vunpack.c.l.b16 %v3974
      %v4271 = vunpack.c.l.b16 %v3975
      %v4272 = vunpack.c.l.b16 %v3976
      %v4273 = vunpack.c.l.b16 %v3977
      %v4274 = vunpack.c.l.b16 %v3978
      %v4275 = vunpack.c.l.b16 %v3979
      %v4276 = vunpack.c.l.b16 %v3980
      %v4277 = vunpack.c.l.b16 %v3981
      %v4278 = vunpack.c.l.b16 %v3982
      %v4279 = vunpack.c.l.b16 %v3983
      %v4280 = vunpack.c.l.b16 %v3984
      %v4281 = vunpack.c.l.b16 %v3985
      %v4282 = vunpack.c.l.b16 %v3986
      %v4283 = vunpack.c.l.b16 %v3987
      %v4284 = vunpack.c.l.b16 %v3988
      %v4285 = vunpack.c.l.b16 %v3989
      %v4286 = vunpack.c.l.b16 %v3990
      %v4287 = vunpack.c.l.b16 %v3991
      %v4288 = vunpack.c.l.b16 %v3992
      %v4289 = vunpack.c.l.b16 %v3993
      %v4290 = vunpack.c.l.b16 %v3994
      %v4291 = vunpack.c.l.b16 %v3995
      %v4292 = vunpack.c.l.b16 %v3996
      %v4293 = vunpack.c.l.b16 %v3997
      %v4294 = vunpack.c.l.b16 %v3998
      %v4295 = vunpack.c.l.b16 %v3999
      %v4296 = vunpack.c.l.b16 %v4000
      %v4297 = vunpack.c.l.b16 %v4001
      %v4298 = vunpack.c.l.b16 %v4002
      %v4299 = vunpack.c.l.b16 %v4003
      %v4300 = vunpack.c.l.b16 %v4004
      %v4301 = vunpack.c.l.b16 %v4005
      %v4302 = vunpack.c.l.b16 %v4006
      %v4303 = vunpack.c.l.b16 %v4007
      %v4304 = vunpack.c.l.b16 %v4008
      %v4305 = vpack.c.b16 %v4162, %v4161
      %v4306 = vpack.c.b16 %v4164, %v4163
      %v4307 = vpack.c.b16 %v4166, %v4165
      %v4308 = vpack.c.b16 %v4168, %v4167
      %v4309 = vpack.c.b16 %v4170, %v4169
      %v4310 = vpack.c.b16 %v4172, %v4171
      %v4311 = vpack.c.b16 %v4174, %v4173
      %v4312 = vpack.c.b16 %v4176, %v4175
      %v4313 = vpack.c.b16 %v4178, %v4177
      %v4314 = vpack.c.b16 %v4180, %v4179
      %v4315 = vpack.c.b16 %v4182, %v4181
      %v4316 = vpack.c.b16 %v4184, %v4183
      %v4317 = vpack.c.b16 %v4186, %v4185
      %v4318 = vpack.c.b16 %v4188, %v4187
      %v4319 = vpack.c.b16 %v4190, %v4189
      %v4320 = vpack.c.b16 %v4192, %v4191
      %v4321 = vpack.c.b16 %v4194, %v4193
      %v4322 = vpack.c.b16 %v4196, %v4195
      %v4323 = vpack.c.b16 %v4198, %v4197
      %v4324 = vpack.c.b16 %v4200, %v4199
      %v4325 = vpack.c.b16 %v4202, %v4201
      %v4326 = vpack.c.b16 %v4204, %v4203
      %v4327 = vpack.c.b16 %v4206, %v4205
      %v4328 = vpack.c.b16 %v4208, %v4207
      %v4329 = vpack.c.b16 %v4210, %v4209
      %v4330 = vpack.c.b16 %v4212, %v4211
      %v4331 = vpack.c.b16 %v4214, %v4213
      %v4332 = vpack.c.b16 %v4216, %v4215
      %v4333 = vpack.c.b16 %v4218, %v4217
      %v4334 = vpack.c.b16 %v4220, %v4219
      %v4335 = vpack.c.b16 %v4222, %v4221
      %v4336 = vpack.c.b16 %v4224, %v4223
      %v4337 = vpack.c.b16 %v4226, %v4225
      %v4338 = vpack.c.b16 %v4228, %v4227
      %v4339 = vpack.c.b16 %v4230, %v4229
      %v4340 = vpack.c.b16 %v4232, %v4231
      %v4341 = vpack.c.b16 %v4234, %v4233
      %v4342 = vpack.c.b16 %v4236, %v4235
      %v4343 = vpack.c.b16 %v4238, %v4237
      %v4344 = vpack.c.b16 %v4240, %v4239
      %v4345 = vpack.c.b16 %v4242, %v4241
      %v4346 = vpack.c.b16 %v4244, %v4243
      %v4347 = vpack.c.b16 %v4246, %v4245
      %v4348 = vpack.c.b16 %v4248, %v4247
      %v4349 = vpack.c.b16 %v4250, %v4249
      %v4350 = vpack.c.b16 %v4252, %v4251
      %v4351 = vpack.c.b16 %v4254, %v4253
      %v4352 = vpack.c.b16 %v4256, %v4255
      %v4353 = vpack.c.b16 %v4258, %v4257
      %v4354 = vpack.c.b16 %v4260, %v4259
      %v4355 = vpack.c.b16 %v4262, %v4261
      %v4356 = vpack.c.b16 %v4264, %v4263
      %v4357 = vpack.c.b16 %v4266, %v4265
      %v4358 = vpack.c.b16 %v4268, %v4267
      %v4359 = vpack.c.b16 %v4270, %v4269
      %v4360 = vpack.c.b16 %v4272, %v4271
      %v4361 = vpack.c.b16 %v4274, %v4273
      %v4362 = vpack.c.b16 %v4276, %v4275
      %v4363 = vpack.c.b16 %v4278, %v4277
      %v4364 = vpack.c.b16 %v4280, %v4279
      %v4365 = vpack.c.b16 %v4282, %v4281
      %v4366 = vpack.c.b16 %v4284, %v4283
      %v4367 = vpack.c.b16 %v4286, %v4285
      %v4368 = vpack.c.b16 %v4288, %v4287
      %v4369 = vpack.c.b16 %v4290, %v4289
      %v4370 = vpack.c.b16 %v4292, %v4291
      %v4371 = vpack.c.b16 %v4294, %v4293
      %v4372 = vpack.c.b16 %v4296, %v4295
      %v4373 = vpack.c.b16 %v4298, %v4297
      %v4374 = vpack.c.b16 %v4300, %v4299
      %v4375 = vpack.c.b16 %v4302, %v4301
      %v4376 = vpack.c.b16 %v4304, %v4303
      %4449 = vmatprep.subr.bf16.mxu0 0
      %4450 = vmatpush1.bf16.msra.mxu0 %v4305
      %4451 = vmatprep.subr.bf16.mxu0 0
      %4452 = vmatpush1.bf16.msra.mxu0 %v4306
      %4453 = vmatprep.subr.bf16.mxu0 0
      %4454 = vmatpush1.bf16.msra.mxu0 %v4307
      %4455 = vmatprep.subr.bf16.mxu0 0
      %4456 = vmatpush1.bf16.msra.mxu0 %v4308
      %4457 = vmatprep.subr.bf16.mxu0 0
      %4458 = vmatpush1.bf16.msra.mxu0 %v4309
      %4459 = vmatprep.subr.bf16.mxu0 0
      %4460 = vmatpush1.bf16.msra.mxu0 %v4310
      %4461 = vmatprep.subr.bf16.mxu0 0
      %4462 = vmatpush1.bf16.msra.mxu0 %v4311
      %4463 = vmatprep.subr.bf16.mxu0 0
      %4464 = vmatpush1.bf16.msra.mxu0 %v4312
      %4465 = vmatprep.subr.bf16.mxu0 0
      %4466 = vmatpush1.bf16.msra.mxu0 %v4313
      %4467 = vmatprep.subr.bf16.mxu0 0
      %4468 = vmatpush1.bf16.msra.mxu0 %v4314
      %4469 = vmatprep.subr.bf16.mxu0 0
      %4470 = vmatpush1.bf16.msra.mxu0 %v4315
      %4471 = vmatprep.subr.bf16.mxu0 0
      %4472 = vmatpush1.bf16.msra.mxu0 %v4316
      %4473 = vmatprep.subr.bf16.mxu0 0
      %4474 = vmatpush1.bf16.msra.mxu0 %v4317
      %4475 = vmatprep.subr.bf16.mxu0 0
      %4476 = vmatpush1.bf16.msra.mxu0 %v4318
      %4477 = vmatprep.subr.bf16.mxu0 0
      %4478 = vmatpush1.bf16.msra.mxu0 %v4319
      %4479 = vmatprep.subr.bf16.mxu0 0
      %4480 = vmatpush1.bf16.msra.mxu0 %v4320
      %4481 = vmatprep.mubr.bf16.mxu0 %v3830
      %4482 = vmatmul.mubr.bf16.gmra.mrb[0].mxu0 %v3829
      %v4483 = vpop.f32.mrb[0].mxu0
      %v4484 = vadd.f32 %v4009, %v4483
      %v4485 = vpop.f32.mrb[0].mxu0
      %v4486 = vpop.f32.mrb[0].mxu0
      %v4487 = vadd.f32 %v4010, %v4486
      %v4488 = vpop.f32.mrb[0].mxu0
      %4489 = vmatprep.mubr.bf16.mxu0 %v3839
      %4490 = vmatmul.mubr.bf16.gmra.mrb[0].mxu0 %v3838
      %v4491 = vpop.f32.mrb[0].mxu0
      %v4492 = vadd.f32 %v4011, %v4491
      %v4493 = vpop.f32.mrb[0].mxu0
      %v4494 = vpop.f32.mrb[0].mxu0
      %v4495 = vadd.f32 %v4012, %v4494
      %v4496 = vpop.f32.mrb[0].mxu0
      %4497 = vmatprep.mubr.bf16.mxu0 %v3848
      %4498 = vmatmul.mubr.bf16.gmra.mrb[0].mxu0 %v3847
      %v4499 = vpop.f32.mrb[0].mxu0
      %v4500 = vadd.f32 %v4013, %v4499
      %v4501 = vpop.f32.mrb[0].mxu0
      %v4502 = vpop.f32.mrb[0].mxu0
      %v4503 = vadd.f32 %v4014, %v4502
      %v4504 = vpop.f32.mrb[0].mxu0
      %4505 = vmatprep.mubr.bf16.mxu0 %v3857
      %4506 = vmatmul.mubr.bf16.gmra.mrb[0].mxu0 %v3856
      %v4507 = vpop.f32.mrb[0].mxu0
      %v4508 = vadd.f32 %v4015, %v4507
      %v4509 = vpop.f32.mrb[0].mxu0
      %v4510 = vpop.f32.mrb[0].mxu0
      %v4511 = vadd.f32 %v4016, %v4510
      %v4512 = vpop.f32.mrb[0].mxu0
      %4513 = vdwg.mxu0
      %4514 = vmatprep.subr.bf16.mxu0 0
      %4515 = vmatpush1.bf16.msra.mxu0 %v4321
      %4516 = vmatprep.subr.bf16.mxu0 0
      %4517 = vmatpush1.bf16.msra.mxu0 %v4322
      %4518 = vmatprep.subr.bf16.mxu0 0
      %4519 = vmatpush1.bf16.msra.mxu0 %v4323
      %4520 = vmatprep.subr.bf16.mxu0 0
      %4521 = vmatpush1.bf16.msra.mxu0 %v4324
      %4522 = vmatprep.subr.bf16.mxu0 0
      %4523 = vmatpush1.bf16.msra.mxu0 %v4325
      %4524 = vmatprep.subr.bf16.mxu0 0
      %4525 = vmatpush1.bf16.msra.mxu0 %v4326
      %4526 = vmatprep.subr.bf16.mxu0 0
      %4527 = vmatpush1.bf16.msra.mxu0 %v4327
      %4528 = vmatprep.subr.bf16.mxu0 0
      %4529 = vmatpush1.bf16.msra.mxu0 %v4328
      %4530 = vmatprep.subr.bf16.mxu0 0
      %4531 = vmatpush1.bf16.msra.mxu0 %v4329
      %4532 = vmatprep.subr.bf16.mxu0 0
      %4533 = vmatpush1.bf16.msra.mxu0 %v4330
      %4534 = vmatprep.subr.bf16.mxu0 0
      %4535 = vmatpush1.bf16.msra.mxu0 %v4331
      %4536 = vmatprep.subr.bf16.mxu0 0
      %4537 = vmatpush1.bf16.msra.mxu0 %v4332
      %4538 = vmatprep.subr.bf16.mxu0 0
      %4539 = vmatpush1.bf16.msra.mxu0 %v4333
      %4540 = vmatprep.subr.bf16.mxu0 0
      %4541 = vmatpush1.bf16.msra.mxu0 %v4334
      %4542 = vmatprep.subr.bf16.mxu0 0
      %4543 = vmatpush1.bf16.msra.mxu0 %v4335
      %4544 = vmatprep.subr.bf16.mxu0 0
      %4545 = vmatpush1.bf16.msra.mxu0 %v4336
      %4546 = vmatprep.mubr.bf16.mxu0 %v3832
      %4547 = vmatmul.mubr.bf16.gmra.mrb[0].mxu0 %v3831
      %v4548 = vpop.f32.mrb[0].mxu0
      %v4549 = vadd.f32 %v4484, %v4548
      %v4550 = vpop.f32.mrb[0].mxu0
      %v4551 = vpop.f32.mrb[0].mxu0
      %v4552 = vadd.f32 %v4487, %v4551
      %v4553 = vpop.f32.mrb[0].mxu0
      %4554 = vmatprep.mubr.bf16.mxu0 %v3841
      %4555 = vmatmul.mubr.bf16.gmra.mrb[0].mxu0 %v3840
      %v4556 = vpop.f32.mrb[0].mxu0
      %v4557 = vadd.f32 %v4492, %v4556
      %v4558 = vpop.f32.mrb[0].mxu0
      %v4559 = vpop.f32.mrb[0].mxu0
      %v4560 = vadd.f32 %v4495, %v4559
      %v4561 = vpop.f32.mrb[0].mxu0
      %4562 = vmatprep.mubr.bf16.mxu0 %v3850
      %4563 = vmatmul.mubr.bf16.gmra.mrb[0].mxu0 %v3849
      %v4564 = vpop.f32.mrb[0].mxu0
      %v4565 = vadd.f32 %v4500, %v4564
      %v4566 = vpop.f32.mrb[0].mxu0
      %v4567 = vpop.f32.mrb[0].mxu0
      %v4568 = vadd.f32 %v4503, %v4567
      %v4569 = vpop.f32.mrb[0].mxu0
      %4570 = vmatprep.mubr.bf16.mxu0 %v3859
      %4571 = vmatmul.mubr.bf16.gmra.mrb[0].mxu0 %v3858
      %v4572 = vpop.f32.mrb[0].mxu0
      %v4573 = vadd.f32 %v4508, %v4572
      %v4574 = vpop.f32.mrb[0].mxu0
      %v4575 = vpop.f32.mrb[0].mxu0
      %v4576 = vadd.f32 %v4511, %v4575
      %v4577 = vpop.f32.mrb[0].mxu0
      %4578 = vdwg.mxu0
      %4579 = vmatprep.subr.bf16.mxu0 0
      %4580 = vmatpush1.bf16.msra.mxu0 %v4337
      %4581 = vmatprep.subr.bf16.mxu0 0
      %4582 = vmatpush1.bf16.msra.mxu0 %v4338
      %4583 = vmatprep.subr.bf16.mxu0 0
      %4584 = vmatpush1.bf16.msra.mxu0 %v4339
      %4585 = vmatprep.subr.bf16.mxu0 0
      %4586 = vmatpush1.bf16.msra.mxu0 %v4340
      %4587 = vmatprep.subr.bf16.mxu0 0
      %4588 = vmatpush1.bf16.msra.mxu0 %v4341
      %4589 = vmatprep.subr.bf16.mxu0 0
      %4590 = vmatpush1.bf16.msra.mxu0 %v4342
      %4591 = vmatprep.subr.bf16.mxu0 0
      %4592 = vmatpush1.bf16.msra.mxu0 %v4343
      %4593 = vmatprep.subr.bf16.mxu0 0
      %4594 = vmatpush1.bf16.msra.mxu0 %v4344
      %4595 = vmatprep.subr.bf16.mxu0 0
      %4596 = vmatpush1.bf16.msra.mxu0 %v4345
      %4597 = vmatprep.subr.bf16.mxu0 0
      %4598 = vmatpush1.bf16.msra.mxu0 %v4346
      %4599 = vmatprep.subr.bf16.mxu0 0
      %4600 = vmatpush1.bf16.msra.mxu0 %v4347
      %4601 = vmatprep.subr.bf16.mxu0 0
      %4602 = vmatpush1.bf16.msra.mxu0 %v4348
      %4603 = vmatprep.subr.bf16.mxu0 0
      %4604 = vmatpush1.bf16.msra.mxu0 %v4349
      %4605 = vmatprep.subr.bf16.mxu0 0
      %4606 = vmatpush1.bf16.msra.mxu0 %v4350
      %4607 = vmatprep.subr.bf16.mxu0 0
      %4608 = vmatpush1.bf16.msra.mxu0 %v4351
      %4609 = vmatprep.subr.bf16.mxu0 0
      %4610 = vmatpush1.bf16.msra.mxu0 %v4352
      %4611 = vmatprep.mubr.bf16.mxu0 %v3834
      %4612 = vmatmul.mubr.bf16.gmra.mrb[0].mxu0 %v3833
      %v4613 = vpop.f32.mrb[0].mxu0
      %v4614 = vadd.f32 %v4549, %v4613
      %v4615 = vpop.f32.mrb[0].mxu0
      %v4616 = vpop.f32.mrb[0].mxu0
      %v4617 = vadd.f32 %v4552, %v4616
      %v4618 = vpop.f32.mrb[0].mxu0
      %4619 = vmatprep.mubr.bf16.mxu0 %v3843
      %4620 = vmatmul.mubr.bf16.gmra.mrb[0].mxu0 %v3842
      %v4621 = vpop.f32.mrb[0].mxu0
      %v4622 = vadd.f32 %v4557, %v4621
      %v4623 = vpop.f32.mrb[0].mxu0
      %v4624 = vpop.f32.mrb[0].mxu0
      %v4625 = vadd.f32 %v4560, %v4624
      %v4626 = vpop.f32.mrb[0].mxu0
      %4627 = vmatprep.mubr.bf16.mxu0 %v3852
      %4628 = vmatmul.mubr.bf16.gmra.mrb[0].mxu0 %v3851
      %v4629 = vpop.f32.mrb[0].mxu0
      %v4630 = vadd.f32 %v4565, %v4629
      %v4631 = vpop.f32.mrb[0].mxu0
      %v4632 = vpop.f32.mrb[0].mxu0
      %v4633 = vadd.f32 %v4568, %v4632
      %v4634 = vpop.f32.mrb[0].mxu0
      %4635 = vmatprep.mubr.bf16.mxu0 %v3861
      %4636 = vmatmul.mubr.bf16.gmra.mrb[0].mxu0 %v3860
      %v4637 = vpop.f32.mrb[0].mxu0
      %v4638 = vadd.f32 %v4573, %v4637
      %v4639 = vpop.f32.mrb[0].mxu0
      %v4640 = vpop.f32.mrb[0].mxu0
      %v4641 = vadd.f32 %v4576, %v4640
      %v4642 = vpop.f32.mrb[0].mxu0
      %4643 = vdwg.mxu0
      %4644 = vmatprep.subr.bf16.mxu0 0
      %4645 = vmatpush1.bf16.msra.mxu0 %v4353
      %4646 = vmatprep.subr.bf16.mxu0 0
      %4647 = vmatpush1.bf16.msra.mxu0 %v4354
      %4648 = vmatprep.subr.bf16.mxu0 0
      %4649 = vmatpush1.bf16.msra.mxu0 %v4355
      %4650 = vmatprep.subr.bf16.mxu0 0
      %4651 = vmatpush1.bf16.msra.mxu0 %v4356
      %4652 = vmatprep.subr.bf16.mxu0 0
      %4653 = vmatpush1.bf16.msra.mxu0 %v4357
      %4654 = vmatprep.subr.bf16.mxu0 0
      %4655 = vmatpush1.bf16.msra.mxu0 %v4358
      %4656 = vmatprep.subr.bf16.mxu0 0
      %4657 = vmatpush1.bf16.msra.mxu0 %v4359
      %4658 = vmatprep.subr.bf16.mxu0 0
      %4659 = vmatpush1.bf16.msra.mxu0 %v4360
      %4660 = vmatprep.subr.bf16.mxu0 0
      %4661 = vmatpush1.bf16.msra.mxu0 %v4361
      %4662 = vmatprep.subr.bf16.mxu0 0
      %4663 = vmatpush1.bf16.msra.mxu0 %v4362
      %4664 = vmatprep.subr.bf16.mxu0 0
      %4665 = vmatpush1.bf16.msra.mxu0 %v4363
      %4666 = vmatprep.subr.bf16.mxu0 0
      %4667 = vmatpush1.bf16.msra.mxu0 %v4364
      %4668 = vmatprep.subr.bf16.mxu0 0
      %4669 = vmatpush1.bf16.msra.mxu0 %v4365
      %4670 = vmatprep.subr.bf16.mxu0 0
      %4671 = vmatpush1.bf16.msra.mxu0 %v4366
      %4672 = vmatprep.subr.bf16.mxu0 0
      %4673 = vmatpush1.bf16.msra.mxu0 %v4367
      %4674 = vmatprep.subr.bf16.mxu0 0
      %4675 = vmatpush1.bf16.msra.mxu0 %v4368
      %4676 = vmatprep.mubr.bf16.mxu0 %v3836
      %4677 = vmatmul.mubr.bf16.gmra.mrb[0].mxu0 %v3835
      %v4678 = vpop.f32.mrb[0].mxu0
      %v4679 = vadd.f32 %v4614, %v4678
      %v4680 = vpop.f32.mrb[0].mxu0
      %v4681 = vpop.f32.mrb[0].mxu0
      %v4682 = vadd.f32 %v4617, %v4681
      %v4683 = vpop.f32.mrb[0].mxu0
      %4684 = vmatprep.mubr.bf16.mxu0 %v3845
      %4685 = vmatmul.mubr.bf16.gmra.mrb[0].mxu0 %v3844
      %v4686 = vpop.f32.mrb[0].mxu0
      %v4687 = vadd.f32 %v4622, %v4686
      %v4688 = vpop.f32.mrb[0].mxu0
      %v4689 = vpop.f32.mrb[0].mxu0
      %v4690 = vadd.f32 %v4625, %v4689
      %v4691 = vpop.f32.mrb[0].mxu0
      %4692 = vmatprep.mubr.bf16.mxu0 %v3854
      %4693 = vmatmul.mubr.bf16.gmra.mrb[0].mxu0 %v3853
      %v4694 = vpop.f32.mrb[0].mxu0
      %v4695 = vadd.f32 %v4630, %v4694
      %v4696 = vpop.f32.mrb[0].mxu0
      %v4697 = vpop.f32.mrb[0].mxu0
      %v4698 = vadd.f32 %v4633, %v4697
      %v4699 = vpop.f32.mrb[0].mxu0
      %4700 = vmatprep.mubr.bf16.mxu0 %v3863
      %4701 = vmatmul.mubr.bf16.gmra.mrb[0].mxu0 %v3862
      %v4702 = vpop.f32.mrb[0].mxu0
      %v4703 = vadd.f32 %v4638, %v4702
      %v4704 = vpop.f32.mrb[0].mxu0
      %v4705 = vpop.f32.mrb[0].mxu0
      %v4706 = vadd.f32 %v4641, %v4705
      %v4707 = vpop.f32.mrb[0].mxu0
      %4708 = vdwg.mxu0
      %4709 = vmatprep.subr.bf16.mxu0 0
      %4710 = vmatpush1.bf16.msra.mxu0 %v4369
      %4711 = vmatprep.subr.bf16.mxu0 0
      %4712 = vmatpush1.bf16.msra.mxu0 %v4370
      %4713 = vmatprep.subr.bf16.mxu0 0
      %4714 = vmatpush1.bf16.msra.mxu0 %v4371
      %4715 = vmatprep.subr.bf16.mxu0 0
      %4716 = vmatpush1.bf16.msra.mxu0 %v4372
      %4717 = vmatprep.subr.bf16.mxu0 0
      %4718 = vmatpush1.bf16.msra.mxu0 %v4373
      %4719 = vmatprep.subr.bf16.mxu0 0
      %4720 = vmatpush1.bf16.msra.mxu0 %v4374
      %4721 = vmatprep.subr.bf16.mxu0 0
      %4722 = vmatpush1.bf16.msra.mxu0 %v4375
      %4723 = vmatprep.subr.bf16.mxu0 0
      %4724 = vmatpush1.bf16.msra.mxu0 %v4376
      %4725 = vmatprep.subr.bf16.mxu0 0
      %4726 = vmatpush1.bf16.msra.mxu0 0
      %4727 = vmatprep.subr.bf16.mxu0 0
      %4728 = vmatpush1.bf16.msra.mxu0 0
      %4729 = vmatprep.subr.bf16.mxu0 0
      %4730 = vmatpush1.bf16.msra.mxu0 0
      %4731 = vmatprep.subr.bf16.mxu0 0
      %4732 = vmatpush1.bf16.msra.mxu0 0
      %4733 = vmatprep.subr.bf16.mxu0 0
      %4734 = vmatpush1.bf16.msra.mxu0 0
      %4735 = vmatprep.subr.bf16.mxu0 0
      %4736 = vmatpush1.bf16.msra.mxu0 0
      %4737 = vmatprep.subr.bf16.mxu0 0
      %4738 = vmatpush1.bf16.msra.mxu0 0
      %4739 = vmatprep.subr.bf16.mxu0 0
      %4740 = vmatpush1.bf16.msra.mxu0 0
      %4741 = vmatprep.mubr.bf16.mxu0 0
      %4742 = vmatmul.mubr.bf16.gmra.mrb[0].mxu0 %v3837
      %v4743 = vpop.f32.mrb[0].mxu0
      %v4744 = vadd.f32 %v4679, %v4743
      %v4745 = vpop.f32.mrb[0].mxu0
      %v4746 = vpop.f32.mrb[0].mxu0
      %v4747 = vadd.f32 %v4682, %v4746
      %v4748 = vpop.f32.mrb[0].mxu0
      %4749 = vmatprep.mubr.bf16.mxu0 0
      %4750 = vmatmul.mubr.bf16.gmra.mrb[0].mxu0 %v3846
      %v4751 = vpop.f32.mrb[0].mxu0
      %v4752 = vadd.f32 %v4687, %v4751
      %v4753 = vpop.f32.mrb[0].mxu0
      %v4754 = vpop.f32.mrb[0].mxu0
      %v4755 = vadd.f32 %v4690, %v4754
      %v4756 = vpop.f32.mrb[0].mxu0
      %4757 = vmatprep.mubr.bf16.mxu0 0
      %4758 = vmatmul.mubr.bf16.gmra.mrb[0].mxu0 %v3855
      %v4759 = vpop.f32.mrb[0].mxu0
      %v4760 = vadd.f32 %v4695, %v4759
      %v4761 = vpop.f32.mrb[0].mxu0
      %v4762 = vpop.f32.mrb[0].mxu0
      %v4763 = vadd.f32 %v4698, %v4762
      %v4764 = vpop.f32.mrb[0].mxu0
      %4765 = vmatprep.mubr.bf16.mxu0 0
      %4766 = vmatmul.mubr.bf16.gmra.mrb[0].mxu0 %v3864
      %v4767 = vpop.f32.mrb[0].mxu0
      %v4768 = vadd.f32 %v4703, %v4767
      %v4769 = vpop.f32.mrb[0].mxu0
      %v4770 = vpop.f32.mrb[0].mxu0
      %v4771 = vadd.f32 %v4706, %v4770
      %v4772 = vpop.f32.mrb[0].mxu0
      %4773 = vdwg.mxu0
      %v4774 = vpack.c.bf16 %v4747, %v4744
      %v4775 = vpack.c.bf16 %v4755, %v4752
      %v4776 = vpack.c.bf16 %v4763, %v4760
      %v4777 = vpack.c.bf16 %v4771, %v4768
      %v4782 = vunpack.c.l.b16 %v4774
      %v4783 = vunpack.c.h.b16 %v4774
      %v4784 = vunpack.c.l.b16 %v4775
      %v4785 = vunpack.c.h.b16 %v4775
      %v4786 = vunpack.c.l.b16 %v4776
      %v4787 = vunpack.c.h.b16 %v4776
      %v4788 = vunpack.c.l.b16 %v4777
      %v4789 = vunpack.c.h.b16 %v4777
      %v4790 = vpack.c.b16 %v4782, %v4782
      %v4791 = vpack.c.b16 %v4783, %v4783
      %v4792 = vpack.c.b16 %v4784, %v4784
      %v4793 = vpack.c.b16 %v4785, %v4785
      %v4794 = vpack.c.b16 %v4786, %v4786
      %v4795 = vpack.c.b16 %v4787, %v4787
      %v4796 = vpack.c.b16 %v4788, %v4788
      %v4797 = vpack.c.b16 %v4789, %v4789
      %4806 = vst [vmem:[%s305] sm:$0xf] %v4790
      %4807 = vst [vmem:[%s305 + $0x4] sm:$0xf] %v4791
      %4808 = vst [vmem:[%s305 + $0x8] sm:$0xf] %v4792
      %4809 = vst [vmem:[%s305 + $0xc] sm:$0xf] %v4793
      %4810 = vst [vmem:[%s305 + $0x10] sm:$0xf] %v4794
      %4811 = vst [vmem:[%s305 + $0x14] sm:$0xf] %v4795
      %4812 = vst [vmem:[%s305 + $0x18] sm:$0xf] %v4796
      %4813 = vst [vmem:[%s305 + $0x1c] sm:$0xf] %v4797
      %p4814 = scmp.lt.s32.totalorder %s19, 1
      %s4815 = scalar_select %p4814, %s19, 1
      %s4816 = smul.addr %s4815, 8
      %s4817 = smul.addr %s4816, 4
      %s4818 = scalar_lea.vmem %s8, %s4817
      // Predicated region
      $region53: #{network_block_fwd.2} parent=51 // pred_check
        %p4819 = pneg %p210
      $region54: #{network_block_fwd.2} parent=51 // pred_check_branch
        %4821 = sbr.rel (%p4819) target = $region56
      $region55: #{network_block_fwd.2} parent=51 // pred_region
        _
      $region56: #{network_block_fwd.2} parent=51 // pred_fallthru
        _
    $region52: #{network_block_fwd.2} parent=5 // pred_fallthru
      _
    %p4822 = scmp.le.s32.totalorder 2, %s14
    // Predicated region
    $region57: #{network_block_fwd.2} parent=5 // pred_check
      %p4823 = pneg %p4822
    $region58: #{network_block_fwd.2} parent=5 // pred_check_branch
      %4825 = sbr.rel (%p4823) target = $region60
    $region59: #{network_block_fwd.2} parent=5 // pred_region
      %s4826 = ssub.s32 %s14, 2
      // Predicated region
      $region61: #{network_block_fwd.2} parent=59 // pred_check
        %p4827 = pneg %p216
      $region62: #{network_block_fwd.2} parent=59 // pred_check_branch
        %4829 = sbr.rel (%p4827) target = $region64
      $region63: #{network_block_fwd.2} parent=59 // pred_region
        %p4830 = scmp.lt.s32.totalorder %s20, 1
        %s4831 = scalar_select %p4830, %s20, 1
        %s4832 = smul.addr %s4831, 8
        %s4833 = smul.addr %s4832, 4
        %s4834 = scalar_lea.vmem %s8, %s4833
      $region64: #{network_block_fwd.2} parent=59 // pred_fallthru
        _
    $region60: #{network_block_fwd.2} parent=5 // pred_fallthru
      _
  $region6: #{network_block_fwd.2} parent=0 // loop_footer
    %s18 = sadd.s32 1, %s14
  $region7: #{network_block_fwd.2} parent=0 // loop_footer_branch
    %13 = sbr.rel target = $region3
  $region8: #{network_block_fwd.2} parent=0 // loop_exit
    _

</llo_original>
